<compile_context>
chip_gen: v7x
topology: tpu7x:2x2x1
jax: 0.10.0
libtpu: 0.0.40
codegen_flags: <defaults>
</compile_context>

<pallas_src>
import jax
import jax.numpy as jnp
from jax.experimental import pallas as pl
from jax.experimental.pallas import tpu as pltpu

# ----------------------------- configuration --------------------------------
B = 2                      # batch
IN_CH = 3                  # Embeddings default in_channels
IMG = 256                  # img_size (module default; encoder patch_num = IMG//16)
PH = PW = 16               # config.patches['size'] (non-hybrid path)
PATCH_NUM = IMG // 16      # encoder patch_num
NPATCH = PATCH_NUM * PATCH_NUM     # 256 tokens
CP = IN_CH * PH * PW               # 768 unfolded patch features
HIDDEN = 32                # config.hidden_size == encoder in_channels (small)
ED0 = 16                   # embed_dims[0] (small)
OUT_CH = HIDDEN            # encoder out_channels == in_channels
NH = 4                     # num_heads[0]
HD = ED0 // NH             # head dim
MLP_RATIO = 4              # mlp_ratios[0]
MLP_HID = ED0 * MLP_RATIO
DEPTH0 = 2                 # depths[0]
LN_EPS = 1e-5              # nn.LayerNorm default
AS_EPS = 1e-8              # epsilon in the reference AS normalisation
SCALE = HD ** -0.5         # qk_scale=None -> head_dim**-0.5 (folded into Wq)

# -------- packed-parameter layouts (all offsets static inside the kernel) ---
ROW_WQ = 0                 # blkw_a rows [0, 16)   : Wq^T (scale pre-folded)
ROW_WK = ED0               # rows [16, 32)         : Wk^T
ROW_WV = 2 * ED0           # rows [32, 48)         : Wv^T
ROW_PROJ = 3 * ED0         # rows [48, 64)         : proj_w^T
ROW_FC1 = 4 * ED0          # rows [64, 128)        : fc1_w^T
BLKW_A_ROWS = 4 * ED0 + MLP_HID

N_VEC_PER_BLK = 7
V_LN1_G, V_LN1_B, V_LN2_G, V_LN2_B, V_PROJ_B, V_FC1_B, V_FC2_B = range(N_VEC_PER_BLK)
V_NORM0_G = DEPTH0 * N_VEC_PER_BLK
V_NORM0_B = V_NORM0_G + 1
V_FPE_B = V_NORM0_G + 2
N_VECS = V_FPE_B + 1
MAX_VDIM = MLP_HID         # 64 rows in the packed vector buffer


# --------------------------- fused encoder kernel ----------------------------
def _fused_encoder_kernel(pT_ref, cw_ref, cb_ref, wa_ref, wb_ref, fpe_ref,
                          vecs_ref, encT_ref, as_ref):
    f32 = jnp.float32

    def layer_norm_fm(X, g_col, b_col):
        # feature-major LayerNorm: normalise over the feature (sublane) axis
        mu = jnp.mean(X, axis=0, keepdims=True)
        var = jnp.mean(jnp.square(X - mu), axis=0, keepdims=True)
        return (X - mu) * jax.lax.rsqrt(var + LN_EPS) * g_col + b_col

    def gelu_tanh(v):
        # TODO(synk): torch nn.GELU() is exact (erf); tanh approximation used
        # (erf has no guaranteed Mosaic lowering), max abs deviation ~1e-3.
        c = 0.7978845608028654  # sqrt(2/pi)
        return 0.5 * v * (1.0 + jnp.tanh(c * (v + 0.044715 * v * v * v)))

    def vcol(nrows, col):
        # static Ref view of one packed per-feature vector, shape (nrows, 1)
        return vecs_ref[0:nrows, col:col + 1]

    # ---- Embeddings + to_patch_embedding (pre-composed on host) -------------
    # X = (pe_w @ tpe_w)^T @ patches^T + ((pe_b + pos) @ tpe_w + tpe_b)^T
    X = jnp.dot(cw_ref[...], pT_ref[0],
                preferred_element_type=f32) + cb_ref[...]            # (ED0, N)
    # dropout: eval mode -> identity

    as_col = jnp.zeros((NPATCH, 1), f32)

    # ---- stage0_as: DEPTH0 pre-norm MHSA + MLP blocks (drop rates = 0) ------
    # TODO(synk): UTSTransformer_attnloss source not provided; a standard
    # pre-norm MHSA (qkv_bias=False, sr_ratio=1) + (fc1, GELU, fc2) MLP is used.
    for blk in range(DEPTH0):
        vb = blk * N_VEC_PER_BLK
        last = blk == DEPTH0 - 1

        # ----- attention -----
        H1 = layer_norm_fm(X, vcol(ED0, vb + V_LN1_G), vcol(ED0, vb + V_LN1_B))
        QKV = jnp.dot(wa_ref[blk, ROW_WQ:ROW_PROJ, :], H1,
                      preferred_element_type=f32)                    # (3*ED0, N)
        K_tok = QKV[ROW_WK:ROW_WV, :].T                              # (N, ED0), one aligned transpose
        attn_acc = jnp.zeros((ED0, NPATCH), f32)
        for hh in range(NH):
            qT = QKV[hh * HD:(hh + 1) * HD, :]                       # (HD, N)
            vT = QKV[2 * ED0 + hh * HD:2 * ED0 + (hh + 1) * HD, :]   # (HD, N)
            Kh = K_tok[:, hh * HD:(hh + 1) * HD]                     # (N, HD)
            # scores with keys on sublanes / queries on lanes; scale in Wq
            S = jnp.dot(Kh, qT, preferred_element_type=f32)          # (Nk, Nq)
            S = S - jnp.max(S, axis=0, keepdims=True)                # torch softmax
            E = jnp.exp(S)
            r = 1.0 / jnp.sum(E, axis=0, keepdims=True)              # (1, Nq) exact
            # PV first, then normalise the (HD, N) result (never the (N, N) map)
            ohT = jnp.dot(vT, E, preferred_element_type=f32) * r     # (HD, Nq)
            # head merge folded into the output projection (static Ref slice)
            attn_acc = attn_acc + jnp.dot(
                wa_ref[blk, ROW_PROJ:ROW_FC1, hh * HD:(hh + 1) * HD], ohT,
                preferred_element_type=f32)                          # (ED0, Nq)
            if last and hh < 2:
                # AS map: attn[:, 0:2].sum(heads).sum(queries) of the LAST block
                # = per-key sums of E weighted by the per-query reciprocal.
                as_col = as_col + jnp.sum(E * r, axis=1, keepdims=True)
        X = X + attn_acc + vcol(ED0, vb + V_PROJ_B)                  # residual

        # ----- MLP -----
        H2 = layer_norm_fm(X, vcol(ED0, vb + V_LN2_G), vcol(ED0, vb + V_LN2_B))
        H2 = jnp.dot(wa_ref[blk, ROW_FC1:BLKW_A_ROWS, :], H2,
                     preferred_element_type=f32) + vcol(MLP_HID, vb + V_FC1_B)
        H2 = gelu_tanh(H2)
        H2 = jnp.dot(wb_ref[blk], H2,
                     preferred_element_type=f32) + vcol(ED0, vb + V_FC2_B)
        X = X + H2                                                   # residual

    # ---- AS score: per-batch min-max normalisation (+1e-8 as in reference) --
    mn = jnp.min(as_col, axis=0, keepdims=True)
    mx = jnp.max(as_col, axis=0, keepdims=True)
    as_ref[0] = ((as_col - mn) / (mx - mn + AS_EPS)).astype(as_ref.dtype)

    # ---- norm0_as LayerNorm + from_patch_embedding Linear(ED0 -> OUT_CH) ----
    Xn = layer_norm_fm(X, vcol(ED0, V_NORM0_G), vcol(ED0, V_NORM0_B))
    enc = jnp.dot(fpe_ref[...], Xn,
                  preferred_element_type=f32) + vcol(OUT_CH, V_FPE_B)
    encT_ref[0] = enc.astype(encT_ref.dtype)                         # (OUT_CH, N) lane-dense


def _fused_call(patchesT, p):
    bsz = patchesT.shape[0]

    def full2(a):
        return pl.BlockSpec(a.shape, lambda i: (0, 0))

    def full3(a):
        return pl.BlockSpec(a.shape, lambda i: (0, 0, 0))

    in_specs = [
        pl.BlockSpec((1, CP, NPATCH), lambda i: (i, 0, 0)),   # patches^T per batch (bf16)
        full2(p['cw_T']),                                     # pre-composed embed weight^T (bf16)
        full2(p['cb_T']),                                     # pre-composed embed bias^T
        full3(p['blkw_a']),                                   # [WqT;WkT;WvT;projT;fc1T] per block
        full3(p['blkw_b']),                                   # fc2T per block
        full2(p['fpe_wT']),                                   # from_patch_embedding weight^T
        full2(p['vecs']),                                     # all tiny vectors, one DMA
    ]
    out_specs = (
        pl.BlockSpec((1, OUT_CH, NPATCH), lambda i: (i, 0, 0)),   # encoded^T (lane-dense)
        pl.BlockSpec((1, NPATCH, 1), lambda i: (i, 0, 0)),        # AS score column
    )
    out_shape = (jax.ShapeDtypeStruct((bsz, OUT_CH, NPATCH), jnp.float32),
                 jax.ShapeDtypeStruct((bsz, NPATCH, 1), jnp.float32))
    return pl.pallas_call(
        _fused_encoder_kernel,
        grid=(bsz,),
        in_specs=in_specs,
        out_specs=out_specs,
        out_shape=out_shape,
        compiler_params=pltpu.CompilerParams(
            dimension_semantics=("parallel",)),   # one batch element per TC on v7x
    )(patchesT, p['cw_T'], p['cb_T'], p['blkw_a'], p['blkw_b'],
      p['fpe_wT'], p['vecs'])


# ------------------------------ parameters -----------------------------------
def init_params(key):
    ks = jax.random.split(key, 16)

    def nrm(k, shape):
        return 0.02 * jax.random.normal(k, shape, jnp.float32)

    # Embeddings: Conv2d(in=3, out=HIDDEN, k=stride=16) as unfolded matmul
    pe_w = nrm(ks[0], (CP, HIDDEN))
    pe_b = nrm(ks[1], (HIDDEN,))
    pos = nrm(ks[2], (NPATCH, HIDDEN))            # nn.Parameter (zeros at torch init)
    # Encoder.to_patch_embedding Linear(HIDDEN -> ED0)
    tpe_w = nrm(ks[3], (HIDDEN, ED0))
    tpe_b = nrm(ks[4], (ED0,))
    # stage0_as block weights
    wq = nrm(ks[5], (DEPTH0, ED0, ED0)) * SCALE   # qk scale folded into Wq
    wk = nrm(ks[6], (DEPTH0, ED0, ED0))
    wv = nrm(ks[7], (DEPTH0, ED0, ED0))
    proj_w = nrm(ks[8], (DEPTH0, ED0, ED0))
    proj_b = nrm(ks[9], (DEPTH0, ED0))
    fc1_w = nrm(ks[10], (DEPTH0, ED0, MLP_HID))
    fc1_b = nrm(ks[11], (DEPTH0, MLP_HID))
    fc2_w = nrm(ks[12], (DEPTH0, MLP_HID, ED0))
    fc2_b = nrm(ks[13], (DEPTH0, ED0))
    ln1_g = jnp.ones((DEPTH0, ED0), jnp.float32)
    ln1_b = jnp.zeros((DEPTH0, ED0), jnp.float32)
    ln2_g = jnp.ones((DEPTH0, ED0), jnp.float32)
    ln2_b = jnp.zeros((DEPTH0, ED0), jnp.float32)
    norm0_g = jnp.ones((ED0,), jnp.float32)
    norm0_b = jnp.zeros((ED0,), jnp.float32)
    # Encoder.from_patch_embedding Linear(ED0 -> out_channels)
    fpe_w = nrm(ks[14], (ED0, OUT_CH))
    fpe_b = nrm(ks[15], (OUT_CH,))

    p = {}
    # pre-composed embedding chain (exact up to fp reassociation)
    comb_w = pe_w @ tpe_w                                        # (CP, ED0)
    comb_b = (pe_b[None, :] + pos) @ tpe_w + tpe_b[None, :]      # (N, ED0)
    p['cw_T'] = comb_w.T.astype(jnp.bfloat16)                    # (ED0, CP) bf16
    p['cb_T'] = comb_b.T                                         # (ED0, N)  f32

    # per-block weights, feature-major (transposed), packed into two buffers
    a_blocks = []
    for d in range(DEPTH0):
        qkvT = jnp.concatenate([wq[d].T, wk[d].T, wv[d].T], axis=0)   # (3*ED0, ED0)
        a_blocks.append(jnp.concatenate([qkvT, proj_w[d].T, fc1_w[d].T], axis=0))
    p['blkw_a'] = jnp.stack(a_blocks)                            # (DEPTH0, 128, ED0)
    p['blkw_b'] = jnp.stack([fc2_w[d].T for d in range(DEPTH0)]) # (DEPTH0, ED0, MLP_HID)
    p['fpe_wT'] = fpe_w.T                                        # (OUT_CH, ED0)

    # all tiny per-feature vectors packed column-wise into one buffer
    def col(v):
        return jnp.pad(v, (0, MAX_VDIM - v.shape[0]))

    cols = []
    for d in range(DEPTH0):
        cols += [col(ln1_g[d]), col(ln1_b[d]), col(ln2_g[d]), col(ln2_b[d]),
                 col(proj_b[d]), col(fc1_b[d]), col(fc2_b[d])]
    cols += [col(norm0_g), col(norm0_b), col(fpe_b)]
    p['vecs'] = jnp.stack(cols, axis=1)                          # (MAX_VDIM, N_VECS)
    return p


# ------------------------------ forward pass ---------------------------------
def vit_forward(params, x):
    # VisionTransformer.forward: grayscale -> 3-channel repeat
    if x.shape[1] == 1:
        x = jnp.repeat(x, 3, axis=1)
    bsz, c, h, w = x.shape
    hp, wp = h // PH, w // PW
    n = hp * wp

    # strided conv (kernel == stride) == patch unfold in (c, kh, kw) order,
    # produced feature-major ((CP, N) per batch) and in bf16 so the HBM round
    # trip re-read by the kernel is half size; the matmul is inside the kernel.
    xb = x.astype(jnp.bfloat16)
    patchesT = xb.reshape(bsz, c, hp, PH, wp, PW).transpose(0, 1, 3, 5, 2, 4)
    patchesT = patchesT.reshape(bsz, c * PH * PW, n)
    features = None                      # non-hybrid Embeddings path

    encT, as_col = _fused_call(patchesT, params)

    encoded = jnp.transpose(encT, (0, 2, 1))                     # (B, N, OUT_CH)
    attn_score = as_col.reshape(bsz, PATCH_NUM, PATCH_NUM)       # 'b (h w) -> b h w'

    # TODO(synk): HTM (atm1/atm2) DPC-KNN token clustering, stages 1-4
    # (UTSBlock_attnloss_tokenscore / UTSBlock_attnloss), FAT_PTRV2 (ltr3/ltr4),
    # var_downup and the DecoderCup + SegmentationHead conv decoder are not
    # reproducible here (class definitions not provided / data-dependent
    # clustering); the stage0 token path and from_patch_embedding are preserved.
    return encoded, features, attn_score


# ----------------------------------- main -------------------------------------
if __name__ == "__main__":
    root = jax.random.PRNGKey(0)
    pkey, xkey = jax.random.split(root)
    params = init_params(pkey)
    x = jax.random.normal(xkey, (B, IN_CH, IMG, IMG), jnp.float32)

    fwd = jax.jit(vit_forward)
    encoded, features, attn_score = fwd(params, x)
    jax.block_until_ready(encoded)
    jax.block_until_ready(attn_score)

    assert encoded.shape == (B, NPATCH, OUT_CH), encoded.shape
    assert attn_score.shape == (B, PATCH_NUM, PATCH_NUM), attn_score.shape
    assert features is None
    assert bool(jnp.all(jnp.isfinite(encoded)))
    assert bool(jnp.all(jnp.isfinite(attn_score)))
    print("KERNEL_OK")
</pallas_src>

<mosaic_0001>
module attributes {stable_mosaic.version = 11 : i64} {
  func.func @_fused_encoder_kernel(%arg0: i32, %arg1: memref<1x768x256xbf16, #tpu.memory_space<vmem>>, %arg2: memref<16x768xbf16, #tpu.memory_space<vmem>>, %arg3: memref<16x256xf32, #tpu.memory_space<vmem>>, %arg4: memref<2x128x16xf32, #tpu.memory_space<vmem>>, %arg5: memref<2x16x64xf32, #tpu.memory_space<vmem>>, %arg6: memref<32x16xf32, #tpu.memory_space<vmem>>, %arg7: memref<64x17xf32, #tpu.memory_space<vmem>>, %arg8: memref<1x32x256xf32, #tpu.memory_space<vmem>>, %arg9: memref<1x256x1xf32, #tpu.memory_space<vmem>>) attributes {dimension_semantics = [#tpu.dimension_semantics<parallel>], iteration_bounds = array<i64: 2>, scalar_prefetch = 0 : i64, scratch_operands = 0 : i64, tpu.core_type = #tpu.core_type<tc>, window_params = [{transform_indices = @transform_0, window_bounds = array<i64: 1, 768, 256>}, {pipeline_mode = #tpu.pipeline_mode<synchronous>, transform_indices = @transform_1, window_bounds = array<i64: 16, 768>}, {pipeline_mode = #tpu.pipeline_mode<synchronous>, transform_indices = @transform_2, window_bounds = array<i64: 16, 256>}, {pipeline_mode = #tpu.pipeline_mode<synchronous>, transform_indices = @transform_3, window_bounds = array<i64: 2, 128, 16>}, {pipeline_mode = #tpu.pipeline_mode<synchronous>, transform_indices = @transform_4, window_bounds = array<i64: 2, 16, 64>}, {pipeline_mode = #tpu.pipeline_mode<synchronous>, transform_indices = @transform_5, window_bounds = array<i64: 32, 16>}, {pipeline_mode = #tpu.pipeline_mode<synchronous>, transform_indices = @transform_6, window_bounds = array<i64: 64, 17>}, {transform_indices = @transform_7, window_bounds = array<i64: 1, 32, 256>}, {transform_indices = @transform_8, window_bounds = array<i64: 1, 256, 1>}]} {
    %c0 = arith.constant 0 : index
    %c0_0 = arith.constant 0 : index
    %0 = vector.load %arg2[%c0, %c0_0] : memref<16x768xbf16, #tpu.memory_space<vmem>>, vector<16x768xbf16>
    %c0_1 = arith.constant 0 : index
    %c0_2 = arith.constant 0 : index
    %c0_3 = arith.constant 0 : index
    %1 = vector.load %arg1[%c0_1, %c0_2, %c0_3] : memref<1x768x256xbf16, #tpu.memory_space<vmem>>, vector<1x768x256xbf16>
    %2 = vector.shape_cast %1 : vector<1x768x256xbf16> to vector<768x256xbf16>
    %cst = arith.constant dense<0.000000e+00> : vector<16x256xf32>
    %3 = tpu.matmul %0, %2, %cst {dimension_numbers = #tpu.dot_dimension_numbers<[1], [0], [0], [1], [0, 0, 1, 1], [], []>} : vector<16x768xbf16>, vector<768x256xbf16>, vector<16x256xf32> -> vector<16x256xf32>
    %c0_4 = arith.constant 0 : index
    %c0_5 = arith.constant 0 : index
    %4 = vector.load %arg3[%c0_4, %c0_5] : memref<16x256xf32, #tpu.memory_space<vmem>>, vector<16x256xf32>
    %5 = arith.addf %3, %4 : vector<16x256xf32>
    %cst_6 = arith.constant 0.000000e+00 : f32
    %6 = vector.broadcast %cst_6 : f32 to vector<256x1xf32>
    %c0_7 = arith.constant 0 : index
    %c0_8 = arith.constant 0 : index
    %7 = vector.load %arg7[%c0_7, %c0_8] : memref<64x17xf32, #tpu.memory_space<vmem>>, vector<16x1xf32>
    %c0_9 = arith.constant 0 : index
    %c1 = arith.constant 1 : index
    %8 = vector.load %arg7[%c0_9, %c1] : memref<64x17xf32, #tpu.memory_space<vmem>>, vector<16x1xf32>
    %cst_10 = arith.constant dense<0.000000e+00> : vector<256xf32>
    %9 = vector.multi_reduction <add>, %5, %cst_10 [0] : vector<16x256xf32> to vector<256xf32>
    %10 = vector.shape_cast %9 : vector<256xf32> to vector<1x256xf32>
    %cst_11 = arith.constant 1.600000e+01 : f32
    %11 = vector.broadcast %cst_11 : f32 to vector<1x256xf32>
    %12 = arith.divf %10, %11 : vector<1x256xf32>
    %13 = vector.broadcast %12 : vector<1x256xf32> to vector<16x256xf32>
    %14 = arith.subf %5, %13 : vector<16x256xf32>
    %15 = arith.mulf %14, %14 : vector<16x256xf32>
    %cst_12 = arith.constant dense<0.000000e+00> : vector<256xf32>
    %16 = vector.multi_reduction <add>, %15, %cst_12 [0] : vector<16x256xf32> to vector<256xf32>
    %17 = vector.shape_cast %16 : vector<256xf32> to vector<1x256xf32>
    %cst_13 = arith.constant 1.600000e+01 : f32
    %18 = vector.broadcast %cst_13 : f32 to vector<1x256xf32>
    %19 = arith.divf %17, %18 : vector<1x256xf32>
    %20 = vector.broadcast %12 : vector<1x256xf32> to vector<16x256xf32>
    %21 = arith.subf %5, %20 : vector<16x256xf32>
    %cst_14 = arith.constant 9.99999974E-6 : f32
    %22 = vector.broadcast %cst_14 : f32 to vector<1x256xf32>
    %23 = arith.addf %19, %22 : vector<1x256xf32>
    %24 = math.rsqrt %23 : vector<1x256xf32>
    %25 = vector.broadcast %24 : vector<1x256xf32> to vector<16x256xf32>
    %26 = arith.mulf %21, %25 : vector<16x256xf32>
    %27 = vector.broadcast %7 : vector<16x1xf32> to vector<16x256xf32>
    %28 = arith.mulf %26, %27 : vector<16x256xf32>
    %29 = vector.broadcast %8 : vector<16x1xf32> to vector<16x256xf32>
    %30 = arith.addf %28, %29 : vector<16x256xf32>
    %c0_15 = arith.constant 0 : index
    %c0_16 = arith.constant 0 : index
    %c0_17 = arith.constant 0 : index
    %31 = vector.load %arg4[%c0_15, %c0_16, %c0_17] : memref<2x128x16xf32, #tpu.memory_space<vmem>>, vector<1x48x16xf32>
    %32 = vector.shape_cast %31 : vector<1x48x16xf32> to vector<48x16xf32>
    %cst_18 = arith.constant dense<0.000000e+00> : vector<48x256xf32>
    %33 = tpu.matmul %32, %30, %cst_18 {dimension_numbers = #tpu.dot_dimension_numbers<[1], [0], [0], [1], [0, 0, 1, 1], [], []>} : vector<48x16xf32>, vector<16x256xf32>, vector<48x256xf32> -> vector<48x256xf32>
    %34 = vector.extract_strided_slice %33 {offsets = [16, 0], sizes = [16, 256], strides = [1, 1]} : vector<48x256xf32> to vector<16x256xf32>
    %35 = tpu.transpose %34, [1, 0] : vector<16x256xf32> -> vector<256x16xf32>
    %cst_19 = arith.constant 0.000000e+00 : f32
    %36 = vector.broadcast %cst_19 : f32 to vector<16x256xf32>
    %37 = vector.extract_strided_slice %33 {offsets = [0, 0], sizes = [4, 256], strides = [1, 1]} : vector<48x256xf32> to vector<4x256xf32>
    %38 = vector.extract_strided_slice %33 {offsets = [32, 0], sizes = [4, 256], strides = [1, 1]} : vector<48x256xf32> to vector<4x256xf32>
    %39 = vector.extract_strided_slice %35 {offsets = [0, 0], sizes = [256, 4], strides = [1, 1]} : vector<256x16xf32> to vector<256x4xf32>
    %cst_20 = arith.constant dense<0.000000e+00> : vector<256x256xf32>
    %40 = tpu.matmul %39, %37, %cst_20 {dimension_numbers = #tpu.dot_dimension_numbers<[1], [0], [0], [1], [0, 0, 1, 1], [], []>} : vector<256x4xf32>, vector<4x256xf32>, vector<256x256xf32> -> vector<256x256xf32>
    %cst_21 = arith.constant dense<0xFF800000> : vector<256xf32>
    %41 = vector.multi_reduction <maximumf>, %40, %cst_21 [0] : vector<256x256xf32> to vector<256xf32>
    %42 = vector.shape_cast %41 : vector<256xf32> to vector<1x256xf32>
    %43 = vector.broadcast %42 : vector<1x256xf32> to vector<256x256xf32>
    %44 = arith.subf %40, %43 : vector<256x256xf32>
    %45 = math.exp %44 : vector<256x256xf32>
    %cst_22 = arith.constant dense<0.000000e+00> : vector<256xf32>
    %46 = vector.multi_reduction <add>, %45, %cst_22 [0] : vector<256x256xf32> to vector<256xf32>
    %47 = vector.shape_cast %46 : vector<256xf32> to vector<1x256xf32>
    %cst_23 = arith.constant 1.000000e+00 : f32
    %48 = vector.broadcast %cst_23 : f32 to vector<1x256xf32>
    %49 = arith.divf %48, %47 : vector<1x256xf32>
    %cst_24 = arith.constant dense<0.000000e+00> : vector<4x256xf32>
    %50 = tpu.matmul %38, %45, %cst_24 {dimension_numbers = #tpu.dot_dimension_numbers<[1], [0], [0], [1], [0, 0, 1, 1], [], []>} : vector<4x256xf32>, vector<256x256xf32>, vector<4x256xf32> -> vector<4x256xf32>
    %51 = vector.broadcast %49 : vector<1x256xf32> to vector<4x256xf32>
    %52 = arith.mulf %50, %51 : vector<4x256xf32>
    %c0_25 = arith.constant 0 : index
    %c48 = arith.constant 48 : index
    %c0_26 = arith.constant 0 : index
    %53 = vector.load %arg4[%c0_25, %c48, %c0_26] : memref<2x128x16xf32, #tpu.memory_space<vmem>>, vector<1x16x4xf32>
    %54 = vector.shape_cast %53 : vector<1x16x4xf32> to vector<16x4xf32>
    %cst_27 = arith.constant dense<0.000000e+00> : vector<16x256xf32>
    %55 = tpu.matmul %54, %52, %cst_27 {dimension_numbers = #tpu.dot_dimension_numbers<[1], [0], [0], [1], [0, 0, 1, 1], [], []>} : vector<16x4xf32>, vector<4x256xf32>, vector<16x256xf32> -> vector<16x256xf32>
    %56 = arith.addf %36, %55 : vector<16x256xf32>
    %57 = vector.extract_strided_slice %33 {offsets = [4, 0], sizes = [4, 256], strides = [1, 1]} : vector<48x256xf32> to vector<4x256xf32>
    %58 = vector.extract_strided_slice %33 {offsets = [36, 0], sizes = [4, 256], strides = [1, 1]} : vector<48x256xf32> to vector<4x256xf32>
    %59 = vector.extract_strided_slice %35 {offsets = [0, 4], sizes = [256, 4], strides = [1, 1]} : vector<256x16xf32> to vector<256x4xf32>
    %cst_28 = arith.constant dense<0.000000e+00> : vector<256x256xf32>
    %60 = tpu.matmul %59, %57, %cst_28 {dimension_numbers = #tpu.dot_dimension_numbers<[1], [0], [0], [1], [0, 0, 1, 1], [], []>} : vector<256x4xf32>, vector<4x256xf32>, vector<256x256xf32> -> vector<256x256xf32>
    %cst_29 = arith.constant dense<0xFF800000> : vector<256xf32>
    %61 = vector.multi_reduction <maximumf>, %60, %cst_29 [0] : vector<256x256xf32> to vector<256xf32>
    %62 = vector.shape_cast %61 : vector<256xf32> to vector<1x256xf32>
    %63 = vector.broadcast %62 : vector<1x256xf32> to vector<256x256xf32>
    %64 = arith.subf %60, %63 : vector<256x256xf32>
    %65 = math.exp %64 : vector<256x256xf32>
    %cst_30 = arith.constant dense<0.000000e+00> : vector<256xf32>
    %66 = vector.multi_reduction <add>, %65, %cst_30 [0] : vector<256x256xf32> to vector<256xf32>
    %67 = vector.shape_cast %66 : vector<256xf32> to vector<1x256xf32>
    %cst_31 = arith.constant 1.000000e+00 : f32
    %68 = vector.broadcast %cst_31 : f32 to vector<1x256xf32>
    %69 = arith.divf %68, %67 : vector<1x256xf32>
    %cst_32 = arith.constant dense<0.000000e+00> : vector<4x256xf32>
    %70 = tpu.matmul %58, %65, %cst_32 {dimension_numbers = #tpu.dot_dimension_numbers<[1], [0], [0], [1], [0, 0, 1, 1], [], []>} : vector<4x256xf32>, vector<256x256xf32>, vector<4x256xf32> -> vector<4x256xf32>
    %71 = vector.broadcast %69 : vector<1x256xf32> to vector<4x256xf32>
    %72 = arith.mulf %70, %71 : vector<4x256xf32>
    %c0_33 = arith.constant 0 : index
    %c48_34 = arith.constant 48 : index
    %c4 = arith.constant 4 : index
    %73 = vector.load %arg4[%c0_33, %c48_34, %c4] : memref<2x128x16xf32, #tpu.memory_space<vmem>>, vector<1x16x4xf32>
    %74 = vector.shape_cast %73 : vector<1x16x4xf32> to vector<16x4xf32>
    %cst_35 = arith.constant dense<0.000000e+00> : vector<16x256xf32>
    %75 = tpu.matmul %74, %72, %cst_35 {dimension_numbers = #tpu.dot_dimension_numbers<[1], [0], [0], [1], [0, 0, 1, 1], [], []>} : vector<16x4xf32>, vector<4x256xf32>, vector<16x256xf32> -> vector<16x256xf32>
    %76 = arith.addf %56, %75 : vector<16x256xf32>
    %77 = vector.extract_strided_slice %33 {offsets = [8, 0], sizes = [4, 256], strides = [1, 1]} : vector<48x256xf32> to vector<4x256xf32>
    %78 = vector.extract_strided_slice %33 {offsets = [40, 0], sizes = [4, 256], strides = [1, 1]} : vector<48x256xf32> to vector<4x256xf32>
    %79 = vector.extract_strided_slice %35 {offsets = [0, 8], sizes = [256, 4], strides = [1, 1]} : vector<256x16xf32> to vector<256x4xf32>
    %cst_36 = arith.constant dense<0.000000e+00> : vector<256x256xf32>
    %80 = tpu.matmul %79, %77, %cst_36 {dimension_numbers = #tpu.dot_dimension_numbers<[1], [0], [0], [1], [0, 0, 1, 1], [], []>} : vector<256x4xf32>, vector<4x256xf32>, vector<256x256xf32> -> vector<256x256xf32>
    %cst_37 = arith.constant dense<0xFF800000> : vector<256xf32>
    %81 = vector.multi_reduction <maximumf>, %80, %cst_37 [0] : vector<256x256xf32> to vector<256xf32>
    %82 = vector.shape_cast %81 : vector<256xf32> to vector<1x256xf32>
    %83 = vector.broadcast %82 : vector<1x256xf32> to vector<256x256xf32>
    %84 = arith.subf %80, %83 : vector<256x256xf32>
    %85 = math.exp %84 : vector<256x256xf32>
    %cst_38 = arith.constant dense<0.000000e+00> : vector<256xf32>
    %86 = vector.multi_reduction <add>, %85, %cst_38 [0] : vector<256x256xf32> to vector<256xf32>
    %87 = vector.shape_cast %86 : vector<256xf32> to vector<1x256xf32>
    %cst_39 = arith.constant 1.000000e+00 : f32
    %88 = vector.broadcast %cst_39 : f32 to vector<1x256xf32>
    %89 = arith.divf %88, %87 : vector<1x256xf32>
    %cst_40 = arith.constant dense<0.000000e+00> : vector<4x256xf32>
    %90 = tpu.matmul %78, %85, %cst_40 {dimension_numbers = #tpu.dot_dimension_numbers<[1], [0], [0], [1], [0, 0, 1, 1], [], []>} : vector<4x256xf32>, vector<256x256xf32>, vector<4x256xf32> -> vector<4x256xf32>
    %91 = vector.broadcast %89 : vector<1x256xf32> to vector<4x256xf32>
    %92 = arith.mulf %90, %91 : vector<4x256xf32>
    %c0_41 = arith.constant 0 : index
    %c48_42 = arith.constant 48 : index
    %c8 = arith.constant 8 : index
    %93 = vector.load %arg4[%c0_41, %c48_42, %c8] : memref<2x128x16xf32, #tpu.memory_space<vmem>>, vector<1x16x4xf32>
    %94 = vector.shape_cast %93 : vector<1x16x4xf32> to vector<16x4xf32>
    %cst_43 = arith.constant dense<0.000000e+00> : vector<16x256xf32>
    %95 = tpu.matmul %94, %92, %cst_43 {dimension_numbers = #tpu.dot_dimension_numbers<[1], [0], [0], [1], [0, 0, 1, 1], [], []>} : vector<16x4xf32>, vector<4x256xf32>, vector<16x256xf32> -> vector<16x256xf32>
    %96 = arith.addf %76, %95 : vector<16x256xf32>
    %97 = vector.extract_strided_slice %33 {offsets = [12, 0], sizes = [4, 256], strides = [1, 1]} : vector<48x256xf32> to vector<4x256xf32>
    %98 = vector.extract_strided_slice %33 {offsets = [44, 0], sizes = [4, 256], strides = [1, 1]} : vector<48x256xf32> to vector<4x256xf32>
    %99 = vector.extract_strided_slice %35 {offsets = [0, 12], sizes = [256, 4], strides = [1, 1]} : vector<256x16xf32> to vector<256x4xf32>
    %cst_44 = arith.constant dense<0.000000e+00> : vector<256x256xf32>
    %100 = tpu.matmul %99, %97, %cst_44 {dimension_numbers = #tpu.dot_dimension_numbers<[1], [0], [0], [1], [0, 0, 1, 1], [], []>} : vector<256x4xf32>, vector<4x256xf32>, vector<256x256xf32> -> vector<256x256xf32>
    %cst_45 = arith.constant dense<0xFF800000> : vector<256xf32>
    %101 = vector.multi_reduction <maximumf>, %100, %cst_45 [0] : vector<256x256xf32> to vector<256xf32>
    %102 = vector.shape_cast %101 : vector<256xf32> to vector<1x256xf32>
    %103 = vector.broadcast %102 : vector<1x256xf32> to vector<256x256xf32>
    %104 = arith.subf %100, %103 : vector<256x256xf32>
    %105 = math.exp %104 : vector<256x256xf32>
    %cst_46 = arith.constant dense<0.000000e+00> : vector<256xf32>
    %106 = vector.multi_reduction <add>, %105, %cst_46 [0] : vector<256x256xf32> to vector<256xf32>
    %107 = vector.shape_cast %106 : vector<256xf32> to vector<1x256xf32>
    %cst_47 = arith.constant 1.000000e+00 : f32
    %108 = vector.broadcast %cst_47 : f32 to vector<1x256xf32>
    %109 = arith.divf %108, %107 : vector<1x256xf32>
    %cst_48 = arith.constant dense<0.000000e+00> : vector<4x256xf32>
    %110 = tpu.matmul %98, %105, %cst_48 {dimension_numbers = #tpu.dot_dimension_numbers<[1], [0], [0], [1], [0, 0, 1, 1], [], []>} : vector<4x256xf32>, vector<256x256xf32>, vector<4x256xf32> -> vector<4x256xf32>
    %111 = vector.broadcast %109 : vector<1x256xf32> to vector<4x256xf32>
    %112 = arith.mulf %110, %111 : vector<4x256xf32>
    %c0_49 = arith.constant 0 : index
    %c48_50 = arith.constant 48 : index
    %c12 = arith.constant 12 : index
    %113 = vector.load %arg4[%c0_49, %c48_50, %c12] : memref<2x128x16xf32, #tpu.memory_space<vmem>>, vector<1x16x4xf32>
    %114 = vector.shape_cast %113 : vector<1x16x4xf32> to vector<16x4xf32>
    %cst_51 = arith.constant dense<0.000000e+00> : vector<16x256xf32>
    %115 = tpu.matmul %114, %112, %cst_51 {dimension_numbers = #tpu.dot_dimension_numbers<[1], [0], [0], [1], [0, 0, 1, 1], [], []>} : vector<16x4xf32>, vector<4x256xf32>, vector<16x256xf32> -> vector<16x256xf32>
    %116 = arith.addf %96, %115 : vector<16x256xf32>
    %117 = arith.addf %5, %116 : vector<16x256xf32>
    %c0_52 = arith.constant 0 : index
    %c4_53 = arith.constant 4 : index
    %118 = vector.load %arg7[%c0_52, %c4_53] : memref<64x17xf32, #tpu.memory_space<vmem>>, vector<16x1xf32>
    %119 = vector.broadcast %118 : vector<16x1xf32> to vector<16x256xf32>
    %120 = arith.addf %117, %119 : vector<16x256xf32>
    %c0_54 = arith.constant 0 : index
    %c2 = arith.constant 2 : index
    %121 = vector.load %arg7[%c0_54, %c2] : memref<64x17xf32, #tpu.memory_space<vmem>>, vector<16x1xf32>
    %c0_55 = arith.constant 0 : index
    %c3 = arith.constant 3 : index
    %122 = vector.load %arg7[%c0_55, %c3] : memref<64x17xf32, #tpu.memory_space<vmem>>, vector<16x1xf32>
    %cst_56 = arith.constant dense<0.000000e+00> : vector<256xf32>
    %123 = vector.multi_reduction <add>, %120, %cst_56 [0] : vector<16x256xf32> to vector<256xf32>
    %124 = vector.shape_cast %123 : vector<256xf32> to vector<1x256xf32>
    %cst_57 = arith.constant 1.600000e+01 : f32
    %125 = vector.broadcast %cst_57 : f32 to vector<1x256xf32>
    %126 = arith.divf %124, %125 : vector<1x256xf32>
    %127 = vector.broadcast %126 : vector<1x256xf32> to vector<16x256xf32>
    %128 = arith.subf %120, %127 : vector<16x256xf32>
    %129 = arith.mulf %128, %128 : vector<16x256xf32>
    %cst_58 = arith.constant dense<0.000000e+00> : vector<256xf32>
    %130 = vector.multi_reduction <add>, %129, %cst_58 [0] : vector<16x256xf32> to vector<256xf32>
    %131 = vector.shape_cast %130 : vector<256xf32> to vector<1x256xf32>
    %cst_59 = arith.constant 1.600000e+01 : f32
    %132 = vector.broadcast %cst_59 : f32 to vector<1x256xf32>
    %133 = arith.divf %131, %132 : vector<1x256xf32>
    %134 = vector.broadcast %126 : vector<1x256xf32> to vector<16x256xf32>
    %135 = arith.subf %120, %134 : vector<16x256xf32>
    %cst_60 = arith.constant 9.99999974E-6 : f32
    %136 = vector.broadcast %cst_60 : f32 to vector<1x256xf32>
    %137 = arith.addf %133, %136 : vector<1x256xf32>
    %138 = math.rsqrt %137 : vector<1x256xf32>
    %139 = vector.broadcast %138 : vector<1x256xf32> to vector<16x256xf32>
    %140 = arith.mulf %135, %139 : vector<16x256xf32>
    %141 = vector.broadcast %121 : vector<16x1xf32> to vector<16x256xf32>
    %142 = arith.mulf %140, %141 : vector<16x256xf32>
    %143 = vector.broadcast %122 : vector<16x1xf32> to vector<16x256xf32>
    %144 = arith.addf %142, %143 : vector<16x256xf32>
    %c0_61 = arith.constant 0 : index
    %c64 = arith.constant 64 : index
    %c0_62 = arith.constant 0 : index
    %145 = vector.load %arg4[%c0_61, %c64, %c0_62] : memref<2x128x16xf32, #tpu.memory_space<vmem>>, vector<1x64x16xf32>
    %146 = vector.shape_cast %145 : vector<1x64x16xf32> to vector<64x16xf32>
    %cst_63 = arith.constant dense<0.000000e+00> : vector<64x256xf32>
    %147 = tpu.matmul %146, %144, %cst_63 {dimension_numbers = #tpu.dot_dimension_numbers<[1], [0], [0], [1], [0, 0, 1, 1], [], []>} : vector<64x16xf32>, vector<16x256xf32>, vector<64x256xf32> -> vector<64x256xf32>
    %c0_64 = arith.constant 0 : index
    %c5 = arith.constant 5 : index
    %148 = vector.load %arg7[%c0_64, %c5] : memref<64x17xf32, #tpu.memory_space<vmem>>, vector<64x1xf32>
    %149 = vector.broadcast %148 : vector<64x1xf32> to vector<64x256xf32>
    %150 = arith.addf %147, %149 : vector<64x256xf32>
    %cst_65 = arith.constant 5.000000e-01 : f32
    %151 = vector.broadcast %cst_65 : f32 to vector<64x256xf32>
    %152 = arith.mulf %151, %150 : vector<64x256xf32>
    %cst_66 = arith.constant 4.471500e-02 : f32
    %153 = vector.broadcast %cst_66 : f32 to vector<64x256xf32>
    %154 = arith.mulf %153, %150 : vector<64x256xf32>
    %155 = arith.mulf %154, %150 : vector<64x256xf32>
    %156 = arith.mulf %155, %150 : vector<64x256xf32>
    %157 = arith.addf %150, %156 : vector<64x256xf32>
    %cst_67 = arith.constant 0.797884583 : f32
    %158 = vector.broadcast %cst_67 : f32 to vector<64x256xf32>
    %159 = arith.mulf %158, %157 : vector<64x256xf32>
    %160 = math.tanh %159 : vector<64x256xf32>
    %cst_68 = arith.constant 1.000000e+00 : f32
    %161 = vector.broadcast %cst_68 : f32 to vector<64x256xf32>
    %162 = arith.addf %161, %160 : vector<64x256xf32>
    %163 = arith.mulf %152, %162 : vector<64x256xf32>
    %c0_69 = arith.constant 0 : index
    %c0_70 = arith.constant 0 : index
    %c0_71 = arith.constant 0 : index
    %164 = vector.load %arg5[%c0_69, %c0_70, %c0_71] : memref<2x16x64xf32, #tpu.memory_space<vmem>>, vector<1x16x64xf32>
    %165 = vector.shape_cast %164 : vector<1x16x64xf32> to vector<16x64xf32>
    %cst_72 = arith.constant dense<0.000000e+00> : vector<16x256xf32>
    %166 = tpu.matmul %165, %163, %cst_72 {dimension_numbers = #tpu.dot_dimension_numbers<[1], [0], [0], [1], [0, 0, 1, 1], [], []>} : vector<16x64xf32>, vector<64x256xf32>, vector<16x256xf32> -> vector<16x256xf32>
    %c0_73 = arith.constant 0 : index
    %c6 = arith.constant 6 : index
    %167 = vector.load %arg7[%c0_73, %c6] : memref<64x17xf32, #tpu.memory_space<vmem>>, vector<16x1xf32>
    %168 = vector.broadcast %167 : vector<16x1xf32> to vector<16x256xf32>
    %169 = arith.addf %166, %168 : vector<16x256xf32>
    %170 = arith.addf %120, %169 : vector<16x256xf32>
    %c0_74 = arith.constant 0 : index
    %c7 = arith.constant 7 : index
    %171 = vector.load %arg7[%c0_74, %c7] : memref<64x17xf32, #tpu.memory_space<vmem>>, vector<16x1xf32>
    %c0_75 = arith.constant 0 : index
    %c8_76 = arith.constant 8 : index
    %172 = vector.load %arg7[%c0_75, %c8_76] : memref<64x17xf32, #tpu.memory_space<vmem>>, vector<16x1xf32>
    %cst_77 = arith.constant dense<0.000000e+00> : vector<256xf32>
    %173 = vector.multi_reduction <add>, %170, %cst_77 [0] : vector<16x256xf32> to vector<256xf32>
    %174 = vector.shape_cast %173 : vector<256xf32> to vector<1x256xf32>
    %cst_78 = arith.constant 1.600000e+01 : f32
    %175 = vector.broadcast %cst_78 : f32 to vector<1x256xf32>
    %176 = arith.divf %174, %175 : vector<1x256xf32>
    %177 = vector.broadcast %176 : vector<1x256xf32> to vector<16x256xf32>
    %178 = arith.subf %170, %177 : vector<16x256xf32>
    %179 = arith.mulf %178, %178 : vector<16x256xf32>
    %cst_79 = arith.constant dense<0.000000e+00> : vector<256xf32>
    %180 = vector.multi_reduction <add>, %179, %cst_79 [0] : vector<16x256xf32> to vector<256xf32>
    %181 = vector.shape_cast %180 : vector<256xf32> to vector<1x256xf32>
    %cst_80 = arith.constant 1.600000e+01 : f32
    %182 = vector.broadcast %cst_80 : f32 to vector<1x256xf32>
    %183 = arith.divf %181, %182 : vector<1x256xf32>
    %184 = vector.broadcast %176 : vector<1x256xf32> to vector<16x256xf32>
    %185 = arith.subf %170, %184 : vector<16x256xf32>
    %cst_81 = arith.constant 9.99999974E-6 : f32
    %186 = vector.broadcast %cst_81 : f32 to vector<1x256xf32>
    %187 = arith.addf %183, %186 : vector<1x256xf32>
    %188 = math.rsqrt %187 : vector<1x256xf32>
    %189 = vector.broadcast %188 : vector<1x256xf32> to vector<16x256xf32>
    %190 = arith.mulf %185, %189 : vector<16x256xf32>
    %191 = vector.broadcast %171 : vector<16x1xf32> to vector<16x256xf32>
    %192 = arith.mulf %190, %191 : vector<16x256xf32>
    %193 = vector.broadcast %172 : vector<16x1xf32> to vector<16x256xf32>
    %194 = arith.addf %192, %193 : vector<16x256xf32>
    %c1_82 = arith.constant 1 : index
    %c0_83 = arith.constant 0 : index
    %c0_84 = arith.constant 0 : index
    %195 = vector.load %arg4[%c1_82, %c0_83, %c0_84] : memref<2x128x16xf32, #tpu.memory_space<vmem>>, vector<1x48x16xf32>
    %196 = vector.shape_cast %195 : vector<1x48x16xf32> to vector<48x16xf32>
    %cst_85 = arith.constant dense<0.000000e+00> : vector<48x256xf32>
    %197 = tpu.matmul %196, %194, %cst_85 {dimension_numbers = #tpu.dot_dimension_numbers<[1], [0], [0], [1], [0, 0, 1, 1], [], []>} : vector<48x16xf32>, vector<16x256xf32>, vector<48x256xf32> -> vector<48x256xf32>
    %198 = vector.extract_strided_slice %197 {offsets = [16, 0], sizes = [16, 256], strides = [1, 1]} : vector<48x256xf32> to vector<16x256xf32>
    %199 = tpu.transpose %198, [1, 0] : vector<16x256xf32> -> vector<256x16xf32>
    %cst_86 = arith.constant 0.000000e+00 : f32
    %200 = vector.broadcast %cst_86 : f32 to vector<16x256xf32>
    %201 = vector.extract_strided_slice %197 {offsets = [0, 0], sizes = [4, 256], strides = [1, 1]} : vector<48x256xf32> to vector<4x256xf32>
    %202 = vector.extract_strided_slice %197 {offsets = [32, 0], sizes = [4, 256], strides = [1, 1]} : vector<48x256xf32> to vector<4x256xf32>
    %203 = vector.extract_strided_slice %199 {offsets = [0, 0], sizes = [256, 4], strides = [1, 1]} : vector<256x16xf32> to vector<256x4xf32>
    %cst_87 = arith.constant dense<0.000000e+00> : vector<256x256xf32>
    %204 = tpu.matmul %203, %201, %cst_87 {dimension_numbers = #tpu.dot_dimension_numbers<[1], [0], [0], [1], [0, 0, 1, 1], [], []>} : vector<256x4xf32>, vector<4x256xf32>, vector<256x256xf32> -> vector<256x256xf32>
    %cst_88 = arith.constant dense<0xFF800000> : vector<256xf32>
    %205 = vector.multi_reduction <maximumf>, %204, %cst_88 [0] : vector<256x256xf32> to vector<256xf32>
    %206 = vector.shape_cast %205 : vector<256xf32> to vector<1x256xf32>
    %207 = vector.broadcast %206 : vector<1x256xf32> to vector<256x256xf32>
    %208 = arith.subf %204, %207 : vector<256x256xf32>
    %209 = math.exp %208 : vector<256x256xf32>
    %cst_89 = arith.constant dense<0.000000e+00> : vector<256xf32>
    %210 = vector.multi_reduction <add>, %209, %cst_89 [0] : vector<256x256xf32> to vector<256xf32>
    %211 = vector.shape_cast %210 : vector<256xf32> to vector<1x256xf32>
    %cst_90 = arith.constant 1.000000e+00 : f32
    %212 = vector.broadcast %cst_90 : f32 to vector<1x256xf32>
    %213 = arith.divf %212, %211 : vector<1x256xf32>
    %cst_91 = arith.constant dense<0.000000e+00> : vector<4x256xf32>
    %214 = tpu.matmul %202, %209, %cst_91 {dimension_numbers = #tpu.dot_dimension_numbers<[1], [0], [0], [1], [0, 0, 1, 1], [], []>} : vector<4x256xf32>, vector<256x256xf32>, vector<4x256xf32> -> vector<4x256xf32>
    %215 = vector.broadcast %213 : vector<1x256xf32> to vector<4x256xf32>
    %216 = arith.mulf %214, %215 : vector<4x256xf32>
    %c1_92 = arith.constant 1 : index
    %c48_93 = arith.constant 48 : index
    %c0_94 = arith.constant 0 : index
    %217 = vector.load %arg4[%c1_92, %c48_93, %c0_94] : memref<2x128x16xf32, #tpu.memory_space<vmem>>, vector<1x16x4xf32>
    %218 = vector.shape_cast %217 : vector<1x16x4xf32> to vector<16x4xf32>
    %cst_95 = arith.constant dense<0.000000e+00> : vector<16x256xf32>
    %219 = tpu.matmul %218, %216, %cst_95 {dimension_numbers = #tpu.dot_dimension_numbers<[1], [0], [0], [1], [0, 0, 1, 1], [], []>} : vector<16x4xf32>, vector<4x256xf32>, vector<16x256xf32> -> vector<16x256xf32>
    %220 = arith.addf %200, %219 : vector<16x256xf32>
    %221 = vector.broadcast %213 : vector<1x256xf32> to vector<256x256xf32>
    %222 = arith.mulf %209, %221 : vector<256x256xf32>
    %cst_96 = arith.constant dense<0.000000e+00> : vector<256xf32>
    %223 = vector.multi_reduction <add>, %222, %cst_96 [1] : vector<256x256xf32> to vector<256xf32>
    %224 = vector.shape_cast %223 : vector<256xf32> to vector<256x1xf32>
    %225 = arith.addf %6, %224 : vector<256x1xf32>
    %226 = vector.extract_strided_slice %197 {offsets = [4, 0], sizes = [4, 256], strides = [1, 1]} : vector<48x256xf32> to vector<4x256xf32>
    %227 = vector.extract_strided_slice %197 {offsets = [36, 0], sizes = [4, 256], strides = [1, 1]} : vector<48x256xf32> to vector<4x256xf32>
    %228 = vector.extract_strided_slice %199 {offsets = [0, 4], sizes = [256, 4], strides = [1, 1]} : vector<256x16xf32> to vector<256x4xf32>
    %cst_97 = arith.constant dense<0.000000e+00> : vector<256x256xf32>
    %229 = tpu.matmul %228, %226, %cst_97 {dimension_numbers = #tpu.dot_dimension_numbers<[1], [0], [0], [1], [0, 0, 1, 1], [], []>} : vector<256x4xf32>, vector<4x256xf32>, vector<256x256xf32> -> vector<256x256xf32>
    %cst_98 = arith.constant dense<0xFF800000> : vector<256xf32>
    %230 = vector.multi_reduction <maximumf>, %229, %cst_98 [0] : vector<256x256xf32> to vector<256xf32>
    %231 = vector.shape_cast %230 : vector<256xf32> to vector<1x256xf32>
    %232 = vector.broadcast %231 : vector<1x256xf32> to vector<256x256xf32>
    %233 = arith.subf %229, %232 : vector<256x256xf32>
    %234 = math.exp %233 : vector<256x256xf32>
    %cst_99 = arith.constant dense<0.000000e+00> : vector<256xf32>
    %235 = vector.multi_reduction <add>, %234, %cst_99 [0] : vector<256x256xf32> to vector<256xf32>
    %236 = vector.shape_cast %235 : vector<256xf32> to vector<1x256xf32>
    %cst_100 = arith.constant 1.000000e+00 : f32
    %237 = vector.broadcast %cst_100 : f32 to vector<1x256xf32>
    %238 = arith.divf %237, %236 : vector<1x256xf32>
    %cst_101 = arith.constant dense<0.000000e+00> : vector<4x256xf32>
    %239 = tpu.matmul %227, %234, %cst_101 {dimension_numbers = #tpu.dot_dimension_numbers<[1], [0], [0], [1], [0, 0, 1, 1], [], []>} : vector<4x256xf32>, vector<256x256xf32>, vector<4x256xf32> -> vector<4x256xf32>
    %240 = vector.broadcast %238 : vector<1x256xf32> to vector<4x256xf32>
    %241 = arith.mulf %239, %240 : vector<4x256xf32>
    %c1_102 = arith.constant 1 : index
    %c48_103 = arith.constant 48 : index
    %c4_104 = arith.constant 4 : index
    %242 = vector.load %arg4[%c1_102, %c48_103, %c4_104] : memref<2x128x16xf32, #tpu.memory_space<vmem>>, vector<1x16x4xf32>
    %243 = vector.shape_cast %242 : vector<1x16x4xf32> to vector<16x4xf32>
    %cst_105 = arith.constant dense<0.000000e+00> : vector<16x256xf32>
    %244 = tpu.matmul %243, %241, %cst_105 {dimension_numbers = #tpu.dot_dimension_numbers<[1], [0], [0], [1], [0, 0, 1, 1], [], []>} : vector<16x4xf32>, vector<4x256xf32>, vector<16x256xf32> -> vector<16x256xf32>
    %245 = arith.addf %220, %244 : vector<16x256xf32>
    %246 = vector.broadcast %238 : vector<1x256xf32> to vector<256x256xf32>
    %247 = arith.mulf %234, %246 : vector<256x256xf32>
    %cst_106 = arith.constant dense<0.000000e+00> : vector<256xf32>
    %248 = vector.multi_reduction <add>, %247, %cst_106 [1] : vector<256x256xf32> to vector<256xf32>
    %249 = vector.shape_cast %248 : vector<256xf32> to vector<256x1xf32>
    %250 = arith.addf %225, %249 : vector<256x1xf32>
    %251 = vector.extract_strided_slice %197 {offsets = [8, 0], sizes = [4, 256], strides = [1, 1]} : vector<48x256xf32> to vector<4x256xf32>
    %252 = vector.extract_strided_slice %197 {offsets = [40, 0], sizes = [4, 256], strides = [1, 1]} : vector<48x256xf32> to vector<4x256xf32>
    %253 = vector.extract_strided_slice %199 {offsets = [0, 8], sizes = [256, 4], strides = [1, 1]} : vector<256x16xf32> to vector<256x4xf32>
    %cst_107 = arith.constant dense<0.000000e+00> : vector<256x256xf32>
    %254 = tpu.matmul %253, %251, %cst_107 {dimension_numbers = #tpu.dot_dimension_numbers<[1], [0], [0], [1], [0, 0, 1, 1], [], []>} : vector<256x4xf32>, vector<4x256xf32>, vector<256x256xf32> -> vector<256x256xf32>
    %cst_108 = arith.constant dense<0xFF800000> : vector<256xf32>
    %255 = vector.multi_reduction <maximumf>, %254, %cst_108 [0] : vector<256x256xf32> to vector<256xf32>
    %256 = vector.shape_cast %255 : vector<256xf32> to vector<1x256xf32>
    %257 = vector.broadcast %256 : vector<1x256xf32> to vector<256x256xf32>
    %258 = arith.subf %254, %257 : vector<256x256xf32>
    %259 = math.exp %258 : vector<256x256xf32>
    %cst_109 = arith.constant dense<0.000000e+00> : vector<256xf32>
    %260 = vector.multi_reduction <add>, %259, %cst_109 [0] : vector<256x256xf32> to vector<256xf32>
    %261 = vector.shape_cast %260 : vector<256xf32> to vector<1x256xf32>
    %cst_110 = arith.constant 1.000000e+00 : f32
    %262 = vector.broadcast %cst_110 : f32 to vector<1x256xf32>
    %263 = arith.divf %262, %261 : vector<1x256xf32>
    %cst_111 = arith.constant dense<0.000000e+00> : vector<4x256xf32>
    %264 = tpu.matmul %252, %259, %cst_111 {dimension_numbers = #tpu.dot_dimension_numbers<[1], [0], [0], [1], [0, 0, 1, 1], [], []>} : vector<4x256xf32>, vector<256x256xf32>, vector<4x256xf32> -> vector<4x256xf32>
    %265 = vector.broadcast %263 : vector<1x256xf32> to vector<4x256xf32>
    %266 = arith.mulf %264, %265 : vector<4x256xf32>
    %c1_112 = arith.constant 1 : index
    %c48_113 = arith.constant 48 : index
    %c8_114 = arith.constant 8 : index
    %267 = vector.load %arg4[%c1_112, %c48_113, %c8_114] : memref<2x128x16xf32, #tpu.memory_space<vmem>>, vector<1x16x4xf32>
    %268 = vector.shape_cast %267 : vector<1x16x4xf32> to vector<16x4xf32>
    %cst_115 = arith.constant dense<0.000000e+00> : vector<16x256xf32>
    %269 = tpu.matmul %268, %266, %cst_115 {dimension_numbers = #tpu.dot_dimension_numbers<[1], [0], [0], [1], [0, 0, 1, 1], [], []>} : vector<16x4xf32>, vector<4x256xf32>, vector<16x256xf32> -> vector<16x256xf32>
    %270 = arith.addf %245, %269 : vector<16x256xf32>
    %271 = vector.extract_strided_slice %197 {offsets = [12, 0], sizes = [4, 256], strides = [1, 1]} : vector<48x256xf32> to vector<4x256xf32>
    %272 = vector.extract_strided_slice %197 {offsets = [44, 0], sizes = [4, 256], strides = [1, 1]} : vector<48x256xf32> to vector<4x256xf32>
    %273 = vector.extract_strided_slice %199 {offsets = [0, 12], sizes = [256, 4], strides = [1, 1]} : vector<256x16xf32> to vector<256x4xf32>
    %cst_116 = arith.constant dense<0.000000e+00> : vector<256x256xf32>
    %274 = tpu.matmul %273, %271, %cst_116 {dimension_numbers = #tpu.dot_dimension_numbers<[1], [0], [0], [1], [0, 0, 1, 1], [], []>} : vector<256x4xf32>, vector<4x256xf32>, vector<256x256xf32> -> vector<256x256xf32>
    %cst_117 = arith.constant dense<0xFF800000> : vector<256xf32>
    %275 = vector.multi_reduction <maximumf>, %274, %cst_117 [0] : vector<256x256xf32> to vector<256xf32>
    %276 = vector.shape_cast %275 : vector<256xf32> to vector<1x256xf32>
    %277 = vector.broadcast %276 : vector<1x256xf32> to vector<256x256xf32>
    %278 = arith.subf %274, %277 : vector<256x256xf32>
    %279 = math.exp %278 : vector<256x256xf32>
    %cst_118 = arith.constant dense<0.000000e+00> : vector<256xf32>
    %280 = vector.multi_reduction <add>, %279, %cst_118 [0] : vector<256x256xf32> to vector<256xf32>
    %281 = vector.shape_cast %280 : vector<256xf32> to vector<1x256xf32>
    %cst_119 = arith.constant 1.000000e+00 : f32
    %282 = vector.broadcast %cst_119 : f32 to vector<1x256xf32>
    %283 = arith.divf %282, %281 : vector<1x256xf32>
    %cst_120 = arith.constant dense<0.000000e+00> : vector<4x256xf32>
    %284 = tpu.matmul %272, %279, %cst_120 {dimension_numbers = #tpu.dot_dimension_numbers<[1], [0], [0], [1], [0, 0, 1, 1], [], []>} : vector<4x256xf32>, vector<256x256xf32>, vector<4x256xf32> -> vector<4x256xf32>
    %285 = vector.broadcast %283 : vector<1x256xf32> to vector<4x256xf32>
    %286 = arith.mulf %284, %285 : vector<4x256xf32>
    %c1_121 = arith.constant 1 : index
    %c48_122 = arith.constant 48 : index
    %c12_123 = arith.constant 12 : index
    %287 = vector.load %arg4[%c1_121, %c48_122, %c12_123] : memref<2x128x16xf32, #tpu.memory_space<vmem>>, vector<1x16x4xf32>
    %288 = vector.shape_cast %287 : vector<1x16x4xf32> to vector<16x4xf32>
    %cst_124 = arith.constant dense<0.000000e+00> : vector<16x256xf32>
    %289 = tpu.matmul %288, %286, %cst_124 {dimension_numbers = #tpu.dot_dimension_numbers<[1], [0], [0], [1], [0, 0, 1, 1], [], []>} : vector<16x4xf32>, vector<4x256xf32>, vector<16x256xf32> -> vector<16x256xf32>
    %290 = arith.addf %270, %289 : vector<16x256xf32>
    %291 = arith.addf %170, %290 : vector<16x256xf32>
    %c0_125 = arith.constant 0 : index
    %c11 = arith.constant 11 : index
    %292 = vector.load %arg7[%c0_125, %c11] : memref<64x17xf32, #tpu.memory_space<vmem>>, vector<16x1xf32>
    %293 = vector.broadcast %292 : vector<16x1xf32> to vector<16x256xf32>
    %294 = arith.addf %291, %293 : vector<16x256xf32>
    %c0_126 = arith.constant 0 : index
    %c9 = arith.constant 9 : index
    %295 = vector.load %arg7[%c0_126, %c9] : memref<64x17xf32, #tpu.memory_space<vmem>>, vector<16x1xf32>
    %c0_127 = arith.constant 0 : index
    %c10 = arith.constant 10 : index
    %296 = vector.load %arg7[%c0_127, %c10] : memref<64x17xf32, #tpu.memory_space<vmem>>, vector<16x1xf32>
    %cst_128 = arith.constant dense<0.000000e+00> : vector<256xf32>
    %297 = vector.multi_reduction <add>, %294, %cst_128 [0] : vector<16x256xf32> to vector<256xf32>
    %298 = vector.shape_cast %297 : vector<256xf32> to vector<1x256xf32>
    %cst_129 = arith.constant 1.600000e+01 : f32
    %299 = vector.broadcast %cst_129 : f32 to vector<1x256xf32>
    %300 = arith.divf %298, %299 : vector<1x256xf32>
    %301 = vector.broadcast %300 : vector<1x256xf32> to vector<16x256xf32>
    %302 = arith.subf %294, %301 : vector<16x256xf32>
    %303 = arith.mulf %302, %302 : vector<16x256xf32>
    %cst_130 = arith.constant dense<0.000000e+00> : vector<256xf32>
    %304 = vector.multi_reduction <add>, %303, %cst_130 [0] : vector<16x256xf32> to vector<256xf32>
    %305 = vector.shape_cast %304 : vector<256xf32> to vector<1x256xf32>
    %cst_131 = arith.constant 1.600000e+01 : f32
    %306 = vector.broadcast %cst_131 : f32 to vector<1x256xf32>
    %307 = arith.divf %305, %306 : vector<1x256xf32>
    %308 = vector.broadcast %300 : vector<1x256xf32> to vector<16x256xf32>
    %309 = arith.subf %294, %308 : vector<16x256xf32>
    %cst_132 = arith.constant 9.99999974E-6 : f32
    %310 = vector.broadcast %cst_132 : f32 to vector<1x256xf32>
    %311 = arith.addf %307, %310 : vector<1x256xf32>
    %312 = math.rsqrt %311 : vector<1x256xf32>
    %313 = vector.broadcast %312 : vector<1x256xf32> to vector<16x256xf32>
    %314 = arith.mulf %309, %313 : vector<16x256xf32>
    %315 = vector.broadcast %295 : vector<16x1xf32> to vector<16x256xf32>
    %316 = arith.mulf %314, %315 : vector<16x256xf32>
    %317 = vector.broadcast %296 : vector<16x1xf32> to vector<16x256xf32>
    %318 = arith.addf %316, %317 : vector<16x256xf32>
    %c1_133 = arith.constant 1 : index
    %c64_134 = arith.constant 64 : index
    %c0_135 = arith.constant 0 : index
    %319 = vector.load %arg4[%c1_133, %c64_134, %c0_135] : memref<2x128x16xf32, #tpu.memory_space<vmem>>, vector<1x64x16xf32>
    %320 = vector.shape_cast %319 : vector<1x64x16xf32> to vector<64x16xf32>
    %cst_136 = arith.constant dense<0.000000e+00> : vector<64x256xf32>
    %321 = tpu.matmul %320, %318, %cst_136 {dimension_numbers = #tpu.dot_dimension_numbers<[1], [0], [0], [1], [0, 0, 1, 1], [], []>} : vector<64x16xf32>, vector<16x256xf32>, vector<64x256xf32> -> vector<64x256xf32>
    %c0_137 = arith.constant 0 : index
    %c12_138 = arith.constant 12 : index
    %322 = vector.load %arg7[%c0_137, %c12_138] : memref<64x17xf32, #tpu.memory_space<vmem>>, vector<64x1xf32>
    %323 = vector.broadcast %322 : vector<64x1xf32> to vector<64x256xf32>
    %324 = arith.addf %321, %323 : vector<64x256xf32>
    %cst_139 = arith.constant 5.000000e-01 : f32
    %325 = vector.broadcast %cst_139 : f32 to vector<64x256xf32>
    %326 = arith.mulf %325, %324 : vector<64x256xf32>
    %cst_140 = arith.constant 4.471500e-02 : f32
    %327 = vector.broadcast %cst_140 : f32 to vector<64x256xf32>
    %328 = arith.mulf %327, %324 : vector<64x256xf32>
    %329 = arith.mulf %328, %324 : vector<64x256xf32>
    %330 = arith.mulf %329, %324 : vector<64x256xf32>
    %331 = arith.addf %324, %330 : vector<64x256xf32>
    %cst_141 = arith.constant 0.797884583 : f32
    %332 = vector.broadcast %cst_141 : f32 to vector<64x256xf32>
    %333 = arith.mulf %332, %331 : vector<64x256xf32>
    %334 = math.tanh %333 : vector<64x256xf32>
    %cst_142 = arith.constant 1.000000e+00 : f32
    %335 = vector.broadcast %cst_142 : f32 to vector<64x256xf32>
    %336 = arith.addf %335, %334 : vector<64x256xf32>
    %337 = arith.mulf %326, %336 : vector<64x256xf32>
    %c1_143 = arith.constant 1 : index
    %c0_144 = arith.constant 0 : index
    %c0_145 = arith.constant 0 : index
    %338 = vector.load %arg5[%c1_143, %c0_144, %c0_145] : memref<2x16x64xf32, #tpu.memory_space<vmem>>, vector<1x16x64xf32>
    %339 = vector.shape_cast %338 : vector<1x16x64xf32> to vector<16x64xf32>
    %cst_146 = arith.constant dense<0.000000e+00> : vector<16x256xf32>
    %340 = tpu.matmul %339, %337, %cst_146 {dimension_numbers = #tpu.dot_dimension_numbers<[1], [0], [0], [1], [0, 0, 1, 1], [], []>} : vector<16x64xf32>, vector<64x256xf32>, vector<16x256xf32> -> vector<16x256xf32>
    %c0_147 = arith.constant 0 : index
    %c13 = arith.constant 13 : index
    %341 = vector.load %arg7[%c0_147, %c13] : memref<64x17xf32, #tpu.memory_space<vmem>>, vector<16x1xf32>
    %342 = vector.broadcast %341 : vector<16x1xf32> to vector<16x256xf32>
    %343 = arith.addf %340, %342 : vector<16x256xf32>
    %344 = arith.addf %294, %343 : vector<16x256xf32>
    %cst_148 = arith.constant dense<0x7F800000> : vector<1xf32>
    %345 = vector.multi_reduction <minimumf>, %250, %cst_148 [0] : vector<256x1xf32> to vector<1xf32>
    %346 = vector.shape_cast %345 : vector<1xf32> to vector<1x1xf32>
    %cst_149 = arith.constant dense<0xFF800000> : vector<1xf32>
    %347 = vector.multi_reduction <maximumf>, %250, %cst_149 [0] : vector<256x1xf32> to vector<1xf32>
    %348 = vector.shape_cast %347 : vector<1xf32> to vector<1x1xf32>
    %349 = vector.broadcast %346 : vector<1x1xf32> to vector<256x1xf32>
    %350 = arith.subf %250, %349 : vector<256x1xf32>
    %351 = arith.subf %348, %346 : vector<1x1xf32>
    %cst_150 = arith.constant 9.99999993E-9 : f32
    %352 = vector.broadcast %cst_150 : f32 to vector<1x1xf32>
    %353 = arith.addf %351, %352 : vector<1x1xf32>
    %354 = vector.broadcast %353 : vector<1x1xf32> to vector<256x1xf32>
    %355 = arith.divf %350, %354 : vector<256x1xf32>
    %c0_151 = arith.constant 0 : index
    %c0_152 = arith.constant 0 : index
    %c0_153 = arith.constant 0 : index
    %356 = vector.load %arg9[%c0_151, %c0_152, %c0_153] : memref<1x256x1xf32, #tpu.memory_space<vmem>>, vector<1x256x1xf32>
    %357 = vector.shape_cast %356 : vector<1x256x1xf32> to vector<256x1xf32>
    %358 = vector.shape_cast %355 : vector<256x1xf32> to vector<1x256x1xf32>
    tpu.vector_store %arg9[%c0_151, %c0_152, %c0_153], %358 {strides = array<i32>} : memref<1x256x1xf32, #tpu.memory_space<vmem>>, vector<1x256x1xf32>,
    %c0_154 = arith.constant 0 : index
    %c14 = arith.constant 14 : index
    %359 = vector.load %arg7[%c0_154, %c14] : memref<64x17xf32, #tpu.memory_space<vmem>>, vector<16x1xf32>
    %c0_155 = arith.constant 0 : index
    %c15 = arith.constant 15 : index
    %360 = vector.load %arg7[%c0_155, %c15] : memref<64x17xf32, #tpu.memory_space<vmem>>, vector<16x1xf32>
    %cst_156 = arith.constant dense<0.000000e+00> : vector<256xf32>
    %361 = vector.multi_reduction <add>, %344, %cst_156 [0] : vector<16x256xf32> to vector<256xf32>
    %362 = vector.shape_cast %361 : vector<256xf32> to vector<1x256xf32>
    %cst_157 = arith.constant 1.600000e+01 : f32
    %363 = vector.broadcast %cst_157 : f32 to vector<1x256xf32>
    %364 = arith.divf %362, %363 : vector<1x256xf32>
    %365 = vector.broadcast %364 : vector<1x256xf32> to vector<16x256xf32>
    %366 = arith.subf %344, %365 : vector<16x256xf32>
    %367 = arith.mulf %366, %366 : vector<16x256xf32>
    %cst_158 = arith.constant dense<0.000000e+00> : vector<256xf32>
    %368 = vector.multi_reduction <add>, %367, %cst_158 [0] : vector<16x256xf32> to vector<256xf32>
    %369 = vector.shape_cast %368 : vector<256xf32> to vector<1x256xf32>
    %cst_159 = arith.constant 1.600000e+01 : f32
    %370 = vector.broadcast %cst_159 : f32 to vector<1x256xf32>
    %371 = arith.divf %369, %370 : vector<1x256xf32>
    %372 = vector.broadcast %364 : vector<1x256xf32> to vector<16x256xf32>
    %373 = arith.subf %344, %372 : vector<16x256xf32>
    %cst_160 = arith.constant 9.99999974E-6 : f32
    %374 = vector.broadcast %cst_160 : f32 to vector<1x256xf32>
    %375 = arith.addf %371, %374 : vector<1x256xf32>
    %376 = math.rsqrt %375 : vector<1x256xf32>
    %377 = vector.broadcast %376 : vector<1x256xf32> to vector<16x256xf32>
    %378 = arith.mulf %373, %377 : vector<16x256xf32>
    %379 = vector.broadcast %359 : vector<16x1xf32> to vector<16x256xf32>
    %380 = arith.mulf %378, %379 : vector<16x256xf32>
    %381 = vector.broadcast %360 : vector<16x1xf32> to vector<16x256xf32>
    %382 = arith.addf %380, %381 : vector<16x256xf32>
    %c0_161 = arith.constant 0 : index
    %c0_162 = arith.constant 0 : index
    %383 = vector.load %arg6[%c0_161, %c0_162] : memref<32x16xf32, #tpu.memory_space<vmem>>, vector<32x16xf32>
    %cst_163 = arith.constant dense<0.000000e+00> : vector<32x256xf32>
    %384 = tpu.matmul %383, %382, %cst_163 {dimension_numbers = #tpu.dot_dimension_numbers<[1], [0], [0], [1], [0, 0, 1, 1], [], []>} : vector<32x16xf32>, vector<16x256xf32>, vector<32x256xf32> -> vector<32x256xf32>
    %c0_164 = arith.constant 0 : index
    %c16 = arith.constant 16 : index
    %385 = vector.load %arg7[%c0_164, %c16] : memref<64x17xf32, #tpu.memory_space<vmem>>, vector<32x1xf32>
    %386 = vector.broadcast %385 : vector<32x1xf32> to vector<32x256xf32>
    %387 = arith.addf %384, %386 : vector<32x256xf32>
    %c0_165 = arith.constant 0 : index
    %c0_166 = arith.constant 0 : index
    %c0_167 = arith.constant 0 : index
    %388 = vector.load %arg8[%c0_165, %c0_166, %c0_167] : memref<1x32x256xf32, #tpu.memory_space<vmem>>, vector<1x32x256xf32>
    %389 = vector.shape_cast %388 : vector<1x32x256xf32> to vector<32x256xf32>
    %390 = vector.shape_cast %387 : vector<32x256xf32> to vector<1x32x256xf32>
    tpu.vector_store %arg8[%c0_165, %c0_166, %c0_167], %390 {strides = array<i32>} : memref<1x32x256xf32, #tpu.memory_space<vmem>>, vector<1x32x256xf32>,
    return
  }
  func.func @transform_0(%arg0: i32) -> (i32, i32, i32) {
    %c0_i32 = arith.constant 0 : i32
    %c0_i32_0 = arith.constant 0 : i32
    %c0_i32_1 = arith.constant 0 : i32
    return %arg0, %c0_i32, %c0_i32_0 : i32, i32, i32
  }
  func.func @transform_1(%arg0: i32) -> (i32, i32) {
    %c0_i32 = arith.constant 0 : i32
    %c0_i32_0 = arith.constant 0 : i32
    %c0_i32_1 = arith.constant 0 : i32
    return %c0_i32, %c0_i32_0 : i32, i32
  }
  func.func @transform_2(%arg0: i32) -> (i32, i32) {
    %c0_i32 = arith.constant 0 : i32
    %c0_i32_0 = arith.constant 0 : i32
    %c0_i32_1 = arith.constant 0 : i32
    return %c0_i32, %c0_i32_0 : i32, i32
  }
  func.func @transform_3(%arg0: i32) -> (i32, i32, i32) {
    %c0_i32 = arith.constant 0 : i32
    %c0_i32_0 = arith.constant 0 : i32
    %c0_i32_1 = arith.constant 0 : i32
    %c0_i32_2 = arith.constant 0 : i32
    return %c0_i32, %c0_i32_0, %c0_i32_1 : i32, i32, i32
  }
  func.func @transform_4(%arg0: i32) -> (i32, i32, i32) {
    %c0_i32 = arith.constant 0 : i32
    %c0_i32_0 = arith.constant 0 : i32
    %c0_i32_1 = arith.constant 0 : i32
    %c0_i32_2 = arith.constant 0 : i32
    return %c0_i32, %c0_i32_0, %c0_i32_1 : i32, i32, i32
  }
  func.func @transform_5(%arg0: i32) -> (i32, i32) {
    %c0_i32 = arith.constant 0 : i32
    %c0_i32_0 = arith.constant 0 : i32
    %c0_i32_1 = arith.constant 0 : i32
    return %c0_i32, %c0_i32_0 : i32, i32
  }
  func.func @transform_6(%arg0: i32) -> (i32, i32) {
    %c0_i32 = arith.constant 0 : i32
    %c0_i32_0 = arith.constant 0 : i32
    %c0_i32_1 = arith.constant 0 : i32
    return %c0_i32, %c0_i32_0 : i32, i32
  }
  func.func @transform_7(%arg0: i32) -> (i32, i32, i32) {
    %c0_i32 = arith.constant 0 : i32
    %c0_i32_0 = arith.constant 0 : i32
    %c0_i32_1 = arith.constant 0 : i32
    return %arg0, %c0_i32, %c0_i32_0 : i32, i32, i32
  }
  func.func @transform_8(%arg0: i32) -> (i32, i32, i32) {
    %c0_i32 = arith.constant 0 : i32
    %c0_i32_0 = arith.constant 0 : i32
    %c0_i32_1 = arith.constant 0 : i32
    return %arg0, %c0_i32, %c0_i32_0 : i32, i32, i32
  }
}

</mosaic_0001>

<llo_original>
// kernel: vit_forward.1
$region0: #{vit_forward.1}
  #allocation0 [shape = 'u32[]', space=smem, size = 0x4, offset = 0x4, fixed_abs, tag = 'smem constant byte address 0x4 - core index']
  #allocation1 [shape = 'u32[144,128]{1,0:T(1,128)}', space=vmem, size = 0x12000, scoped, tag = 'internal scratch']
  %s0 = inlined_call_operand.vmem [shape: bf16[2,768,256], index: 0, kind: input, shape index: {}]
  %s1 = inlined_call_operand.vmem [shape: bf16[16,768], index: 1, kind: input, shape index: {}]
  %s2 = inlined_call_operand.vmem [shape: f32[16,256], index: 2, kind: input, shape index: {}]
  %s3 = inlined_call_operand.vmem [shape: f32[2,128,16], index: 3, kind: input, shape index: {}]
  %s4 = inlined_call_operand.vmem [shape: f32[2,16,64], index: 4, kind: input, shape index: {}]
  %s5 = inlined_call_operand.vmem [shape: f32[32,16], index: 5, kind: input, shape index: {}]
  %s6 = inlined_call_operand.vmem [shape: f32[64,17], index: 6, kind: input, shape index: {}]
  %s7 = inlined_call_operand.hbm [shape: f32[2,32,256], index: 7, kind: output, shape index: {0}]
  %s8 = inlined_call_operand.vmem [shape: f32[2,256,1], index: 8, kind: output, shape index: {1}]
  %9 = xla_tuple %s7, %s8
  %s10 = sld [smem:[#allocation0]]
  $region69: #{vit_forward.1} parent=0
    _
  %s12 = ssub.s32 1, %s10
  %s13 = scalar_select 0, %s12, %s10
  $region1: #{vit_forward.1} parent=0
    #allocation2 [shape = 'u8[65536]{0}', space=vmem, size = 0x10000, scoped, tag = 'output window, operand 0']
    #allocation3 [shape = 's32[2]{0}', space=sflag, size = 0x8, scoped, tag = 'scoped memory for vit_forward.1']
    %14 = vsyncpa [#allocation3], 0
    %s15 = scalar_lea.sflag [#allocation3], 1
    %16 = vsyncpa %s15, 0
    loop: start=0, step=1, limit=4
    $region2: #{vit_forward.1} parent=1 // loop_pre_header
      _
    $region3: #{vit_forward.1} parent=1 // loop_header
      %s18 = sphi 0, %s22
      %p19 = scmp.ge.s32.totalorder %s18, 4
      %s28 = sphi 0, %s30
      %s31 = sphi 0, %s28
      %s32 = sphi 0, %s31
      %s48 = sphi 0, %s32
      %s52 = sphi 0, %s52
      %s54 = sphi 0, %s52
      %s55 = sphi 0, %s54
      %s69 = sphi 0, %s55
      %s73 = sphi 0, %s73
      %s75 = sphi 0, %s73
      %s76 = sphi 0, %s75
      %s90 = sphi 0, %s76
      %s94 = sphi 0, %s94
      %s96 = sphi 0, %s94
      %s97 = sphi 0, %s96
      %s111 = sphi 0, %s97
      %s115 = sphi 0, %s115
      %s117 = sphi 0, %s115
      %s118 = sphi 0, %s117
      %s132 = sphi 0, %s118
      %s136 = sphi 0, %s136
      %s138 = sphi 0, %s136
      %s139 = sphi 0, %s138
      %s153 = sphi 0, %s139
      %s157 = sphi 0, %s157
      %s159 = sphi 0, %s157
      %s160 = sphi 0, %s159
      %s174 = sphi 0, %s160
      %s180 = sphi 0, %s182
      %s183 = sphi 0, %s180
      %s184 = sphi 0, %s183
      %s200 = sphi 0, %s184
      %s206 = sphi 0, %s208
      %s209 = sphi 0, %s206
      %s210 = sphi 0, %s209
      %s226 = sphi 0, %s210
    $region4: #{vit_forward.1} parent=1 // loop_header_branch
      %21 = sbr.rel (%p19) target = $region8
    $region5: #{vit_forward.1} parent=1 // loop_body
      %s23 = ssub.s32 %s18, 1
      %s24 = ssub.s32 %s18, 2
      %s25 = sadd.s32 %s18, 1
      %s26 = ssub.s32 %s18, %s25
      %p27 = scmp.eq.s32.totalorder %s26, 0
      %s29 = sadd.s32 %s28, 1
      %s30 = scalar_select %p27, %s28, %s29
      %p33 = pneg %p27
      %p34 = scmp.eq.s32.totalorder %s18, 1
      %p35 = por %p33, %p34
      %p36 = scmp.ne.s32.totalorder %s28, %s31
      %p37 = scmp.eq.s32.totalorder %s18, 0
      %p38 = por %p36, %p37
      %p39 = scmp.ne.s32.totalorder %s28, %s31
      %p40 = scmp.eq.s32.totalorder %s23, 1
      %p41 = por %p39, %p40
      %p42 = scmp.ne.s32.totalorder %s31, %s32
      %p43 = scmp.eq.s32.totalorder %s23, 0
      %p44 = por %p42, %p43
      %p45 = scmp.ne.s32.totalorder %s31, %s32
      %p46 = scmp.eq.s32.totalorder %s24, 1
      %p47 = por %p45, %p46
      %p49 = scmp.ne.s32.totalorder %s32, %s48
      %p50 = scmp.eq.s32.totalorder %s24, 0
      %p51 = por %p49, %p50
      %s53 = sadd.s32 %s52, 1
      %p56 = scmp.eq.s32.totalorder %s18, 1
      %p57 = scmp.ne.s32.totalorder %s52, %s54
      %p58 = scmp.eq.s32.totalorder %s18, 0
      %p59 = por %p57, %p58
      %p60 = scmp.ne.s32.totalorder %s52, %s54
      %p61 = scmp.eq.s32.totalorder %s23, 1
      %p62 = por %p60, %p61
      %p63 = scmp.ne.s32.totalorder %s54, %s55
      %p64 = scmp.eq.s32.totalorder %s23, 0
      %p65 = por %p63, %p64
      %p66 = scmp.ne.s32.totalorder %s54, %s55
      %p67 = scmp.eq.s32.totalorder %s24, 1
      %p68 = por %p66, %p67
      %p70 = scmp.ne.s32.totalorder %s55, %s69
      %p71 = scmp.eq.s32.totalorder %s24, 0
      %p72 = por %p70, %p71
      %s74 = sadd.s32 %s73, 1
      %p77 = scmp.eq.s32.totalorder %s18, 1
      %p78 = scmp.ne.s32.totalorder %s73, %s75
      %p79 = scmp.eq.s32.totalorder %s18, 0
      %p80 = por %p78, %p79
      %p81 = scmp.ne.s32.totalorder %s73, %s75
      %p82 = scmp.eq.s32.totalorder %s23, 1
      %p83 = por %p81, %p82
      %p84 = scmp.ne.s32.totalorder %s75, %s76
      %p85 = scmp.eq.s32.totalorder %s23, 0
      %p86 = por %p84, %p85
      %p87 = scmp.ne.s32.totalorder %s75, %s76
      %p88 = scmp.eq.s32.totalorder %s24, 1
      %p89 = por %p87, %p88
      %p91 = scmp.ne.s32.totalorder %s76, %s90
      %p92 = scmp.eq.s32.totalorder %s24, 0
      %p93 = por %p91, %p92
      %s95 = sadd.s32 %s94, 1
      %p98 = scmp.eq.s32.totalorder %s18, 1
      %p99 = scmp.ne.s32.totalorder %s94, %s96
      %p100 = scmp.eq.s32.totalorder %s18, 0
      %p101 = por %p99, %p100
      %p102 = scmp.ne.s32.totalorder %s94, %s96
      %p103 = scmp.eq.s32.totalorder %s23, 1
      %p104 = por %p102, %p103
      %p105 = scmp.ne.s32.totalorder %s96, %s97
      %p106 = scmp.eq.s32.totalorder %s23, 0
      %p107 = por %p105, %p106
      %p108 = scmp.ne.s32.totalorder %s96, %s97
      %p109 = scmp.eq.s32.totalorder %s24, 1
      %p110 = por %p108, %p109
      %p112 = scmp.ne.s32.totalorder %s97, %s111
      %p113 = scmp.eq.s32.totalorder %s24, 0
      %p114 = por %p112, %p113
      %s116 = sadd.s32 %s115, 1
      %p119 = scmp.eq.s32.totalorder %s18, 1
      %p120 = scmp.ne.s32.totalorder %s115, %s117
      %p121 = scmp.eq.s32.totalorder %s18, 0
      %p122 = por %p120, %p121
      %p123 = scmp.ne.s32.totalorder %s115, %s117
      %p124 = scmp.eq.s32.totalorder %s23, 1
      %p125 = por %p123, %p124
      %p126 = scmp.ne.s32.totalorder %s117, %s118
      %p127 = scmp.eq.s32.totalorder %s23, 0
      %p128 = por %p126, %p127
      %p129 = scmp.ne.s32.totalorder %s117, %s118
      %p130 = scmp.eq.s32.totalorder %s24, 1
      %p131 = por %p129, %p130
      %p133 = scmp.ne.s32.totalorder %s118, %s132
      %p134 = scmp.eq.s32.totalorder %s24, 0
      %p135 = por %p133, %p134
      %s137 = sadd.s32 %s136, 1
      %p140 = scmp.eq.s32.totalorder %s18, 1
      %p141 = scmp.ne.s32.totalorder %s136, %s138
      %p142 = scmp.eq.s32.totalorder %s18, 0
      %p143 = por %p141, %p142
      %p144 = scmp.ne.s32.totalorder %s136, %s138
      %p145 = scmp.eq.s32.totalorder %s23, 1
      %p146 = por %p144, %p145
      %p147 = scmp.ne.s32.totalorder %s138, %s139
      %p148 = scmp.eq.s32.totalorder %s23, 0
      %p149 = por %p147, %p148
      %p150 = scmp.ne.s32.totalorder %s138, %s139
      %p151 = scmp.eq.s32.totalorder %s24, 1
      %p152 = por %p150, %p151
      %p154 = scmp.ne.s32.totalorder %s139, %s153
      %p155 = scmp.eq.s32.totalorder %s24, 0
      %p156 = por %p154, %p155
      %s158 = sadd.s32 %s157, 1
      %p161 = scmp.eq.s32.totalorder %s18, 1
      %p162 = scmp.ne.s32.totalorder %s157, %s159
      %p163 = scmp.eq.s32.totalorder %s18, 0
      %p164 = por %p162, %p163
      %p165 = scmp.ne.s32.totalorder %s157, %s159
      %p166 = scmp.eq.s32.totalorder %s23, 1
      %p167 = por %p165, %p166
      %p168 = scmp.ne.s32.totalorder %s159, %s160
      %p169 = scmp.eq.s32.totalorder %s23, 0
      %p170 = por %p168, %p169
      %p171 = scmp.ne.s32.totalorder %s159, %s160
      %p172 = scmp.eq.s32.totalorder %s24, 1
      %p173 = por %p171, %p172
      %p175 = scmp.ne.s32.totalorder %s160, %s174
      %p176 = scmp.eq.s32.totalorder %s24, 0
      %p177 = por %p175, %p176
      %s178 = ssub.s32 %s18, %s25
      %p179 = scmp.eq.s32.totalorder %s178, 0
      %s181 = sadd.s32 %s180, 1
      %s182 = scalar_select %p179, %s180, %s181
      %p185 = pneg %p179
      %p186 = scmp.eq.s32.totalorder %s18, 1
      %p187 = por %p185, %p186
      %p188 = scmp.ne.s32.totalorder %s180, %s183
      %p189 = scmp.eq.s32.totalorder %s18, 0
      %p190 = por %p188, %p189
      %p191 = scmp.ne.s32.totalorder %s180, %s183
      %p192 = scmp.eq.s32.totalorder %s23, 1
      %p193 = por %p191, %p192
      %p194 = scmp.ne.s32.totalorder %s183, %s184
      %p195 = scmp.eq.s32.totalorder %s23, 0
      %p196 = por %p194, %p195
      %p197 = scmp.ne.s32.totalorder %s183, %s184
      %p198 = scmp.eq.s32.totalorder %s24, 1
      %p199 = por %p197, %p198
      %p201 = scmp.ne.s32.totalorder %s184, %s200
      %p202 = scmp.eq.s32.totalorder %s24, 0
      %p203 = por %p201, %p202
      %s204 = ssub.s32 %s18, %s25
      %p205 = scmp.eq.s32.totalorder %s204, 0
      %s207 = sadd.s32 %s206, 1
      %s208 = scalar_select %p205, %s206, %s207
      %p211 = pneg %p205
      %p212 = scmp.eq.s32.totalorder %s18, 1
      %p213 = por %p211, %p212
      %p214 = scmp.ne.s32.totalorder %s206, %s209
      %p215 = scmp.eq.s32.totalorder %s18, 0
      %p216 = por %p214, %p215
      %p217 = scmp.ne.s32.totalorder %s206, %s209
      %p218 = scmp.eq.s32.totalorder %s23, 1
      %p219 = por %p217, %p218
      %p220 = scmp.ne.s32.totalorder %s209, %s210
      %p221 = scmp.eq.s32.totalorder %s23, 0
      %p222 = por %p220, %p221
      %p223 = scmp.ne.s32.totalorder %s209, %s210
      %p224 = scmp.eq.s32.totalorder %s24, 1
      %p225 = por %p223, %p224
      %p227 = scmp.ne.s32.totalorder %s210, %s226
      %p228 = scmp.eq.s32.totalorder %s24, 0
      %p229 = por %p227, %p228
      %p230 = scmp.le.s32.totalorder 1, %s18
      %p231 = scmp.lt.s32.totalorder %s18, 3
      %p232 = pnand %p230, %p231
      %p233 = pneg %p232
      // Predicated region
      $region9: #{vit_forward.1} parent=5 // pred_check
        _
      $region10: #{vit_forward.1} parent=5 // pred_check_branch
        %235 = sbr.rel (%p232) target = $region12
      $region11: #{vit_forward.1} parent=5 // pred_region
        %s236 = ssub.s32 %s18, 1
        // Predicated region
        $region13: #{vit_forward.1} parent=11 // pred_check
          %p237 = pneg %p65
        $region14: #{vit_forward.1} parent=11 // pred_check_branch
          %239 = sbr.rel (%p237) target = $region16
        $region15: #{vit_forward.1} parent=11 // pred_region
          _
        $region16: #{vit_forward.1} parent=11 // pred_fallthru
          _
        // Predicated region
        $region17: #{vit_forward.1} parent=11 // pred_check
          %p240 = pneg %p86
        $region18: #{vit_forward.1} parent=11 // pred_check_branch
          %242 = sbr.rel (%p240) target = $region20
        $region19: #{vit_forward.1} parent=11 // pred_region
          _
        $region20: #{vit_forward.1} parent=11 // pred_fallthru
          _
        // Predicated region
        $region21: #{vit_forward.1} parent=11 // pred_check
          %p243 = pneg %p107
        $region22: #{vit_forward.1} parent=11 // pred_check_branch
          %245 = sbr.rel (%p243) target = $region24
        $region23: #{vit_forward.1} parent=11 // pred_region
          _
        $region24: #{vit_forward.1} parent=11 // pred_fallthru
          _
        // Predicated region
        $region25: #{vit_forward.1} parent=11 // pred_check
          %p246 = pneg %p128
        $region26: #{vit_forward.1} parent=11 // pred_check_branch
          %248 = sbr.rel (%p246) target = $region28
        $region27: #{vit_forward.1} parent=11 // pred_region
          _
        $region28: #{vit_forward.1} parent=11 // pred_fallthru
          _
        // Predicated region
        $region29: #{vit_forward.1} parent=11 // pred_check
          %p249 = pneg %p149
        $region30: #{vit_forward.1} parent=11 // pred_check_branch
          %251 = sbr.rel (%p249) target = $region32
        $region31: #{vit_forward.1} parent=11 // pred_region
          _
        $region32: #{vit_forward.1} parent=11 // pred_fallthru
          _
        // Predicated region
        $region33: #{vit_forward.1} parent=11 // pred_check
          %p252 = pneg %p170
        $region34: #{vit_forward.1} parent=11 // pred_check_branch
          %254 = sbr.rel (%p252) target = $region36
        $region35: #{vit_forward.1} parent=11 // pred_region
          _
        $region36: #{vit_forward.1} parent=11 // pred_fallthru
          _
      $region12: #{vit_forward.1} parent=5 // pred_fallthru
        _
      %p255 = scmp.lt.s32.totalorder %s18, 2
      // Predicated region
      $region37: #{vit_forward.1} parent=5 // pred_check
        %p256 = pneg %p255
      $region38: #{vit_forward.1} parent=5 // pred_check_branch
        %258 = sbr.rel (%p256) target = $region40
      $region39: #{vit_forward.1} parent=5 // pred_region
        // Predicated region
        $region41: #{vit_forward.1} parent=39 // pred_check
          %p259 = pneg %p38
        $region42: #{vit_forward.1} parent=39 // pred_check_branch
          %261 = sbr.rel (%p259) target = $region44
        $region43: #{vit_forward.1} parent=39 // pred_region
          %p262 = scmp.lt.s32.totalorder %s18, 1
          %s263 = scalar_select %p262, %s18, 1
          %s264 = smul.addr %s263, 192
          %s265 = smul.addr %s264, 4
          %s266 = scalar_lea.vmem %s0, %s265
        $region44: #{vit_forward.1} parent=39 // pred_fallthru
          _
      $region40: #{vit_forward.1} parent=5 // pred_fallthru
        _
      %p267 = scmp.le.s32.totalorder 1, %s18
      %p268 = scmp.lt.s32.totalorder %s18, 3
      %p269 = pnand %p267, %p268
      %p270 = pneg %p269
      // Predicated region
      $region45: #{vit_forward.1} parent=5 // pred_check
        _
      $region46: #{vit_forward.1} parent=5 // pred_check_branch
        %272 = sbr.rel (%p269) target = $region48
      $region47: #{vit_forward.1} parent=5 // pred_region
        %s273 = ssub.s32 %s18, 1
        %p274 = scmp.lt.s32.totalorder %s23, 1
        %s275 = scalar_select %p274, %s23, 1
        %s276 = smul.addr %s275, 192
        %s277 = smul.addr %s276, 4
        %s278 = scalar_lea.vmem %s0, %s277
        %p279 = pneg %p44
        %p280 = pneg %p41
        %p281 = pneg %p65
        %p282 = pneg %p62
        %p283 = pneg %p86
        %p284 = pneg %p83
        %p285 = pneg %p107
        %p286 = pneg %p104
        %p287 = pneg %p128
        %p288 = pneg %p125
        %p289 = pneg %p149
        %p290 = pneg %p146
        %p291 = pneg %p170
        %p292 = pneg %p167
        %p293 = pneg %p196
        %p294 = pneg %p193
        %s295 = sand.u32 %s183, 1
        %s296 = scalar_lea.sflag [#allocation3], %s295
        %s297 = sand.u32 %s183, 1
        %s298 = smul.addr %s297, 64
        %s299 = scalar_lea.vmem [#allocation2], %s298
        %p300 = pneg %p222
        %p301 = pneg %p219
        %p302 = scmp.lt.s32.totalorder %s23, 1
        %s303 = scalar_select %p302, %s23, 1
        %s304 = smul.addr %s303, 32
        %s305 = smul.addr %s304, 8
        %s306 = scalar_lea.vmem %s8, %s305
        %p307 = scmp.lt.s32.totalorder %s23, 1
        %s308 = scalar_select %p307, %s23, 1
        %s309 = smul.addr %s308, 192
        %s310 = smul.addr %s309, 4
        %s311 = scalar_lea.vmem %s0, %s310
        %p312 = scmp.lt.s32.totalorder %s23, 1
        %s313 = scalar_select %p312, %s23, 1
        %s314 = smul.addr %s313, 32
        %s315 = smul.addr %s314, 8
        %s316 = scalar_lea.vmem %s8, %s315
        %v317 = vld [vmem:[%s1] sm:$0xff]
        %v318 = vld [vmem:[%s1 + $0x8] sm:$0xff]
        %v319 = vld [vmem:[%s1 + $0x10] sm:$0xff]
        %v320 = vld [vmem:[%s1 + $0x18] sm:$0xff]
        %v321 = vld [vmem:[%s1 + $0x20] sm:$0xff]
        %v322 = vld [vmem:[%s1 + $0x28] sm:$0xff]
        %v323 = vld [vmem:[%s311] sm:$0xff]
        %v324 = vld [vmem:[%s311 + $0x8] sm:$0xff]
        %v325 = vld [vmem:[%s311 + $0x10] sm:$0xff]
        %v326 = vld [vmem:[%s311 + $0x18] sm:$0xff]
        %v327 = vld [vmem:[%s311 + $0x20] sm:$0xff]
        %v328 = vld [vmem:[%s311 + $0x28] sm:$0xff]
        %v329 = vld [vmem:[%s311 + $0x30] sm:$0xff]
        %v330 = vld [vmem:[%s311 + $0x38] sm:$0xff]
        %v331 = vld [vmem:[%s311 + $0x40] sm:$0xff]
        %v332 = vld [vmem:[%s311 + $0x48] sm:$0xff]
        %v333 = vld [vmem:[%s311 + $0x50] sm:$0xff]
        %v334 = vld [vmem:[%s311 + $0x58] sm:$0xff]
        %v335 = vld [vmem:[%s311 + $0x60] sm:$0xff]
        %v336 = vld [vmem:[%s311 + $0x68] sm:$0xff]
        %v337 = vld [vmem:[%s311 + $0x70] sm:$0xff]
        %v338 = vld [vmem:[%s311 + $0x78] sm:$0xff]
        %v339 = vld [vmem:[%s311 + $0x80] sm:$0xff]
        %v340 = vld [vmem:[%s311 + $0x88] sm:$0xff]
        %v341 = vld [vmem:[%s311 + $0x90] sm:$0xff]
        %v342 = vld [vmem:[%s311 + $0x98] sm:$0xff]
        %v343 = vld [vmem:[%s311 + $0xa0] sm:$0xff]
        %v344 = vld [vmem:[%s311 + $0xa8] sm:$0xff]
        %v345 = vld [vmem:[%s311 + $0xb0] sm:$0xff]
        %v346 = vld [vmem:[%s311 + $0xb8] sm:$0xff]
        %v347 = vld [vmem:[%s311 + $0xc0] sm:$0xff]
        %v348 = vld [vmem:[%s311 + $0xc8] sm:$0xff]
        %v349 = vld [vmem:[%s311 + $0xd0] sm:$0xff]
        %v350 = vld [vmem:[%s311 + $0xd8] sm:$0xff]
        %v351 = vld [vmem:[%s311 + $0xe0] sm:$0xff]
        %v352 = vld [vmem:[%s311 + $0xe8] sm:$0xff]
        %v353 = vld [vmem:[%s311 + $0xf0] sm:$0xff]
        %v354 = vld [vmem:[%s311 + $0xf8] sm:$0xff]
        %v355 = vld [vmem:[%s311 + $0x100] sm:$0xff]
        %v356 = vld [vmem:[%s311 + $0x108] sm:$0xff]
        %v357 = vld [vmem:[%s311 + $0x110] sm:$0xff]
        %v358 = vld [vmem:[%s311 + $0x118] sm:$0xff]
        %v359 = vld [vmem:[%s311 + $0x120] sm:$0xff]
        %v360 = vld [vmem:[%s311 + $0x128] sm:$0xff]
        %v361 = vld [vmem:[%s311 + $0x130] sm:$0xff]
        %v362 = vld [vmem:[%s311 + $0x138] sm:$0xff]
        %v363 = vld [vmem:[%s311 + $0x140] sm:$0xff]
        %v364 = vld [vmem:[%s311 + $0x148] sm:$0xff]
        %v365 = vld [vmem:[%s311 + $0x150] sm:$0xff]
        %v366 = vld [vmem:[%s311 + $0x158] sm:$0xff]
        %v367 = vld [vmem:[%s311 + $0x160] sm:$0xff]
        %v368 = vld [vmem:[%s311 + $0x168] sm:$0xff]
        %v369 = vld [vmem:[%s311 + $0x170] sm:$0xff]
        %v370 = vld [vmem:[%s311 + $0x178] sm:$0xff]
        %v371 = vld [vmem:[%s311 + $0x180] sm:$0xff]
        %v372 = vld [vmem:[%s311 + $0x188] sm:$0xff]
        %v373 = vld [vmem:[%s311 + $0x190] sm:$0xff]
        %v374 = vld [vmem:[%s311 + $0x198] sm:$0xff]
        %v375 = vld [vmem:[%s311 + $0x1a0] sm:$0xff]
        %v376 = vld [vmem:[%s311 + $0x1a8] sm:$0xff]
        %v377 = vld [vmem:[%s311 + $0x1b0] sm:$0xff]
        %v378 = vld [vmem:[%s311 + $0x1b8] sm:$0xff]
        %v379 = vld [vmem:[%s311 + $0x1c0] sm:$0xff]
        %v380 = vld [vmem:[%s311 + $0x1c8] sm:$0xff]
        %v381 = vld [vmem:[%s311 + $0x1d0] sm:$0xff]
        %v382 = vld [vmem:[%s311 + $0x1d8] sm:$0xff]
        %v383 = vld [vmem:[%s311 + $0x1e0] sm:$0xff]
        %v384 = vld [vmem:[%s311 + $0x1e8] sm:$0xff]
        %v385 = vld [vmem:[%s311 + $0x1f0] sm:$0xff]
        %v386 = vld [vmem:[%s311 + $0x1f8] sm:$0xff]
        %v387 = vld [vmem:[%s311 + $0x200] sm:$0xff]
        %v388 = vld [vmem:[%s311 + $0x208] sm:$0xff]
        %v389 = vld [vmem:[%s311 + $0x210] sm:$0xff]
        %v390 = vld [vmem:[%s311 + $0x218] sm:$0xff]
        %v391 = vld [vmem:[%s311 + $0x220] sm:$0xff]
        %v392 = vld [vmem:[%s311 + $0x228] sm:$0xff]
        %v393 = vld [vmem:[%s311 + $0x230] sm:$0xff]
        %v394 = vld [vmem:[%s311 + $0x238] sm:$0xff]
        %v395 = vld [vmem:[%s311 + $0x240] sm:$0xff]
        %v396 = vld [vmem:[%s311 + $0x248] sm:$0xff]
        %v397 = vld [vmem:[%s311 + $0x250] sm:$0xff]
        %v398 = vld [vmem:[%s311 + $0x258] sm:$0xff]
        %v399 = vld [vmem:[%s311 + $0x260] sm:$0xff]
        %v400 = vld [vmem:[%s311 + $0x268] sm:$0xff]
        %v401 = vld [vmem:[%s311 + $0x270] sm:$0xff]
        %v402 = vld [vmem:[%s311 + $0x278] sm:$0xff]
        %v403 = vld [vmem:[%s311 + $0x280] sm:$0xff]
        %v404 = vld [vmem:[%s311 + $0x288] sm:$0xff]
        %v405 = vld [vmem:[%s311 + $0x290] sm:$0xff]
        %v406 = vld [vmem:[%s311 + $0x298] sm:$0xff]
        %v407 = vld [vmem:[%s311 + $0x2a0] sm:$0xff]
        %v408 = vld [vmem:[%s311 + $0x2a8] sm:$0xff]
        %v409 = vld [vmem:[%s311 + $0x2b0] sm:$0xff]
        %v410 = vld [vmem:[%s311 + $0x2b8] sm:$0xff]
        %v411 = vld [vmem:[%s311 + $0x2c0] sm:$0xff]
        %v412 = vld [vmem:[%s311 + $0x2c8] sm:$0xff]
        %v413 = vld [vmem:[%s311 + $0x2d0] sm:$0xff]
        %v414 = vld [vmem:[%s311 + $0x2d8] sm:$0xff]
        %v415 = vld [vmem:[%s311 + $0x2e0] sm:$0xff]
        %v416 = vld [vmem:[%s311 + $0x2e8] sm:$0xff]
        %v417 = vld [vmem:[%s311 + $0x2f0] sm:$0xff]
        %v418 = vld [vmem:[%s311 + $0x2f8] sm:$0xff]
        %v419 = vld [vmem:[%s2] sm:$0xff]
        %v420 = vld [vmem:[%s2 + $0x8] sm:$0xff]
        %v421 = vld [vmem:[%s2 + $0x10] sm:$0xff]
        %v422 = vld [vmem:[%s2 + $0x18] sm:$0xff]
        %v429 = vunpack.c.l.b16 %v317
        %v430 = vunpack.c.h.b16 %v317
        %v431 = vunpack.c.l.b16 %v318
        %v432 = vunpack.c.h.b16 %v318
        %v433 = vunpack.c.l.b16 %v319
        %v434 = vunpack.c.h.b16 %v319
        %v435 = vunpack.c.l.b16 %v320
        %v436 = vunpack.c.h.b16 %v320
        %v437 = vunpack.c.l.b16 %v321
        %v438 = vunpack.c.h.b16 %v321
        %v439 = vunpack.c.l.b16 %v322
        %v440 = vunpack.c.h.b16 %v322
        %v441 = vpack.c.b16 %v435, %v429
        %v442 = vpack.c.b16 %v436, %v430
        %v443 = vpack.c.b16 %v437, %v431
        %v444 = vpack.c.b16 %v438, %v432
        %v445 = vpack.c.b16 %v439, %v433
        %v446 = vpack.c.b16 %v440, %v434
        %v549 = vunpack.c.l.b16 %v323
        %v550 = vunpack.c.h.b16 %v323
        %v551 = vunpack.c.l.b16 %v324
        %v552 = vunpack.c.h.b16 %v324
        %v553 = vunpack.c.l.b16 %v325
        %v554 = vunpack.c.h.b16 %v325
        %v555 = vunpack.c.l.b16 %v326
        %v556 = vunpack.c.h.b16 %v326
        %v557 = vunpack.c.l.b16 %v327
        %v558 = vunpack.c.h.b16 %v327
        %v559 = vunpack.c.l.b16 %v328
        %v560 = vunpack.c.h.b16 %v328
        %v561 = vunpack.c.l.b16 %v329
        %v562 = vunpack.c.h.b16 %v329
        %v563 = vunpack.c.l.b16 %v330
        %v564 = vunpack.c.h.b16 %v330
        %v565 = vunpack.c.l.b16 %v331
        %v566 = vunpack.c.h.b16 %v331
        %v567 = vunpack.c.l.b16 %v332
        %v568 = vunpack.c.h.b16 %v332
        %v569 = vunpack.c.l.b16 %v333
        %v570 = vunpack.c.h.b16 %v333
        %v571 = vunpack.c.l.b16 %v334
        %v572 = vunpack.c.h.b16 %v334
        %v573 = vunpack.c.l.b16 %v335
        %v574 = vunpack.c.h.b16 %v335
        %v575 = vunpack.c.l.b16 %v336
        %v576 = vunpack.c.h.b16 %v336
        %v577 = vunpack.c.l.b16 %v337
        %v578 = vunpack.c.h.b16 %v337
        %v579 = vunpack.c.l.b16 %v338
        %v580 = vunpack.c.h.b16 %v338
        %v581 = vunpack.c.l.b16 %v339
        %v582 = vunpack.c.h.b16 %v339
        %v583 = vunpack.c.l.b16 %v340
        %v584 = vunpack.c.h.b16 %v340
        %v585 = vunpack.c.l.b16 %v341
        %v586 = vunpack.c.h.b16 %v341
        %v587 = vunpack.c.l.b16 %v342
        %v588 = vunpack.c.h.b16 %v342
        %v589 = vunpack.c.l.b16 %v343
        %v590 = vunpack.c.h.b16 %v343
        %v591 = vunpack.c.l.b16 %v344
        %v592 = vunpack.c.h.b16 %v344
        %v593 = vunpack.c.l.b16 %v345
        %v594 = vunpack.c.h.b16 %v345
        %v595 = vunpack.c.l.b16 %v346
        %v596 = vunpack.c.h.b16 %v346
        %v597 = vunpack.c.l.b16 %v347
        %v598 = vunpack.c.h.b16 %v347
        %v599 = vunpack.c.l.b16 %v348
        %v600 = vunpack.c.h.b16 %v348
        %v601 = vunpack.c.l.b16 %v349
        %v602 = vunpack.c.h.b16 %v349
        %v603 = vunpack.c.l.b16 %v350
        %v604 = vunpack.c.h.b16 %v350
        %v605 = vunpack.c.l.b16 %v351
        %v606 = vunpack.c.h.b16 %v351
        %v607 = vunpack.c.l.b16 %v352
        %v608 = vunpack.c.h.b16 %v352
        %v609 = vunpack.c.l.b16 %v353
        %v610 = vunpack.c.h.b16 %v353
        %v611 = vunpack.c.l.b16 %v354
        %v612 = vunpack.c.h.b16 %v354
        %v613 = vunpack.c.l.b16 %v355
        %v614 = vunpack.c.h.b16 %v355
        %v615 = vunpack.c.l.b16 %v356
        %v616 = vunpack.c.h.b16 %v356
        %v617 = vunpack.c.l.b16 %v357
        %v618 = vunpack.c.h.b16 %v357
        %v619 = vunpack.c.l.b16 %v358
        %v620 = vunpack.c.h.b16 %v358
        %v621 = vunpack.c.l.b16 %v359
        %v622 = vunpack.c.h.b16 %v359
        %v623 = vunpack.c.l.b16 %v360
        %v624 = vunpack.c.h.b16 %v360
        %v625 = vunpack.c.l.b16 %v361
        %v626 = vunpack.c.h.b16 %v361
        %v627 = vunpack.c.l.b16 %v362
        %v628 = vunpack.c.h.b16 %v362
        %v629 = vunpack.c.l.b16 %v363
        %v630 = vunpack.c.h.b16 %v363
        %v631 = vunpack.c.l.b16 %v364
        %v632 = vunpack.c.h.b16 %v364
        %v633 = vunpack.c.l.b16 %v365
        %v634 = vunpack.c.h.b16 %v365
        %v635 = vunpack.c.l.b16 %v366
        %v636 = vunpack.c.h.b16 %v366
        %v637 = vunpack.c.l.b16 %v367
        %v638 = vunpack.c.h.b16 %v367
        %v639 = vunpack.c.l.b16 %v368
        %v640 = vunpack.c.h.b16 %v368
        %v641 = vunpack.c.l.b16 %v369
        %v642 = vunpack.c.h.b16 %v369
        %v643 = vunpack.c.l.b16 %v370
        %v644 = vunpack.c.h.b16 %v370
        %v645 = vunpack.c.l.b16 %v371
        %v646 = vunpack.c.h.b16 %v371
        %v647 = vunpack.c.l.b16 %v372
        %v648 = vunpack.c.h.b16 %v372
        %v649 = vunpack.c.l.b16 %v373
        %v650 = vunpack.c.h.b16 %v373
        %v651 = vunpack.c.l.b16 %v374
        %v652 = vunpack.c.h.b16 %v374
        %v653 = vunpack.c.l.b16 %v375
        %v654 = vunpack.c.h.b16 %v375
        %v655 = vunpack.c.l.b16 %v376
        %v656 = vunpack.c.h.b16 %v376
        %v657 = vunpack.c.l.b16 %v377
        %v658 = vunpack.c.h.b16 %v377
        %v659 = vunpack.c.l.b16 %v378
        %v660 = vunpack.c.h.b16 %v378
        %v661 = vunpack.c.l.b16 %v379
        %v662 = vunpack.c.h.b16 %v379
        %v663 = vunpack.c.l.b16 %v380
        %v664 = vunpack.c.h.b16 %v380
        %v665 = vunpack.c.l.b16 %v381
        %v666 = vunpack.c.h.b16 %v381
        %v667 = vunpack.c.l.b16 %v382
        %v668 = vunpack.c.h.b16 %v382
        %v669 = vunpack.c.l.b16 %v383
        %v670 = vunpack.c.h.b16 %v383
        %v671 = vunpack.c.l.b16 %v384
        %v672 = vunpack.c.h.b16 %v384
        %v673 = vunpack.c.l.b16 %v385
        %v674 = vunpack.c.h.b16 %v385
        %v675 = vunpack.c.l.b16 %v386
        %v676 = vunpack.c.h.b16 %v386
        %v677 = vunpack.c.l.b16 %v387
        %v678 = vunpack.c.h.b16 %v387
        %v679 = vunpack.c.l.b16 %v388
        %v680 = vunpack.c.h.b16 %v388
        %v681 = vunpack.c.l.b16 %v389
        %v682 = vunpack.c.h.b16 %v389
        %v683 = vunpack.c.l.b16 %v390
        %v684 = vunpack.c.h.b16 %v390
        %v685 = vunpack.c.l.b16 %v391
        %v686 = vunpack.c.h.b16 %v391
        %v687 = vunpack.c.l.b16 %v392
        %v688 = vunpack.c.h.b16 %v392
        %v689 = vunpack.c.l.b16 %v393
        %v690 = vunpack.c.h.b16 %v393
        %v691 = vunpack.c.l.b16 %v394
        %v692 = vunpack.c.h.b16 %v394
        %v693 = vunpack.c.l.b16 %v395
        %v694 = vunpack.c.h.b16 %v395
        %v695 = vunpack.c.l.b16 %v396
        %v696 = vunpack.c.h.b16 %v396
        %v697 = vunpack.c.l.b16 %v397
        %v698 = vunpack.c.h.b16 %v397
        %v699 = vunpack.c.l.b16 %v398
        %v700 = vunpack.c.h.b16 %v398
        %v701 = vunpack.c.l.b16 %v399
        %v702 = vunpack.c.h.b16 %v399
        %v703 = vunpack.c.l.b16 %v400
        %v704 = vunpack.c.h.b16 %v400
        %v705 = vunpack.c.l.b16 %v401
        %v706 = vunpack.c.h.b16 %v401
        %v707 = vunpack.c.l.b16 %v402
        %v708 = vunpack.c.h.b16 %v402
        %v709 = vunpack.c.l.b16 %v403
        %v710 = vunpack.c.h.b16 %v403
        %v711 = vunpack.c.l.b16 %v404
        %v712 = vunpack.c.h.b16 %v404
        %v713 = vunpack.c.l.b16 %v405
        %v714 = vunpack.c.h.b16 %v405
        %v715 = vunpack.c.l.b16 %v406
        %v716 = vunpack.c.h.b16 %v406
        %v717 = vunpack.c.l.b16 %v407
        %v718 = vunpack.c.h.b16 %v407
        %v719 = vunpack.c.l.b16 %v408
        %v720 = vunpack.c.h.b16 %v408
        %v721 = vunpack.c.l.b16 %v409
        %v722 = vunpack.c.h.b16 %v409
        %v723 = vunpack.c.l.b16 %v410
        %v724 = vunpack.c.h.b16 %v410
        %v725 = vunpack.c.l.b16 %v411
        %v726 = vunpack.c.h.b16 %v411
        %v727 = vunpack.c.l.b16 %v412
        %v728 = vunpack.c.h.b16 %v412
        %v729 = vunpack.c.l.b16 %v413
        %v730 = vunpack.c.h.b16 %v413
        %v731 = vunpack.c.l.b16 %v414
        %v732 = vunpack.c.h.b16 %v414
        %v733 = vunpack.c.l.b16 %v415
        %v734 = vunpack.c.h.b16 %v415
        %v735 = vunpack.c.l.b16 %v416
        %v736 = vunpack.c.h.b16 %v416
        %v737 = vunpack.c.l.b16 %v417
        %v738 = vunpack.c.h.b16 %v417
        %v739 = vunpack.c.l.b16 %v418
        %v740 = vunpack.c.h.b16 %v418
        %v741 = vpack.c.b16 %v551, %v549
        %v742 = vpack.c.b16 %v552, %v550
        %v743 = vpack.c.b16 %v555, %v553
        %v744 = vpack.c.b16 %v556, %v554
        %v745 = vpack.c.b16 %v559, %v557
        %v746 = vpack.c.b16 %v560, %v558
        %v747 = vpack.c.b16 %v563, %v561
        %v748 = vpack.c.b16 %v564, %v562
        %v749 = vpack.c.b16 %v567, %v565
        %v750 = vpack.c.b16 %v568, %v566
        %v751 = vpack.c.b16 %v571, %v569
        %v752 = vpack.c.b16 %v572, %v570
        %v753 = vpack.c.b16 %v575, %v573
        %v754 = vpack.c.b16 %v576, %v574
        %v755 = vpack.c.b16 %v579, %v577
        %v756 = vpack.c.b16 %v580, %v578
        %v757 = vpack.c.b16 %v583, %v581
        %v758 = vpack.c.b16 %v584, %v582
        %v759 = vpack.c.b16 %v587, %v585
        %v760 = vpack.c.b16 %v588, %v586
        %v761 = vpack.c.b16 %v591, %v589
        %v762 = vpack.c.b16 %v592, %v590
        %v763 = vpack.c.b16 %v595, %v593
        %v764 = vpack.c.b16 %v596, %v594
        %v765 = vpack.c.b16 %v599, %v597
        %v766 = vpack.c.b16 %v600, %v598
        %v767 = vpack.c.b16 %v603, %v601
        %v768 = vpack.c.b16 %v604, %v602
        %v769 = vpack.c.b16 %v607, %v605
        %v770 = vpack.c.b16 %v608, %v606
        %v771 = vpack.c.b16 %v611, %v609
        %v772 = vpack.c.b16 %v612, %v610
        %v773 = vpack.c.b16 %v615, %v613
        %v774 = vpack.c.b16 %v616, %v614
        %v775 = vpack.c.b16 %v619, %v617
        %v776 = vpack.c.b16 %v620, %v618
        %v777 = vpack.c.b16 %v623, %v621
        %v778 = vpack.c.b16 %v624, %v622
        %v779 = vpack.c.b16 %v627, %v625
        %v780 = vpack.c.b16 %v628, %v626
        %v781 = vpack.c.b16 %v631, %v629
        %v782 = vpack.c.b16 %v632, %v630
        %v783 = vpack.c.b16 %v635, %v633
        %v784 = vpack.c.b16 %v636, %v634
        %v785 = vpack.c.b16 %v639, %v637
        %v786 = vpack.c.b16 %v640, %v638
        %v787 = vpack.c.b16 %v643, %v641
        %v788 = vpack.c.b16 %v644, %v642
        %v789 = vpack.c.b16 %v647, %v645
        %v790 = vpack.c.b16 %v648, %v646
        %v791 = vpack.c.b16 %v651, %v649
        %v792 = vpack.c.b16 %v652, %v650
        %v793 = vpack.c.b16 %v655, %v653
        %v794 = vpack.c.b16 %v656, %v654
        %v795 = vpack.c.b16 %v659, %v657
        %v796 = vpack.c.b16 %v660, %v658
        %v797 = vpack.c.b16 %v663, %v661
        %v798 = vpack.c.b16 %v664, %v662
        %v799 = vpack.c.b16 %v667, %v665
        %v800 = vpack.c.b16 %v668, %v666
        %v801 = vpack.c.b16 %v671, %v669
        %v802 = vpack.c.b16 %v672, %v670
        %v803 = vpack.c.b16 %v675, %v673
        %v804 = vpack.c.b16 %v676, %v674
        %v805 = vpack.c.b16 %v679, %v677
        %v806 = vpack.c.b16 %v680, %v678
        %v807 = vpack.c.b16 %v683, %v681
        %v808 = vpack.c.b16 %v684, %v682
        %v809 = vpack.c.b16 %v687, %v685
        %v810 = vpack.c.b16 %v688, %v686
        %v811 = vpack.c.b16 %v691, %v689
        %v812 = vpack.c.b16 %v692, %v690
        %v813 = vpack.c.b16 %v695, %v693
        %v814 = vpack.c.b16 %v696, %v694
        %v815 = vpack.c.b16 %v699, %v697
        %v816 = vpack.c.b16 %v700, %v698
        %v817 = vpack.c.b16 %v703, %v701
        %v818 = vpack.c.b16 %v704, %v702
        %v819 = vpack.c.b16 %v707, %v705
        %v820 = vpack.c.b16 %v708, %v706
        %v821 = vpack.c.b16 %v711, %v709
        %v822 = vpack.c.b16 %v712, %v710
        %v823 = vpack.c.b16 %v715, %v713
        %v824 = vpack.c.b16 %v716, %v714
        %v825 = vpack.c.b16 %v719, %v717
        %v826 = vpack.c.b16 %v720, %v718
        %v827 = vpack.c.b16 %v723, %v721
        %v828 = vpack.c.b16 %v724, %v722
        %v829 = vpack.c.b16 %v727, %v725
        %v830 = vpack.c.b16 %v728, %v726
        %v831 = vpack.c.b16 %v731, %v729
        %v832 = vpack.c.b16 %v732, %v730
        %v833 = vpack.c.b16 %v735, %v733
        %v834 = vpack.c.b16 %v736, %v734
        %v835 = vpack.c.b16 %v739, %v737
        %v836 = vpack.c.b16 %v740, %v738
        %933 = vmatprep.subr.bf16.mxu0 %v742
        %934 = vmatpush1.bf16.msra.mxu0 %v741
        %935 = vmatprep.subr.bf16.mxu0 %v744
        %936 = vmatpush1.bf16.msra.mxu0 %v743
        %937 = vmatprep.subr.bf16.mxu0 %v746
        %938 = vmatpush1.bf16.msra.mxu0 %v745
        %939 = vmatprep.subr.bf16.mxu0 %v748
        %940 = vmatpush1.bf16.msra.mxu0 %v747
        %941 = vmatprep.subr.bf16.mxu0 %v750
        %942 = vmatpush1.bf16.msra.mxu0 %v749
        %943 = vmatprep.subr.bf16.mxu0 %v752
        %944 = vmatpush1.bf16.msra.mxu0 %v751
        %945 = vmatprep.subr.bf16.mxu0 %v754
        %946 = vmatpush1.bf16.msra.mxu0 %v753
        %947 = vmatprep.subr.bf16.mxu0 %v756
        %948 = vmatpush1.bf16.msra.mxu0 %v755
        %949 = vmatprep.subr.bf16.mxu0 %v758
        %950 = vmatpush1.bf16.msra.mxu0 %v757
        %951 = vmatprep.subr.bf16.mxu0 %v760
        %952 = vmatpush1.bf16.msra.mxu0 %v759
        %953 = vmatprep.subr.bf16.mxu0 %v762
        %954 = vmatpush1.bf16.msra.mxu0 %v761
        %955 = vmatprep.subr.bf16.mxu0 %v764
        %956 = vmatpush1.bf16.msra.mxu0 %v763
        %957 = vmatprep.subr.bf16.mxu0 %v766
        %958 = vmatpush1.bf16.msra.mxu0 %v765
        %959 = vmatprep.subr.bf16.mxu0 %v768
        %960 = vmatpush1.bf16.msra.mxu0 %v767
        %961 = vmatprep.subr.bf16.mxu0 %v770
        %962 = vmatpush1.bf16.msra.mxu0 %v769
        %963 = vmatprep.subr.bf16.mxu0 %v772
        %964 = vmatpush1.bf16.msra.mxu0 %v771
        %965 = vmatprep.mubr.bf16.mxu0 %v442
        %966 = vmatmul.mubr.bf16.gmra.mrb[0].mxu0 %v441
        %v967 = vpop.f32.mrb[0].mxu0
        %v968 = vadd.f32 %v419, %v967
        %v969 = vpop.f32.mrb[0].mxu0
        %v970 = vadd.f32 %v420, %v969
        %v971 = vpop.f32.mrb[0].mxu0
        %v972 = vadd.f32 %v421, %v971
        %v973 = vpop.f32.mrb[0].mxu0
        %v974 = vadd.f32 %v422, %v973
        %975 = vdwg.mxu0
        %976 = vmatprep.subr.bf16.mxu0 %v774
        %977 = vmatpush1.bf16.msra.mxu0 %v773
        %978 = vmatprep.subr.bf16.mxu0 %v776
        %979 = vmatpush1.bf16.msra.mxu0 %v775
        %980 = vmatprep.subr.bf16.mxu0 %v778
        %981 = vmatpush1.bf16.msra.mxu0 %v777
        %982 = vmatprep.subr.bf16.mxu0 %v780
        %983 = vmatpush1.bf16.msra.mxu0 %v779
        %984 = vmatprep.subr.bf16.mxu0 %v782
        %985 = vmatpush1.bf16.msra.mxu0 %v781
        %986 = vmatprep.subr.bf16.mxu0 %v784
        %987 = vmatpush1.bf16.msra.mxu0 %v783
        %988 = vmatprep.subr.bf16.mxu0 %v786
        %989 = vmatpush1.bf16.msra.mxu0 %v785
        %990 = vmatprep.subr.bf16.mxu0 %v788
        %991 = vmatpush1.bf16.msra.mxu0 %v787
        %992 = vmatprep.subr.bf16.mxu0 %v790
        %993 = vmatpush1.bf16.msra.mxu0 %v789
        %994 = vmatprep.subr.bf16.mxu0 %v792
        %995 = vmatpush1.bf16.msra.mxu0 %v791
        %996 = vmatprep.subr.bf16.mxu0 %v794
        %997 = vmatpush1.bf16.msra.mxu0 %v793
        %998 = vmatprep.subr.bf16.mxu0 %v796
        %999 = vmatpush1.bf16.msra.mxu0 %v795
        %1000 = vmatprep.subr.bf16.mxu0 %v798
        %1001 = vmatpush1.bf16.msra.mxu0 %v797
        %1002 = vmatprep.subr.bf16.mxu0 %v800
        %1003 = vmatpush1.bf16.msra.mxu0 %v799
        %1004 = vmatprep.subr.bf16.mxu0 %v802
        %1005 = vmatpush1.bf16.msra.mxu0 %v801
        %1006 = vmatprep.subr.bf16.mxu0 %v804
        %1007 = vmatpush1.bf16.msra.mxu0 %v803
        %1008 = vmatprep.mubr.bf16.mxu0 %v444
        %1009 = vmatmul.mubr.bf16.gmra.mrb[0].mxu0 %v443
        %v1010 = vpop.f32.mrb[0].mxu0
        %v1011 = vadd.f32 %v968, %v1010
        %v1012 = vpop.f32.mrb[0].mxu0
        %v1013 = vadd.f32 %v970, %v1012
        %v1014 = vpop.f32.mrb[0].mxu0
        %v1015 = vadd.f32 %v972, %v1014
        %v1016 = vpop.f32.mrb[0].mxu0
        %v1017 = vadd.f32 %v974, %v1016
        %1018 = vdwg.mxu0
        %1019 = vmatprep.subr.bf16.mxu0 %v806
        %1020 = vmatpush1.bf16.msra.mxu0 %v805
        %1021 = vmatprep.subr.bf16.mxu0 %v808
        %1022 = vmatpush1.bf16.msra.mxu0 %v807
        %1023 = vmatprep.subr.bf16.mxu0 %v810
        %1024 = vmatpush1.bf16.msra.mxu0 %v809
        %1025 = vmatprep.subr.bf16.mxu0 %v812
        %1026 = vmatpush1.bf16.msra.mxu0 %v811
        %1027 = vmatprep.subr.bf16.mxu0 %v814
        %1028 = vmatpush1.bf16.msra.mxu0 %v813
        %1029 = vmatprep.subr.bf16.mxu0 %v816
        %1030 = vmatpush1.bf16.msra.mxu0 %v815
        %1031 = vmatprep.subr.bf16.mxu0 %v818
        %1032 = vmatpush1.bf16.msra.mxu0 %v817
        %1033 = vmatprep.subr.bf16.mxu0 %v820
        %1034 = vmatpush1.bf16.msra.mxu0 %v819
        %1035 = vmatprep.subr.bf16.mxu0 %v822
        %1036 = vmatpush1.bf16.msra.mxu0 %v821
        %1037 = vmatprep.subr.bf16.mxu0 %v824
        %1038 = vmatpush1.bf16.msra.mxu0 %v823
        %1039 = vmatprep.subr.bf16.mxu0 %v826
        %1040 = vmatpush1.bf16.msra.mxu0 %v825
        %1041 = vmatprep.subr.bf16.mxu0 %v828
        %1042 = vmatpush1.bf16.msra.mxu0 %v827
        %1043 = vmatprep.subr.bf16.mxu0 %v830
        %1044 = vmatpush1.bf16.msra.mxu0 %v829
        %1045 = vmatprep.subr.bf16.mxu0 %v832
        %1046 = vmatpush1.bf16.msra.mxu0 %v831
        %1047 = vmatprep.subr.bf16.mxu0 %v834
        %1048 = vmatpush1.bf16.msra.mxu0 %v833
        %1049 = vmatprep.subr.bf16.mxu0 %v836
        %1050 = vmatpush1.bf16.msra.mxu0 %v835
        %1051 = vmatprep.mubr.bf16.mxu0 %v446
        %1052 = vmatmul.mubr.bf16.gmra.mrb[0].mxu0 %v445
        %v1053 = vpop.f32.mrb[0].mxu0
        %v1054 = vadd.f32 %v1011, %v1053
        %v1055 = vpop.f32.mrb[0].mxu0
        %v1056 = vadd.f32 %v1013, %v1055
        %v1057 = vpop.f32.mrb[0].mxu0
        %v1058 = vadd.f32 %v1015, %v1057
        %v1059 = vpop.f32.mrb[0].mxu0
        %v1060 = vadd.f32 %v1017, %v1059
        %1061 = vdwg.mxu0
        %v1062 = vld [vmem:[%s6] sm:$0xff]
        %v1063 = vld [vmem:[%s6 + $0x8] sm:$0xff]
        %v1064 = vadd.f32 %v1054, %v1058
        %v1065 = vrot.slane %v1064, 4
        %v1066 = vadd.f32 %v1064, %v1065
        %v1067 = vrot.slane %v1066, 2
        %v1068 = vadd.f32 %v1066, %v1067
        %v1069 = vrot.slane %v1068, 1
        %v1070 = vadd.f32 %v1068, %v1069
        %v1071 = vadd.f32 %v1056, %v1060
        %v1072 = vrot.slane %v1071, 4
        %v1073 = vadd.f32 %v1071, %v1072
        %v1074 = vrot.slane %v1073, 2
        %v1075 = vadd.f32 %v1073, %v1074
        %v1076 = vrot.slane %v1075, 1
        %v1077 = vadd.f32 %v1075, %v1076
        %v1078 = vrcp.pop 16.0
        %v1079 = vmul.f32 %v1070, %v1078
        %v1080 = vmul.f32 %v1077, %v1078
        %v1081 = vsub.f32 %v1054, %v1079
        %v1082 = vsub.f32 %v1056, %v1080
        %v1083 = vsub.f32 %v1058, %v1079
        %v1084 = vsub.f32 %v1060, %v1080
        %v1085 = vmul.f32 %v1081, %v1081
        %v1086 = vmul.f32 %v1082, %v1082
        %v1087 = vmul.f32 %v1083, %v1083
        %v1088 = vmul.f32 %v1084, %v1084
        %v1089 = vadd.f32 %v1085, %v1087
        %v1090 = vrot.slane %v1089, 4
        %v1091 = vadd.f32 %v1089, %v1090
        %v1092 = vrot.slane %v1091, 2
        %v1093 = vadd.f32 %v1091, %v1092
        %v1094 = vrot.slane %v1093, 1
        %v1095 = vadd.f32 %v1093, %v1094
        %v1096 = vadd.f32 %v1086, %v1088
        %v1097 = vrot.slane %v1096, 4
        %v1098 = vadd.f32 %v1096, %v1097
        %v1099 = vrot.slane %v1098, 2
        %v1100 = vadd.f32 %v1098, %v1099
        %v1101 = vrot.slane %v1100, 1
        %v1102 = vadd.f32 %v1100, %v1101
        %v1103 = vmul.f32 %v1095, %v1078
        %v1104 = vmul.f32 %v1102, %v1078
        %v1105 = vadd.f32 %v1103, 1e-05
        %v1106 = vadd.f32 %v1104, 1e-05
        %v1107 = vrsqrt.pop %v1105
        %v1108 = vrsqrt.pop %v1106
        %v1109 = vmul.f32 %v1081, %v1107
        %v1110 = vmul.f32 %v1082, %v1108
        %v1111 = vmul.f32 %v1083, %v1107
        %v1112 = vmul.f32 %v1084, %v1108
        %1114 = vset.pattern.permute.xlu0 0
        %1115 = vperm.xlu0 %1114, %v1062
        %v1116 = vpop.permute.xlu0 %1115
        %1119 = vset.pattern.permute.xlu0 0
        %1120 = vperm.xlu0 %1119, %v1063
        %v1121 = vpop.permute.xlu0 %1120
        %v1123 = vmul.f32 %v1109, %v1116
        %v1124 = vmul.f32 %v1110, %v1116
        %v1125 = vmul.f32 %v1111, %v1121
        %v1126 = vmul.f32 %v1112, %v1121
        %1127 = vset.pattern.permute.xlu0 1
        %1128 = vperm.xlu0 %1127, %v1062
        %v1129 = vpop.permute.xlu0 %1128
        %1131 = vset.pattern.permute.xlu0 1
        %1132 = vperm.xlu0 %1131, %v1063
        %v1133 = vpop.permute.xlu0 %1132
        %v1135 = vadd.f32 %v1123, %v1129
        %v1136 = vadd.f32 %v1124, %v1129
        %v1137 = vadd.f32 %v1125, %v1133
        %v1138 = vadd.f32 %v1126, %v1133
        %v1139 = vld [vmem:[%s3] sm:$0xff]
        %v1140 = vld [vmem:[%s3 + $0x8] sm:$0xff]
        %v1141 = vld [vmem:[%s3 + $0x10] sm:$0xff]
        %v1142 = vld [vmem:[%s3 + $0x18] sm:$0xff]
        %v1143 = vld [vmem:[%s3 + $0x20] sm:$0xff]
        %v1144 = vld [vmem:[%s3 + $0x28] sm:$0xff]
        %vm1145 = vcmask 130048
        %v1147 = vsel %vm1145, %v1139, 0
        %v1150 = vsel %vm1145, %v1140, 0
        %v1153 = vsel %vm1145, %v1141, 0
        %v1156 = vsel %vm1145, %v1142, 0
        %v1159 = vsel %vm1145, %v1143, 0
        %v1162 = vsel %vm1145, %v1144, 0
        %1164 = vmatprep.subr.mxu0 %v1136
        %1165 = vmatpush1.msra.mxu0 %v1135
        %1166 = vmatprep.subr.mxu0 %v1138
        %1167 = vmatpush1.msra.mxu0 %v1137
        %1168 = vmatprep.subr.mxu0 0.0
        %1169 = vmatpush1.msra.mxu0 0.0
        %1170 = vmatprep.subr.mxu0 0.0
        %1171 = vmatpush1.msra.mxu0 0.0
        %1172 = vmatprep.subr.mxu0 0.0
        %1173 = vmatpush1.msra.mxu0 0.0
        %1174 = vmatprep.subr.mxu0 0.0
        %1175 = vmatpush1.msra.mxu0 0.0
        %1176 = vmatprep.subr.mxu0 0.0
        %1177 = vmatpush1.msra.mxu0 0.0
        %1178 = vmatprep.subr.mxu0 0.0
        %1179 = vmatpush1.msra.mxu0 0.0
        %1180 = vmatprep.subr.mxu0 0.0
        %1181 = vmatpush1.msra.mxu0 0.0
        %1182 = vmatprep.subr.mxu0 0.0
        %1183 = vmatpush1.msra.mxu0 0.0
        %1184 = vmatprep.subr.mxu0 0.0
        %1185 = vmatpush1.msra.mxu0 0.0
        %1186 = vmatprep.subr.mxu0 0.0
        %1187 = vmatpush1.msra.mxu0 0.0
        %1188 = vmatprep.subr.mxu0 0.0
        %1189 = vmatpush1.msra.mxu0 0.0
        %1190 = vmatprep.subr.mxu0 0.0
        %1191 = vmatpush1.msra.mxu0 0.0
        %1192 = vmatprep.subr.mxu0 0.0
        %1193 = vmatpush1.msra.mxu0 0.0
        %1194 = vmatprep.subr.mxu0 0.0
        %1195 = vmatpush1.msra.mxu0 0.0
        %1196 = vmatprep.subr.mxu0 0.0
        %1197 = vmatpush1.msra.mxu0 0.0
        %1198 = vmatprep.subr.mxu0 0.0
        %1199 = vmatpush1.msra.mxu0 0.0
        %1200 = vmatprep.subr.mxu0 0.0
        %1201 = vmatpush1.msra.mxu0 0.0
        %1202 = vmatprep.subr.mxu0 0.0
        %1203 = vmatpush1.msra.mxu0 0.0
        %1204 = vmatprep.subr.mxu0 0.0
        %1205 = vmatpush1.msra.mxu0 0.0
        %1206 = vmatprep.subr.mxu0 0.0
        %1207 = vmatpush1.msra.mxu0 0.0
        %1208 = vmatprep.subr.mxu0 0.0
        %1209 = vmatpush1.msra.mxu0 0.0
        %1210 = vmatprep.subr.mxu0 0.0
        %1211 = vmatpush1.msra.mxu0 0.0
        %1212 = vmatprep.subr.mxu0 0.0
        %1213 = vmatpush1.msra.mxu0 0.0
        %1214 = vmatprep.subr.mxu0 0.0
        %1215 = vmatpush1.msra.mxu0 0.0
        %1216 = vmatprep.subr.mxu0 0.0
        %1217 = vmatpush1.msra.mxu0 0.0
        %1218 = vmatprep.subr.mxu0 0.0
        %1219 = vmatpush1.msra.mxu0 0.0
        %1220 = vmatprep.subr.mxu0 0.0
        %1221 = vmatpush1.msra.mxu0 0.0
        %1222 = vmatprep.subr.mxu0 0.0
        %1223 = vmatpush1.msra.mxu0 0.0
        %1224 = vmatprep.subr.mxu0 0.0
        %1225 = vmatpush1.msra.mxu0 0.0
        %1226 = vmatprep.subr.mxu0 0.0
        %1227 = vmatpush1.msra.mxu0 0.0
        %1228 = vmatprep.mubr.f32.mxu0 0.0
        %1229 = vmatmul.mubr.f32.gmra.mrb[0].mxu0 %v1147
        %v1230 = vpop.f32.mrb[0].mxu0
        %v1231 = vadd.f32 0.0, %v1230
        %v1232 = vpop.f32.mrb[0].mxu0
        %v1233 = vadd.f32 0.0, %v1232
        %1234 = vmatprep.mubr.f32.mxu0 0.0
        %1235 = vmatmul.mubr.f32.gmra.mrb[0].mxu0 %v1150
        %v1236 = vpop.f32.mrb[0].mxu0
        %v1237 = vadd.f32 0.0, %v1236
        %v1238 = vpop.f32.mrb[0].mxu0
        %v1239 = vadd.f32 0.0, %v1238
        %1240 = vmatprep.mubr.f32.mxu0 0.0
        %1241 = vmatmul.mubr.f32.gmra.mrb[0].mxu0 %v1153
        %v1242 = vpop.f32.mrb[0].mxu0
        %v1243 = vadd.f32 0.0, %v1242
        %v1244 = vpop.f32.mrb[0].mxu0
        %v1245 = vadd.f32 0.0, %v1244
        %1246 = vmatprep.mubr.f32.mxu0 0.0
        %1247 = vmatmul.mubr.f32.gmra.mrb[0].mxu0 %v1156
        %v1248 = vpop.f32.mrb[0].mxu0
        %v1249 = vadd.f32 0.0, %v1248
        %v1250 = vpop.f32.mrb[0].mxu0
        %v1251 = vadd.f32 0.0, %v1250
        %1252 = vmatprep.mubr.f32.mxu0 0.0
        %1253 = vmatmul.mubr.f32.gmra.mrb[0].mxu0 %v1159
        %v1254 = vpop.f32.mrb[0].mxu0
        %v1255 = vadd.f32 0.0, %v1254
        %v1256 = vpop.f32.mrb[0].mxu0
        %v1257 = vadd.f32 0.0, %v1256
        %1258 = vmatprep.mubr.f32.mxu0 0.0
        %1259 = vmatmul.mubr.f32.gmra.mrb[0].mxu0 %v1162
        %v1260 = vpop.f32.mrb[0].mxu0
        %v1261 = vadd.f32 0.0, %v1260
        %v1262 = vpop.f32.mrb[0].mxu0
        %v1263 = vadd.f32 0.0, %v1262
        %1264 = vdwg.mxu0
        %1265 = vxpose.xlu0.b32.start [1/16] %v1243, 128
        %1266 = vxpose.xlu0.b32.cont [2/16] %v1249, 128
        %1267 = vxpose.xlu0.b32.cont [3/16] 0.0, 128
        %1268 = vxpose.xlu0.b32.cont [4/16] 0.0, 128
        %1269 = vxpose.xlu0.b32.cont [5/16] 0.0, 128
        %1270 = vxpose.xlu0.b32.cont [6/16] 0.0, 128
        %1271 = vxpose.xlu0.b32.cont [7/16] 0.0, 128
        %1272 = vxpose.xlu0.b32.cont [8/16] 0.0, 128
        %1273 = vxpose.xlu0.b32.cont [9/16] 0.0, 128
        %1274 = vxpose.xlu0.b32.cont [10/16] 0.0, 128
        %1275 = vxpose.xlu0.b32.cont [11/16] 0.0, 128
        %1276 = vxpose.xlu0.b32.cont [12/16] 0.0, 128
        %1277 = vxpose.xlu0.b32.cont [13/16] 0.0, 128
        %1278 = vxpose.xlu0.b32.cont [14/16] 0.0, 128
        %1279 = vxpose.xlu0.b32.cont [15/16] 0.0, 128
        %1280 = vxpose.xlu0.b32.end [16/16] 0.0, 128
        %v1281 = vpop.trf.xlu0
        %v1282 = vpop.trf.xlu0
        %v1283 = vpop.trf.xlu0
        %v1284 = vpop.trf.xlu0
        %v1285 = vpop.trf.xlu0
        %v1286 = vpop.trf.xlu0
        %v1287 = vpop.trf.xlu0
        %v1288 = vpop.trf.xlu0
        %v1289 = vpop.trf.xlu0
        %v1290 = vpop.trf.xlu0
        %v1291 = vpop.trf.xlu0
        %v1292 = vpop.trf.xlu0
        %v1293 = vpop.trf.xlu0
        %v1294 = vpop.trf.xlu0
        %v1295 = vpop.trf.xlu0
        %v1296 = vpop.trf.xlu0
        %1297 = vxpose.xlu0.b32.start [1/16] %v1245, 128
        %1298 = vxpose.xlu0.b32.cont [2/16] %v1251, 128
        %1299 = vxpose.xlu0.b32.cont [3/16] 0.0, 128
        %1300 = vxpose.xlu0.b32.cont [4/16] 0.0, 128
        %1301 = vxpose.xlu0.b32.cont [5/16] 0.0, 128
        %1302 = vxpose.xlu0.b32.cont [6/16] 0.0, 128
        %1303 = vxpose.xlu0.b32.cont [7/16] 0.0, 128
        %1304 = vxpose.xlu0.b32.cont [8/16] 0.0, 128
        %1305 = vxpose.xlu0.b32.cont [9/16] 0.0, 128
        %1306 = vxpose.xlu0.b32.cont [10/16] 0.0, 128
        %1307 = vxpose.xlu0.b32.cont [11/16] 0.0, 128
        %1308 = vxpose.xlu0.b32.cont [12/16] 0.0, 128
        %1309 = vxpose.xlu0.b32.cont [13/16] 0.0, 128
        %1310 = vxpose.xlu0.b32.cont [14/16] 0.0, 128
        %1311 = vxpose.xlu0.b32.cont [15/16] 0.0, 128
        %1312 = vxpose.xlu0.b32.end [16/16] 0.0, 128
        %v1313 = vpop.trf.xlu0
        %v1314 = vpop.trf.xlu0
        %v1315 = vpop.trf.xlu0
        %v1316 = vpop.trf.xlu0
        %v1317 = vpop.trf.xlu0
        %v1318 = vpop.trf.xlu0
        %v1319 = vpop.trf.xlu0
        %v1320 = vpop.trf.xlu0
        %v1321 = vpop.trf.xlu0
        %v1322 = vpop.trf.xlu0
        %v1323 = vpop.trf.xlu0
        %v1324 = vpop.trf.xlu0
        %v1325 = vpop.trf.xlu0
        %v1326 = vpop.trf.xlu0
        %v1327 = vpop.trf.xlu0
        %v1328 = vpop.trf.xlu0
        %vm1329 = vcmask 31744
        %v1331 = vsel %vm1329, %v1281, 0
        %v1334 = vsel %vm1329, %v1282, 0
        %v1337 = vsel %vm1329, %v1283, 0
        %v1340 = vsel %vm1329, %v1284, 0
        %v1343 = vsel %vm1329, %v1285, 0
        %v1346 = vsel %vm1329, %v1286, 0
        %v1349 = vsel %vm1329, %v1287, 0
        %v1352 = vsel %vm1329, %v1288, 0
        %v1355 = vsel %vm1329, %v1289, 0
        %v1358 = vsel %vm1329, %v1290, 0
        %v1361 = vsel %vm1329, %v1291, 0
        %v1364 = vsel %vm1329, %v1292, 0
        %v1367 = vsel %vm1329, %v1293, 0
        %v1370 = vsel %vm1329, %v1294, 0
        %v1373 = vsel %vm1329, %v1295, 0
        %v1376 = vsel %vm1329, %v1296, 0
        %v1379 = vsel %vm1329, %v1313, 0
        %v1382 = vsel %vm1329, %v1314, 0
        %v1385 = vsel %vm1329, %v1315, 0
        %v1388 = vsel %vm1329, %v1316, 0
        %v1391 = vsel %vm1329, %v1317, 0
        %v1394 = vsel %vm1329, %v1318, 0
        %v1397 = vsel %vm1329, %v1319, 0
        %v1400 = vsel %vm1329, %v1320, 0
        %v1403 = vsel %vm1329, %v1321, 0
        %v1406 = vsel %vm1329, %v1322, 0
        %v1409 = vsel %vm1329, %v1323, 0
        %v1412 = vsel %vm1329, %v1324, 0
        %v1415 = vsel %vm1329, %v1325, 0
        %v1418 = vsel %vm1329, %v1326, 0
        %v1421 = vsel %vm1329, %v1327, 0
        %v1424 = vsel %vm1329, %v1328, 0
        %vm1426 = vcmask 1043456
        %v1428 = vsel %vm1426, %v1231, 0
        %v1431 = vsel %vm1426, %v1233, 0
        %1433 = vmatprep.subr.mxu0 %v1431
        %1434 = vmatpush1.msra.mxu0 %v1428
        %1435 = vmatprep.subr.mxu0 0.0
        %1436 = vmatpush1.msra.mxu0 0.0
        %1437 = vmatprep.subr.mxu0 0.0
        %1438 = vmatpush1.msra.mxu0 0.0
        %1439 = vmatprep.subr.mxu0 0.0
        %1440 = vmatpush1.msra.mxu0 0.0
        %1441 = vmatprep.subr.mxu0 0.0
        %1442 = vmatpush1.msra.mxu0 0.0
        %1443 = vmatprep.subr.mxu0 0.0
        %1444 = vmatpush1.msra.mxu0 0.0
        %1445 = vmatprep.subr.mxu0 0.0
        %1446 = vmatpush1.msra.mxu0 0.0
        %1447 = vmatprep.subr.mxu0 0.0
        %1448 = vmatpush1.msra.mxu0 0.0
        %1449 = vmatprep.subr.mxu0 0.0
        %1450 = vmatpush1.msra.mxu0 0.0
        %1451 = vmatprep.subr.mxu0 0.0
        %1452 = vmatpush1.msra.mxu0 0.0
        %1453 = vmatprep.subr.mxu0 0.0
        %1454 = vmatpush1.msra.mxu0 0.0
        %1455 = vmatprep.subr.mxu0 0.0
        %1456 = vmatpush1.msra.mxu0 0.0
        %1457 = vmatprep.subr.mxu0 0.0
        %1458 = vmatpush1.msra.mxu0 0.0
        %1459 = vmatprep.subr.mxu0 0.0
        %1460 = vmatpush1.msra.mxu0 0.0
        %1461 = vmatprep.subr.mxu0 0.0
        %1462 = vmatpush1.msra.mxu0 0.0
        %1463 = vmatprep.subr.mxu0 0.0
        %1464 = vmatpush1.msra.mxu0 0.0
        %1465 = vmatprep.subr.mxu0 0.0
        %1466 = vmatpush1.msra.mxu0 0.0
        %1467 = vmatprep.subr.mxu0 0.0
        %1468 = vmatpush1.msra.mxu0 0.0
        %1469 = vmatprep.subr.mxu0 0.0
        %1470 = vmatpush1.msra.mxu0 0.0
        %1471 = vmatprep.subr.mxu0 0.0
        %1472 = vmatpush1.msra.mxu0 0.0
        %1473 = vmatprep.subr.mxu0 0.0
        %1474 = vmatpush1.msra.mxu0 0.0
        %1475 = vmatprep.subr.mxu0 0.0
        %1476 = vmatpush1.msra.mxu0 0.0
        %1477 = vmatprep.subr.mxu0 0.0
        %1478 = vmatpush1.msra.mxu0 0.0
        %1479 = vmatprep.subr.mxu0 0.0
        %1480 = vmatpush1.msra.mxu0 0.0
        %1481 = vmatprep.subr.mxu0 0.0
        %1482 = vmatpush1.msra.mxu0 0.0
        %1483 = vmatprep.subr.mxu0 0.0
        %1484 = vmatpush1.msra.mxu0 0.0
        %1485 = vmatprep.subr.mxu0 0.0
        %1486 = vmatpush1.msra.mxu0 0.0
        %1487 = vmatprep.subr.mxu0 0.0
        %1488 = vmatpush1.msra.mxu0 0.0
        %1489 = vmatprep.subr.mxu0 0.0
        %1490 = vmatpush1.msra.mxu0 0.0
        %1491 = vmatprep.subr.mxu0 0.0
        %1492 = vmatpush1.msra.mxu0 0.0
        %1493 = vmatprep.subr.mxu0 0.0
        %1494 = vmatpush1.msra.mxu0 0.0
        %1495 = vmatprep.subr.mxu0 0.0
        %1496 = vmatpush1.msra.mxu0 0.0
        %1497 = vmatprep.mubr.f32.mxu0 0.0
        %1498 = vmatmul.mubr.f32.gmra.mrb[0].mxu0 %v1331
        %v1499 = vpop.f32.mrb[0].mxu0
        %v1500 = vadd.f32 0.0, %v1499
        %v1501 = vpop.f32.mrb[0].mxu0
        %v1502 = vadd.f32 0.0, %v1501
        %1503 = vmatprep.mubr.f32.mxu0 0.0
        %1504 = vmatmul.mubr.f32.gmra.mrb[0].mxu0 %v1334
        %v1505 = vpop.f32.mrb[0].mxu0
        %v1506 = vadd.f32 0.0, %v1505
        %v1507 = vpop.f32.mrb[0].mxu0
        %v1508 = vadd.f32 0.0, %v1507
        %1509 = vmatprep.mubr.f32.mxu0 0.0
        %1510 = vmatmul.mubr.f32.gmra.mrb[0].mxu0 %v1337
        %v1511 = vpop.f32.mrb[0].mxu0
        %v1512 = vadd.f32 0.0, %v1511
        %v1513 = vpop.f32.mrb[0].mxu0
        %v1514 = vadd.f32 0.0, %v1513
        %1515 = vmatprep.mubr.f32.mxu0 0.0
        %1516 = vmatmul.mubr.f32.gmra.mrb[0].mxu0 %v1340
        %v1517 = vpop.f32.mrb[0].mxu0
        %v1518 = vadd.f32 0.0, %v1517
        %v1519 = vpop.f32.mrb[0].mxu0
        %v1520 = vadd.f32 0.0, %v1519
        %1521 = vmatprep.mubr.f32.mxu0 0.0
        %1522 = vmatmul.mubr.f32.gmra.mrb[0].mxu0 %v1343
        %v1523 = vpop.f32.mrb[0].mxu0
        %v1524 = vadd.f32 0.0, %v1523
        %v1525 = vpop.f32.mrb[0].mxu0
        %v1526 = vadd.f32 0.0, %v1525
        %1527 = vmatprep.mubr.f32.mxu0 0.0
        %1528 = vmatmul.mubr.f32.gmra.mrb[0].mxu0 %v1346
        %v1529 = vpop.f32.mrb[0].mxu0
        %v1530 = vadd.f32 0.0, %v1529
        %v1531 = vpop.f32.mrb[0].mxu0
        %v1532 = vadd.f32 0.0, %v1531
        %1533 = vmatprep.mubr.f32.mxu0 0.0
        %1534 = vmatmul.mubr.f32.gmra.mrb[0].mxu0 %v1349
        %v1535 = vpop.f32.mrb[0].mxu0
        %v1536 = vadd.f32 0.0, %v1535
        %v1537 = vpop.f32.mrb[0].mxu0
        %v1538 = vadd.f32 0.0, %v1537
        %1539 = vmatprep.mubr.f32.mxu0 0.0
        %1540 = vmatmul.mubr.f32.gmra.mrb[0].mxu0 %v1352
        %v1541 = vpop.f32.mrb[0].mxu0
        %v1542 = vadd.f32 0.0, %v1541
        %v1543 = vpop.f32.mrb[0].mxu0
        %v1544 = vadd.f32 0.0, %v1543
        %1545 = vmatprep.mubr.f32.mxu0 0.0
        %1546 = vmatmul.mubr.f32.gmra.mrb[0].mxu0 %v1355
        %v1547 = vpop.f32.mrb[0].mxu0
        %v1548 = vadd.f32 0.0, %v1547
        %v1549 = vpop.f32.mrb[0].mxu0
        %v1550 = vadd.f32 0.0, %v1549
        %1551 = vmatprep.mubr.f32.mxu0 0.0
        %1552 = vmatmul.mubr.f32.gmra.mrb[0].mxu0 %v1358
        %v1553 = vpop.f32.mrb[0].mxu0
        %v1554 = vadd.f32 0.0, %v1553
        %v1555 = vpop.f32.mrb[0].mxu0
        %v1556 = vadd.f32 0.0, %v1555
        %1557 = vmatprep.mubr.f32.mxu0 0.0
        %1558 = vmatmul.mubr.f32.gmra.mrb[0].mxu0 %v1361
        %v1559 = vpop.f32.mrb[0].mxu0
        %v1560 = vadd.f32 0.0, %v1559
        %v1561 = vpop.f32.mrb[0].mxu0
        %v1562 = vadd.f32 0.0, %v1561
        %1563 = vmatprep.mubr.f32.mxu0 0.0
        %1564 = vmatmul.mubr.f32.gmra.mrb[0].mxu0 %v1364
        %v1565 = vpop.f32.mrb[0].mxu0
        %v1566 = vadd.f32 0.0, %v1565
        %v1567 = vpop.f32.mrb[0].mxu0
        %v1568 = vadd.f32 0.0, %v1567
        %1569 = vmatprep.mubr.f32.mxu0 0.0
        %1570 = vmatmul.mubr.f32.gmra.mrb[0].mxu0 %v1367
        %v1571 = vpop.f32.mrb[0].mxu0
        %v1572 = vadd.f32 0.0, %v1571
        %v1573 = vpop.f32.mrb[0].mxu0
        %v1574 = vadd.f32 0.0, %v1573
        %1575 = vmatprep.mubr.f32.mxu0 0.0
        %1576 = vmatmul.mubr.f32.gmra.mrb[0].mxu0 %v1370
        %v1577 = vpop.f32.mrb[0].mxu0
        %v1578 = vadd.f32 0.0, %v1577
        %v1579 = vpop.f32.mrb[0].mxu0
        %v1580 = vadd.f32 0.0, %v1579
        %1581 = vmatprep.mubr.f32.mxu0 0.0
        %1582 = vmatmul.mubr.f32.gmra.mrb[0].mxu0 %v1373
        %v1583 = vpop.f32.mrb[0].mxu0
        %v1584 = vadd.f32 0.0, %v1583
        %v1585 = vpop.f32.mrb[0].mxu0
        %v1586 = vadd.f32 0.0, %v1585
        %1587 = vmatprep.mubr.f32.mxu0 0.0
        %1588 = vmatmul.mubr.f32.gmra.mrb[0].mxu0 %v1376
        %v1589 = vpop.f32.mrb[0].mxu0
        %v1590 = vadd.f32 0.0, %v1589
        %v1591 = vpop.f32.mrb[0].mxu0
        %v1592 = vadd.f32 0.0, %v1591
        %1593 = vmatprep.mubr.f32.mxu0 0.0
        %1594 = vmatmul.mubr.f32.gmra.mrb[0].mxu0 %v1379
        %v1595 = vpop.f32.mrb[0].mxu0
        %v1596 = vadd.f32 0.0, %v1595
        %v1597 = vpop.f32.mrb[0].mxu0
        %v1598 = vadd.f32 0.0, %v1597
        %1599 = vmatprep.mubr.f32.mxu0 0.0
        %1600 = vmatmul.mubr.f32.gmra.mrb[0].mxu0 %v1382
        %v1601 = vpop.f32.mrb[0].mxu0
        %v1602 = vadd.f32 0.0, %v1601
        %v1603 = vpop.f32.mrb[0].mxu0
        %v1604 = vadd.f32 0.0, %v1603
        %1605 = vmatprep.mubr.f32.mxu0 0.0
        %1606 = vmatmul.mubr.f32.gmra.mrb[0].mxu0 %v1385
        %v1607 = vpop.f32.mrb[0].mxu0
        %v1608 = vadd.f32 0.0, %v1607
        %v1609 = vpop.f32.mrb[0].mxu0
        %v1610 = vadd.f32 0.0, %v1609
        %1611 = vmatprep.mubr.f32.mxu0 0.0
        %1612 = vmatmul.mubr.f32.gmra.mrb[0].mxu0 %v1388
        %v1613 = vpop.f32.mrb[0].mxu0
        %v1614 = vadd.f32 0.0, %v1613
        %v1615 = vpop.f32.mrb[0].mxu0
        %v1616 = vadd.f32 0.0, %v1615
        %1617 = vmatprep.mubr.f32.mxu0 0.0
        %1618 = vmatmul.mubr.f32.gmra.mrb[0].mxu0 %v1391
        %v1619 = vpop.f32.mrb[0].mxu0
        %v1620 = vadd.f32 0.0, %v1619
        %v1621 = vpop.f32.mrb[0].mxu0
        %v1622 = vadd.f32 0.0, %v1621
        %1623 = vmatprep.mubr.f32.mxu0 0.0
        %1624 = vmatmul.mubr.f32.gmra.mrb[0].mxu0 %v1394
        %v1625 = vpop.f32.mrb[0].mxu0
        %v1626 = vadd.f32 0.0, %v1625
        %v1627 = vpop.f32.mrb[0].mxu0
        %v1628 = vadd.f32 0.0, %v1627
        %1629 = vmatprep.mubr.f32.mxu0 0.0
        %1630 = vmatmul.mubr.f32.gmra.mrb[0].mxu0 %v1397
        %v1631 = vpop.f32.mrb[0].mxu0
        %v1632 = vadd.f32 0.0, %v1631
        %v1633 = vpop.f32.mrb[0].mxu0
        %v1634 = vadd.f32 0.0, %v1633
        %1635 = vmatprep.mubr.f32.mxu0 0.0
        %1636 = vmatmul.mubr.f32.gmra.mrb[0].mxu0 %v1400
        %v1637 = vpop.f32.mrb[0].mxu0
        %v1638 = vadd.f32 0.0, %v1637
        %v1639 = vpop.f32.mrb[0].mxu0
        %v1640 = vadd.f32 0.0, %v1639
        %1641 = vmatprep.mubr.f32.mxu0 0.0
        %1642 = vmatmul.mubr.f32.gmra.mrb[0].mxu0 %v1403
        %v1643 = vpop.f32.mrb[0].mxu0
        %v1644 = vadd.f32 0.0, %v1643
        %v1645 = vpop.f32.mrb[0].mxu0
        %v1646 = vadd.f32 0.0, %v1645
        %1647 = vmatprep.mubr.f32.mxu0 0.0
        %1648 = vmatmul.mubr.f32.gmra.mrb[0].mxu0 %v1406
        %v1649 = vpop.f32.mrb[0].mxu0
        %v1650 = vadd.f32 0.0, %v1649
        %v1651 = vpop.f32.mrb[0].mxu0
        %v1652 = vadd.f32 0.0, %v1651
        %1653 = vmatprep.mubr.f32.mxu0 0.0
        %1654 = vmatmul.mubr.f32.gmra.mrb[0].mxu0 %v1409
        %v1655 = vpop.f32.mrb[0].mxu0
        %v1656 = vadd.f32 0.0, %v1655
        %v1657 = vpop.f32.mrb[0].mxu0
        %v1658 = vadd.f32 0.0, %v1657
        %1659 = vmatprep.mubr.f32.mxu0 0.0
        %1660 = vmatmul.mubr.f32.gmra.mrb[0].mxu0 %v1412
        %v1661 = vpop.f32.mrb[0].mxu0
        %v1662 = vadd.f32 0.0, %v1661
        %v1663 = vpop.f32.mrb[0].mxu0
        %v1664 = vadd.f32 0.0, %v1663
        %1665 = vmatprep.mubr.f32.mxu0 0.0
        %1666 = vmatmul.mubr.f32.gmra.mrb[0].mxu0 %v1415
        %v1667 = vpop.f32.mrb[0].mxu0
        %v1668 = vadd.f32 0.0, %v1667
        %v1669 = vpop.f32.mrb[0].mxu0
        %v1670 = vadd.f32 0.0, %v1669
        %1671 = vmatprep.mubr.f32.mxu0 0.0
        %1672 = vmatmul.mubr.f32.gmra.mrb[0].mxu0 %v1418
        %v1673 = vpop.f32.mrb[0].mxu0
        %v1674 = vadd.f32 0.0, %v1673
        %v1675 = vpop.f32.mrb[0].mxu0
        %v1676 = vadd.f32 0.0, %v1675
        %1677 = vmatprep.mubr.f32.mxu0 0.0
        %1678 = vmatmul.mubr.f32.gmra.mrb[0].mxu0 %v1421
        %v1679 = vpop.f32.mrb[0].mxu0
        %v1680 = vadd.f32 0.0, %v1679
        %v1681 = vpop.f32.mrb[0].mxu0
        %v1682 = vadd.f32 0.0, %v1681
        %1683 = vmatprep.mubr.f32.mxu0 0.0
        %1684 = vmatmul.mubr.f32.gmra.mrb[0].mxu0 %v1424
        %v1685 = vpop.f32.mrb[0].mxu0
        %v1686 = vadd.f32 0.0, %v1685
        %v1687 = vpop.f32.mrb[0].mxu0
        %v1688 = vadd.f32 0.0, %v1687
        %1689 = vdwg.mxu0
        %v1690 = vmax.f32 %v1500, %v1512
        %v1691 = vmax.f32 %v1506, %v1518
        %v1692 = vmax.f32 %v1690, %v1524
        %v1693 = vmax.f32 %v1691, %v1530
        %v1694 = vmax.f32 %v1692, %v1536
        %v1695 = vmax.f32 %v1693, %v1542
        %v1696 = vmax.f32 %v1694, %v1548
        %v1697 = vmax.f32 %v1695, %v1554
        %v1698 = vmax.f32 %v1696, %v1560
        %v1699 = vmax.f32 %v1697, %v1566
        %v1700 = vmax.f32 %v1698, %v1572
        %v1701 = vmax.f32 %v1699, %v1578
        %v1702 = vmax.f32 %v1700, %v1584
        %v1703 = vmax.f32 %v1701, %v1590
        %v1704 = vmax.f32 %v1702, %v1596
        %v1705 = vmax.f32 %v1703, %v1602
        %v1706 = vmax.f32 %v1704, %v1608
        %v1707 = vmax.f32 %v1705, %v1614
        %v1708 = vmax.f32 %v1706, %v1620
        %v1709 = vmax.f32 %v1707, %v1626
        %v1710 = vmax.f32 %v1708, %v1632
        %v1711 = vmax.f32 %v1709, %v1638
        %v1712 = vmax.f32 %v1710, %v1644
        %v1713 = vmax.f32 %v1711, %v1650
        %v1714 = vmax.f32 %v1712, %v1656
        %v1715 = vmax.f32 %v1713, %v1662
        %v1716 = vmax.f32 %v1714, %v1668
        %v1717 = vmax.f32 %v1715, %v1674
        %v1718 = vmax.f32 %v1716, %v1680
        %v1719 = vmax.f32 %v1717, %v1686
        %v1720 = vmax.f32 %v1718, %v1719
        %v1721 = vrot.slane %v1720, 4
        %v1722 = vmax.f32 %v1720, %v1721
        %v1723 = vrot.slane %v1722, 2
        %v1724 = vmax.f32 %v1722, %v1723
        %v1725 = vrot.slane %v1724, 1
        %v1726 = vmax.f32 %v1724, %v1725
        %v1727 = vmax.f32 %v1502, %v1514
        %v1728 = vmax.f32 %v1508, %v1520
        %v1729 = vmax.f32 %v1727, %v1526
        %v1730 = vmax.f32 %v1728, %v1532
        %v1731 = vmax.f32 %v1729, %v1538
        %v1732 = vmax.f32 %v1730, %v1544
        %v1733 = vmax.f32 %v1731, %v1550
        %v1734 = vmax.f32 %v1732, %v1556
        %v1735 = vmax.f32 %v1733, %v1562
        %v1736 = vmax.f32 %v1734, %v1568
        %v1737 = vmax.f32 %v1735, %v1574
        %v1738 = vmax.f32 %v1736, %v1580
        %v1739 = vmax.f32 %v1737, %v1586
        %v1740 = vmax.f32 %v1738, %v1592
        %v1741 = vmax.f32 %v1739, %v1598
        %v1742 = vmax.f32 %v1740, %v1604
        %v1743 = vmax.f32 %v1741, %v1610
        %v1744 = vmax.f32 %v1742, %v1616
        %v1745 = vmax.f32 %v1743, %v1622
        %v1746 = vmax.f32 %v1744, %v1628
        %v1747 = vmax.f32 %v1745, %v1634
        %v1748 = vmax.f32 %v1746, %v1640
        %v1749 = vmax.f32 %v1747, %v1646
        %v1750 = vmax.f32 %v1748, %v1652
        %v1751 = vmax.f32 %v1749, %v1658
        %v1752 = vmax.f32 %v1750, %v1664
        %v1753 = vmax.f32 %v1751, %v1670
        %v1754 = vmax.f32 %v1752, %v1676
        %v1755 = vmax.f32 %v1753, %v1682
        %v1756 = vmax.f32 %v1754, %v1688
        %v1757 = vmax.f32 %v1755, %v1756
        %v1758 = vrot.slane %v1757, 4
        %v1759 = vmax.f32 %v1757, %v1758
        %v1760 = vrot.slane %v1759, 2
        %v1761 = vmax.f32 %v1759, %v1760
        %v1762 = vrot.slane %v1761, 1
        %v1763 = vmax.f32 %v1761, %v1762
        %v1764 = vsub.f32 %v1500, %v1726
        %v1765 = vsub.f32 %v1502, %v1763
        %v1766 = vsub.f32 %v1506, %v1726
        %v1767 = vsub.f32 %v1508, %v1763
        %v1768 = vsub.f32 %v1512, %v1726
        %v1769 = vsub.f32 %v1514, %v1763
        %v1770 = vsub.f32 %v1518, %v1726
        %v1771 = vsub.f32 %v1520, %v1763
        %v1772 = vsub.f32 %v1524, %v1726
        %v1773 = vsub.f32 %v1526, %v1763
        %v1774 = vsub.f32 %v1530, %v1726
        %v1775 = vsub.f32 %v1532, %v1763
        %v1776 = vsub.f32 %v1536, %v1726
        %v1777 = vsub.f32 %v1538, %v1763
        %v1778 = vsub.f32 %v1542, %v1726
        %v1779 = vsub.f32 %v1544, %v1763
        %v1780 = vsub.f32 %v1548, %v1726
        %v1781 = vsub.f32 %v1550, %v1763
        %v1782 = vsub.f32 %v1554, %v1726
        %v1783 = vsub.f32 %v1556, %v1763
        %v1784 = vsub.f32 %v1560, %v1726
        %v1785 = vsub.f32 %v1562, %v1763
        %v1786 = vsub.f32 %v1566, %v1726
        %v1787 = vsub.f32 %v1568, %v1763
        %v1788 = vsub.f32 %v1572, %v1726
        %v1789 = vsub.f32 %v1574, %v1763
        %v1790 = vsub.f32 %v1578, %v1726
        %v1791 = vsub.f32 %v1580, %v1763
        %v1792 = vsub.f32 %v1584, %v1726
        %v1793 = vsub.f32 %v1586, %v1763
        %v1794 = vsub.f32 %v1590, %v1726
        %v1795 = vsub.f32 %v1592, %v1763
        %v1796 = vsub.f32 %v1596, %v1726
        %v1797 = vsub.f32 %v1598, %v1763
        %v1798 = vsub.f32 %v1602, %v1726
        %v1799 = vsub.f32 %v1604, %v1763
        %v1800 = vsub.f32 %v1608, %v1726
        %v1801 = vsub.f32 %v1610, %v1763
        %v1802 = vsub.f32 %v1614, %v1726
        %v1803 = vsub.f32 %v1616, %v1763
        %v1804 = vsub.f32 %v1620, %v1726
        %v1805 = vsub.f32 %v1622, %v1763
        %v1806 = vsub.f32 %v1626, %v1726
        %v1807 = vsub.f32 %v1628, %v1763
        %v1808 = vsub.f32 %v1632, %v1726
        %v1809 = vsub.f32 %v1634, %v1763
        %v1810 = vsub.f32 %v1638, %v1726
        %v1811 = vsub.f32 %v1640, %v1763
        %v1812 = vsub.f32 %v1644, %v1726
        %v1813 = vsub.f32 %v1646, %v1763
        %v1814 = vsub.f32 %v1650, %v1726
        %v1815 = vsub.f32 %v1652, %v1763
        %v1816 = vsub.f32 %v1656, %v1726
        %v1817 = vsub.f32 %v1658, %v1763
        %v1818 = vsub.f32 %v1662, %v1726
        %v1819 = vsub.f32 %v1664, %v1763
        %v1820 = vsub.f32 %v1668, %v1726
        %v1821 = vsub.f32 %v1670, %v1763
        %v1822 = vsub.f32 %v1674, %v1726
        %v1823 = vsub.f32 %v1676, %v1763
        %v1824 = vsub.f32 %v1680, %v1726
        %v1825 = vsub.f32 %v1682, %v1763
        %v1826 = vsub.f32 %v1686, %v1726
        %v1827 = vsub.f32 %v1688, %v1763
        %v1828 = vmul.f32 %v1764, 1.442695
        %v1829 = vpow.pop %v1828
        %v1830 = vmul.f32 %v1765, 1.442695
        %v1831 = vpow.pop %v1830
        %v1832 = vmul.f32 %v1766, 1.442695
        %v1833 = vpow.pop %v1832
        %v1834 = vmul.f32 %v1767, 1.442695
        %v1835 = vpow.pop %v1834
        %v1836 = vmul.f32 %v1768, 1.442695
        %v1837 = vpow.pop %v1836
        %v1838 = vmul.f32 %v1769, 1.442695
        %v1839 = vpow.pop %v1838
        %v1840 = vmul.f32 %v1770, 1.442695
        %v1841 = vpow.pop %v1840
        %v1842 = vmul.f32 %v1771, 1.442695
        %v1843 = vpow.pop %v1842
        %v1844 = vmul.f32 %v1772, 1.442695
        %v1845 = vpow.pop %v1844
        %v1846 = vmul.f32 %v1773, 1.442695
        %v1847 = vpow.pop %v1846
        %v1848 = vmul.f32 %v1774, 1.442695
        %v1849 = vpow.pop %v1848
        %v1850 = vmul.f32 %v1775, 1.442695
        %v1851 = vpow.pop %v1850
        %v1852 = vmul.f32 %v1776, 1.442695
        %v1853 = vpow.pop %v1852
        %v1854 = vmul.f32 %v1777, 1.442695
        %v1855 = vpow.pop %v1854
        %v1856 = vmul.f32 %v1778, 1.442695
        %v1857 = vpow.pop %v1856
        %v1858 = vmul.f32 %v1779, 1.442695
        %v1859 = vpow.pop %v1858
        %v1860 = vmul.f32 %v1780, 1.442695
        %v1861 = vpow.pop %v1860
        %v1862 = vmul.f32 %v1781, 1.442695
        %v1863 = vpow.pop %v1862
        %v1864 = vmul.f32 %v1782, 1.442695
        %v1865 = vpow.pop %v1864
        %v1866 = vmul.f32 %v1783, 1.442695
        %v1867 = vpow.pop %v1866
        %v1868 = vmul.f32 %v1784, 1.442695
        %v1869 = vpow.pop %v1868
        %v1870 = vmul.f32 %v1785, 1.442695
        %v1871 = vpow.pop %v1870
        %v1872 = vmul.f32 %v1786, 1.442695
        %v1873 = vpow.pop %v1872
        %v1874 = vmul.f32 %v1787, 1.442695
        %v1875 = vpow.pop %v1874
        %v1876 = vmul.f32 %v1788, 1.442695
        %v1877 = vpow.pop %v1876
        %v1878 = vmul.f32 %v1789, 1.442695
        %v1879 = vpow.pop %v1878
        %v1880 = vmul.f32 %v1790, 1.442695
        %v1881 = vpow.pop %v1880
        %v1882 = vmul.f32 %v1791, 1.442695
        %v1883 = vpow.pop %v1882
        %v1884 = vmul.f32 %v1792, 1.442695
        %v1885 = vpow.pop %v1884
        %v1886 = vmul.f32 %v1793, 1.442695
        %v1887 = vpow.pop %v1886
        %v1888 = vmul.f32 %v1794, 1.442695
        %v1889 = vpow.pop %v1888
        %v1890 = vmul.f32 %v1795, 1.442695
        %v1891 = vpow.pop %v1890
        %v1892 = vmul.f32 %v1796, 1.442695
        %v1893 = vpow.pop %v1892
        %v1894 = vmul.f32 %v1797, 1.442695
        %v1895 = vpow.pop %v1894
        %v1896 = vmul.f32 %v1798, 1.442695
        %v1897 = vpow.pop %v1896
        %v1898 = vmul.f32 %v1799, 1.442695
        %v1899 = vpow.pop %v1898
        %v1900 = vmul.f32 %v1800, 1.442695
        %v1901 = vpow.pop %v1900
        %v1902 = vmul.f32 %v1801, 1.442695
        %v1903 = vpow.pop %v1902
        %v1904 = vmul.f32 %v1802, 1.442695
        %v1905 = vpow.pop %v1904
        %v1906 = vmul.f32 %v1803, 1.442695
        %v1907 = vpow.pop %v1906
        %v1908 = vmul.f32 %v1804, 1.442695
        %v1909 = vpow.pop %v1908
        %v1910 = vmul.f32 %v1805, 1.442695
        %v1911 = vpow.pop %v1910
        %v1912 = vmul.f32 %v1806, 1.442695
        %v1913 = vpow.pop %v1912
        %v1914 = vmul.f32 %v1807, 1.442695
        %v1915 = vpow.pop %v1914
        %v1916 = vmul.f32 %v1808, 1.442695
        %v1917 = vpow.pop %v1916
        %v1918 = vmul.f32 %v1809, 1.442695
        %v1919 = vpow.pop %v1918
        %v1920 = vmul.f32 %v1810, 1.442695
        %v1921 = vpow.pop %v1920
        %v1922 = vmul.f32 %v1811, 1.442695
        %v1923 = vpow.pop %v1922
        %v1924 = vmul.f32 %v1812, 1.442695
        %v1925 = vpow.pop %v1924
        %v1926 = vmul.f32 %v1813, 1.442695
        %v1927 = vpow.pop %v1926
        %v1928 = vmul.f32 %v1814, 1.442695
        %v1929 = vpow.pop %v1928
        %v1930 = vmul.f32 %v1815, 1.442695
        %v1931 = vpow.pop %v1930
        %v1932 = vmul.f32 %v1816, 1.442695
        %v1933 = vpow.pop %v1932
        %v1934 = vmul.f32 %v1817, 1.442695
        %v1935 = vpow.pop %v1934
        %v1936 = vmul.f32 %v1818, 1.442695
        %v1937 = vpow.pop %v1936
        %v1938 = vmul.f32 %v1819, 1.442695
        %v1939 = vpow.pop %v1938
        %v1940 = vmul.f32 %v1820, 1.442695
        %v1941 = vpow.pop %v1940
        %v1942 = vmul.f32 %v1821, 1.442695
        %v1943 = vpow.pop %v1942
        %v1944 = vmul.f32 %v1822, 1.442695
        %v1945 = vpow.pop %v1944
        %v1946 = vmul.f32 %v1823, 1.442695
        %v1947 = vpow.pop %v1946
        %v1948 = vmul.f32 %v1824, 1.442695
        %v1949 = vpow.pop %v1948
        %v1950 = vmul.f32 %v1825, 1.442695
        %v1951 = vpow.pop %v1950
        %v1952 = vmul.f32 %v1826, 1.442695
        %v1953 = vpow.pop %v1952
        %v1954 = vmul.f32 %v1827, 1.442695
        %v1955 = vpow.pop %v1954
        %v1956 = vadd.f32 %v1829, %v1833
        %v1957 = vadd.f32 %v1956, %v1837
        %v1958 = vadd.f32 %v1957, %v1841
        %v1959 = vadd.f32 %v1958, %v1845
        %v1960 = vadd.f32 %v1959, %v1849
        %v1961 = vadd.f32 %v1960, %v1853
        %v1962 = vadd.f32 %v1961, %v1857
        %v1963 = vadd.f32 %v1962, %v1861
        %v1964 = vadd.f32 %v1963, %v1865
        %v1965 = vadd.f32 %v1964, %v1869
        %v1966 = vadd.f32 %v1965, %v1873
        %v1967 = vadd.f32 %v1966, %v1877
        %v1968 = vadd.f32 %v1967, %v1881
        %v1969 = vadd.f32 %v1968, %v1885
        %v1970 = vadd.f32 %v1969, %v1889
        %v1971 = vadd.f32 %v1970, %v1893
        %v1972 = vadd.f32 %v1971, %v1897
        %v1973 = vadd.f32 %v1972, %v1901
        %v1974 = vadd.f32 %v1973, %v1905
        %v1975 = vadd.f32 %v1974, %v1909
        %v1976 = vadd.f32 %v1975, %v1913
        %v1977 = vadd.f32 %v1976, %v1917
        %v1978 = vadd.f32 %v1977, %v1921
        %v1979 = vadd.f32 %v1978, %v1925
        %v1980 = vadd.f32 %v1979, %v1929
        %v1981 = vadd.f32 %v1980, %v1933
        %v1982 = vadd.f32 %v1981, %v1937
        %v1983 = vadd.f32 %v1982, %v1941
        %v1984 = vadd.f32 %v1983, %v1945
        %v1985 = vadd.f32 %v1984, %v1949
        %v1986 = vadd.f32 %v1985, %v1953
        %v1987 = vrot.slane %v1986, 4
        %v1988 = vadd.f32 %v1986, %v1987
        %v1989 = vrot.slane %v1988, 2
        %v1990 = vadd.f32 %v1988, %v1989
        %v1991 = vrot.slane %v1990, 1
        %v1992 = vadd.f32 %v1990, %v1991
        %v1993 = vadd.f32 %v1831, %v1835
        %v1994 = vadd.f32 %v1993, %v1839
        %v1995 = vadd.f32 %v1994, %v1843
        %v1996 = vadd.f32 %v1995, %v1847
        %v1997 = vadd.f32 %v1996, %v1851
        %v1998 = vadd.f32 %v1997, %v1855
        %v1999 = vadd.f32 %v1998, %v1859
        %v2000 = vadd.f32 %v1999, %v1863
        %v2001 = vadd.f32 %v2000, %v1867
        %v2002 = vadd.f32 %v2001, %v1871
        %v2003 = vadd.f32 %v2002, %v1875
        %v2004 = vadd.f32 %v2003, %v1879
        %v2005 = vadd.f32 %v2004, %v1883
        %v2006 = vadd.f32 %v2005, %v1887
        %v2007 = vadd.f32 %v2006, %v1891
        %v2008 = vadd.f32 %v2007, %v1895
        %v2009 = vadd.f32 %v2008, %v1899
        %v2010 = vadd.f32 %v2009, %v1903
        %v2011 = vadd.f32 %v2010, %v1907
        %v2012 = vadd.f32 %v2011, %v1911
        %v2013 = vadd.f32 %v2012, %v1915
        %v2014 = vadd.f32 %v2013, %v1919
        %v2015 = vadd.f32 %v2014, %v1923
        %v2016 = vadd.f32 %v2015, %v1927
        %v2017 = vadd.f32 %v2016, %v1931
        %v2018 = vadd.f32 %v2017, %v1935
        %v2019 = vadd.f32 %v2018, %v1939
        %v2020 = vadd.f32 %v2019, %v1943
        %v2021 = vadd.f32 %v2020, %v1947
        %v2022 = vadd.f32 %v2021, %v1951
        %v2023 = vadd.f32 %v2022, %v1955
        %v2024 = vrot.slane %v2023, 4
        %v2025 = vadd.f32 %v2023, %v2024
        %v2026 = vrot.slane %v2025, 2
        %v2027 = vadd.f32 %v2025, %v2026
        %v2028 = vrot.slane %v2027, 1
        %v2029 = vadd.f32 %v2027, %v2028
        %v2030 = vrcp.pop %v1992
        %v2031 = vmul.f32 1.0, %v2030
        %v2032 = vrcp.pop %v2029
        %v2033 = vmul.f32 1.0, %v2032
        %2034 = vmatprep.subr.mxu0 %v1831
        %2035 = vmatpush1.msra.mxu0 %v1829
        %2036 = vmatprep.subr.mxu0 %v1835
        %2037 = vmatpush1.msra.mxu0 %v1833
        %2038 = vmatprep.subr.mxu0 %v1839
        %2039 = vmatpush1.msra.mxu0 %v1837
        %2040 = vmatprep.subr.mxu0 %v1843
        %2041 = vmatpush1.msra.mxu0 %v1841
        %2042 = vmatprep.subr.mxu0 %v1847
        %2043 = vmatpush1.msra.mxu0 %v1845
        %2044 = vmatprep.subr.mxu0 %v1851
        %2045 = vmatpush1.msra.mxu0 %v1849
        %2046 = vmatprep.subr.mxu0 %v1855
        %2047 = vmatpush1.msra.mxu0 %v1853
        %2048 = vmatprep.subr.mxu0 %v1859
        %2049 = vmatpush1.msra.mxu0 %v1857
        %2050 = vmatprep.subr.mxu0 %v1863
        %2051 = vmatpush1.msra.mxu0 %v1861
        %2052 = vmatprep.subr.mxu0 %v1867
        %2053 = vmatpush1.msra.mxu0 %v1865
        %2054 = vmatprep.subr.mxu0 %v1871
        %2055 = vmatpush1.msra.mxu0 %v1869
        %2056 = vmatprep.subr.mxu0 %v1875
        %2057 = vmatpush1.msra.mxu0 %v1873
        %2058 = vmatprep.subr.mxu0 %v1879
        %2059 = vmatpush1.msra.mxu0 %v1877
        %2060 = vmatprep.subr.mxu0 %v1883
        %2061 = vmatpush1.msra.mxu0 %v1881
        %2062 = vmatprep.subr.mxu0 %v1887
        %2063 = vmatpush1.msra.mxu0 %v1885
        %2064 = vmatprep.subr.mxu0 %v1891
        %2065 = vmatpush1.msra.mxu0 %v1889
        %2066 = vmatprep.subr.mxu0 %v1895
        %2067 = vmatpush1.msra.mxu0 %v1893
        %2068 = vmatprep.subr.mxu0 %v1899
        %2069 = vmatpush1.msra.mxu0 %v1897
        %2070 = vmatprep.subr.mxu0 %v1903
        %2071 = vmatpush1.msra.mxu0 %v1901
        %2072 = vmatprep.subr.mxu0 %v1907
        %2073 = vmatpush1.msra.mxu0 %v1905
        %2074 = vmatprep.subr.mxu0 %v1911
        %2075 = vmatpush1.msra.mxu0 %v1909
        %2076 = vmatprep.subr.mxu0 %v1915
        %2077 = vmatpush1.msra.mxu0 %v1913
        %2078 = vmatprep.subr.mxu0 %v1919
        %2079 = vmatpush1.msra.mxu0 %v1917
        %2080 = vmatprep.subr.mxu0 %v1923
        %2081 = vmatpush1.msra.mxu0 %v1921
        %2082 = vmatprep.subr.mxu0 %v1927
        %2083 = vmatpush1.msra.mxu0 %v1925
        %2084 = vmatprep.subr.mxu0 %v1931
        %2085 = vmatpush1.msra.mxu0 %v1929
        %2086 = vmatprep.subr.mxu0 %v1935
        %2087 = vmatpush1.msra.mxu0 %v1933
        %2088 = vmatprep.subr.mxu0 %v1939
        %2089 = vmatpush1.msra.mxu0 %v1937
        %2090 = vmatprep.subr.mxu0 %v1943
        %2091 = vmatpush1.msra.mxu0 %v1941
        %2092 = vmatprep.subr.mxu0 %v1947
        %2093 = vmatpush1.msra.mxu0 %v1945
        %2094 = vmatprep.subr.mxu0 %v1951
        %2095 = vmatpush1.msra.mxu0 %v1949
        %2096 = vmatprep.subr.mxu0 %v1955
        %2097 = vmatpush1.msra.mxu0 %v1953
        %2098 = vmatprep.mubr.f32.mxu0 %v1257
        %2099 = vmatmul.mubr.f32.gmra.mrb[0].mxu0 %v1255
        %v2100 = vpop.f32.mrb[0].mxu0
        %v2101 = vadd.f32 0.0, %v2100
        %v2102 = vpop.f32.mrb[0].mxu0
        %v2103 = vadd.f32 0.0, %v2102
        %2104 = vdwg.mxu0
        %v2105 = vmul.f32 %v2101, %v2031
        %v2106 = vmul.f32 %v2103, %v2033
        %v2107 = vld [vmem:[%s3 + $0x30] sm:$0xff]
        %v2108 = vld [vmem:[%s3 + $0x38] sm:$0xff]
        %2109 = vrot.lane.b32.xlu0 %v1281, 124
        %v2110 = vpop.permute.xlu0 %2109
        %2111 = vrot.lane.b32.xlu0 %v1282, 124
        %v2112 = vpop.permute.xlu0 %2111
        %2113 = vrot.lane.b32.xlu0 %v1283, 124
        %v2114 = vpop.permute.xlu0 %2113
        %2115 = vrot.lane.b32.xlu0 %v1284, 124
        %v2116 = vpop.permute.xlu0 %2115
        %2117 = vrot.lane.b32.xlu0 %v1285, 124
        %v2118 = vpop.permute.xlu0 %2117
        %2119 = vrot.lane.b32.xlu0 %v1286, 124
        %v2120 = vpop.permute.xlu0 %2119
        %2121 = vrot.lane.b32.xlu0 %v1287, 124
        %v2122 = vpop.permute.xlu0 %2121
        %2123 = vrot.lane.b32.xlu0 %v1288, 124
        %v2124 = vpop.permute.xlu0 %2123
        %2125 = vrot.lane.b32.xlu0 %v1289, 124
        %v2126 = vpop.permute.xlu0 %2125
        %2127 = vrot.lane.b32.xlu0 %v1290, 124
        %v2128 = vpop.permute.xlu0 %2127
        %2129 = vrot.lane.b32.xlu0 %v1291, 124
        %v2130 = vpop.permute.xlu0 %2129
        %2131 = vrot.lane.b32.xlu0 %v1292, 124
        %v2132 = vpop.permute.xlu0 %2131
        %2133 = vrot.lane.b32.xlu0 %v1293, 124
        %v2134 = vpop.permute.xlu0 %2133
        %2135 = vrot.lane.b32.xlu0 %v1294, 124
        %v2136 = vpop.permute.xlu0 %2135
        %2137 = vrot.lane.b32.xlu0 %v1295, 124
        %v2138 = vpop.permute.xlu0 %2137
        %2139 = vrot.lane.b32.xlu0 %v1296, 124
        %v2140 = vpop.permute.xlu0 %2139
        %2141 = vrot.lane.b32.xlu0 %v1313, 124
        %v2142 = vpop.permute.xlu0 %2141
        %2143 = vrot.lane.b32.xlu0 %v1314, 124
        %v2144 = vpop.permute.xlu0 %2143
        %2145 = vrot.lane.b32.xlu0 %v1315, 124
        %v2146 = vpop.permute.xlu0 %2145
        %2147 = vrot.lane.b32.xlu0 %v1316, 124
        %v2148 = vpop.permute.xlu0 %2147
        %2149 = vrot.lane.b32.xlu0 %v1317, 124
        %v2150 = vpop.permute.xlu0 %2149
        %2151 = vrot.lane.b32.xlu0 %v1318, 124
        %v2152 = vpop.permute.xlu0 %2151
        %2153 = vrot.lane.b32.xlu0 %v1319, 124
        %v2154 = vpop.permute.xlu0 %2153
        %2155 = vrot.lane.b32.xlu0 %v1320, 124
        %v2156 = vpop.permute.xlu0 %2155
        %2157 = vrot.lane.b32.xlu0 %v1321, 124
        %v2158 = vpop.permute.xlu0 %2157
        %2159 = vrot.lane.b32.xlu0 %v1322, 124
        %v2160 = vpop.permute.xlu0 %2159
        %2161 = vrot.lane.b32.xlu0 %v1323, 124
        %v2162 = vpop.permute.xlu0 %2161
        %2163 = vrot.lane.b32.xlu0 %v1324, 124
        %v2164 = vpop.permute.xlu0 %2163
        %2165 = vrot.lane.b32.xlu0 %v1325, 124
        %v2166 = vpop.permute.xlu0 %2165
        %2167 = vrot.lane.b32.xlu0 %v1326, 124
        %v2168 = vpop.permute.xlu0 %2167
        %2169 = vrot.lane.b32.xlu0 %v1327, 124
        %v2170 = vpop.permute.xlu0 %2169
        %2171 = vrot.lane.b32.xlu0 %v1328, 124
        %v2172 = vpop.permute.xlu0 %2171
        %v2173 = vrot.slane %v1231, 4
        %v2174 = vrot.slane %v1233, 4
        %v2175 = vsel %vm1329, %v2110, 0
        %v2177 = vsel %vm1329, %v2112, 0
        %v2179 = vsel %vm1329, %v2114, 0
        %v2181 = vsel %vm1329, %v2116, 0
        %v2183 = vsel %vm1329, %v2118, 0
        %v2185 = vsel %vm1329, %v2120, 0
        %v2187 = vsel %vm1329, %v2122, 0
        %v2189 = vsel %vm1329, %v2124, 0
        %v2191 = vsel %vm1329, %v2126, 0
        %v2193 = vsel %vm1329, %v2128, 0
        %v2195 = vsel %vm1329, %v2130, 0
        %v2197 = vsel %vm1329, %v2132, 0
        %v2199 = vsel %vm1329, %v2134, 0
        %v2201 = vsel %vm1329, %v2136, 0
        %v2203 = vsel %vm1329, %v2138, 0
        %v2205 = vsel %vm1329, %v2140, 0
        %v2207 = vsel %vm1329, %v2142, 0
        %v2209 = vsel %vm1329, %v2144, 0
        %v2211 = vsel %vm1329, %v2146, 0
        %v2213 = vsel %vm1329, %v2148, 0
        %v2215 = vsel %vm1329, %v2150, 0
        %v2217 = vsel %vm1329, %v2152, 0
        %v2219 = vsel %vm1329, %v2154, 0
        %v2221 = vsel %vm1329, %v2156, 0
        %v2223 = vsel %vm1329, %v2158, 0
        %v2225 = vsel %vm1329, %v2160, 0
        %v2227 = vsel %vm1329, %v2162, 0
        %v2229 = vsel %vm1329, %v2164, 0
        %v2231 = vsel %vm1329, %v2166, 0
        %v2233 = vsel %vm1329, %v2168, 0
        %v2235 = vsel %vm1329, %v2170, 0
        %v2237 = vsel %vm1329, %v2172, 0
        %v2239 = vsel %vm1426, %v2173, 0
        %v2241 = vsel %vm1426, %v2174, 0
        %2243 = vmatprep.subr.mxu0 %v2241
        %2244 = vmatpush1.msra.mxu0 %v2239
        %2245 = vmatprep.subr.mxu0 0.0
        %2246 = vmatpush1.msra.mxu0 0.0
        %2247 = vmatprep.subr.mxu0 0.0
        %2248 = vmatpush1.msra.mxu0 0.0
        %2249 = vmatprep.subr.mxu0 0.0
        %2250 = vmatpush1.msra.mxu0 0.0
        %2251 = vmatprep.subr.mxu0 0.0
        %2252 = vmatpush1.msra.mxu0 0.0
        %2253 = vmatprep.subr.mxu0 0.0
        %2254 = vmatpush1.msra.mxu0 0.0
        %2255 = vmatprep.subr.mxu0 0.0
        %2256 = vmatpush1.msra.mxu0 0.0
        %2257 = vmatprep.subr.mxu0 0.0
        %2258 = vmatpush1.msra.mxu0 0.0
        %2259 = vmatprep.subr.mxu0 0.0
        %2260 = vmatpush1.msra.mxu0 0.0
        %2261 = vmatprep.subr.mxu0 0.0
        %2262 = vmatpush1.msra.mxu0 0.0
        %2263 = vmatprep.subr.mxu0 0.0
        %2264 = vmatpush1.msra.mxu0 0.0
        %2265 = vmatprep.subr.mxu0 0.0
        %2266 = vmatpush1.msra.mxu0 0.0
        %2267 = vmatprep.subr.mxu0 0.0
        %2268 = vmatpush1.msra.mxu0 0.0
        %2269 = vmatprep.subr.mxu0 0.0
        %2270 = vmatpush1.msra.mxu0 0.0
        %2271 = vmatprep.subr.mxu0 0.0
        %2272 = vmatpush1.msra.mxu0 0.0
        %2273 = vmatprep.subr.mxu0 0.0
        %2274 = vmatpush1.msra.mxu0 0.0
        %2275 = vmatprep.subr.mxu0 0.0
        %2276 = vmatpush1.msra.mxu0 0.0
        %2277 = vmatprep.subr.mxu0 0.0
        %2278 = vmatpush1.msra.mxu0 0.0
        %2279 = vmatprep.subr.mxu0 0.0
        %2280 = vmatpush1.msra.mxu0 0.0
        %2281 = vmatprep.subr.mxu0 0.0
        %2282 = vmatpush1.msra.mxu0 0.0
        %2283 = vmatprep.subr.mxu0 0.0
        %2284 = vmatpush1.msra.mxu0 0.0
        %2285 = vmatprep.subr.mxu0 0.0
        %2286 = vmatpush1.msra.mxu0 0.0
        %2287 = vmatprep.subr.mxu0 0.0
        %2288 = vmatpush1.msra.mxu0 0.0
        %2289 = vmatprep.subr.mxu0 0.0
        %2290 = vmatpush1.msra.mxu0 0.0
        %2291 = vmatprep.subr.mxu0 0.0
        %2292 = vmatpush1.msra.mxu0 0.0
        %2293 = vmatprep.subr.mxu0 0.0
        %2294 = vmatpush1.msra.mxu0 0.0
        %2295 = vmatprep.subr.mxu0 0.0
        %2296 = vmatpush1.msra.mxu0 0.0
        %2297 = vmatprep.subr.mxu0 0.0
        %2298 = vmatpush1.msra.mxu0 0.0
        %2299 = vmatprep.subr.mxu0 0.0
        %2300 = vmatpush1.msra.mxu0 0.0
        %2301 = vmatprep.subr.mxu0 0.0
        %2302 = vmatpush1.msra.mxu0 0.0
        %2303 = vmatprep.subr.mxu0 0.0
        %2304 = vmatpush1.msra.mxu0 0.0
        %2305 = vmatprep.subr.mxu0 0.0
        %2306 = vmatpush1.msra.mxu0 0.0
        %2307 = vmatprep.mubr.f32.mxu0 0.0
        %2308 = vmatmul.mubr.f32.gmra.mrb[0].mxu0 %v2175
        %v2309 = vpop.f32.mrb[0].mxu0
        %v2310 = vadd.f32 0.0, %v2309
        %v2311 = vpop.f32.mrb[0].mxu0
        %v2312 = vadd.f32 0.0, %v2311
        %2313 = vmatprep.mubr.f32.mxu0 0.0
        %2314 = vmatmul.mubr.f32.gmra.mrb[0].mxu0 %v2177
        %v2315 = vpop.f32.mrb[0].mxu0
        %v2316 = vadd.f32 0.0, %v2315
        %v2317 = vpop.f32.mrb[0].mxu0
        %v2318 = vadd.f32 0.0, %v2317
        %2319 = vmatprep.mubr.f32.mxu0 0.0
        %2320 = vmatmul.mubr.f32.gmra.mrb[0].mxu0 %v2179
        %v2321 = vpop.f32.mrb[0].mxu0
        %v2322 = vadd.f32 0.0, %v2321
        %v2323 = vpop.f32.mrb[0].mxu0
        %v2324 = vadd.f32 0.0, %v2323
        %2325 = vmatprep.mubr.f32.mxu0 0.0
        %2326 = vmatmul.mubr.f32.gmra.mrb[0].mxu0 %v2181
        %v2327 = vpop.f32.mrb[0].mxu0
        %v2328 = vadd.f32 0.0, %v2327
        %v2329 = vpop.f32.mrb[0].mxu0
        %v2330 = vadd.f32 0.0, %v2329
        %2331 = vmatprep.mubr.f32.mxu0 0.0
        %2332 = vmatmul.mubr.f32.gmra.mrb[0].mxu0 %v2183
        %v2333 = vpop.f32.mrb[0].mxu0
        %v2334 = vadd.f32 0.0, %v2333
        %v2335 = vpop.f32.mrb[0].mxu0
        %v2336 = vadd.f32 0.0, %v2335
        %2337 = vmatprep.mubr.f32.mxu0 0.0
        %2338 = vmatmul.mubr.f32.gmra.mrb[0].mxu0 %v2185
        %v2339 = vpop.f32.mrb[0].mxu0
        %v2340 = vadd.f32 0.0, %v2339
        %v2341 = vpop.f32.mrb[0].mxu0
        %v2342 = vadd.f32 0.0, %v2341
        %2343 = vmatprep.mubr.f32.mxu0 0.0
        %2344 = vmatmul.mubr.f32.gmra.mrb[0].mxu0 %v2187
        %v2345 = vpop.f32.mrb[0].mxu0
        %v2346 = vadd.f32 0.0, %v2345
        %v2347 = vpop.f32.mrb[0].mxu0
        %v2348 = vadd.f32 0.0, %v2347
        %2349 = vmatprep.mubr.f32.mxu0 0.0
        %2350 = vmatmul.mubr.f32.gmra.mrb[0].mxu0 %v2189
        %v2351 = vpop.f32.mrb[0].mxu0
        %v2352 = vadd.f32 0.0, %v2351
        %v2353 = vpop.f32.mrb[0].mxu0
        %v2354 = vadd.f32 0.0, %v2353
        %2355 = vmatprep.mubr.f32.mxu0 0.0
        %2356 = vmatmul.mubr.f32.gmra.mrb[0].mxu0 %v2191
        %v2357 = vpop.f32.mrb[0].mxu0
        %v2358 = vadd.f32 0.0, %v2357
        %v2359 = vpop.f32.mrb[0].mxu0
        %v2360 = vadd.f32 0.0, %v2359
        %2361 = vmatprep.mubr.f32.mxu0 0.0
        %2362 = vmatmul.mubr.f32.gmra.mrb[0].mxu0 %v2193
        %v2363 = vpop.f32.mrb[0].mxu0
        %v2364 = vadd.f32 0.0, %v2363
        %v2365 = vpop.f32.mrb[0].mxu0
        %v2366 = vadd.f32 0.0, %v2365
        %2367 = vmatprep.mubr.f32.mxu0 0.0
        %2368 = vmatmul.mubr.f32.gmra.mrb[0].mxu0 %v2195
        %v2369 = vpop.f32.mrb[0].mxu0
        %v2370 = vadd.f32 0.0, %v2369
        %v2371 = vpop.f32.mrb[0].mxu0
        %v2372 = vadd.f32 0.0, %v2371
        %2373 = vmatprep.mubr.f32.mxu0 0.0
        %2374 = vmatmul.mubr.f32.gmra.mrb[0].mxu0 %v2197
        %v2375 = vpop.f32.mrb[0].mxu0
        %v2376 = vadd.f32 0.0, %v2375
        %v2377 = vpop.f32.mrb[0].mxu0
        %v2378 = vadd.f32 0.0, %v2377
        %2379 = vmatprep.mubr.f32.mxu0 0.0
        %2380 = vmatmul.mubr.f32.gmra.mrb[0].mxu0 %v2199
        %v2381 = vpop.f32.mrb[0].mxu0
        %v2382 = vadd.f32 0.0, %v2381
        %v2383 = vpop.f32.mrb[0].mxu0
        %v2384 = vadd.f32 0.0, %v2383
        %2385 = vmatprep.mubr.f32.mxu0 0.0
        %2386 = vmatmul.mubr.f32.gmra.mrb[0].mxu0 %v2201
        %v2387 = vpop.f32.mrb[0].mxu0
        %v2388 = vadd.f32 0.0, %v2387
        %v2389 = vpop.f32.mrb[0].mxu0
        %v2390 = vadd.f32 0.0, %v2389
        %2391 = vmatprep.mubr.f32.mxu0 0.0
        %2392 = vmatmul.mubr.f32.gmra.mrb[0].mxu0 %v2203
        %v2393 = vpop.f32.mrb[0].mxu0
        %v2394 = vadd.f32 0.0, %v2393
        %v2395 = vpop.f32.mrb[0].mxu0
        %v2396 = vadd.f32 0.0, %v2395
        %2397 = vmatprep.mubr.f32.mxu0 0.0
        %2398 = vmatmul.mubr.f32.gmra.mrb[0].mxu0 %v2205
        %v2399 = vpop.f32.mrb[0].mxu0
        %v2400 = vadd.f32 0.0, %v2399
        %v2401 = vpop.f32.mrb[0].mxu0
        %v2402 = vadd.f32 0.0, %v2401
        %2403 = vmatprep.mubr.f32.mxu0 0.0
        %2404 = vmatmul.mubr.f32.gmra.mrb[0].mxu0 %v2207
        %v2405 = vpop.f32.mrb[0].mxu0
        %v2406 = vadd.f32 0.0, %v2405
        %v2407 = vpop.f32.mrb[0].mxu0
        %v2408 = vadd.f32 0.0, %v2407
        %2409 = vmatprep.mubr.f32.mxu0 0.0
        %2410 = vmatmul.mubr.f32.gmra.mrb[0].mxu0 %v2209
        %v2411 = vpop.f32.mrb[0].mxu0
        %v2412 = vadd.f32 0.0, %v2411
        %v2413 = vpop.f32.mrb[0].mxu0
        %v2414 = vadd.f32 0.0, %v2413
        %2415 = vmatprep.mubr.f32.mxu0 0.0
        %2416 = vmatmul.mubr.f32.gmra.mrb[0].mxu0 %v2211
        %v2417 = vpop.f32.mrb[0].mxu0
        %v2418 = vadd.f32 0.0, %v2417
        %v2419 = vpop.f32.mrb[0].mxu0
        %v2420 = vadd.f32 0.0, %v2419
        %2421 = vmatprep.mubr.f32.mxu0 0.0
        %2422 = vmatmul.mubr.f32.gmra.mrb[0].mxu0 %v2213
        %v2423 = vpop.f32.mrb[0].mxu0
        %v2424 = vadd.f32 0.0, %v2423
        %v2425 = vpop.f32.mrb[0].mxu0
        %v2426 = vadd.f32 0.0, %v2425
        %2427 = vmatprep.mubr.f32.mxu0 0.0
        %2428 = vmatmul.mubr.f32.gmra.mrb[0].mxu0 %v2215
        %v2429 = vpop.f32.mrb[0].mxu0
        %v2430 = vadd.f32 0.0, %v2429
        %v2431 = vpop.f32.mrb[0].mxu0
        %v2432 = vadd.f32 0.0, %v2431
        %2433 = vmatprep.mubr.f32.mxu0 0.0
        %2434 = vmatmul.mubr.f32.gmra.mrb[0].mxu0 %v2217
        %v2435 = vpop.f32.mrb[0].mxu0
        %v2436 = vadd.f32 0.0, %v2435
        %v2437 = vpop.f32.mrb[0].mxu0
        %v2438 = vadd.f32 0.0, %v2437
        %2439 = vmatprep.mubr.f32.mxu0 0.0
        %2440 = vmatmul.mubr.f32.gmra.mrb[0].mxu0 %v2219
        %v2441 = vpop.f32.mrb[0].mxu0
        %v2442 = vadd.f32 0.0, %v2441
        %v2443 = vpop.f32.mrb[0].mxu0
        %v2444 = vadd.f32 0.0, %v2443
        %2445 = vmatprep.mubr.f32.mxu0 0.0
        %2446 = vmatmul.mubr.f32.gmra.mrb[0].mxu0 %v2221
        %v2447 = vpop.f32.mrb[0].mxu0
        %v2448 = vadd.f32 0.0, %v2447
        %v2449 = vpop.f32.mrb[0].mxu0
        %v2450 = vadd.f32 0.0, %v2449
        %2451 = vmatprep.mubr.f32.mxu0 0.0
        %2452 = vmatmul.mubr.f32.gmra.mrb[0].mxu0 %v2223
        %v2453 = vpop.f32.mrb[0].mxu0
        %v2454 = vadd.f32 0.0, %v2453
        %v2455 = vpop.f32.mrb[0].mxu0
        %v2456 = vadd.f32 0.0, %v2455
        %2457 = vmatprep.mubr.f32.mxu0 0.0
        %2458 = vmatmul.mubr.f32.gmra.mrb[0].mxu0 %v2225
        %v2459 = vpop.f32.mrb[0].mxu0
        %v2460 = vadd.f32 0.0, %v2459
        %v2461 = vpop.f32.mrb[0].mxu0
        %v2462 = vadd.f32 0.0, %v2461
        %2463 = vmatprep.mubr.f32.mxu0 0.0
        %2464 = vmatmul.mubr.f32.gmra.mrb[0].mxu0 %v2227
        %v2465 = vpop.f32.mrb[0].mxu0
        %v2466 = vadd.f32 0.0, %v2465
        %v2467 = vpop.f32.mrb[0].mxu0
        %v2468 = vadd.f32 0.0, %v2467
        %2469 = vmatprep.mubr.f32.mxu0 0.0
        %2470 = vmatmul.mubr.f32.gmra.mrb[0].mxu0 %v2229
        %v2471 = vpop.f32.mrb[0].mxu0
        %v2472 = vadd.f32 0.0, %v2471
        %v2473 = vpop.f32.mrb[0].mxu0
        %v2474 = vadd.f32 0.0, %v2473
        %2475 = vmatprep.mubr.f32.mxu0 0.0
        %2476 = vmatmul.mubr.f32.gmra.mrb[0].mxu0 %v2231
        %v2477 = vpop.f32.mrb[0].mxu0
        %v2478 = vadd.f32 0.0, %v2477
        %v2479 = vpop.f32.mrb[0].mxu0
        %v2480 = vadd.f32 0.0, %v2479
        %2481 = vmatprep.mubr.f32.mxu0 0.0
        %2482 = vmatmul.mubr.f32.gmra.mrb[0].mxu0 %v2233
        %v2483 = vpop.f32.mrb[0].mxu0
        %v2484 = vadd.f32 0.0, %v2483
        %v2485 = vpop.f32.mrb[0].mxu0
        %v2486 = vadd.f32 0.0, %v2485
        %2487 = vmatprep.mubr.f32.mxu0 0.0
        %2488 = vmatmul.mubr.f32.gmra.mrb[0].mxu0 %v2235
        %v2489 = vpop.f32.mrb[0].mxu0
        %v2490 = vadd.f32 0.0, %v2489
        %v2491 = vpop.f32.mrb[0].mxu0
        %v2492 = vadd.f32 0.0, %v2491
        %2493 = vmatprep.mubr.f32.mxu0 0.0
        %2494 = vmatmul.mubr.f32.gmra.mrb[0].mxu0 %v2237
        %v2495 = vpop.f32.mrb[0].mxu0
        %v2496 = vadd.f32 0.0, %v2495
        %v2497 = vpop.f32.mrb[0].mxu0
        %v2498 = vadd.f32 0.0, %v2497
        %2499 = vdwg.mxu0
        %v2500 = vmax.f32 %v2310, %v2322
        %v2501 = vmax.f32 %v2316, %v2328
        %v2502 = vmax.f32 %v2500, %v2334
        %v2503 = vmax.f32 %v2501, %v2340
        %v2504 = vmax.f32 %v2502, %v2346
        %v2505 = vmax.f32 %v2503, %v2352
        %v2506 = vmax.f32 %v2504, %v2358
        %v2507 = vmax.f32 %v2505, %v2364
        %v2508 = vmax.f32 %v2506, %v2370
        %v2509 = vmax.f32 %v2507, %v2376
        %v2510 = vmax.f32 %v2508, %v2382
        %v2511 = vmax.f32 %v2509, %v2388
        %v2512 = vmax.f32 %v2510, %v2394
        %v2513 = vmax.f32 %v2511, %v2400
        %v2514 = vmax.f32 %v2512, %v2406
        %v2515 = vmax.f32 %v2513, %v2412
        %v2516 = vmax.f32 %v2514, %v2418
        %v2517 = vmax.f32 %v2515, %v2424
        %v2518 = vmax.f32 %v2516, %v2430
        %v2519 = vmax.f32 %v2517, %v2436
        %v2520 = vmax.f32 %v2518, %v2442
        %v2521 = vmax.f32 %v2519, %v2448
        %v2522 = vmax.f32 %v2520, %v2454
        %v2523 = vmax.f32 %v2521, %v2460
        %v2524 = vmax.f32 %v2522, %v2466
        %v2525 = vmax.f32 %v2523, %v2472
        %v2526 = vmax.f32 %v2524, %v2478
        %v2527 = vmax.f32 %v2525, %v2484
        %v2528 = vmax.f32 %v2526, %v2490
        %v2529 = vmax.f32 %v2527, %v2496
        %v2530 = vmax.f32 %v2528, %v2529
        %v2531 = vrot.slane %v2530, 4
        %v2532 = vmax.f32 %v2530, %v2531
        %v2533 = vrot.slane %v2532, 2
        %v2534 = vmax.f32 %v2532, %v2533
        %v2535 = vrot.slane %v2534, 1
        %v2536 = vmax.f32 %v2534, %v2535
        %v2537 = vmax.f32 %v2312, %v2324
        %v2538 = vmax.f32 %v2318, %v2330
        %v2539 = vmax.f32 %v2537, %v2336
        %v2540 = vmax.f32 %v2538, %v2342
        %v2541 = vmax.f32 %v2539, %v2348
        %v2542 = vmax.f32 %v2540, %v2354
        %v2543 = vmax.f32 %v2541, %v2360
        %v2544 = vmax.f32 %v2542, %v2366
        %v2545 = vmax.f32 %v2543, %v2372
        %v2546 = vmax.f32 %v2544, %v2378
        %v2547 = vmax.f32 %v2545, %v2384
        %v2548 = vmax.f32 %v2546, %v2390
        %v2549 = vmax.f32 %v2547, %v2396
        %v2550 = vmax.f32 %v2548, %v2402
        %v2551 = vmax.f32 %v2549, %v2408
        %v2552 = vmax.f32 %v2550, %v2414
        %v2553 = vmax.f32 %v2551, %v2420
        %v2554 = vmax.f32 %v2552, %v2426
        %v2555 = vmax.f32 %v2553, %v2432
        %v2556 = vmax.f32 %v2554, %v2438
        %v2557 = vmax.f32 %v2555, %v2444
        %v2558 = vmax.f32 %v2556, %v2450
        %v2559 = vmax.f32 %v2557, %v2456
        %v2560 = vmax.f32 %v2558, %v2462
        %v2561 = vmax.f32 %v2559, %v2468
        %v2562 = vmax.f32 %v2560, %v2474
        %v2563 = vmax.f32 %v2561, %v2480
        %v2564 = vmax.f32 %v2562, %v2486
        %v2565 = vmax.f32 %v2563, %v2492
        %v2566 = vmax.f32 %v2564, %v2498
        %v2567 = vmax.f32 %v2565, %v2566
        %v2568 = vrot.slane %v2567, 4
        %v2569 = vmax.f32 %v2567, %v2568
        %v2570 = vrot.slane %v2569, 2
        %v2571 = vmax.f32 %v2569, %v2570
        %v2572 = vrot.slane %v2571, 1
        %v2573 = vmax.f32 %v2571, %v2572
        %v2574 = vsub.f32 %v2310, %v2536
        %v2575 = vsub.f32 %v2312, %v2573
        %v2576 = vsub.f32 %v2316, %v2536
        %v2577 = vsub.f32 %v2318, %v2573
        %v2578 = vsub.f32 %v2322, %v2536
        %v2579 = vsub.f32 %v2324, %v2573
        %v2580 = vsub.f32 %v2328, %v2536
        %v2581 = vsub.f32 %v2330, %v2573
        %v2582 = vsub.f32 %v2334, %v2536
        %v2583 = vsub.f32 %v2336, %v2573
        %v2584 = vsub.f32 %v2340, %v2536
        %v2585 = vsub.f32 %v2342, %v2573
        %v2586 = vsub.f32 %v2346, %v2536
        %v2587 = vsub.f32 %v2348, %v2573
        %v2588 = vsub.f32 %v2352, %v2536
        %v2589 = vsub.f32 %v2354, %v2573
        %v2590 = vsub.f32 %v2358, %v2536
        %v2591 = vsub.f32 %v2360, %v2573
        %v2592 = vsub.f32 %v2364, %v2536
        %v2593 = vsub.f32 %v2366, %v2573
        %v2594 = vsub.f32 %v2370, %v2536
        %v2595 = vsub.f32 %v2372, %v2573
        %v2596 = vsub.f32 %v2376, %v2536
        %v2597 = vsub.f32 %v2378, %v2573
        %v2598 = vsub.f32 %v2382, %v2536
        %v2599 = vsub.f32 %v2384, %v2573
        %v2600 = vsub.f32 %v2388, %v2536
        %v2601 = vsub.f32 %v2390, %v2573
        %v2602 = vsub.f32 %v2394, %v2536
        %v2603 = vsub.f32 %v2396, %v2573
        %v2604 = vsub.f32 %v2400, %v2536
        %v2605 = vsub.f32 %v2402, %v2573
        %v2606 = vsub.f32 %v2406, %v2536
        %v2607 = vsub.f32 %v2408, %v2573
        %v2608 = vsub.f32 %v2412, %v2536
        %v2609 = vsub.f32 %v2414, %v2573
        %v2610 = vsub.f32 %v2418, %v2536
        %v2611 = vsub.f32 %v2420, %v2573
        %v2612 = vsub.f32 %v2424, %v2536
        %v2613 = vsub.f32 %v2426, %v2573
        %v2614 = vsub.f32 %v2430, %v2536
        %v2615 = vsub.f32 %v2432, %v2573
        %v2616 = vsub.f32 %v2436, %v2536
        %v2617 = vsub.f32 %v2438, %v2573
        %v2618 = vsub.f32 %v2442, %v2536
        %v2619 = vsub.f32 %v2444, %v2573
        %v2620 = vsub.f32 %v2448, %v2536
        %v2621 = vsub.f32 %v2450, %v2573
        %v2622 = vsub.f32 %v2454, %v2536
        %v2623 = vsub.f32 %v2456, %v2573
        %v2624 = vsub.f32 %v2460, %v2536
        %v2625 = vsub.f32 %v2462, %v2573
        %v2626 = vsub.f32 %v2466, %v2536
        %v2627 = vsub.f32 %v2468, %v2573
        %v2628 = vsub.f32 %v2472, %v2536
        %v2629 = vsub.f32 %v2474, %v2573
        %v2630 = vsub.f32 %v2478, %v2536
        %v2631 = vsub.f32 %v2480, %v2573
        %v2632 = vsub.f32 %v2484, %v2536
        %v2633 = vsub.f32 %v2486, %v2573
        %v2634 = vsub.f32 %v2490, %v2536
        %v2635 = vsub.f32 %v2492, %v2573
        %v2636 = vsub.f32 %v2496, %v2536
        %v2637 = vsub.f32 %v2498, %v2573
        %v2638 = vmul.f32 %v2574, 1.442695
        %v2639 = vpow.pop %v2638
        %v2640 = vmul.f32 %v2575, 1.442695
        %v2641 = vpow.pop %v2640
        %v2642 = vmul.f32 %v2576, 1.442695
        %v2643 = vpow.pop %v2642
        %v2644 = vmul.f32 %v2577, 1.442695
        %v2645 = vpow.pop %v2644
        %v2646 = vmul.f32 %v2578, 1.442695
        %v2647 = vpow.pop %v2646
        %v2648 = vmul.f32 %v2579, 1.442695
        %v2649 = vpow.pop %v2648
        %v2650 = vmul.f32 %v2580, 1.442695
        %v2651 = vpow.pop %v2650
        %v2652 = vmul.f32 %v2581, 1.442695
        %v2653 = vpow.pop %v2652
        %v2654 = vmul.f32 %v2582, 1.442695
        %v2655 = vpow.pop %v2654
        %v2656 = vmul.f32 %v2583, 1.442695
        %v2657 = vpow.pop %v2656
        %v2658 = vmul.f32 %v2584, 1.442695
        %v2659 = vpow.pop %v2658
        %v2660 = vmul.f32 %v2585, 1.442695
        %v2661 = vpow.pop %v2660
        %v2662 = vmul.f32 %v2586, 1.442695
        %v2663 = vpow.pop %v2662
        %v2664 = vmul.f32 %v2587, 1.442695
        %v2665 = vpow.pop %v2664
        %v2666 = vmul.f32 %v2588, 1.442695
        %v2667 = vpow.pop %v2666
        %v2668 = vmul.f32 %v2589, 1.442695
        %v2669 = vpow.pop %v2668
        %v2670 = vmul.f32 %v2590, 1.442695
        %v2671 = vpow.pop %v2670
        %v2672 = vmul.f32 %v2591, 1.442695
        %v2673 = vpow.pop %v2672
        %v2674 = vmul.f32 %v2592, 1.442695
        %v2675 = vpow.pop %v2674
        %v2676 = vmul.f32 %v2593, 1.442695
        %v2677 = vpow.pop %v2676
        %v2678 = vmul.f32 %v2594, 1.442695
        %v2679 = vpow.pop %v2678
        %v2680 = vmul.f32 %v2595, 1.442695
        %v2681 = vpow.pop %v2680
        %v2682 = vmul.f32 %v2596, 1.442695
        %v2683 = vpow.pop %v2682
        %v2684 = vmul.f32 %v2597, 1.442695
        %v2685 = vpow.pop %v2684
        %v2686 = vmul.f32 %v2598, 1.442695
        %v2687 = vpow.pop %v2686
        %v2688 = vmul.f32 %v2599, 1.442695
        %v2689 = vpow.pop %v2688
        %v2690 = vmul.f32 %v2600, 1.442695
        %v2691 = vpow.pop %v2690
        %v2692 = vmul.f32 %v2601, 1.442695
        %v2693 = vpow.pop %v2692
        %v2694 = vmul.f32 %v2602, 1.442695
        %v2695 = vpow.pop %v2694
        %v2696 = vmul.f32 %v2603, 1.442695
        %v2697 = vpow.pop %v2696
        %v2698 = vmul.f32 %v2604, 1.442695
        %v2699 = vpow.pop %v2698
        %v2700 = vmul.f32 %v2605, 1.442695
        %v2701 = vpow.pop %v2700
        %v2702 = vmul.f32 %v2606, 1.442695
        %v2703 = vpow.pop %v2702
        %v2704 = vmul.f32 %v2607, 1.442695
        %v2705 = vpow.pop %v2704
        %v2706 = vmul.f32 %v2608, 1.442695
        %v2707 = vpow.pop %v2706
        %v2708 = vmul.f32 %v2609, 1.442695
        %v2709 = vpow.pop %v2708
        %v2710 = vmul.f32 %v2610, 1.442695
        %v2711 = vpow.pop %v2710
        %v2712 = vmul.f32 %v2611, 1.442695
        %v2713 = vpow.pop %v2712
        %v2714 = vmul.f32 %v2612, 1.442695
        %v2715 = vpow.pop %v2714
        %v2716 = vmul.f32 %v2613, 1.442695
        %v2717 = vpow.pop %v2716
        %v2718 = vmul.f32 %v2614, 1.442695
        %v2719 = vpow.pop %v2718
        %v2720 = vmul.f32 %v2615, 1.442695
        %v2721 = vpow.pop %v2720
        %v2722 = vmul.f32 %v2616, 1.442695
        %v2723 = vpow.pop %v2722
        %v2724 = vmul.f32 %v2617, 1.442695
        %v2725 = vpow.pop %v2724
        %v2726 = vmul.f32 %v2618, 1.442695
        %v2727 = vpow.pop %v2726
        %v2728 = vmul.f32 %v2619, 1.442695
        %v2729 = vpow.pop %v2728
        %v2730 = vmul.f32 %v2620, 1.442695
        %v2731 = vpow.pop %v2730
        %v2732 = vmul.f32 %v2621, 1.442695
        %v2733 = vpow.pop %v2732
        %v2734 = vmul.f32 %v2622, 1.442695
        %v2735 = vpow.pop %v2734
        %v2736 = vmul.f32 %v2623, 1.442695
        %v2737 = vpow.pop %v2736
        %v2738 = vmul.f32 %v2624, 1.442695
        %v2739 = vpow.pop %v2738
        %v2740 = vmul.f32 %v2625, 1.442695
        %v2741 = vpow.pop %v2740
        %v2742 = vmul.f32 %v2626, 1.442695
        %v2743 = vpow.pop %v2742
        %v2744 = vmul.f32 %v2627, 1.442695
        %v2745 = vpow.pop %v2744
        %v2746 = vmul.f32 %v2628, 1.442695
        %v2747 = vpow.pop %v2746
        %v2748 = vmul.f32 %v2629, 1.442695
        %v2749 = vpow.pop %v2748
        %v2750 = vmul.f32 %v2630, 1.442695
        %v2751 = vpow.pop %v2750
        %v2752 = vmul.f32 %v2631, 1.442695
        %v2753 = vpow.pop %v2752
        %v2754 = vmul.f32 %v2632, 1.442695
        %v2755 = vpow.pop %v2754
        %v2756 = vmul.f32 %v2633, 1.442695
        %v2757 = vpow.pop %v2756
        %v2758 = vmul.f32 %v2634, 1.442695
        %v2759 = vpow.pop %v2758
        %v2760 = vmul.f32 %v2635, 1.442695
        %v2761 = vpow.pop %v2760
        %v2762 = vmul.f32 %v2636, 1.442695
        %v2763 = vpow.pop %v2762
        %v2764 = vmul.f32 %v2637, 1.442695
        %v2765 = vpow.pop %v2764
        %v2766 = vadd.f32 %v2639, %v2643
        %v2767 = vadd.f32 %v2766, %v2647
        %v2768 = vadd.f32 %v2767, %v2651
        %v2769 = vadd.f32 %v2768, %v2655
        %v2770 = vadd.f32 %v2769, %v2659
        %v2771 = vadd.f32 %v2770, %v2663
        %v2772 = vadd.f32 %v2771, %v2667
        %v2773 = vadd.f32 %v2772, %v2671
        %v2774 = vadd.f32 %v2773, %v2675
        %v2775 = vadd.f32 %v2774, %v2679
        %v2776 = vadd.f32 %v2775, %v2683
        %v2777 = vadd.f32 %v2776, %v2687
        %v2778 = vadd.f32 %v2777, %v2691
        %v2779 = vadd.f32 %v2778, %v2695
        %v2780 = vadd.f32 %v2779, %v2699
        %v2781 = vadd.f32 %v2780, %v2703
        %v2782 = vadd.f32 %v2781, %v2707
        %v2783 = vadd.f32 %v2782, %v2711
        %v2784 = vadd.f32 %v2783, %v2715
        %v2785 = vadd.f32 %v2784, %v2719
        %v2786 = vadd.f32 %v2785, %v2723
        %v2787 = vadd.f32 %v2786, %v2727
        %v2788 = vadd.f32 %v2787, %v2731
        %v2789 = vadd.f32 %v2788, %v2735
        %v2790 = vadd.f32 %v2789, %v2739
        %v2791 = vadd.f32 %v2790, %v2743
        %v2792 = vadd.f32 %v2791, %v2747
        %v2793 = vadd.f32 %v2792, %v2751
        %v2794 = vadd.f32 %v2793, %v2755
        %v2795 = vadd.f32 %v2794, %v2759
        %v2796 = vadd.f32 %v2795, %v2763
        %v2797 = vrot.slane %v2796, 4
        %v2798 = vadd.f32 %v2796, %v2797
        %v2799 = vrot.slane %v2798, 2
        %v2800 = vadd.f32 %v2798, %v2799
        %v2801 = vrot.slane %v2800, 1
        %v2802 = vadd.f32 %v2800, %v2801
        %v2803 = vadd.f32 %v2641, %v2645
        %v2804 = vadd.f32 %v2803, %v2649
        %v2805 = vadd.f32 %v2804, %v2653
        %v2806 = vadd.f32 %v2805, %v2657
        %v2807 = vadd.f32 %v2806, %v2661
        %v2808 = vadd.f32 %v2807, %v2665
        %v2809 = vadd.f32 %v2808, %v2669
        %v2810 = vadd.f32 %v2809, %v2673
        %v2811 = vadd.f32 %v2810, %v2677
        %v2812 = vadd.f32 %v2811, %v2681
        %v2813 = vadd.f32 %v2812, %v2685
        %v2814 = vadd.f32 %v2813, %v2689
        %v2815 = vadd.f32 %v2814, %v2693
        %v2816 = vadd.f32 %v2815, %v2697
        %v2817 = vadd.f32 %v2816, %v2701
        %v2818 = vadd.f32 %v2817, %v2705
        %v2819 = vadd.f32 %v2818, %v2709
        %v2820 = vadd.f32 %v2819, %v2713
        %v2821 = vadd.f32 %v2820, %v2717
        %v2822 = vadd.f32 %v2821, %v2721
        %v2823 = vadd.f32 %v2822, %v2725
        %v2824 = vadd.f32 %v2823, %v2729
        %v2825 = vadd.f32 %v2824, %v2733
        %v2826 = vadd.f32 %v2825, %v2737
        %v2827 = vadd.f32 %v2826, %v2741
        %v2828 = vadd.f32 %v2827, %v2745
        %v2829 = vadd.f32 %v2828, %v2749
        %v2830 = vadd.f32 %v2829, %v2753
        %v2831 = vadd.f32 %v2830, %v2757
        %v2832 = vadd.f32 %v2831, %v2761
        %v2833 = vadd.f32 %v2832, %v2765
        %v2834 = vrot.slane %v2833, 4
        %v2835 = vadd.f32 %v2833, %v2834
        %v2836 = vrot.slane %v2835, 2
        %v2837 = vadd.f32 %v2835, %v2836
        %v2838 = vrot.slane %v2837, 1
        %v2839 = vadd.f32 %v2837, %v2838
        %v2840 = vrcp.pop %v2802
        %v2841 = vmul.f32 1.0, %v2840
        %v2842 = vrcp.pop %v2839
        %v2843 = vmul.f32 1.0, %v2842
        %v2846 = vrot.slane %v1255, 4
        %v2847 = vrot.slane %v1257, 4
        %2850 = vmatprep.subr.mxu0 %v2641
        %2851 = vmatpush1.msra.mxu0 %v2639
        %2852 = vmatprep.subr.mxu0 %v2645
        %2853 = vmatpush1.msra.mxu0 %v2643
        %2854 = vmatprep.subr.mxu0 %v2649
        %2855 = vmatpush1.msra.mxu0 %v2647
        %2856 = vmatprep.subr.mxu0 %v2653
        %2857 = vmatpush1.msra.mxu0 %v2651
        %2858 = vmatprep.subr.mxu0 %v2657
        %2859 = vmatpush1.msra.mxu0 %v2655
        %2860 = vmatprep.subr.mxu0 %v2661
        %2861 = vmatpush1.msra.mxu0 %v2659
        %2862 = vmatprep.subr.mxu0 %v2665
        %2863 = vmatpush1.msra.mxu0 %v2663
        %2864 = vmatprep.subr.mxu0 %v2669
        %2865 = vmatpush1.msra.mxu0 %v2667
        %2866 = vmatprep.subr.mxu0 %v2673
        %2867 = vmatpush1.msra.mxu0 %v2671
        %2868 = vmatprep.subr.mxu0 %v2677
        %2869 = vmatpush1.msra.mxu0 %v2675
        %2870 = vmatprep.subr.mxu0 %v2681
        %2871 = vmatpush1.msra.mxu0 %v2679
        %2872 = vmatprep.subr.mxu0 %v2685
        %2873 = vmatpush1.msra.mxu0 %v2683
        %2874 = vmatprep.subr.mxu0 %v2689
        %2875 = vmatpush1.msra.mxu0 %v2687
        %2876 = vmatprep.subr.mxu0 %v2693
        %2877 = vmatpush1.msra.mxu0 %v2691
        %2878 = vmatprep.subr.mxu0 %v2697
        %2879 = vmatpush1.msra.mxu0 %v2695
        %2880 = vmatprep.subr.mxu0 %v2701
        %2881 = vmatpush1.msra.mxu0 %v2699
        %2882 = vmatprep.subr.mxu0 %v2705
        %2883 = vmatpush1.msra.mxu0 %v2703
        %2884 = vmatprep.subr.mxu0 %v2709
        %2885 = vmatpush1.msra.mxu0 %v2707
        %2886 = vmatprep.subr.mxu0 %v2713
        %2887 = vmatpush1.msra.mxu0 %v2711
        %2888 = vmatprep.subr.mxu0 %v2717
        %2889 = vmatpush1.msra.mxu0 %v2715
        %2890 = vmatprep.subr.mxu0 %v2721
        %2891 = vmatpush1.msra.mxu0 %v2719
        %2892 = vmatprep.subr.mxu0 %v2725
        %2893 = vmatpush1.msra.mxu0 %v2723
        %2894 = vmatprep.subr.mxu0 %v2729
        %2895 = vmatpush1.msra.mxu0 %v2727
        %2896 = vmatprep.subr.mxu0 %v2733
        %2897 = vmatpush1.msra.mxu0 %v2731
        %2898 = vmatprep.subr.mxu0 %v2737
        %2899 = vmatpush1.msra.mxu0 %v2735
        %2900 = vmatprep.subr.mxu0 %v2741
        %2901 = vmatpush1.msra.mxu0 %v2739
        %2902 = vmatprep.subr.mxu0 %v2745
        %2903 = vmatpush1.msra.mxu0 %v2743
        %2904 = vmatprep.subr.mxu0 %v2749
        %2905 = vmatpush1.msra.mxu0 %v2747
        %2906 = vmatprep.subr.mxu0 %v2753
        %2907 = vmatpush1.msra.mxu0 %v2751
        %2908 = vmatprep.subr.mxu0 %v2757
        %2909 = vmatpush1.msra.mxu0 %v2755
        %2910 = vmatprep.subr.mxu0 %v2761
        %2911 = vmatpush1.msra.mxu0 %v2759
        %2912 = vmatprep.subr.mxu0 %v2765
        %2913 = vmatpush1.msra.mxu0 %v2763
        %2914 = vmatprep.mubr.f32.mxu0 %v2847
        %2915 = vmatmul.mubr.f32.gmra.mrb[0].mxu0 %v2846
        %v2916 = vpop.f32.mrb[0].mxu0
        %v2917 = vadd.f32 0.0, %v2916
        %v2918 = vpop.f32.mrb[0].mxu0
        %v2919 = vadd.f32 0.0, %v2918
        %2920 = vdwg.mxu0
        %v2921 = vmul.f32 %v2917, %v2841
        %v2922 = vmul.f32 %v2919, %v2843
        %2925 = vrot.lane.b32.xlu0 %v2107, 124
        %v2926 = vpop.permute.xlu0 %2925
        %2927 = vrot.lane.b32.xlu0 %v2108, 124
        %v2928 = vpop.permute.xlu0 %2927
        %v2929 = vsel %vm1329, %v2926, 0
        %v2931 = vsel %vm1329, %v2928, 0
        %v2934 = vsel %vm1426, %v2921, 0
        %v2937 = vsel %vm1426, %v2922, 0
        %2939 = vmatprep.subr.mxu0 %v2937
        %2940 = vmatpush1.msra.mxu0 %v2934
        %2941 = vmatprep.subr.mxu0 0.0
        %2942 = vmatpush1.msra.mxu0 0.0
        %2943 = vmatprep.subr.mxu0 0.0
        %2944 = vmatpush1.msra.mxu0 0.0
        %2945 = vmatprep.subr.mxu0 0.0
        %2946 = vmatpush1.msra.mxu0 0.0
        %2947 = vmatprep.subr.mxu0 0.0
        %2948 = vmatpush1.msra.mxu0 0.0
        %2949 = vmatprep.subr.mxu0 0.0
        %2950 = vmatpush1.msra.mxu0 0.0
        %2951 = vmatprep.subr.mxu0 0.0
        %2952 = vmatpush1.msra.mxu0 0.0
        %2953 = vmatprep.subr.mxu0 0.0
        %2954 = vmatpush1.msra.mxu0 0.0
        %2955 = vmatprep.subr.mxu0 0.0
        %2956 = vmatpush1.msra.mxu0 0.0
        %2957 = vmatprep.subr.mxu0 0.0
        %2958 = vmatpush1.msra.mxu0 0.0
        %2959 = vmatprep.subr.mxu0 0.0
        %2960 = vmatpush1.msra.mxu0 0.0
        %2961 = vmatprep.subr.mxu0 0.0
        %2962 = vmatpush1.msra.mxu0 0.0
        %2963 = vmatprep.subr.mxu0 0.0
        %2964 = vmatpush1.msra.mxu0 0.0
        %2965 = vmatprep.subr.mxu0 0.0
        %2966 = vmatpush1.msra.mxu0 0.0
        %2967 = vmatprep.subr.mxu0 0.0
        %2968 = vmatpush1.msra.mxu0 0.0
        %2969 = vmatprep.subr.mxu0 0.0
        %2970 = vmatpush1.msra.mxu0 0.0
        %2971 = vmatprep.subr.mxu0 0.0
        %2972 = vmatpush1.msra.mxu0 0.0
        %2973 = vmatprep.subr.mxu0 0.0
        %2974 = vmatpush1.msra.mxu0 0.0
        %2975 = vmatprep.subr.mxu0 0.0
        %2976 = vmatpush1.msra.mxu0 0.0
        %2977 = vmatprep.subr.mxu0 0.0
        %2978 = vmatpush1.msra.mxu0 0.0
        %2979 = vmatprep.subr.mxu0 0.0
        %2980 = vmatpush1.msra.mxu0 0.0
        %2981 = vmatprep.subr.mxu0 0.0
        %2982 = vmatpush1.msra.mxu0 0.0
        %2983 = vmatprep.subr.mxu0 0.0
        %2984 = vmatpush1.msra.mxu0 0.0
        %2985 = vmatprep.subr.mxu0 0.0
        %2986 = vmatpush1.msra.mxu0 0.0
        %2987 = vmatprep.subr.mxu0 0.0
        %2988 = vmatpush1.msra.mxu0 0.0
        %2989 = vmatprep.subr.mxu0 0.0
        %2990 = vmatpush1.msra.mxu0 0.0
        %2991 = vmatprep.subr.mxu0 0.0
        %2992 = vmatpush1.msra.mxu0 0.0
        %2993 = vmatprep.subr.mxu0 0.0
        %2994 = vmatpush1.msra.mxu0 0.0
        %2995 = vmatprep.subr.mxu0 0.0
        %2996 = vmatpush1.msra.mxu0 0.0
        %2997 = vmatprep.subr.mxu0 0.0
        %2998 = vmatpush1.msra.mxu0 0.0
        %2999 = vmatprep.subr.mxu0 0.0
        %3000 = vmatpush1.msra.mxu0 0.0
        %3001 = vmatprep.subr.mxu0 0.0
        %3002 = vmatpush1.msra.mxu0 0.0
        %3003 = vmatprep.mubr.f32.mxu0 0.0
        %3004 = vmatmul.mubr.f32.gmra.mrb[0].mxu0 %v2929
        %v3005 = vpop.f32.mrb[0].mxu0
        %v3006 = vadd.f32 0.0, %v3005
        %v3007 = vpop.f32.mrb[0].mxu0
        %v3008 = vadd.f32 0.0, %v3007
        %3009 = vmatprep.mubr.f32.mxu0 0.0
        %3010 = vmatmul.mubr.f32.gmra.mrb[0].mxu0 %v2931
        %v3011 = vpop.f32.mrb[0].mxu0
        %v3012 = vadd.f32 0.0, %v3011
        %v3013 = vpop.f32.mrb[0].mxu0
        %v3014 = vadd.f32 0.0, %v3013
        %3015 = vdwg.mxu0
        %v3016 = vsel %vm1329, %v2107, 0
        %v3018 = vsel %vm1329, %v2108, 0
        %v3021 = vsel %vm1426, %v2105, 0
        %v3024 = vsel %vm1426, %v2106, 0
        %3026 = vmatprep.subr.mxu0 %v3024
        %3027 = vmatpush1.msra.mxu0 %v3021
        %3028 = vmatprep.subr.mxu0 0.0
        %3029 = vmatpush1.msra.mxu0 0.0
        %3030 = vmatprep.subr.mxu0 0.0
        %3031 = vmatpush1.msra.mxu0 0.0
        %3032 = vmatprep.subr.mxu0 0.0
        %3033 = vmatpush1.msra.mxu0 0.0
        %3034 = vmatprep.subr.mxu0 0.0
        %3035 = vmatpush1.msra.mxu0 0.0
        %3036 = vmatprep.subr.mxu0 0.0
        %3037 = vmatpush1.msra.mxu0 0.0
        %3038 = vmatprep.subr.mxu0 0.0
        %3039 = vmatpush1.msra.mxu0 0.0
        %3040 = vmatprep.subr.mxu0 0.0
        %3041 = vmatpush1.msra.mxu0 0.0
        %3042 = vmatprep.subr.mxu0 0.0
        %3043 = vmatpush1.msra.mxu0 0.0
        %3044 = vmatprep.subr.mxu0 0.0
        %3045 = vmatpush1.msra.mxu0 0.0
        %3046 = vmatprep.subr.mxu0 0.0
        %3047 = vmatpush1.msra.mxu0 0.0
        %3048 = vmatprep.subr.mxu0 0.0
        %3049 = vmatpush1.msra.mxu0 0.0
        %3050 = vmatprep.subr.mxu0 0.0
        %3051 = vmatpush1.msra.mxu0 0.0
        %3052 = vmatprep.subr.mxu0 0.0
        %3053 = vmatpush1.msra.mxu0 0.0
        %3054 = vmatprep.subr.mxu0 0.0
        %3055 = vmatpush1.msra.mxu0 0.0
        %3056 = vmatprep.subr.mxu0 0.0
        %3057 = vmatpush1.msra.mxu0 0.0
        %3058 = vmatprep.subr.mxu0 0.0
        %3059 = vmatpush1.msra.mxu0 0.0
        %3060 = vmatprep.subr.mxu0 0.0
        %3061 = vmatpush1.msra.mxu0 0.0
        %3062 = vmatprep.subr.mxu0 0.0
        %3063 = vmatpush1.msra.mxu0 0.0
        %3064 = vmatprep.subr.mxu0 0.0
        %3065 = vmatpush1.msra.mxu0 0.0
        %3066 = vmatprep.subr.mxu0 0.0
        %3067 = vmatpush1.msra.mxu0 0.0
        %3068 = vmatprep.subr.mxu0 0.0
        %3069 = vmatpush1.msra.mxu0 0.0
        %3070 = vmatprep.subr.mxu0 0.0
        %3071 = vmatpush1.msra.mxu0 0.0
        %3072 = vmatprep.subr.mxu0 0.0
        %3073 = vmatpush1.msra.mxu0 0.0
        %3074 = vmatprep.subr.mxu0 0.0
        %3075 = vmatpush1.msra.mxu0 0.0
        %3076 = vmatprep.subr.mxu0 0.0
        %3077 = vmatpush1.msra.mxu0 0.0
        %3078 = vmatprep.subr.mxu0 0.0
        %3079 = vmatpush1.msra.mxu0 0.0
        %3080 = vmatprep.subr.mxu0 0.0
        %3081 = vmatpush1.msra.mxu0 0.0
        %3082 = vmatprep.subr.mxu0 0.0
        %3083 = vmatpush1.msra.mxu0 0.0
        %3084 = vmatprep.subr.mxu0 0.0
        %3085 = vmatpush1.msra.mxu0 0.0
        %3086 = vmatprep.subr.mxu0 0.0
        %3087 = vmatpush1.msra.mxu0 0.0
        %3088 = vmatprep.subr.mxu0 0.0
        %3089 = vmatpush1.msra.mxu0 0.0
        %3090 = vmatprep.mubr.f32.mxu0 0.0
        %3091 = vmatmul.mubr.f32.gmra.mrb[0].mxu0 %v3016
        %v3092 = vpop.f32.mrb[0].mxu0
        %v3093 = vadd.f32 %v3006, %v3092
        %v3094 = vpop.f32.mrb[0].mxu0
        %v3095 = vadd.f32 %v3008, %v3094
        %3096 = vmatprep.mubr.f32.mxu0 0.0
        %3097 = vmatmul.mubr.f32.gmra.mrb[0].mxu0 %v3018
        %v3098 = vpop.f32.mrb[0].mxu0
        %v3099 = vadd.f32 %v3012, %v3098
        %v3100 = vpop.f32.mrb[0].mxu0
        %v3101 = vadd.f32 %v3014, %v3100
        %3102 = vdwg.mxu0
        %3103 = vrot.lane.b32.xlu0 %v1281, 120
        %v3104 = vpop.permute.xlu0 %3103
        %3105 = vrot.lane.b32.xlu0 %v1282, 120
        %v3106 = vpop.permute.xlu0 %3105
        %3107 = vrot.lane.b32.xlu0 %v1283, 120
        %v3108 = vpop.permute.xlu0 %3107
        %3109 = vrot.lane.b32.xlu0 %v1284, 120
        %v3110 = vpop.permute.xlu0 %3109
        %3111 = vrot.lane.b32.xlu0 %v1285, 120
        %v3112 = vpop.permute.xlu0 %3111
        %3113 = vrot.lane.b32.xlu0 %v1286, 120
        %v3114 = vpop.permute.xlu0 %3113
        %3115 = vrot.lane.b32.xlu0 %v1287, 120
        %v3116 = vpop.permute.xlu0 %3115
        %3117 = vrot.lane.b32.xlu0 %v1288, 120
        %v3118 = vpop.permute.xlu0 %3117
        %3119 = vrot.lane.b32.xlu0 %v1289, 120
        %v3120 = vpop.permute.xlu0 %3119
        %3121 = vrot.lane.b32.xlu0 %v1290, 120
        %v3122 = vpop.permute.xlu0 %3121
        %3123 = vrot.lane.b32.xlu0 %v1291, 120
        %v3124 = vpop.permute.xlu0 %3123
        %3125 = vrot.lane.b32.xlu0 %v1292, 120
        %v3126 = vpop.permute.xlu0 %3125
        %3127 = vrot.lane.b32.xlu0 %v1293, 120
        %v3128 = vpop.permute.xlu0 %3127
        %3129 = vrot.lane.b32.xlu0 %v1294, 120
        %v3130 = vpop.permute.xlu0 %3129
        %3131 = vrot.lane.b32.xlu0 %v1295, 120
        %v3132 = vpop.permute.xlu0 %3131
        %3133 = vrot.lane.b32.xlu0 %v1296, 120
        %v3134 = vpop.permute.xlu0 %3133
        %3135 = vrot.lane.b32.xlu0 %v1313, 120
        %v3136 = vpop.permute.xlu0 %3135
        %3137 = vrot.lane.b32.xlu0 %v1314, 120
        %v3138 = vpop.permute.xlu0 %3137
        %3139 = vrot.lane.b32.xlu0 %v1315, 120
        %v3140 = vpop.permute.xlu0 %3139
        %3141 = vrot.lane.b32.xlu0 %v1316, 120
        %v3142 = vpop.permute.xlu0 %3141
        %3143 = vrot.lane.b32.xlu0 %v1317, 120
        %v3144 = vpop.permute.xlu0 %3143
        %3145 = vrot.lane.b32.xlu0 %v1318, 120
        %v3146 = vpop.permute.xlu0 %3145
        %3147 = vrot.lane.b32.xlu0 %v1319, 120
        %v3148 = vpop.permute.xlu0 %3147
        %3149 = vrot.lane.b32.xlu0 %v1320, 120
        %v3150 = vpop.permute.xlu0 %3149
        %3151 = vrot.lane.b32.xlu0 %v1321, 120
        %v3152 = vpop.permute.xlu0 %3151
        %3153 = vrot.lane.b32.xlu0 %v1322, 120
        %v3154 = vpop.permute.xlu0 %3153
        %3155 = vrot.lane.b32.xlu0 %v1323, 120
        %v3156 = vpop.permute.xlu0 %3155
        %3157 = vrot.lane.b32.xlu0 %v1324, 120
        %v3158 = vpop.permute.xlu0 %3157
        %3159 = vrot.lane.b32.xlu0 %v1325, 120
        %v3160 = vpop.permute.xlu0 %3159
        %3161 = vrot.lane.b32.xlu0 %v1326, 120
        %v3162 = vpop.permute.xlu0 %3161
        %3163 = vrot.lane.b32.xlu0 %v1327, 120
        %v3164 = vpop.permute.xlu0 %3163
        %3165 = vrot.lane.b32.xlu0 %v1328, 120
        %v3166 = vpop.permute.xlu0 %3165
        %v3167 = vsel %vm1329, %v3104, 0
        %v3169 = vsel %vm1329, %v3106, 0
        %v3171 = vsel %vm1329, %v3108, 0
        %v3173 = vsel %vm1329, %v3110, 0
        %v3175 = vsel %vm1329, %v3112, 0
        %v3177 = vsel %vm1329, %v3114, 0
        %v3179 = vsel %vm1329, %v3116, 0
        %v3181 = vsel %vm1329, %v3118, 0
        %v3183 = vsel %vm1329, %v3120, 0
        %v3185 = vsel %vm1329, %v3122, 0
        %v3187 = vsel %vm1329, %v3124, 0
        %v3189 = vsel %vm1329, %v3126, 0
        %v3191 = vsel %vm1329, %v3128, 0
        %v3193 = vsel %vm1329, %v3130, 0
        %v3195 = vsel %vm1329, %v3132, 0
        %v3197 = vsel %vm1329, %v3134, 0
        %v3199 = vsel %vm1329, %v3136, 0
        %v3201 = vsel %vm1329, %v3138, 0
        %v3203 = vsel %vm1329, %v3140, 0
        %v3205 = vsel %vm1329, %v3142, 0
        %v3207 = vsel %vm1329, %v3144, 0
        %v3209 = vsel %vm1329, %v3146, 0
        %v3211 = vsel %vm1329, %v3148, 0
        %v3213 = vsel %vm1329, %v3150, 0
        %v3215 = vsel %vm1329, %v3152, 0
        %v3217 = vsel %vm1329, %v3154, 0
        %v3219 = vsel %vm1329, %v3156, 0
        %v3221 = vsel %vm1329, %v3158, 0
        %v3223 = vsel %vm1329, %v3160, 0
        %v3225 = vsel %vm1329, %v3162, 0
        %v3227 = vsel %vm1329, %v3164, 0
        %v3229 = vsel %vm1329, %v3166, 0
        %v3232 = vsel %vm1426, %v1237, 0
        %v3235 = vsel %vm1426, %v1239, 0
        %3237 = vmatprep.subr.mxu0 %v3235
        %3238 = vmatpush1.msra.mxu0 %v3232
        %3239 = vmatprep.subr.mxu0 0.0
        %3240 = vmatpush1.msra.mxu0 0.0
        %3241 = vmatprep.subr.mxu0 0.0
        %3242 = vmatpush1.msra.mxu0 0.0
        %3243 = vmatprep.subr.mxu0 0.0
        %3244 = vmatpush1.msra.mxu0 0.0
        %3245 = vmatprep.subr.mxu0 0.0
        %3246 = vmatpush1.msra.mxu0 0.0
        %3247 = vmatprep.subr.mxu0 0.0
        %3248 = vmatpush1.msra.mxu0 0.0
        %3249 = vmatprep.subr.mxu0 0.0
        %3250 = vmatpush1.msra.mxu0 0.0
        %3251 = vmatprep.subr.mxu0 0.0
        %3252 = vmatpush1.msra.mxu0 0.0
        %3253 = vmatprep.subr.mxu0 0.0
        %3254 = vmatpush1.msra.mxu0 0.0
        %3255 = vmatprep.subr.mxu0 0.0
        %3256 = vmatpush1.msra.mxu0 0.0
        %3257 = vmatprep.subr.mxu0 0.0
        %3258 = vmatpush1.msra.mxu0 0.0
        %3259 = vmatprep.subr.mxu0 0.0
        %3260 = vmatpush1.msra.mxu0 0.0
        %3261 = vmatprep.subr.mxu0 0.0
        %3262 = vmatpush1.msra.mxu0 0.0
        %3263 = vmatprep.subr.mxu0 0.0
        %3264 = vmatpush1.msra.mxu0 0.0
        %3265 = vmatprep.subr.mxu0 0.0
        %3266 = vmatpush1.msra.mxu0 0.0
        %3267 = vmatprep.subr.mxu0 0.0
        %3268 = vmatpush1.msra.mxu0 0.0
        %3269 = vmatprep.subr.mxu0 0.0
        %3270 = vmatpush1.msra.mxu0 0.0
        %3271 = vmatprep.subr.mxu0 0.0
        %3272 = vmatpush1.msra.mxu0 0.0
        %3273 = vmatprep.subr.mxu0 0.0
        %3274 = vmatpush1.msra.mxu0 0.0
        %3275 = vmatprep.subr.mxu0 0.0
        %3276 = vmatpush1.msra.mxu0 0.0
        %3277 = vmatprep.subr.mxu0 0.0
        %3278 = vmatpush1.msra.mxu0 0.0
        %3279 = vmatprep.subr.mxu0 0.0
        %3280 = vmatpush1.msra.mxu0 0.0
        %3281 = vmatprep.subr.mxu0 0.0
        %3282 = vmatpush1.msra.mxu0 0.0
        %3283 = vmatprep.subr.mxu0 0.0
        %3284 = vmatpush1.msra.mxu0 0.0
        %3285 = vmatprep.subr.mxu0 0.0
        %3286 = vmatpush1.msra.mxu0 0.0
        %3287 = vmatprep.subr.mxu0 0.0
        %3288 = vmatpush1.msra.mxu0 0.0
        %3289 = vmatprep.subr.mxu0 0.0
        %3290 = vmatpush1.msra.mxu0 0.0
        %3291 = vmatprep.subr.mxu0 0.0
        %3292 = vmatpush1.msra.mxu0 0.0
        %3293 = vmatprep.subr.mxu0 0.0
        %3294 = vmatpush1.msra.mxu0 0.0
        %3295 = vmatprep.subr.mxu0 0.0
        %3296 = vmatpush1.msra.mxu0 0.0
        %3297 = vmatprep.subr.mxu0 0.0
        %3298 = vmatpush1.msra.mxu0 0.0
        %3299 = vmatprep.subr.mxu0 0.0
        %3300 = vmatpush1.msra.mxu0 0.0
        %3301 = vmatprep.mubr.f32.mxu0 0.0
        %3302 = vmatmul.mubr.f32.gmra.mrb[0].mxu0 %v3167
        %v3303 = vpop.f32.mrb[0].mxu0
        %v3304 = vadd.f32 0.0, %v3303
        %v3305 = vpop.f32.mrb[0].mxu0
        %v3306 = vadd.f32 0.0, %v3305
        %3307 = vmatprep.mubr.f32.mxu0 0.0
        %3308 = vmatmul.mubr.f32.gmra.mrb[0].mxu0 %v3169
        %v3309 = vpop.f32.mrb[0].mxu0
        %v3310 = vadd.f32 0.0, %v3309
        %v3311 = vpop.f32.mrb[0].mxu0
        %v3312 = vadd.f32 0.0, %v3311
        %3313 = vmatprep.mubr.f32.mxu0 0.0
        %3314 = vmatmul.mubr.f32.gmra.mrb[0].mxu0 %v3171
        %v3315 = vpop.f32.mrb[0].mxu0
        %v3316 = vadd.f32 0.0, %v3315
        %v3317 = vpop.f32.mrb[0].mxu0
        %v3318 = vadd.f32 0.0, %v3317
        %3319 = vmatprep.mubr.f32.mxu0 0.0
        %3320 = vmatmul.mubr.f32.gmra.mrb[0].mxu0 %v3173
        %v3321 = vpop.f32.mrb[0].mxu0
        %v3322 = vadd.f32 0.0, %v3321
        %v3323 = vpop.f32.mrb[0].mxu0
        %v3324 = vadd.f32 0.0, %v3323
        %3325 = vmatprep.mubr.f32.mxu0 0.0
        %3326 = vmatmul.mubr.f32.gmra.mrb[0].mxu0 %v3175
        %v3327 = vpop.f32.mrb[0].mxu0
        %v3328 = vadd.f32 0.0, %v3327
        %v3329 = vpop.f32.mrb[0].mxu0
        %v3330 = vadd.f32 0.0, %v3329
        %3331 = vmatprep.mubr.f32.mxu0 0.0
        %3332 = vmatmul.mubr.f32.gmra.mrb[0].mxu0 %v3177
        %v3333 = vpop.f32.mrb[0].mxu0
        %v3334 = vadd.f32 0.0, %v3333
        %v3335 = vpop.f32.mrb[0].mxu0
        %v3336 = vadd.f32 0.0, %v3335
        %3337 = vmatprep.mubr.f32.mxu0 0.0
        %3338 = vmatmul.mubr.f32.gmra.mrb[0].mxu0 %v3179
        %v3339 = vpop.f32.mrb[0].mxu0
        %v3340 = vadd.f32 0.0, %v3339
        %v3341 = vpop.f32.mrb[0].mxu0
        %v3342 = vadd.f32 0.0, %v3341
        %3343 = vmatprep.mubr.f32.mxu0 0.0
        %3344 = vmatmul.mubr.f32.gmra.mrb[0].mxu0 %v3181
        %v3345 = vpop.f32.mrb[0].mxu0
        %v3346 = vadd.f32 0.0, %v3345
        %v3347 = vpop.f32.mrb[0].mxu0
        %v3348 = vadd.f32 0.0, %v3347
        %3349 = vmatprep.mubr.f32.mxu0 0.0
        %3350 = vmatmul.mubr.f32.gmra.mrb[0].mxu0 %v3183
        %v3351 = vpop.f32.mrb[0].mxu0
        %v3352 = vadd.f32 0.0, %v3351
        %v3353 = vpop.f32.mrb[0].mxu0
        %v3354 = vadd.f32 0.0, %v3353
        %3355 = vmatprep.mubr.f32.mxu0 0.0
        %3356 = vmatmul.mubr.f32.gmra.mrb[0].mxu0 %v3185
        %v3357 = vpop.f32.mrb[0].mxu0
        %v3358 = vadd.f32 0.0, %v3357
        %v3359 = vpop.f32.mrb[0].mxu0
        %v3360 = vadd.f32 0.0, %v3359
        %3361 = vmatprep.mubr.f32.mxu0 0.0
        %3362 = vmatmul.mubr.f32.gmra.mrb[0].mxu0 %v3187
        %v3363 = vpop.f32.mrb[0].mxu0
        %v3364 = vadd.f32 0.0, %v3363
        %v3365 = vpop.f32.mrb[0].mxu0
        %v3366 = vadd.f32 0.0, %v3365
        %3367 = vmatprep.mubr.f32.mxu0 0.0
        %3368 = vmatmul.mubr.f32.gmra.mrb[0].mxu0 %v3189
        %v3369 = vpop.f32.mrb[0].mxu0
        %v3370 = vadd.f32 0.0, %v3369
        %v3371 = vpop.f32.mrb[0].mxu0
        %v3372 = vadd.f32 0.0, %v3371
        %3373 = vmatprep.mubr.f32.mxu0 0.0
        %3374 = vmatmul.mubr.f32.gmra.mrb[0].mxu0 %v3191
        %v3375 = vpop.f32.mrb[0].mxu0
        %v3376 = vadd.f32 0.0, %v3375
        %v3377 = vpop.f32.mrb[0].mxu0
        %v3378 = vadd.f32 0.0, %v3377
        %3379 = vmatprep.mubr.f32.mxu0 0.0
        %3380 = vmatmul.mubr.f32.gmra.mrb[0].mxu0 %v3193
        %v3381 = vpop.f32.mrb[0].mxu0
        %v3382 = vadd.f32 0.0, %v3381
        %v3383 = vpop.f32.mrb[0].mxu0
        %v3384 = vadd.f32 0.0, %v3383
        %3385 = vmatprep.mubr.f32.mxu0 0.0
        %3386 = vmatmul.mubr.f32.gmra.mrb[0].mxu0 %v3195
        %v3387 = vpop.f32.mrb[0].mxu0
        %v3388 = vadd.f32 0.0, %v3387
        %v3389 = vpop.f32.mrb[0].mxu0
        %v3390 = vadd.f32 0.0, %v3389
        %3391 = vmatprep.mubr.f32.mxu0 0.0
        %3392 = vmatmul.mubr.f32.gmra.mrb[0].mxu0 %v3197
        %v3393 = vpop.f32.mrb[0].mxu0
        %v3394 = vadd.f32 0.0, %v3393
        %v3395 = vpop.f32.mrb[0].mxu0
        %v3396 = vadd.f32 0.0, %v3395
        %3397 = vmatprep.mubr.f32.mxu0 0.0
        %3398 = vmatmul.mubr.f32.gmra.mrb[0].mxu0 %v3199
        %v3399 = vpop.f32.mrb[0].mxu0
        %v3400 = vadd.f32 0.0, %v3399
        %v3401 = vpop.f32.mrb[0].mxu0
        %v3402 = vadd.f32 0.0, %v3401
        %3403 = vmatprep.mubr.f32.mxu0 0.0
        %3404 = vmatmul.mubr.f32.gmra.mrb[0].mxu0 %v3201
        %v3405 = vpop.f32.mrb[0].mxu0
        %v3406 = vadd.f32 0.0, %v3405
        %v3407 = vpop.f32.mrb[0].mxu0
        %v3408 = vadd.f32 0.0, %v3407
        %3409 = vmatprep.mubr.f32.mxu0 0.0
        %3410 = vmatmul.mubr.f32.gmra.mrb[0].mxu0 %v3203
        %v3411 = vpop.f32.mrb[0].mxu0
        %v3412 = vadd.f32 0.0, %v3411
        %v3413 = vpop.f32.mrb[0].mxu0
        %v3414 = vadd.f32 0.0, %v3413
        %3415 = vmatprep.mubr.f32.mxu0 0.0
        %3416 = vmatmul.mubr.f32.gmra.mrb[0].mxu0 %v3205
        %v3417 = vpop.f32.mrb[0].mxu0
        %v3418 = vadd.f32 0.0, %v3417
        %v3419 = vpop.f32.mrb[0].mxu0
        %v3420 = vadd.f32 0.0, %v3419
        %3421 = vmatprep.mubr.f32.mxu0 0.0
        %3422 = vmatmul.mubr.f32.gmra.mrb[0].mxu0 %v3207
        %v3423 = vpop.f32.mrb[0].mxu0
        %v3424 = vadd.f32 0.0, %v3423
        %v3425 = vpop.f32.mrb[0].mxu0
        %v3426 = vadd.f32 0.0, %v3425
        %3427 = vmatprep.mubr.f32.mxu0 0.0
        %3428 = vmatmul.mubr.f32.gmra.mrb[0].mxu0 %v3209
        %v3429 = vpop.f32.mrb[0].mxu0
        %v3430 = vadd.f32 0.0, %v3429
        %v3431 = vpop.f32.mrb[0].mxu0
        %v3432 = vadd.f32 0.0, %v3431
        %3433 = vmatprep.mubr.f32.mxu0 0.0
        %3434 = vmatmul.mubr.f32.gmra.mrb[0].mxu0 %v3211
        %v3435 = vpop.f32.mrb[0].mxu0
        %v3436 = vadd.f32 0.0, %v3435
        %v3437 = vpop.f32.mrb[0].mxu0
        %v3438 = vadd.f32 0.0, %v3437
        %3439 = vmatprep.mubr.f32.mxu0 0.0
        %3440 = vmatmul.mubr.f32.gmra.mrb[0].mxu0 %v3213
        %v3441 = vpop.f32.mrb[0].mxu0
        %v3442 = vadd.f32 0.0, %v3441
        %v3443 = vpop.f32.mrb[0].mxu0
        %v3444 = vadd.f32 0.0, %v3443
        %3445 = vmatprep.mubr.f32.mxu0 0.0
        %3446 = vmatmul.mubr.f32.gmra.mrb[0].mxu0 %v3215
        %v3447 = vpop.f32.mrb[0].mxu0
        %v3448 = vadd.f32 0.0, %v3447
        %v3449 = vpop.f32.mrb[0].mxu0
        %v3450 = vadd.f32 0.0, %v3449
        %3451 = vmatprep.mubr.f32.mxu0 0.0
        %3452 = vmatmul.mubr.f32.gmra.mrb[0].mxu0 %v3217
        %v3453 = vpop.f32.mrb[0].mxu0
        %v3454 = vadd.f32 0.0, %v3453
        %v3455 = vpop.f32.mrb[0].mxu0
        %v3456 = vadd.f32 0.0, %v3455
        %3457 = vmatprep.mubr.f32.mxu0 0.0
        %3458 = vmatmul.mubr.f32.gmra.mrb[0].mxu0 %v3219
        %v3459 = vpop.f32.mrb[0].mxu0
        %v3460 = vadd.f32 0.0, %v3459
        %v3461 = vpop.f32.mrb[0].mxu0
        %v3462 = vadd.f32 0.0, %v3461
        %3463 = vmatprep.mubr.f32.mxu0 0.0
        %3464 = vmatmul.mubr.f32.gmra.mrb[0].mxu0 %v3221
        %v3465 = vpop.f32.mrb[0].mxu0
        %v3466 = vadd.f32 0.0, %v3465
        %v3467 = vpop.f32.mrb[0].mxu0
        %v3468 = vadd.f32 0.0, %v3467
        %3469 = vmatprep.mubr.f32.mxu0 0.0
        %3470 = vmatmul.mubr.f32.gmra.mrb[0].mxu0 %v3223
        %v3471 = vpop.f32.mrb[0].mxu0
        %v3472 = vadd.f32 0.0, %v3471
        %v3473 = vpop.f32.mrb[0].mxu0
        %v3474 = vadd.f32 0.0, %v3473
        %3475 = vmatprep.mubr.f32.mxu0 0.0
        %3476 = vmatmul.mubr.f32.gmra.mrb[0].mxu0 %v3225
        %v3477 = vpop.f32.mrb[0].mxu0
        %v3478 = vadd.f32 0.0, %v3477
        %v3479 = vpop.f32.mrb[0].mxu0
        %v3480 = vadd.f32 0.0, %v3479
        %3481 = vmatprep.mubr.f32.mxu0 0.0
        %3482 = vmatmul.mubr.f32.gmra.mrb[0].mxu0 %v3227
        %v3483 = vpop.f32.mrb[0].mxu0
        %v3484 = vadd.f32 0.0, %v3483
        %v3485 = vpop.f32.mrb[0].mxu0
        %v3486 = vadd.f32 0.0, %v3485
        %3487 = vmatprep.mubr.f32.mxu0 0.0
        %3488 = vmatmul.mubr.f32.gmra.mrb[0].mxu0 %v3229
        %v3489 = vpop.f32.mrb[0].mxu0
        %v3490 = vadd.f32 0.0, %v3489
        %v3491 = vpop.f32.mrb[0].mxu0
        %v3492 = vadd.f32 0.0, %v3491
        %3493 = vdwg.mxu0
        %v3494 = vmax.f32 %v3304, %v3316
        %v3495 = vmax.f32 %v3310, %v3322
        %v3496 = vmax.f32 %v3494, %v3328
        %v3497 = vmax.f32 %v3495, %v3334
        %v3498 = vmax.f32 %v3496, %v3340
        %v3499 = vmax.f32 %v3497, %v3346
        %v3500 = vmax.f32 %v3498, %v3352
        %v3501 = vmax.f32 %v3499, %v3358
        %v3502 = vmax.f32 %v3500, %v3364
        %v3503 = vmax.f32 %v3501, %v3370
        %v3504 = vmax.f32 %v3502, %v3376
        %v3505 = vmax.f32 %v3503, %v3382
        %v3506 = vmax.f32 %v3504, %v3388
        %v3507 = vmax.f32 %v3505, %v3394
        %v3508 = vmax.f32 %v3506, %v3400
        %v3509 = vmax.f32 %v3507, %v3406
        %v3510 = vmax.f32 %v3508, %v3412
        %v3511 = vmax.f32 %v3509, %v3418
        %v3512 = vmax.f32 %v3510, %v3424
        %v3513 = vmax.f32 %v3511, %v3430
        %v3514 = vmax.f32 %v3512, %v3436
        %v3515 = vmax.f32 %v3513, %v3442
        %v3516 = vmax.f32 %v3514, %v3448
        %v3517 = vmax.f32 %v3515, %v3454
        %v3518 = vmax.f32 %v3516, %v3460
        %v3519 = vmax.f32 %v3517, %v3466
        %v3520 = vmax.f32 %v3518, %v3472
        %v3521 = vmax.f32 %v3519, %v3478
        %v3522 = vmax.f32 %v3520, %v3484
        %v3523 = vmax.f32 %v3521, %v3490
        %v3524 = vmax.f32 %v3522, %v3523
        %v3525 = vrot.slane %v3524, 4
        %v3526 = vmax.f32 %v3524, %v3525
        %v3527 = vrot.slane %v3526, 2
        %v3528 = vmax.f32 %v3526, %v3527
        %v3529 = vrot.slane %v3528, 1
        %v3530 = vmax.f32 %v3528, %v3529
        %v3531 = vmax.f32 %v3306, %v3318
        %v3532 = vmax.f32 %v3312, %v3324
        %v3533 = vmax.f32 %v3531, %v3330
        %v3534 = vmax.f32 %v3532, %v3336
        %v3535 = vmax.f32 %v3533, %v3342
        %v3536 = vmax.f32 %v3534, %v3348
        %v3537 = vmax.f32 %v3535, %v3354
        %v3538 = vmax.f32 %v3536, %v3360
        %v3539 = vmax.f32 %v3537, %v3366
        %v3540 = vmax.f32 %v3538, %v3372
        %v3541 = vmax.f32 %v3539, %v3378
        %v3542 = vmax.f32 %v3540, %v3384
        %v3543 = vmax.f32 %v3541, %v3390
        %v3544 = vmax.f32 %v3542, %v3396
        %v3545 = vmax.f32 %v3543, %v3402
        %v3546 = vmax.f32 %v3544, %v3408
        %v3547 = vmax.f32 %v3545, %v3414
        %v3548 = vmax.f32 %v3546, %v3420
        %v3549 = vmax.f32 %v3547, %v3426
        %v3550 = vmax.f32 %v3548, %v3432
        %v3551 = vmax.f32 %v3549, %v3438
        %v3552 = vmax.f32 %v3550, %v3444
        %v3553 = vmax.f32 %v3551, %v3450
        %v3554 = vmax.f32 %v3552, %v3456
        %v3555 = vmax.f32 %v3553, %v3462
        %v3556 = vmax.f32 %v3554, %v3468
        %v3557 = vmax.f32 %v3555, %v3474
        %v3558 = vmax.f32 %v3556, %v3480
        %v3559 = vmax.f32 %v3557, %v3486
        %v3560 = vmax.f32 %v3558, %v3492
        %v3561 = vmax.f32 %v3559, %v3560
        %v3562 = vrot.slane %v3561, 4
        %v3563 = vmax.f32 %v3561, %v3562
        %v3564 = vrot.slane %v3563, 2
        %v3565 = vmax.f32 %v3563, %v3564
        %v3566 = vrot.slane %v3565, 1
        %v3567 = vmax.f32 %v3565, %v3566
        %v3568 = vsub.f32 %v3304, %v3530
        %v3569 = vsub.f32 %v3306, %v3567
        %v3570 = vsub.f32 %v3310, %v3530
        %v3571 = vsub.f32 %v3312, %v3567
        %v3572 = vsub.f32 %v3316, %v3530
        %v3573 = vsub.f32 %v3318, %v3567
        %v3574 = vsub.f32 %v3322, %v3530
        %v3575 = vsub.f32 %v3324, %v3567
        %v3576 = vsub.f32 %v3328, %v3530
        %v3577 = vsub.f32 %v3330, %v3567
        %v3578 = vsub.f32 %v3334, %v3530
        %v3579 = vsub.f32 %v3336, %v3567
        %v3580 = vsub.f32 %v3340, %v3530
        %v3581 = vsub.f32 %v3342, %v3567
        %v3582 = vsub.f32 %v3346, %v3530
        %v3583 = vsub.f32 %v3348, %v3567
        %v3584 = vsub.f32 %v3352, %v3530
        %v3585 = vsub.f32 %v3354, %v3567
        %v3586 = vsub.f32 %v3358, %v3530
        %v3587 = vsub.f32 %v3360, %v3567
        %v3588 = vsub.f32 %v3364, %v3530
        %v3589 = vsub.f32 %v3366, %v3567
        %v3590 = vsub.f32 %v3370, %v3530
        %v3591 = vsub.f32 %v3372, %v3567
        %v3592 = vsub.f32 %v3376, %v3530
        %v3593 = vsub.f32 %v3378, %v3567
        %v3594 = vsub.f32 %v3382, %v3530
        %v3595 = vsub.f32 %v3384, %v3567
        %v3596 = vsub.f32 %v3388, %v3530
        %v3597 = vsub.f32 %v3390, %v3567
        %v3598 = vsub.f32 %v3394, %v3530
        %v3599 = vsub.f32 %v3396, %v3567
        %v3600 = vsub.f32 %v3400, %v3530
        %v3601 = vsub.f32 %v3402, %v3567
        %v3602 = vsub.f32 %v3406, %v3530
        %v3603 = vsub.f32 %v3408, %v3567
        %v3604 = vsub.f32 %v3412, %v3530
        %v3605 = vsub.f32 %v3414, %v3567
        %v3606 = vsub.f32 %v3418, %v3530
        %v3607 = vsub.f32 %v3420, %v3567
        %v3608 = vsub.f32 %v3424, %v3530
        %v3609 = vsub.f32 %v3426, %v3567
        %v3610 = vsub.f32 %v3430, %v3530
        %v3611 = vsub.f32 %v3432, %v3567
        %v3612 = vsub.f32 %v3436, %v3530
        %v3613 = vsub.f32 %v3438, %v3567
        %v3614 = vsub.f32 %v3442, %v3530
        %v3615 = vsub.f32 %v3444, %v3567
        %v3616 = vsub.f32 %v3448, %v3530
        %v3617 = vsub.f32 %v3450, %v3567
        %v3618 = vsub.f32 %v3454, %v3530
        %v3619 = vsub.f32 %v3456, %v3567
        %v3620 = vsub.f32 %v3460, %v3530
        %v3621 = vsub.f32 %v3462, %v3567
        %v3622 = vsub.f32 %v3466, %v3530
        %v3623 = vsub.f32 %v3468, %v3567
        %v3624 = vsub.f32 %v3472, %v3530
        %v3625 = vsub.f32 %v3474, %v3567
        %v3626 = vsub.f32 %v3478, %v3530
        %v3627 = vsub.f32 %v3480, %v3567
        %v3628 = vsub.f32 %v3484, %v3530
        %v3629 = vsub.f32 %v3486, %v3567
        %v3630 = vsub.f32 %v3490, %v3530
        %v3631 = vsub.f32 %v3492, %v3567
        %v3632 = vmul.f32 %v3568, 1.442695
        %v3633 = vpow.pop %v3632
        %v3634 = vmul.f32 %v3569, 1.442695
        %v3635 = vpow.pop %v3634
        %v3636 = vmul.f32 %v3570, 1.442695
        %v3637 = vpow.pop %v3636
        %v3638 = vmul.f32 %v3571, 1.442695
        %v3639 = vpow.pop %v3638
        %v3640 = vmul.f32 %v3572, 1.442695
        %v3641 = vpow.pop %v3640
        %v3642 = vmul.f32 %v3573, 1.442695
        %v3643 = vpow.pop %v3642
        %v3644 = vmul.f32 %v3574, 1.442695
        %v3645 = vpow.pop %v3644
        %v3646 = vmul.f32 %v3575, 1.442695
        %v3647 = vpow.pop %v3646
        %v3648 = vmul.f32 %v3576, 1.442695
        %v3649 = vpow.pop %v3648
        %v3650 = vmul.f32 %v3577, 1.442695
        %v3651 = vpow.pop %v3650
        %v3652 = vmul.f32 %v3578, 1.442695
        %v3653 = vpow.pop %v3652
        %v3654 = vmul.f32 %v3579, 1.442695
        %v3655 = vpow.pop %v3654
        %v3656 = vmul.f32 %v3580, 1.442695
        %v3657 = vpow.pop %v3656
        %v3658 = vmul.f32 %v3581, 1.442695
        %v3659 = vpow.pop %v3658
        %v3660 = vmul.f32 %v3582, 1.442695
        %v3661 = vpow.pop %v3660
        %v3662 = vmul.f32 %v3583, 1.442695
        %v3663 = vpow.pop %v3662
        %v3664 = vmul.f32 %v3584, 1.442695
        %v3665 = vpow.pop %v3664
        %v3666 = vmul.f32 %v3585, 1.442695
        %v3667 = vpow.pop %v3666
        %v3668 = vmul.f32 %v3586, 1.442695
        %v3669 = vpow.pop %v3668
        %v3670 = vmul.f32 %v3587, 1.442695
        %v3671 = vpow.pop %v3670
        %v3672 = vmul.f32 %v3588, 1.442695
        %v3673 = vpow.pop %v3672
        %v3674 = vmul.f32 %v3589, 1.442695
        %v3675 = vpow.pop %v3674
        %v3676 = vmul.f32 %v3590, 1.442695
        %v3677 = vpow.pop %v3676
        %v3678 = vmul.f32 %v3591, 1.442695
        %v3679 = vpow.pop %v3678
        %v3680 = vmul.f32 %v3592, 1.442695
        %v3681 = vpow.pop %v3680
        %v3682 = vmul.f32 %v3593, 1.442695
        %v3683 = vpow.pop %v3682
        %v3684 = vmul.f32 %v3594, 1.442695
        %v3685 = vpow.pop %v3684
        %v3686 = vmul.f32 %v3595, 1.442695
        %v3687 = vpow.pop %v3686
        %v3688 = vmul.f32 %v3596, 1.442695
        %v3689 = vpow.pop %v3688
        %v3690 = vmul.f32 %v3597, 1.442695
        %v3691 = vpow.pop %v3690
        %v3692 = vmul.f32 %v3598, 1.442695
        %v3693 = vpow.pop %v3692
        %v3694 = vmul.f32 %v3599, 1.442695
        %v3695 = vpow.pop %v3694
        %v3696 = vmul.f32 %v3600, 1.442695
        %v3697 = vpow.pop %v3696
        %v3698 = vmul.f32 %v3601, 1.442695
        %v3699 = vpow.pop %v3698
        %v3700 = vmul.f32 %v3602, 1.442695
        %v3701 = vpow.pop %v3700
        %v3702 = vmul.f32 %v3603, 1.442695
        %v3703 = vpow.pop %v3702
        %v3704 = vmul.f32 %v3604, 1.442695
        %v3705 = vpow.pop %v3704
        %v3706 = vmul.f32 %v3605, 1.442695
        %v3707 = vpow.pop %v3706
        %v3708 = vmul.f32 %v3606, 1.442695
        %v3709 = vpow.pop %v3708
        %v3710 = vmul.f32 %v3607, 1.442695
        %v3711 = vpow.pop %v3710
        %v3712 = vmul.f32 %v3608, 1.442695
        %v3713 = vpow.pop %v3712
        %v3714 = vmul.f32 %v3609, 1.442695
        %v3715 = vpow.pop %v3714
        %v3716 = vmul.f32 %v3610, 1.442695
        %v3717 = vpow.pop %v3716
        %v3718 = vmul.f32 %v3611, 1.442695
        %v3719 = vpow.pop %v3718
        %v3720 = vmul.f32 %v3612, 1.442695
        %v3721 = vpow.pop %v3720
        %v3722 = vmul.f32 %v3613, 1.442695
        %v3723 = vpow.pop %v3722
        %v3724 = vmul.f32 %v3614, 1.442695
        %v3725 = vpow.pop %v3724
        %v3726 = vmul.f32 %v3615, 1.442695
        %v3727 = vpow.pop %v3726
        %v3728 = vmul.f32 %v3616, 1.442695
        %v3729 = vpow.pop %v3728
        %v3730 = vmul.f32 %v3617, 1.442695
        %v3731 = vpow.pop %v3730
        %v3732 = vmul.f32 %v3618, 1.442695
        %v3733 = vpow.pop %v3732
        %v3734 = vmul.f32 %v3619, 1.442695
        %v3735 = vpow.pop %v3734
        %v3736 = vmul.f32 %v3620, 1.442695
        %v3737 = vpow.pop %v3736
        %v3738 = vmul.f32 %v3621, 1.442695
        %v3739 = vpow.pop %v3738
        %v3740 = vmul.f32 %v3622, 1.442695
        %v3741 = vpow.pop %v3740
        %v3742 = vmul.f32 %v3623, 1.442695
        %v3743 = vpow.pop %v3742
        %v3744 = vmul.f32 %v3624, 1.442695
        %v3745 = vpow.pop %v3744
        %v3746 = vmul.f32 %v3625, 1.442695
        %v3747 = vpow.pop %v3746
        %v3748 = vmul.f32 %v3626, 1.442695
        %v3749 = vpow.pop %v3748
        %v3750 = vmul.f32 %v3627, 1.442695
        %v3751 = vpow.pop %v3750
        %v3752 = vmul.f32 %v3628, 1.442695
        %v3753 = vpow.pop %v3752
        %v3754 = vmul.f32 %v3629, 1.442695
        %v3755 = vpow.pop %v3754
        %v3756 = vmul.f32 %v3630, 1.442695
        %v3757 = vpow.pop %v3756
        %v3758 = vmul.f32 %v3631, 1.442695
        %v3759 = vpow.pop %v3758
        %v3760 = vadd.f32 %v3633, %v3637
        %v3761 = vadd.f32 %v3760, %v3641
        %v3762 = vadd.f32 %v3761, %v3645
        %v3763 = vadd.f32 %v3762, %v3649
        %v3764 = vadd.f32 %v3763, %v3653
        %v3765 = vadd.f32 %v3764, %v3657
        %v3766 = vadd.f32 %v3765, %v3661
        %v3767 = vadd.f32 %v3766, %v3665
        %v3768 = vadd.f32 %v3767, %v3669
        %v3769 = vadd.f32 %v3768, %v3673
        %v3770 = vadd.f32 %v3769, %v3677
        %v3771 = vadd.f32 %v3770, %v3681
        %v3772 = vadd.f32 %v3771, %v3685
        %v3773 = vadd.f32 %v3772, %v3689
        %v3774 = vadd.f32 %v3773, %v3693
        %v3775 = vadd.f32 %v3774, %v3697
        %v3776 = vadd.f32 %v3775, %v3701
        %v3777 = vadd.f32 %v3776, %v3705
        %v3778 = vadd.f32 %v3777, %v3709
        %v3779 = vadd.f32 %v3778, %v3713
        %v3780 = vadd.f32 %v3779, %v3717
        %v3781 = vadd.f32 %v3780, %v3721
        %v3782 = vadd.f32 %v3781, %v3725
        %v3783 = vadd.f32 %v3782, %v3729
        %v3784 = vadd.f32 %v3783, %v3733
        %v3785 = vadd.f32 %v3784, %v3737
        %v3786 = vadd.f32 %v3785, %v3741
        %v3787 = vadd.f32 %v3786, %v3745
        %v3788 = vadd.f32 %v3787, %v3749
        %v3789 = vadd.f32 %v3788, %v3753
        %v3790 = vadd.f32 %v3789, %v3757
        %v3791 = vrot.slane %v3790, 4
        %v3792 = vadd.f32 %v3790, %v3791
        %v3793 = vrot.slane %v3792, 2
        %v3794 = vadd.f32 %v3792, %v3793
        %v3795 = vrot.slane %v3794, 1
        %v3796 = vadd.f32 %v3794, %v3795
        %v3797 = vadd.f32 %v3635, %v3639
        %v3798 = vadd.f32 %v3797, %v3643
        %v3799 = vadd.f32 %v3798, %v3647
        %v3800 = vadd.f32 %v3799, %v3651
        %v3801 = vadd.f32 %v3800, %v3655
        %v3802 = vadd.f32 %v3801, %v3659
        %v3803 = vadd.f32 %v3802, %v3663
        %v3804 = vadd.f32 %v3803, %v3667
        %v3805 = vadd.f32 %v3804, %v3671
        %v3806 = vadd.f32 %v3805, %v3675
        %v3807 = vadd.f32 %v3806, %v3679
        %v3808 = vadd.f32 %v3807, %v3683
        %v3809 = vadd.f32 %v3808, %v3687
        %v3810 = vadd.f32 %v3809, %v3691
        %v3811 = vadd.f32 %v3810, %v3695
        %v3812 = vadd.f32 %v3811, %v3699
        %v3813 = vadd.f32 %v3812, %v3703
        %v3814 = vadd.f32 %v3813, %v3707
        %v3815 = vadd.f32 %v3814, %v3711
        %v3816 = vadd.f32 %v3815, %v3715
        %v3817 = vadd.f32 %v3816, %v3719
        %v3818 = vadd.f32 %v3817, %v3723
        %v3819 = vadd.f32 %v3818, %v3727
        %v3820 = vadd.f32 %v3819, %v3731
        %v3821 = vadd.f32 %v3820, %v3735
        %v3822 = vadd.f32 %v3821, %v3739
        %v3823 = vadd.f32 %v3822, %v3743
        %v3824 = vadd.f32 %v3823, %v3747
        %v3825 = vadd.f32 %v3824, %v3751
        %v3826 = vadd.f32 %v3825, %v3755
        %v3827 = vadd.f32 %v3826, %v3759
        %v3828 = vrot.slane %v3827, 4
        %v3829 = vadd.f32 %v3827, %v3828
        %v3830 = vrot.slane %v3829, 2
        %v3831 = vadd.f32 %v3829, %v3830
        %v3832 = vrot.slane %v3831, 1
        %v3833 = vadd.f32 %v3831, %v3832
        %v3834 = vrcp.pop %v3796
        %v3835 = vmul.f32 1.0, %v3834
        %v3836 = vrcp.pop %v3833
        %v3837 = vmul.f32 1.0, %v3836
        %3838 = vmatprep.subr.mxu0 %v3635
        %3839 = vmatpush1.msra.mxu0 %v3633
        %3840 = vmatprep.subr.mxu0 %v3639
        %3841 = vmatpush1.msra.mxu0 %v3637
        %3842 = vmatprep.subr.mxu0 %v3643
        %3843 = vmatpush1.msra.mxu0 %v3641
        %3844 = vmatprep.subr.mxu0 %v3647
        %3845 = vmatpush1.msra.mxu0 %v3645
        %3846 = vmatprep.subr.mxu0 %v3651
        %3847 = vmatpush1.msra.mxu0 %v3649
        %3848 = vmatprep.subr.mxu0 %v3655
        %3849 = vmatpush1.msra.mxu0 %v3653
        %3850 = vmatprep.subr.mxu0 %v3659
        %3851 = vmatpush1.msra.mxu0 %v3657
        %3852 = vmatprep.subr.mxu0 %v3663
        %3853 = vmatpush1.msra.mxu0 %v3661
        %3854 = vmatprep.subr.mxu0 %v3667
        %3855 = vmatpush1.msra.mxu0 %v3665
        %3856 = vmatprep.subr.mxu0 %v3671
        %3857 = vmatpush1.msra.mxu0 %v3669
        %3858 = vmatprep.subr.mxu0 %v3675
        %3859 = vmatpush1.msra.mxu0 %v3673
        %3860 = vmatprep.subr.mxu0 %v3679
        %3861 = vmatpush1.msra.mxu0 %v3677
        %3862 = vmatprep.subr.mxu0 %v3683
        %3863 = vmatpush1.msra.mxu0 %v3681
        %3864 = vmatprep.subr.mxu0 %v3687
        %3865 = vmatpush1.msra.mxu0 %v3685
        %3866 = vmatprep.subr.mxu0 %v3691
        %3867 = vmatpush1.msra.mxu0 %v3689
        %3868 = vmatprep.subr.mxu0 %v3695
        %3869 = vmatpush1.msra.mxu0 %v3693
        %3870 = vmatprep.subr.mxu0 %v3699
        %3871 = vmatpush1.msra.mxu0 %v3697
        %3872 = vmatprep.subr.mxu0 %v3703
        %3873 = vmatpush1.msra.mxu0 %v3701
        %3874 = vmatprep.subr.mxu0 %v3707
        %3875 = vmatpush1.msra.mxu0 %v3705
        %3876 = vmatprep.subr.mxu0 %v3711
        %3877 = vmatpush1.msra.mxu0 %v3709
        %3878 = vmatprep.subr.mxu0 %v3715
        %3879 = vmatpush1.msra.mxu0 %v3713
        %3880 = vmatprep.subr.mxu0 %v3719
        %3881 = vmatpush1.msra.mxu0 %v3717
        %3882 = vmatprep.subr.mxu0 %v3723
        %3883 = vmatpush1.msra.mxu0 %v3721
        %3884 = vmatprep.subr.mxu0 %v3727
        %3885 = vmatpush1.msra.mxu0 %v3725
        %3886 = vmatprep.subr.mxu0 %v3731
        %3887 = vmatpush1.msra.mxu0 %v3729
        %3888 = vmatprep.subr.mxu0 %v3735
        %3889 = vmatpush1.msra.mxu0 %v3733
        %3890 = vmatprep.subr.mxu0 %v3739
        %3891 = vmatpush1.msra.mxu0 %v3737
        %3892 = vmatprep.subr.mxu0 %v3743
        %3893 = vmatpush1.msra.mxu0 %v3741
        %3894 = vmatprep.subr.mxu0 %v3747
        %3895 = vmatpush1.msra.mxu0 %v3745
        %3896 = vmatprep.subr.mxu0 %v3751
        %3897 = vmatpush1.msra.mxu0 %v3749
        %3898 = vmatprep.subr.mxu0 %v3755
        %3899 = vmatpush1.msra.mxu0 %v3753
        %3900 = vmatprep.subr.mxu0 %v3759
        %3901 = vmatpush1.msra.mxu0 %v3757
        %3902 = vmatprep.mubr.f32.mxu0 %v1263
        %3903 = vmatmul.mubr.f32.gmra.mrb[0].mxu0 %v1261
        %v3904 = vpop.f32.mrb[0].mxu0
        %v3905 = vadd.f32 0.0, %v3904
        %v3906 = vpop.f32.mrb[0].mxu0
        %v3907 = vadd.f32 0.0, %v3906
        %3908 = vdwg.mxu0
        %v3909 = vmul.f32 %v3905, %v3835
        %v3910 = vmul.f32 %v3907, %v3837
        %3911 = vrot.lane.b32.xlu0 %v2107, 120
        %v3912 = vpop.permute.xlu0 %3911
        %3913 = vrot.lane.b32.xlu0 %v2108, 120
        %v3914 = vpop.permute.xlu0 %3913
        %v3915 = vsel %vm1329, %v3912, 0
        %v3917 = vsel %vm1329, %v3914, 0
        %v3920 = vsel %vm1426, %v3909, 0
        %v3923 = vsel %vm1426, %v3910, 0
        %3925 = vmatprep.subr.mxu0 %v3923
        %3926 = vmatpush1.msra.mxu0 %v3920
        %3927 = vmatprep.subr.mxu0 0.0
        %3928 = vmatpush1.msra.mxu0 0.0
        %3929 = vmatprep.subr.mxu0 0.0
        %3930 = vmatpush1.msra.mxu0 0.0
        %3931 = vmatprep.subr.mxu0 0.0
        %3932 = vmatpush1.msra.mxu0 0.0
        %3933 = vmatprep.subr.mxu0 0.0
        %3934 = vmatpush1.msra.mxu0 0.0
        %3935 = vmatprep.subr.mxu0 0.0
        %3936 = vmatpush1.msra.mxu0 0.0
        %3937 = vmatprep.subr.mxu0 0.0
        %3938 = vmatpush1.msra.mxu0 0.0
        %3939 = vmatprep.subr.mxu0 0.0
        %3940 = vmatpush1.msra.mxu0 0.0
        %3941 = vmatprep.subr.mxu0 0.0
        %3942 = vmatpush1.msra.mxu0 0.0
        %3943 = vmatprep.subr.mxu0 0.0
        %3944 = vmatpush1.msra.mxu0 0.0
        %3945 = vmatprep.subr.mxu0 0.0
        %3946 = vmatpush1.msra.mxu0 0.0
        %3947 = vmatprep.subr.mxu0 0.0
        %3948 = vmatpush1.msra.mxu0 0.0
        %3949 = vmatprep.subr.mxu0 0.0
        %3950 = vmatpush1.msra.mxu0 0.0
        %3951 = vmatprep.subr.mxu0 0.0
        %3952 = vmatpush1.msra.mxu0 0.0
        %3953 = vmatprep.subr.mxu0 0.0
        %3954 = vmatpush1.msra.mxu0 0.0
        %3955 = vmatprep.subr.mxu0 0.0
        %3956 = vmatpush1.msra.mxu0 0.0
        %3957 = vmatprep.subr.mxu0 0.0
        %3958 = vmatpush1.msra.mxu0 0.0
        %3959 = vmatprep.subr.mxu0 0.0
        %3960 = vmatpush1.msra.mxu0 0.0
        %3961 = vmatprep.subr.mxu0 0.0
        %3962 = vmatpush1.msra.mxu0 0.0
        %3963 = vmatprep.subr.mxu0 0.0
        %3964 = vmatpush1.msra.mxu0 0.0
        %3965 = vmatprep.subr.mxu0 0.0
        %3966 = vmatpush1.msra.mxu0 0.0
        %3967 = vmatprep.subr.mxu0 0.0
        %3968 = vmatpush1.msra.mxu0 0.0
        %3969 = vmatprep.subr.mxu0 0.0
        %3970 = vmatpush1.msra.mxu0 0.0
        %3971 = vmatprep.subr.mxu0 0.0
        %3972 = vmatpush1.msra.mxu0 0.0
        %3973 = vmatprep.subr.mxu0 0.0
        %3974 = vmatpush1.msra.mxu0 0.0
        %3975 = vmatprep.subr.mxu0 0.0
        %3976 = vmatpush1.msra.mxu0 0.0
        %3977 = vmatprep.subr.mxu0 0.0
        %3978 = vmatpush1.msra.mxu0 0.0
        %3979 = vmatprep.subr.mxu0 0.0
        %3980 = vmatpush1.msra.mxu0 0.0
        %3981 = vmatprep.subr.mxu0 0.0
        %3982 = vmatpush1.msra.mxu0 0.0
        %3983 = vmatprep.subr.mxu0 0.0
        %3984 = vmatpush1.msra.mxu0 0.0
        %3985 = vmatprep.subr.mxu0 0.0
        %3986 = vmatpush1.msra.mxu0 0.0
        %3987 = vmatprep.subr.mxu0 0.0
        %3988 = vmatpush1.msra.mxu0 0.0
        %3989 = vmatprep.mubr.f32.mxu0 0.0
        %3990 = vmatmul.mubr.f32.gmra.mrb[0].mxu0 %v3915
        %v3991 = vpop.f32.mrb[0].mxu0
        %v3992 = vadd.f32 0.0, %v3991
        %v3993 = vpop.f32.mrb[0].mxu0
        %v3994 = vadd.f32 0.0, %v3993
        %3995 = vmatprep.mubr.f32.mxu0 0.0
        %3996 = vmatmul.mubr.f32.gmra.mrb[0].mxu0 %v3917
        %v3997 = vpop.f32.mrb[0].mxu0
        %v3998 = vadd.f32 0.0, %v3997
        %v3999 = vpop.f32.mrb[0].mxu0
        %v4000 = vadd.f32 0.0, %v3999
        %4001 = vdwg.mxu0
        %v4002 = vadd.f32 %v3093, %v3992
        %v4003 = vadd.f32 %v3095, %v3994
        %v4004 = vadd.f32 %v3099, %v3998
        %v4005 = vadd.f32 %v3101, %v4000
        %4006 = vrot.lane.b32.xlu0 %v1281, 116
        %v4007 = vpop.permute.xlu0 %4006
        %4008 = vrot.lane.b32.xlu0 %v1282, 116
        %v4009 = vpop.permute.xlu0 %4008
        %4010 = vrot.lane.b32.xlu0 %v1283, 116
        %v4011 = vpop.permute.xlu0 %4010
        %4012 = vrot.lane.b32.xlu0 %v1284, 116
        %v4013 = vpop.permute.xlu0 %4012
        %4014 = vrot.lane.b32.xlu0 %v1285, 116
        %v4015 = vpop.permute.xlu0 %4014
        %4016 = vrot.lane.b32.xlu0 %v1286, 116
        %v4017 = vpop.permute.xlu0 %4016
        %4018 = vrot.lane.b32.xlu0 %v1287, 116
        %v4019 = vpop.permute.xlu0 %4018
        %4020 = vrot.lane.b32.xlu0 %v1288, 116
        %v4021 = vpop.permute.xlu0 %4020
        %4022 = vrot.lane.b32.xlu0 %v1289, 116
        %v4023 = vpop.permute.xlu0 %4022
        %4024 = vrot.lane.b32.xlu0 %v1290, 116
        %v4025 = vpop.permute.xlu0 %4024
        %4026 = vrot.lane.b32.xlu0 %v1291, 116
        %v4027 = vpop.permute.xlu0 %4026
        %4028 = vrot.lane.b32.xlu0 %v1292, 116
        %v4029 = vpop.permute.xlu0 %4028
        %4030 = vrot.lane.b32.xlu0 %v1293, 116
        %v4031 = vpop.permute.xlu0 %4030
        %4032 = vrot.lane.b32.xlu0 %v1294, 116
        %v4033 = vpop.permute.xlu0 %4032
        %4034 = vrot.lane.b32.xlu0 %v1295, 116
        %v4035 = vpop.permute.xlu0 %4034
        %4036 = vrot.lane.b32.xlu0 %v1296, 116
        %v4037 = vpop.permute.xlu0 %4036
        %4038 = vrot.lane.b32.xlu0 %v1313, 116
        %v4039 = vpop.permute.xlu0 %4038
        %4040 = vrot.lane.b32.xlu0 %v1314, 116
        %v4041 = vpop.permute.xlu0 %4040
        %4042 = vrot.lane.b32.xlu0 %v1315, 116
        %v4043 = vpop.permute.xlu0 %4042
        %4044 = vrot.lane.b32.xlu0 %v1316, 116
        %v4045 = vpop.permute.xlu0 %4044
        %4046 = vrot.lane.b32.xlu0 %v1317, 116
        %v4047 = vpop.permute.xlu0 %4046
        %4048 = vrot.lane.b32.xlu0 %v1318, 116
        %v4049 = vpop.permute.xlu0 %4048
        %4050 = vrot.lane.b32.xlu0 %v1319, 116
        %v4051 = vpop.permute.xlu0 %4050
        %4052 = vrot.lane.b32.xlu0 %v1320, 116
        %v4053 = vpop.permute.xlu0 %4052
        %4054 = vrot.lane.b32.xlu0 %v1321, 116
        %v4055 = vpop.permute.xlu0 %4054
        %4056 = vrot.lane.b32.xlu0 %v1322, 116
        %v4057 = vpop.permute.xlu0 %4056
        %4058 = vrot.lane.b32.xlu0 %v1323, 116
        %v4059 = vpop.permute.xlu0 %4058
        %4060 = vrot.lane.b32.xlu0 %v1324, 116
        %v4061 = vpop.permute.xlu0 %4060
        %4062 = vrot.lane.b32.xlu0 %v1325, 116
        %v4063 = vpop.permute.xlu0 %4062
        %4064 = vrot.lane.b32.xlu0 %v1326, 116
        %v4065 = vpop.permute.xlu0 %4064
        %4066 = vrot.lane.b32.xlu0 %v1327, 116
        %v4067 = vpop.permute.xlu0 %4066
        %4068 = vrot.lane.b32.xlu0 %v1328, 116
        %v4069 = vpop.permute.xlu0 %4068
        %v4070 = vrot.slane %v1237, 4
        %v4071 = vrot.slane %v1239, 4
        %v4072 = vsel %vm1329, %v4007, 0
        %v4074 = vsel %vm1329, %v4009, 0
        %v4076 = vsel %vm1329, %v4011, 0
        %v4078 = vsel %vm1329, %v4013, 0
        %v4080 = vsel %vm1329, %v4015, 0
        %v4082 = vsel %vm1329, %v4017, 0
        %v4084 = vsel %vm1329, %v4019, 0
        %v4086 = vsel %vm1329, %v4021, 0
        %v4088 = vsel %vm1329, %v4023, 0
        %v4090 = vsel %vm1329, %v4025, 0
        %v4092 = vsel %vm1329, %v4027, 0
        %v4094 = vsel %vm1329, %v4029, 0
        %v4096 = vsel %vm1329, %v4031, 0
        %v4098 = vsel %vm1329, %v4033, 0
        %v4100 = vsel %vm1329, %v4035, 0
        %v4102 = vsel %vm1329, %v4037, 0
        %v4104 = vsel %vm1329, %v4039, 0
        %v4106 = vsel %vm1329, %v4041, 0
        %v4108 = vsel %vm1329, %v4043, 0
        %v4110 = vsel %vm1329, %v4045, 0
        %v4112 = vsel %vm1329, %v4047, 0
        %v4114 = vsel %vm1329, %v4049, 0
        %v4116 = vsel %vm1329, %v4051, 0
        %v4118 = vsel %vm1329, %v4053, 0
        %v4120 = vsel %vm1329, %v4055, 0
        %v4122 = vsel %vm1329, %v4057, 0
        %v4124 = vsel %vm1329, %v4059, 0
        %v4126 = vsel %vm1329, %v4061, 0
        %v4128 = vsel %vm1329, %v4063, 0
        %v4130 = vsel %vm1329, %v4065, 0
        %v4132 = vsel %vm1329, %v4067, 0
        %v4134 = vsel %vm1329, %v4069, 0
        %v4136 = vsel %vm1426, %v4070, 0
        %v4138 = vsel %vm1426, %v4071, 0
        %4140 = vmatprep.subr.mxu0 %v4138
        %4141 = vmatpush1.msra.mxu0 %v4136
        %4142 = vmatprep.subr.mxu0 0.0
        %4143 = vmatpush1.msra.mxu0 0.0
        %4144 = vmatprep.subr.mxu0 0.0
        %4145 = vmatpush1.msra.mxu0 0.0
        %4146 = vmatprep.subr.mxu0 0.0
        %4147 = vmatpush1.msra.mxu0 0.0
        %4148 = vmatprep.subr.mxu0 0.0
        %4149 = vmatpush1.msra.mxu0 0.0
        %4150 = vmatprep.subr.mxu0 0.0
        %4151 = vmatpush1.msra.mxu0 0.0
        %4152 = vmatprep.subr.mxu0 0.0
        %4153 = vmatpush1.msra.mxu0 0.0
        %4154 = vmatprep.subr.mxu0 0.0
        %4155 = vmatpush1.msra.mxu0 0.0
        %4156 = vmatprep.subr.mxu0 0.0
        %4157 = vmatpush1.msra.mxu0 0.0
        %4158 = vmatprep.subr.mxu0 0.0
        %4159 = vmatpush1.msra.mxu0 0.0
        %4160 = vmatprep.subr.mxu0 0.0
        %4161 = vmatpush1.msra.mxu0 0.0
        %4162 = vmatprep.subr.mxu0 0.0
        %4163 = vmatpush1.msra.mxu0 0.0
        %4164 = vmatprep.subr.mxu0 0.0
        %4165 = vmatpush1.msra.mxu0 0.0
        %4166 = vmatprep.subr.mxu0 0.0
        %4167 = vmatpush1.msra.mxu0 0.0
        %4168 = vmatprep.subr.mxu0 0.0
        %4169 = vmatpush1.msra.mxu0 0.0
        %4170 = vmatprep.subr.mxu0 0.0
        %4171 = vmatpush1.msra.mxu0 0.0
        %4172 = vmatprep.subr.mxu0 0.0
        %4173 = vmatpush1.msra.mxu0 0.0
        %4174 = vmatprep.subr.mxu0 0.0
        %4175 = vmatpush1.msra.mxu0 0.0
        %4176 = vmatprep.subr.mxu0 0.0
        %4177 = vmatpush1.msra.mxu0 0.0
        %4178 = vmatprep.subr.mxu0 0.0
        %4179 = vmatpush1.msra.mxu0 0.0
        %4180 = vmatprep.subr.mxu0 0.0
        %4181 = vmatpush1.msra.mxu0 0.0
        %4182 = vmatprep.subr.mxu0 0.0
        %4183 = vmatpush1.msra.mxu0 0.0
        %4184 = vmatprep.subr.mxu0 0.0
        %4185 = vmatpush1.msra.mxu0 0.0
        %4186 = vmatprep.subr.mxu0 0.0
        %4187 = vmatpush1.msra.mxu0 0.0
        %4188 = vmatprep.subr.mxu0 0.0
        %4189 = vmatpush1.msra.mxu0 0.0
        %4190 = vmatprep.subr.mxu0 0.0
        %4191 = vmatpush1.msra.mxu0 0.0
        %4192 = vmatprep.subr.mxu0 0.0
        %4193 = vmatpush1.msra.mxu0 0.0
        %4194 = vmatprep.subr.mxu0 0.0
        %4195 = vmatpush1.msra.mxu0 0.0
        %4196 = vmatprep.subr.mxu0 0.0
        %4197 = vmatpush1.msra.mxu0 0.0
        %4198 = vmatprep.subr.mxu0 0.0
        %4199 = vmatpush1.msra.mxu0 0.0
        %4200 = vmatprep.subr.mxu0 0.0
        %4201 = vmatpush1.msra.mxu0 0.0
        %4202 = vmatprep.subr.mxu0 0.0
        %4203 = vmatpush1.msra.mxu0 0.0
        %4204 = vmatprep.mubr.f32.mxu0 0.0
        %4205 = vmatmul.mubr.f32.gmra.mrb[0].mxu0 %v4072
        %v4206 = vpop.f32.mrb[0].mxu0
        %v4207 = vadd.f32 0.0, %v4206
        %v4208 = vpop.f32.mrb[0].mxu0
        %v4209 = vadd.f32 0.0, %v4208
        %4210 = vmatprep.mubr.f32.mxu0 0.0
        %4211 = vmatmul.mubr.f32.gmra.mrb[0].mxu0 %v4074
        %v4212 = vpop.f32.mrb[0].mxu0
        %v4213 = vadd.f32 0.0, %v4212
        %v4214 = vpop.f32.mrb[0].mxu0
        %v4215 = vadd.f32 0.0, %v4214
        %4216 = vmatprep.mubr.f32.mxu0 0.0
        %4217 = vmatmul.mubr.f32.gmra.mrb[0].mxu0 %v4076
        %v4218 = vpop.f32.mrb[0].mxu0
        %v4219 = vadd.f32 0.0, %v4218
        %v4220 = vpop.f32.mrb[0].mxu0
        %v4221 = vadd.f32 0.0, %v4220
        %4222 = vmatprep.mubr.f32.mxu0 0.0
        %4223 = vmatmul.mubr.f32.gmra.mrb[0].mxu0 %v4078
        %v4224 = vpop.f32.mrb[0].mxu0
        %v4225 = vadd.f32 0.0, %v4224
        %v4226 = vpop.f32.mrb[0].mxu0
        %v4227 = vadd.f32 0.0, %v4226
        %4228 = vmatprep.mubr.f32.mxu0 0.0
        %4229 = vmatmul.mubr.f32.gmra.mrb[0].mxu0 %v4080
        %v4230 = vpop.f32.mrb[0].mxu0
        %v4231 = vadd.f32 0.0, %v4230
        %v4232 = vpop.f32.mrb[0].mxu0
        %v4233 = vadd.f32 0.0, %v4232
        %4234 = vmatprep.mubr.f32.mxu0 0.0
        %4235 = vmatmul.mubr.f32.gmra.mrb[0].mxu0 %v4082
        %v4236 = vpop.f32.mrb[0].mxu0
        %v4237 = vadd.f32 0.0, %v4236
        %v4238 = vpop.f32.mrb[0].mxu0
        %v4239 = vadd.f32 0.0, %v4238
        %4240 = vmatprep.mubr.f32.mxu0 0.0
        %4241 = vmatmul.mubr.f32.gmra.mrb[0].mxu0 %v4084
        %v4242 = vpop.f32.mrb[0].mxu0
        %v4243 = vadd.f32 0.0, %v4242
        %v4244 = vpop.f32.mrb[0].mxu0
        %v4245 = vadd.f32 0.0, %v4244
        %4246 = vmatprep.mubr.f32.mxu0 0.0
        %4247 = vmatmul.mubr.f32.gmra.mrb[0].mxu0 %v4086
        %v4248 = vpop.f32.mrb[0].mxu0
        %v4249 = vadd.f32 0.0, %v4248
        %v4250 = vpop.f32.mrb[0].mxu0
        %v4251 = vadd.f32 0.0, %v4250
        %4252 = vmatprep.mubr.f32.mxu0 0.0
        %4253 = vmatmul.mubr.f32.gmra.mrb[0].mxu0 %v4088
        %v4254 = vpop.f32.mrb[0].mxu0
        %v4255 = vadd.f32 0.0, %v4254
        %v4256 = vpop.f32.mrb[0].mxu0
        %v4257 = vadd.f32 0.0, %v4256
        %4258 = vmatprep.mubr.f32.mxu0 0.0
        %4259 = vmatmul.mubr.f32.gmra.mrb[0].mxu0 %v4090
        %v4260 = vpop.f32.mrb[0].mxu0
        %v4261 = vadd.f32 0.0, %v4260
        %v4262 = vpop.f32.mrb[0].mxu0
        %v4263 = vadd.f32 0.0, %v4262
        %4264 = vmatprep.mubr.f32.mxu0 0.0
        %4265 = vmatmul.mubr.f32.gmra.mrb[0].mxu0 %v4092
        %v4266 = vpop.f32.mrb[0].mxu0
        %v4267 = vadd.f32 0.0, %v4266
        %v4268 = vpop.f32.mrb[0].mxu0
        %v4269 = vadd.f32 0.0, %v4268
        %4270 = vmatprep.mubr.f32.mxu0 0.0
        %4271 = vmatmul.mubr.f32.gmra.mrb[0].mxu0 %v4094
        %v4272 = vpop.f32.mrb[0].mxu0
        %v4273 = vadd.f32 0.0, %v4272
        %v4274 = vpop.f32.mrb[0].mxu0
        %v4275 = vadd.f32 0.0, %v4274
        %4276 = vmatprep.mubr.f32.mxu0 0.0
        %4277 = vmatmul.mubr.f32.gmra.mrb[0].mxu0 %v4096
        %v4278 = vpop.f32.mrb[0].mxu0
        %v4279 = vadd.f32 0.0, %v4278
        %v4280 = vpop.f32.mrb[0].mxu0
        %v4281 = vadd.f32 0.0, %v4280
        %4282 = vmatprep.mubr.f32.mxu0 0.0
        %4283 = vmatmul.mubr.f32.gmra.mrb[0].mxu0 %v4098
        %v4284 = vpop.f32.mrb[0].mxu0
        %v4285 = vadd.f32 0.0, %v4284
        %v4286 = vpop.f32.mrb[0].mxu0
        %v4287 = vadd.f32 0.0, %v4286
        %4288 = vmatprep.mubr.f32.mxu0 0.0
        %4289 = vmatmul.mubr.f32.gmra.mrb[0].mxu0 %v4100
        %v4290 = vpop.f32.mrb[0].mxu0
        %v4291 = vadd.f32 0.0, %v4290
        %v4292 = vpop.f32.mrb[0].mxu0
        %v4293 = vadd.f32 0.0, %v4292
        %4294 = vmatprep.mubr.f32.mxu0 0.0
        %4295 = vmatmul.mubr.f32.gmra.mrb[0].mxu0 %v4102
        %v4296 = vpop.f32.mrb[0].mxu0
        %v4297 = vadd.f32 0.0, %v4296
        %v4298 = vpop.f32.mrb[0].mxu0
        %v4299 = vadd.f32 0.0, %v4298
        %4300 = vmatprep.mubr.f32.mxu0 0.0
        %4301 = vmatmul.mubr.f32.gmra.mrb[0].mxu0 %v4104
        %v4302 = vpop.f32.mrb[0].mxu0
        %v4303 = vadd.f32 0.0, %v4302
        %v4304 = vpop.f32.mrb[0].mxu0
        %v4305 = vadd.f32 0.0, %v4304
        %4306 = vmatprep.mubr.f32.mxu0 0.0
        %4307 = vmatmul.mubr.f32.gmra.mrb[0].mxu0 %v4106
        %v4308 = vpop.f32.mrb[0].mxu0
        %v4309 = vadd.f32 0.0, %v4308
        %v4310 = vpop.f32.mrb[0].mxu0
        %v4311 = vadd.f32 0.0, %v4310
        %4312 = vmatprep.mubr.f32.mxu0 0.0
        %4313 = vmatmul.mubr.f32.gmra.mrb[0].mxu0 %v4108
        %v4314 = vpop.f32.mrb[0].mxu0
        %v4315 = vadd.f32 0.0, %v4314
        %v4316 = vpop.f32.mrb[0].mxu0
        %v4317 = vadd.f32 0.0, %v4316
        %4318 = vmatprep.mubr.f32.mxu0 0.0
        %4319 = vmatmul.mubr.f32.gmra.mrb[0].mxu0 %v4110
        %v4320 = vpop.f32.mrb[0].mxu0
        %v4321 = vadd.f32 0.0, %v4320
        %v4322 = vpop.f32.mrb[0].mxu0
        %v4323 = vadd.f32 0.0, %v4322
        %4324 = vmatprep.mubr.f32.mxu0 0.0
        %4325 = vmatmul.mubr.f32.gmra.mrb[0].mxu0 %v4112
        %v4326 = vpop.f32.mrb[0].mxu0
        %v4327 = vadd.f32 0.0, %v4326
        %v4328 = vpop.f32.mrb[0].mxu0
        %v4329 = vadd.f32 0.0, %v4328
        %4330 = vmatprep.mubr.f32.mxu0 0.0
        %4331 = vmatmul.mubr.f32.gmra.mrb[0].mxu0 %v4114
        %v4332 = vpop.f32.mrb[0].mxu0
        %v4333 = vadd.f32 0.0, %v4332
        %v4334 = vpop.f32.mrb[0].mxu0
        %v4335 = vadd.f32 0.0, %v4334
        %4336 = vmatprep.mubr.f32.mxu0 0.0
        %4337 = vmatmul.mubr.f32.gmra.mrb[0].mxu0 %v4116
        %v4338 = vpop.f32.mrb[0].mxu0
        %v4339 = vadd.f32 0.0, %v4338
        %v4340 = vpop.f32.mrb[0].mxu0
        %v4341 = vadd.f32 0.0, %v4340
        %4342 = vmatprep.mubr.f32.mxu0 0.0
        %4343 = vmatmul.mubr.f32.gmra.mrb[0].mxu0 %v4118
        %v4344 = vpop.f32.mrb[0].mxu0
        %v4345 = vadd.f32 0.0, %v4344
        %v4346 = vpop.f32.mrb[0].mxu0
        %v4347 = vadd.f32 0.0, %v4346
        %4348 = vmatprep.mubr.f32.mxu0 0.0
        %4349 = vmatmul.mubr.f32.gmra.mrb[0].mxu0 %v4120
        %v4350 = vpop.f32.mrb[0].mxu0
        %v4351 = vadd.f32 0.0, %v4350
        %v4352 = vpop.f32.mrb[0].mxu0
        %v4353 = vadd.f32 0.0, %v4352
        %4354 = vmatprep.mubr.f32.mxu0 0.0
        %4355 = vmatmul.mubr.f32.gmra.mrb[0].mxu0 %v4122
        %v4356 = vpop.f32.mrb[0].mxu0
        %v4357 = vadd.f32 0.0, %v4356
        %v4358 = vpop.f32.mrb[0].mxu0
        %v4359 = vadd.f32 0.0, %v4358
        %4360 = vmatprep.mubr.f32.mxu0 0.0
        %4361 = vmatmul.mubr.f32.gmra.mrb[0].mxu0 %v4124
        %v4362 = vpop.f32.mrb[0].mxu0
        %v4363 = vadd.f32 0.0, %v4362
        %v4364 = vpop.f32.mrb[0].mxu0
        %v4365 = vadd.f32 0.0, %v4364
        %4366 = vmatprep.mubr.f32.mxu0 0.0
        %4367 = vmatmul.mubr.f32.gmra.mrb[0].mxu0 %v4126
        %v4368 = vpop.f32.mrb[0].mxu0
        %v4369 = vadd.f32 0.0, %v4368
        %v4370 = vpop.f32.mrb[0].mxu0
        %v4371 = vadd.f32 0.0, %v4370
        %4372 = vmatprep.mubr.f32.mxu0 0.0
        %4373 = vmatmul.mubr.f32.gmra.mrb[0].mxu0 %v4128
        %v4374 = vpop.f32.mrb[0].mxu0
        %v4375 = vadd.f32 0.0, %v4374
        %v4376 = vpop.f32.mrb[0].mxu0
        %v4377 = vadd.f32 0.0, %v4376
        %4378 = vmatprep.mubr.f32.mxu0 0.0
        %4379 = vmatmul.mubr.f32.gmra.mrb[0].mxu0 %v4130
        %v4380 = vpop.f32.mrb[0].mxu0
        %v4381 = vadd.f32 0.0, %v4380
        %v4382 = vpop.f32.mrb[0].mxu0
        %v4383 = vadd.f32 0.0, %v4382
        %4384 = vmatprep.mubr.f32.mxu0 0.0
        %4385 = vmatmul.mubr.f32.gmra.mrb[0].mxu0 %v4132
        %v4386 = vpop.f32.mrb[0].mxu0
        %v4387 = vadd.f32 0.0, %v4386
        %v4388 = vpop.f32.mrb[0].mxu0
        %v4389 = vadd.f32 0.0, %v4388
        %4390 = vmatprep.mubr.f32.mxu0 0.0
        %4391 = vmatmul.mubr.f32.gmra.mrb[0].mxu0 %v4134
        %v4392 = vpop.f32.mrb[0].mxu0
        %v4393 = vadd.f32 0.0, %v4392
        %v4394 = vpop.f32.mrb[0].mxu0
        %v4395 = vadd.f32 0.0, %v4394
        %4396 = vdwg.mxu0
        %v4397 = vmax.f32 %v4207, %v4219
        %v4398 = vmax.f32 %v4213, %v4225
        %v4399 = vmax.f32 %v4397, %v4231
        %v4400 = vmax.f32 %v4398, %v4237
        %v4401 = vmax.f32 %v4399, %v4243
        %v4402 = vmax.f32 %v4400, %v4249
        %v4403 = vmax.f32 %v4401, %v4255
        %v4404 = vmax.f32 %v4402, %v4261
        %v4405 = vmax.f32 %v4403, %v4267
        %v4406 = vmax.f32 %v4404, %v4273
        %v4407 = vmax.f32 %v4405, %v4279
        %v4408 = vmax.f32 %v4406, %v4285
        %v4409 = vmax.f32 %v4407, %v4291
        %v4410 = vmax.f32 %v4408, %v4297
        %v4411 = vmax.f32 %v4409, %v4303
        %v4412 = vmax.f32 %v4410, %v4309
        %v4413 = vmax.f32 %v4411, %v4315
        %v4414 = vmax.f32 %v4412, %v4321
        %v4415 = vmax.f32 %v4413, %v4327
        %v4416 = vmax.f32 %v4414, %v4333
        %v4417 = vmax.f32 %v4415, %v4339
        %v4418 = vmax.f32 %v4416, %v4345
        %v4419 = vmax.f32 %v4417, %v4351
        %v4420 = vmax.f32 %v4418, %v4357
        %v4421 = vmax.f32 %v4419, %v4363
        %v4422 = vmax.f32 %v4420, %v4369
        %v4423 = vmax.f32 %v4421, %v4375
        %v4424 = vmax.f32 %v4422, %v4381
        %v4425 = vmax.f32 %v4423, %v4387
        %v4426 = vmax.f32 %v4424, %v4393
        %v4427 = vmax.f32 %v4425, %v4426
        %v4428 = vrot.slane %v4427, 4
        %v4429 = vmax.f32 %v4427, %v4428
        %v4430 = vrot.slane %v4429, 2
        %v4431 = vmax.f32 %v4429, %v4430
        %v4432 = vrot.slane %v4431, 1
        %v4433 = vmax.f32 %v4431, %v4432
        %v4434 = vmax.f32 %v4209, %v4221
        %v4435 = vmax.f32 %v4215, %v4227
        %v4436 = vmax.f32 %v4434, %v4233
        %v4437 = vmax.f32 %v4435, %v4239
        %v4438 = vmax.f32 %v4436, %v4245
        %v4439 = vmax.f32 %v4437, %v4251
        %v4440 = vmax.f32 %v4438, %v4257
        %v4441 = vmax.f32 %v4439, %v4263
        %v4442 = vmax.f32 %v4440, %v4269
        %v4443 = vmax.f32 %v4441, %v4275
        %v4444 = vmax.f32 %v4442, %v4281
        %v4445 = vmax.f32 %v4443, %v4287
        %v4446 = vmax.f32 %v4444, %v4293
        %v4447 = vmax.f32 %v4445, %v4299
        %v4448 = vmax.f32 %v4446, %v4305
        %v4449 = vmax.f32 %v4447, %v4311
        %v4450 = vmax.f32 %v4448, %v4317
        %v4451 = vmax.f32 %v4449, %v4323
        %v4452 = vmax.f32 %v4450, %v4329
        %v4453 = vmax.f32 %v4451, %v4335
        %v4454 = vmax.f32 %v4452, %v4341
        %v4455 = vmax.f32 %v4453, %v4347
        %v4456 = vmax.f32 %v4454, %v4353
        %v4457 = vmax.f32 %v4455, %v4359
        %v4458 = vmax.f32 %v4456, %v4365
        %v4459 = vmax.f32 %v4457, %v4371
        %v4460 = vmax.f32 %v4458, %v4377
        %v4461 = vmax.f32 %v4459, %v4383
        %v4462 = vmax.f32 %v4460, %v4389
        %v4463 = vmax.f32 %v4461, %v4395
        %v4464 = vmax.f32 %v4462, %v4463
        %v4465 = vrot.slane %v4464, 4
        %v4466 = vmax.f32 %v4464, %v4465
        %v4467 = vrot.slane %v4466, 2
        %v4468 = vmax.f32 %v4466, %v4467
        %v4469 = vrot.slane %v4468, 1
        %v4470 = vmax.f32 %v4468, %v4469
        %v4471 = vsub.f32 %v4207, %v4433
        %v4472 = vsub.f32 %v4209, %v4470
        %v4473 = vsub.f32 %v4213, %v4433
        %v4474 = vsub.f32 %v4215, %v4470
        %v4475 = vsub.f32 %v4219, %v4433
        %v4476 = vsub.f32 %v4221, %v4470
        %v4477 = vsub.f32 %v4225, %v4433
        %v4478 = vsub.f32 %v4227, %v4470
        %v4479 = vsub.f32 %v4231, %v4433
        %v4480 = vsub.f32 %v4233, %v4470
        %v4481 = vsub.f32 %v4237, %v4433
        %v4482 = vsub.f32 %v4239, %v4470
        %v4483 = vsub.f32 %v4243, %v4433
        %v4484 = vsub.f32 %v4245, %v4470
        %v4485 = vsub.f32 %v4249, %v4433
        %v4486 = vsub.f32 %v4251, %v4470
        %v4487 = vsub.f32 %v4255, %v4433
        %v4488 = vsub.f32 %v4257, %v4470
        %v4489 = vsub.f32 %v4261, %v4433
        %v4490 = vsub.f32 %v4263, %v4470
        %v4491 = vsub.f32 %v4267, %v4433
        %v4492 = vsub.f32 %v4269, %v4470
        %v4493 = vsub.f32 %v4273, %v4433
        %v4494 = vsub.f32 %v4275, %v4470
        %v4495 = vsub.f32 %v4279, %v4433
        %v4496 = vsub.f32 %v4281, %v4470
        %v4497 = vsub.f32 %v4285, %v4433
        %v4498 = vsub.f32 %v4287, %v4470
        %v4499 = vsub.f32 %v4291, %v4433
        %v4500 = vsub.f32 %v4293, %v4470
        %v4501 = vsub.f32 %v4297, %v4433
        %v4502 = vsub.f32 %v4299, %v4470
        %v4503 = vsub.f32 %v4303, %v4433
        %v4504 = vsub.f32 %v4305, %v4470
        %v4505 = vsub.f32 %v4309, %v4433
        %v4506 = vsub.f32 %v4311, %v4470
        %v4507 = vsub.f32 %v4315, %v4433
        %v4508 = vsub.f32 %v4317, %v4470
        %v4509 = vsub.f32 %v4321, %v4433
        %v4510 = vsub.f32 %v4323, %v4470
        %v4511 = vsub.f32 %v4327, %v4433
        %v4512 = vsub.f32 %v4329, %v4470
        %v4513 = vsub.f32 %v4333, %v4433
        %v4514 = vsub.f32 %v4335, %v4470
        %v4515 = vsub.f32 %v4339, %v4433
        %v4516 = vsub.f32 %v4341, %v4470
        %v4517 = vsub.f32 %v4345, %v4433
        %v4518 = vsub.f32 %v4347, %v4470
        %v4519 = vsub.f32 %v4351, %v4433
        %v4520 = vsub.f32 %v4353, %v4470
        %v4521 = vsub.f32 %v4357, %v4433
        %v4522 = vsub.f32 %v4359, %v4470
        %v4523 = vsub.f32 %v4363, %v4433
        %v4524 = vsub.f32 %v4365, %v4470
        %v4525 = vsub.f32 %v4369, %v4433
        %v4526 = vsub.f32 %v4371, %v4470
        %v4527 = vsub.f32 %v4375, %v4433
        %v4528 = vsub.f32 %v4377, %v4470
        %v4529 = vsub.f32 %v4381, %v4433
        %v4530 = vsub.f32 %v4383, %v4470
        %v4531 = vsub.f32 %v4387, %v4433
        %v4532 = vsub.f32 %v4389, %v4470
        %v4533 = vsub.f32 %v4393, %v4433
        %v4534 = vsub.f32 %v4395, %v4470
        %v4535 = vmul.f32 %v4471, 1.442695
        %v4536 = vpow.pop %v4535
        %v4537 = vmul.f32 %v4472, 1.442695
        %v4538 = vpow.pop %v4537
        %v4539 = vmul.f32 %v4473, 1.442695
        %v4540 = vpow.pop %v4539
        %v4541 = vmul.f32 %v4474, 1.442695
        %v4542 = vpow.pop %v4541
        %v4543 = vmul.f32 %v4475, 1.442695
        %v4544 = vpow.pop %v4543
        %v4545 = vmul.f32 %v4476, 1.442695
        %v4546 = vpow.pop %v4545
        %v4547 = vmul.f32 %v4477, 1.442695
        %v4548 = vpow.pop %v4547
        %v4549 = vmul.f32 %v4478, 1.442695
        %v4550 = vpow.pop %v4549
        %v4551 = vmul.f32 %v4479, 1.442695
        %v4552 = vpow.pop %v4551
        %v4553 = vmul.f32 %v4480, 1.442695
        %v4554 = vpow.pop %v4553
        %v4555 = vmul.f32 %v4481, 1.442695
        %v4556 = vpow.pop %v4555
        %v4557 = vmul.f32 %v4482, 1.442695
        %v4558 = vpow.pop %v4557
        %v4559 = vmul.f32 %v4483, 1.442695
        %v4560 = vpow.pop %v4559
        %v4561 = vmul.f32 %v4484, 1.442695
        %v4562 = vpow.pop %v4561
        %v4563 = vmul.f32 %v4485, 1.442695
        %v4564 = vpow.pop %v4563
        %v4565 = vmul.f32 %v4486, 1.442695
        %v4566 = vpow.pop %v4565
        %v4567 = vmul.f32 %v4487, 1.442695
        %v4568 = vpow.pop %v4567
        %v4569 = vmul.f32 %v4488, 1.442695
        %v4570 = vpow.pop %v4569
        %v4571 = vmul.f32 %v4489, 1.442695
        %v4572 = vpow.pop %v4571
        %v4573 = vmul.f32 %v4490, 1.442695
        %v4574 = vpow.pop %v4573
        %v4575 = vmul.f32 %v4491, 1.442695
        %v4576 = vpow.pop %v4575
        %v4577 = vmul.f32 %v4492, 1.442695
        %v4578 = vpow.pop %v4577
        %v4579 = vmul.f32 %v4493, 1.442695
        %v4580 = vpow.pop %v4579
        %v4581 = vmul.f32 %v4494, 1.442695
        %v4582 = vpow.pop %v4581
        %v4583 = vmul.f32 %v4495, 1.442695
        %v4584 = vpow.pop %v4583
        %v4585 = vmul.f32 %v4496, 1.442695
        %v4586 = vpow.pop %v4585
        %v4587 = vmul.f32 %v4497, 1.442695
        %v4588 = vpow.pop %v4587
        %v4589 = vmul.f32 %v4498, 1.442695
        %v4590 = vpow.pop %v4589
        %v4591 = vmul.f32 %v4499, 1.442695
        %v4592 = vpow.pop %v4591
        %v4593 = vmul.f32 %v4500, 1.442695
        %v4594 = vpow.pop %v4593
        %v4595 = vmul.f32 %v4501, 1.442695
        %v4596 = vpow.pop %v4595
        %v4597 = vmul.f32 %v4502, 1.442695
        %v4598 = vpow.pop %v4597
        %v4599 = vmul.f32 %v4503, 1.442695
        %v4600 = vpow.pop %v4599
        %v4601 = vmul.f32 %v4504, 1.442695
        %v4602 = vpow.pop %v4601
        %v4603 = vmul.f32 %v4505, 1.442695
        %v4604 = vpow.pop %v4603
        %v4605 = vmul.f32 %v4506, 1.442695
        %v4606 = vpow.pop %v4605
        %v4607 = vmul.f32 %v4507, 1.442695
        %v4608 = vpow.pop %v4607
        %v4609 = vmul.f32 %v4508, 1.442695
        %v4610 = vpow.pop %v4609
        %v4611 = vmul.f32 %v4509, 1.442695
        %v4612 = vpow.pop %v4611
        %v4613 = vmul.f32 %v4510, 1.442695
        %v4614 = vpow.pop %v4613
        %v4615 = vmul.f32 %v4511, 1.442695
        %v4616 = vpow.pop %v4615
        %v4617 = vmul.f32 %v4512, 1.442695
        %v4618 = vpow.pop %v4617
        %v4619 = vmul.f32 %v4513, 1.442695
        %v4620 = vpow.pop %v4619
        %v4621 = vmul.f32 %v4514, 1.442695
        %v4622 = vpow.pop %v4621
        %v4623 = vmul.f32 %v4515, 1.442695
        %v4624 = vpow.pop %v4623
        %v4625 = vmul.f32 %v4516, 1.442695
        %v4626 = vpow.pop %v4625
        %v4627 = vmul.f32 %v4517, 1.442695
        %v4628 = vpow.pop %v4627
        %v4629 = vmul.f32 %v4518, 1.442695
        %v4630 = vpow.pop %v4629
        %v4631 = vmul.f32 %v4519, 1.442695
        %v4632 = vpow.pop %v4631
        %v4633 = vmul.f32 %v4520, 1.442695
        %v4634 = vpow.pop %v4633
        %v4635 = vmul.f32 %v4521, 1.442695
        %v4636 = vpow.pop %v4635
        %v4637 = vmul.f32 %v4522, 1.442695
        %v4638 = vpow.pop %v4637
        %v4639 = vmul.f32 %v4523, 1.442695
        %v4640 = vpow.pop %v4639
        %v4641 = vmul.f32 %v4524, 1.442695
        %v4642 = vpow.pop %v4641
        %v4643 = vmul.f32 %v4525, 1.442695
        %v4644 = vpow.pop %v4643
        %v4645 = vmul.f32 %v4526, 1.442695
        %v4646 = vpow.pop %v4645
        %v4647 = vmul.f32 %v4527, 1.442695
        %v4648 = vpow.pop %v4647
        %v4649 = vmul.f32 %v4528, 1.442695
        %v4650 = vpow.pop %v4649
        %v4651 = vmul.f32 %v4529, 1.442695
        %v4652 = vpow.pop %v4651
        %v4653 = vmul.f32 %v4530, 1.442695
        %v4654 = vpow.pop %v4653
        %v4655 = vmul.f32 %v4531, 1.442695
        %v4656 = vpow.pop %v4655
        %v4657 = vmul.f32 %v4532, 1.442695
        %v4658 = vpow.pop %v4657
        %v4659 = vmul.f32 %v4533, 1.442695
        %v4660 = vpow.pop %v4659
        %v4661 = vmul.f32 %v4534, 1.442695
        %v4662 = vpow.pop %v4661
        %v4663 = vadd.f32 %v4536, %v4540
        %v4664 = vadd.f32 %v4663, %v4544
        %v4665 = vadd.f32 %v4664, %v4548
        %v4666 = vadd.f32 %v4665, %v4552
        %v4667 = vadd.f32 %v4666, %v4556
        %v4668 = vadd.f32 %v4667, %v4560
        %v4669 = vadd.f32 %v4668, %v4564
        %v4670 = vadd.f32 %v4669, %v4568
        %v4671 = vadd.f32 %v4670, %v4572
        %v4672 = vadd.f32 %v4671, %v4576
        %v4673 = vadd.f32 %v4672, %v4580
        %v4674 = vadd.f32 %v4673, %v4584
        %v4675 = vadd.f32 %v4674, %v4588
        %v4676 = vadd.f32 %v4675, %v4592
        %v4677 = vadd.f32 %v4676, %v4596
        %v4678 = vadd.f32 %v4677, %v4600
        %v4679 = vadd.f32 %v4678, %v4604
        %v4680 = vadd.f32 %v4679, %v4608
        %v4681 = vadd.f32 %v4680, %v4612
        %v4682 = vadd.f32 %v4681, %v4616
        %v4683 = vadd.f32 %v4682, %v4620
        %v4684 = vadd.f32 %v4683, %v4624
        %v4685 = vadd.f32 %v4684, %v4628
        %v4686 = vadd.f32 %v4685, %v4632
        %v4687 = vadd.f32 %v4686, %v4636
        %v4688 = vadd.f32 %v4687, %v4640
        %v4689 = vadd.f32 %v4688, %v4644
        %v4690 = vadd.f32 %v4689, %v4648
        %v4691 = vadd.f32 %v4690, %v4652
        %v4692 = vadd.f32 %v4691, %v4656
        %v4693 = vadd.f32 %v4692, %v4660
        %v4694 = vrot.slane %v4693, 4
        %v4695 = vadd.f32 %v4693, %v4694
        %v4696 = vrot.slane %v4695, 2
        %v4697 = vadd.f32 %v4695, %v4696
        %v4698 = vrot.slane %v4697, 1
        %v4699 = vadd.f32 %v4697, %v4698
        %v4700 = vadd.f32 %v4538, %v4542
        %v4701 = vadd.f32 %v4700, %v4546
        %v4702 = vadd.f32 %v4701, %v4550
        %v4703 = vadd.f32 %v4702, %v4554
        %v4704 = vadd.f32 %v4703, %v4558
        %v4705 = vadd.f32 %v4704, %v4562
        %v4706 = vadd.f32 %v4705, %v4566
        %v4707 = vadd.f32 %v4706, %v4570
        %v4708 = vadd.f32 %v4707, %v4574
        %v4709 = vadd.f32 %v4708, %v4578
        %v4710 = vadd.f32 %v4709, %v4582
        %v4711 = vadd.f32 %v4710, %v4586
        %v4712 = vadd.f32 %v4711, %v4590
        %v4713 = vadd.f32 %v4712, %v4594
        %v4714 = vadd.f32 %v4713, %v4598
        %v4715 = vadd.f32 %v4714, %v4602
        %v4716 = vadd.f32 %v4715, %v4606
        %v4717 = vadd.f32 %v4716, %v4610
        %v4718 = vadd.f32 %v4717, %v4614
        %v4719 = vadd.f32 %v4718, %v4618
        %v4720 = vadd.f32 %v4719, %v4622
        %v4721 = vadd.f32 %v4720, %v4626
        %v4722 = vadd.f32 %v4721, %v4630
        %v4723 = vadd.f32 %v4722, %v4634
        %v4724 = vadd.f32 %v4723, %v4638
        %v4725 = vadd.f32 %v4724, %v4642
        %v4726 = vadd.f32 %v4725, %v4646
        %v4727 = vadd.f32 %v4726, %v4650
        %v4728 = vadd.f32 %v4727, %v4654
        %v4729 = vadd.f32 %v4728, %v4658
        %v4730 = vadd.f32 %v4729, %v4662
        %v4731 = vrot.slane %v4730, 4
        %v4732 = vadd.f32 %v4730, %v4731
        %v4733 = vrot.slane %v4732, 2
        %v4734 = vadd.f32 %v4732, %v4733
        %v4735 = vrot.slane %v4734, 1
        %v4736 = vadd.f32 %v4734, %v4735
        %v4737 = vrcp.pop %v4699
        %v4738 = vmul.f32 1.0, %v4737
        %v4739 = vrcp.pop %v4736
        %v4740 = vmul.f32 1.0, %v4739
        %v4743 = vrot.slane %v1261, 4
        %v4744 = vrot.slane %v1263, 4
        %4747 = vmatprep.subr.mxu0 %v4538
        %4748 = vmatpush1.msra.mxu0 %v4536
        %4749 = vmatprep.subr.mxu0 %v4542
        %4750 = vmatpush1.msra.mxu0 %v4540
        %4751 = vmatprep.subr.mxu0 %v4546
        %4752 = vmatpush1.msra.mxu0 %v4544
        %4753 = vmatprep.subr.mxu0 %v4550
        %4754 = vmatpush1.msra.mxu0 %v4548
        %4755 = vmatprep.subr.mxu0 %v4554
        %4756 = vmatpush1.msra.mxu0 %v4552
        %4757 = vmatprep.subr.mxu0 %v4558
        %4758 = vmatpush1.msra.mxu0 %v4556
        %4759 = vmatprep.subr.mxu0 %v4562
        %4760 = vmatpush1.msra.mxu0 %v4560
        %4761 = vmatprep.subr.mxu0 %v4566
        %4762 = vmatpush1.msra.mxu0 %v4564
        %4763 = vmatprep.subr.mxu0 %v4570
        %4764 = vmatpush1.msra.mxu0 %v4568
        %4765 = vmatprep.subr.mxu0 %v4574
        %4766 = vmatpush1.msra.mxu0 %v4572
        %4767 = vmatprep.subr.mxu0 %v4578
        %4768 = vmatpush1.msra.mxu0 %v4576
        %4769 = vmatprep.subr.mxu0 %v4582
        %4770 = vmatpush1.msra.mxu0 %v4580
        %4771 = vmatprep.subr.mxu0 %v4586
        %4772 = vmatpush1.msra.mxu0 %v4584
        %4773 = vmatprep.subr.mxu0 %v4590
        %4774 = vmatpush1.msra.mxu0 %v4588
        %4775 = vmatprep.subr.mxu0 %v4594
        %4776 = vmatpush1.msra.mxu0 %v4592
        %4777 = vmatprep.subr.mxu0 %v4598
        %4778 = vmatpush1.msra.mxu0 %v4596
        %4779 = vmatprep.subr.mxu0 %v4602
        %4780 = vmatpush1.msra.mxu0 %v4600
        %4781 = vmatprep.subr.mxu0 %v4606
        %4782 = vmatpush1.msra.mxu0 %v4604
        %4783 = vmatprep.subr.mxu0 %v4610
        %4784 = vmatpush1.msra.mxu0 %v4608
        %4785 = vmatprep.subr.mxu0 %v4614
        %4786 = vmatpush1.msra.mxu0 %v4612
        %4787 = vmatprep.subr.mxu0 %v4618
        %4788 = vmatpush1.msra.mxu0 %v4616
        %4789 = vmatprep.subr.mxu0 %v4622
        %4790 = vmatpush1.msra.mxu0 %v4620
        %4791 = vmatprep.subr.mxu0 %v4626
        %4792 = vmatpush1.msra.mxu0 %v4624
        %4793 = vmatprep.subr.mxu0 %v4630
        %4794 = vmatpush1.msra.mxu0 %v4628
        %4795 = vmatprep.subr.mxu0 %v4634
        %4796 = vmatpush1.msra.mxu0 %v4632
        %4797 = vmatprep.subr.mxu0 %v4638
        %4798 = vmatpush1.msra.mxu0 %v4636
        %4799 = vmatprep.subr.mxu0 %v4642
        %4800 = vmatpush1.msra.mxu0 %v4640
        %4801 = vmatprep.subr.mxu0 %v4646
        %4802 = vmatpush1.msra.mxu0 %v4644
        %4803 = vmatprep.subr.mxu0 %v4650
        %4804 = vmatpush1.msra.mxu0 %v4648
        %4805 = vmatprep.subr.mxu0 %v4654
        %4806 = vmatpush1.msra.mxu0 %v4652
        %4807 = vmatprep.subr.mxu0 %v4658
        %4808 = vmatpush1.msra.mxu0 %v4656
        %4809 = vmatprep.subr.mxu0 %v4662
        %4810 = vmatpush1.msra.mxu0 %v4660
        %4811 = vmatprep.mubr.f32.mxu0 %v4744
        %4812 = vmatmul.mubr.f32.gmra.mrb[0].mxu0 %v4743
        %v4813 = vpop.f32.mrb[0].mxu0
        %v4814 = vadd.f32 0.0, %v4813
        %v4815 = vpop.f32.mrb[0].mxu0
        %v4816 = vadd.f32 0.0, %v4815
        %4817 = vdwg.mxu0
        %v4818 = vmul.f32 %v4814, %v4738
        %v4819 = vmul.f32 %v4816, %v4740
        %4820 = vrot.lane.b32.xlu0 %v2107, 116
        %v4821 = vpop.permute.xlu0 %4820
        %4822 = vrot.lane.b32.xlu0 %v2108, 116
        %v4823 = vpop.permute.xlu0 %4822
        %v4824 = vsel %vm1329, %v4821, 0
        %v4826 = vsel %vm1329, %v4823, 0
        %v4829 = vsel %vm1426, %v4818, 0
        %v4832 = vsel %vm1426, %v4819, 0
        %4834 = vmatprep.subr.mxu0 %v4832
        %4835 = vmatpush1.msra.mxu0 %v4829
        %4836 = vmatprep.subr.mxu0 0.0
        %4837 = vmatpush1.msra.mxu0 0.0
        %4838 = vmatprep.subr.mxu0 0.0
        %4839 = vmatpush1.msra.mxu0 0.0
        %4840 = vmatprep.subr.mxu0 0.0
        %4841 = vmatpush1.msra.mxu0 0.0
        %4842 = vmatprep.subr.mxu0 0.0
        %4843 = vmatpush1.msra.mxu0 0.0
        %4844 = vmatprep.subr.mxu0 0.0
        %4845 = vmatpush1.msra.mxu0 0.0
        %4846 = vmatprep.subr.mxu0 0.0
        %4847 = vmatpush1.msra.mxu0 0.0
        %4848 = vmatprep.subr.mxu0 0.0
        %4849 = vmatpush1.msra.mxu0 0.0
        %4850 = vmatprep.subr.mxu0 0.0
        %4851 = vmatpush1.msra.mxu0 0.0
        %4852 = vmatprep.subr.mxu0 0.0
        %4853 = vmatpush1.msra.mxu0 0.0
        %4854 = vmatprep.subr.mxu0 0.0
        %4855 = vmatpush1.msra.mxu0 0.0
        %4856 = vmatprep.subr.mxu0 0.0
        %4857 = vmatpush1.msra.mxu0 0.0
        %4858 = vmatprep.subr.mxu0 0.0
        %4859 = vmatpush1.msra.mxu0 0.0
        %4860 = vmatprep.subr.mxu0 0.0
        %4861 = vmatpush1.msra.mxu0 0.0
        %4862 = vmatprep.subr.mxu0 0.0
        %4863 = vmatpush1.msra.mxu0 0.0
        %4864 = vmatprep.subr.mxu0 0.0
        %4865 = vmatpush1.msra.mxu0 0.0
        %4866 = vmatprep.subr.mxu0 0.0
        %4867 = vmatpush1.msra.mxu0 0.0
        %4868 = vmatprep.subr.mxu0 0.0
        %4869 = vmatpush1.msra.mxu0 0.0
        %4870 = vmatprep.subr.mxu0 0.0
        %4871 = vmatpush1.msra.mxu0 0.0
        %4872 = vmatprep.subr.mxu0 0.0
        %4873 = vmatpush1.msra.mxu0 0.0
        %4874 = vmatprep.subr.mxu0 0.0
        %4875 = vmatpush1.msra.mxu0 0.0
        %4876 = vmatprep.subr.mxu0 0.0
        %4877 = vmatpush1.msra.mxu0 0.0
        %4878 = vmatprep.subr.mxu0 0.0
        %4879 = vmatpush1.msra.mxu0 0.0
        %4880 = vmatprep.subr.mxu0 0.0
        %4881 = vmatpush1.msra.mxu0 0.0
        %4882 = vmatprep.subr.mxu0 0.0
        %4883 = vmatpush1.msra.mxu0 0.0
        %4884 = vmatprep.subr.mxu0 0.0
        %4885 = vmatpush1.msra.mxu0 0.0
        %4886 = vmatprep.subr.mxu0 0.0
        %4887 = vmatpush1.msra.mxu0 0.0
        %4888 = vmatprep.subr.mxu0 0.0
        %4889 = vmatpush1.msra.mxu0 0.0
        %4890 = vmatprep.subr.mxu0 0.0
        %4891 = vmatpush1.msra.mxu0 0.0
        %4892 = vmatprep.subr.mxu0 0.0
        %4893 = vmatpush1.msra.mxu0 0.0
        %4894 = vmatprep.subr.mxu0 0.0
        %4895 = vmatpush1.msra.mxu0 0.0
        %4896 = vmatprep.subr.mxu0 0.0
        %4897 = vmatpush1.msra.mxu0 0.0
        %4898 = vmatprep.mubr.f32.mxu0 0.0
        %4899 = vmatmul.mubr.f32.gmra.mrb[0].mxu0 %v4824
        %v4900 = vpop.f32.mrb[0].mxu0
        %v4901 = vadd.f32 0.0, %v4900
        %v4902 = vpop.f32.mrb[0].mxu0
        %v4903 = vadd.f32 0.0, %v4902
        %4904 = vmatprep.mubr.f32.mxu0 0.0
        %4905 = vmatmul.mubr.f32.gmra.mrb[0].mxu0 %v4826
        %v4906 = vpop.f32.mrb[0].mxu0
        %v4907 = vadd.f32 0.0, %v4906
        %v4908 = vpop.f32.mrb[0].mxu0
        %v4909 = vadd.f32 0.0, %v4908
        %4910 = vdwg.mxu0
        %v4911 = vadd.f32 %v4002, %v4901
        %v4912 = vadd.f32 %v4003, %v4903
        %v4913 = vadd.f32 %v4004, %v4907
        %v4914 = vadd.f32 %v4005, %v4909
        %v4915 = vadd.f32 %v1054, %v4911
        %v4916 = vadd.f32 %v1056, %v4912
        %v4917 = vadd.f32 %v1058, %v4913
        %v4918 = vadd.f32 %v1060, %v4914
        %4919 = vset.pattern.permute.xlu0 4
        %4920 = vperm.xlu0 %4919, %v1062
        %v4921 = vpop.permute.xlu0 %4920
        %4923 = vset.pattern.permute.xlu0 4
        %4924 = vperm.xlu0 %4923, %v1063
        %v4925 = vpop.permute.xlu0 %4924
        %v4927 = vadd.f32 %v4915, %v4921
        %v4928 = vadd.f32 %v4916, %v4921
        %v4929 = vadd.f32 %v4917, %v4925
        %v4930 = vadd.f32 %v4918, %v4925
        %v4931 = vadd.f32 %v4927, %v4929
        %v4932 = vrot.slane %v4931, 4
        %v4933 = vadd.f32 %v4931, %v4932
        %v4934 = vrot.slane %v4933, 2
        %v4935 = vadd.f32 %v4933, %v4934
        %v4936 = vrot.slane %v4935, 1
        %v4937 = vadd.f32 %v4935, %v4936
        %v4938 = vadd.f32 %v4928, %v4930
        %v4939 = vrot.slane %v4938, 4
        %v4940 = vadd.f32 %v4938, %v4939
        %v4941 = vrot.slane %v4940, 2
        %v4942 = vadd.f32 %v4940, %v4941
        %v4943 = vrot.slane %v4942, 1
        %v4944 = vadd.f32 %v4942, %v4943
        %v4945 = vmul.f32 %v4937, %v1078
        %v4946 = vmul.f32 %v4944, %v1078
        %v4947 = vsub.f32 %v4927, %v4945
        %v4948 = vsub.f32 %v4928, %v4946
        %v4949 = vsub.f32 %v4929, %v4945
        %v4950 = vsub.f32 %v4930, %v4946
        %v4951 = vmul.f32 %v4947, %v4947
        %v4952 = vmul.f32 %v4948, %v4948
        %v4953 = vmul.f32 %v4949, %v4949
        %v4954 = vmul.f32 %v4950, %v4950
        %v4955 = vadd.f32 %v4951, %v4953
        %v4956 = vrot.slane %v4955, 4
        %v4957 = vadd.f32 %v4955, %v4956
        %v4958 = vrot.slane %v4957, 2
        %v4959 = vadd.f32 %v4957, %v4958
        %v4960 = vrot.slane %v4959, 1
        %v4961 = vadd.f32 %v4959, %v4960
        %v4962 = vadd.f32 %v4952, %v4954
        %v4963 = vrot.slane %v4962, 4
        %v4964 = vadd.f32 %v4962, %v4963
        %v4965 = vrot.slane %v4964, 2
        %v4966 = vadd.f32 %v4964, %v4965
        %v4967 = vrot.slane %v4966, 1
        %v4968 = vadd.f32 %v4966, %v4967
        %v4969 = vmul.f32 %v4961, %v1078
        %v4970 = vmul.f32 %v4968, %v1078
        %v4971 = vadd.f32 %v4969, 1e-05
        %v4972 = vadd.f32 %v4970, 1e-05
        %v4973 = vrsqrt.pop %v4971
        %v4974 = vrsqrt.pop %v4972
        %v4975 = vmul.f32 %v4947, %v4973
        %v4976 = vmul.f32 %v4948, %v4974
        %v4977 = vmul.f32 %v4949, %v4973
        %v4978 = vmul.f32 %v4950, %v4974
        %4979 = vset.pattern.permute.xlu0 2
        %4980 = vperm.xlu0 %4979, %v1062
        %v4981 = vpop.permute.xlu0 %4980
        %4983 = vset.pattern.permute.xlu0 2
        %4984 = vperm.xlu0 %4983, %v1063
        %v4985 = vpop.permute.xlu0 %4984
        %v4987 = vmul.f32 %v4975, %v4981
        %v4988 = vmul.f32 %v4976, %v4981
        %v4989 = vmul.f32 %v4977, %v4985
        %v4990 = vmul.f32 %v4978, %v4985
        %4991 = vset.pattern.permute.xlu0 3
        %4992 = vperm.xlu0 %4991, %v1062
        %v4993 = vpop.permute.xlu0 %4992
        %4995 = vset.pattern.permute.xlu0 3
        %4996 = vperm.xlu0 %4995, %v1063
        %v4997 = vpop.permute.xlu0 %4996
        %v4999 = vadd.f32 %v4987, %v4993
        %v5000 = vadd.f32 %v4988, %v4993
        %v5001 = vadd.f32 %v4989, %v4997
        %v5002 = vadd.f32 %v4990, %v4997
        %v5003 = vld [vmem:[%s3 + $0x40] sm:$0xff]
        %v5004 = vld [vmem:[%s3 + $0x48] sm:$0xff]
        %v5005 = vld [vmem:[%s3 + $0x50] sm:$0xff]
        %v5006 = vld [vmem:[%s3 + $0x58] sm:$0xff]
        %v5007 = vld [vmem:[%s3 + $0x60] sm:$0xff]
        %v5008 = vld [vmem:[%s3 + $0x68] sm:$0xff]
        %v5009 = vld [vmem:[%s3 + $0x70] sm:$0xff]
        %v5010 = vld [vmem:[%s3 + $0x78] sm:$0xff]
        %v5011 = vld [vmem:[%s6] sm:$0xff]
        %v5012 = vld [vmem:[%s6 + $0x8] sm:$0xff]
        %v5013 = vld [vmem:[%s6 + $0x10] sm:$0xff]
        %v5014 = vld [vmem:[%s6 + $0x18] sm:$0xff]
        %v5015 = vld [vmem:[%s6 + $0x20] sm:$0xff]
        %v5016 = vld [vmem:[%s6 + $0x28] sm:$0xff]
        %v5017 = vld [vmem:[%s6 + $0x30] sm:$0xff]
        %v5018 = vld [vmem:[%s6 + $0x38] sm:$0xff]
        %5020 = vset.pattern.permute.xlu0 5
        %5021 = vperm.xlu0 %5020, %v5011
        %v5022 = vpop.permute.xlu0 %5021
        %5025 = vset.pattern.permute.xlu0 5
        %5026 = vperm.xlu0 %5025, %v5012
        %v5027 = vpop.permute.xlu0 %5026
        %5030 = vset.pattern.permute.xlu0 5
        %5031 = vperm.xlu0 %5030, %v5013
        %v5032 = vpop.permute.xlu0 %5031
        %5035 = vset.pattern.permute.xlu0 5
        %5036 = vperm.xlu0 %5035, %v5014
        %v5037 = vpop.permute.xlu0 %5036
        %5040 = vset.pattern.permute.xlu0 5
        %5041 = vperm.xlu0 %5040, %v5015
        %v5042 = vpop.permute.xlu0 %5041
        %5045 = vset.pattern.permute.xlu0 5
        %5046 = vperm.xlu0 %5045, %v5016
        %v5047 = vpop.permute.xlu0 %5046
        %5050 = vset.pattern.permute.xlu0 5
        %5051 = vperm.xlu0 %5050, %v5017
        %v5052 = vpop.permute.xlu0 %5051
        %5055 = vset.pattern.permute.xlu0 5
        %5056 = vperm.xlu0 %5055, %v5018
        %v5057 = vpop.permute.xlu0 %5056
        %v5060 = vsel %vm1145, %v5003, 0
        %v5063 = vsel %vm1145, %v5004, 0
        %v5066 = vsel %vm1145, %v5005, 0
        %v5069 = vsel %vm1145, %v5006, 0
        %v5072 = vsel %vm1145, %v5007, 0
        %v5075 = vsel %vm1145, %v5008, 0
        %v5078 = vsel %vm1145, %v5009, 0
        %v5081 = vsel %vm1145, %v5010, 0
        %5083 = vmatprep.subr.mxu0 %v5000
        %5084 = vmatpush1.msra.mxu0 %v4999
        %5085 = vmatprep.subr.mxu0 %v5002
        %5086 = vmatpush1.msra.mxu0 %v5001
        %5087 = vmatprep.subr.mxu0 0.0
        %5088 = vmatpush1.msra.mxu0 0.0
        %5089 = vmatprep.subr.mxu0 0.0
        %5090 = vmatpush1.msra.mxu0 0.0
        %5091 = vmatprep.subr.mxu0 0.0
        %5092 = vmatpush1.msra.mxu0 0.0
        %5093 = vmatprep.subr.mxu0 0.0
        %5094 = vmatpush1.msra.mxu0 0.0
        %5095 = vmatprep.subr.mxu0 0.0
        %5096 = vmatpush1.msra.mxu0 0.0
        %5097 = vmatprep.subr.mxu0 0.0
        %5098 = vmatpush1.msra.mxu0 0.0
        %5099 = vmatprep.subr.mxu0 0.0
        %5100 = vmatpush1.msra.mxu0 0.0
        %5101 = vmatprep.subr.mxu0 0.0
        %5102 = vmatpush1.msra.mxu0 0.0
        %5103 = vmatprep.subr.mxu0 0.0
        %5104 = vmatpush1.msra.mxu0 0.0
        %5105 = vmatprep.subr.mxu0 0.0
        %5106 = vmatpush1.msra.mxu0 0.0
        %5107 = vmatprep.subr.mxu0 0.0
        %5108 = vmatpush1.msra.mxu0 0.0
        %5109 = vmatprep.subr.mxu0 0.0
        %5110 = vmatpush1.msra.mxu0 0.0
        %5111 = vmatprep.subr.mxu0 0.0
        %5112 = vmatpush1.msra.mxu0 0.0
        %5113 = vmatprep.subr.mxu0 0.0
        %5114 = vmatpush1.msra.mxu0 0.0
        %5115 = vmatprep.subr.mxu0 0.0
        %5116 = vmatpush1.msra.mxu0 0.0
        %5117 = vmatprep.subr.mxu0 0.0
        %5118 = vmatpush1.msra.mxu0 0.0
        %5119 = vmatprep.subr.mxu0 0.0
        %5120 = vmatpush1.msra.mxu0 0.0
        %5121 = vmatprep.subr.mxu0 0.0
        %5122 = vmatpush1.msra.mxu0 0.0
        %5123 = vmatprep.subr.mxu0 0.0
        %5124 = vmatpush1.msra.mxu0 0.0
        %5125 = vmatprep.subr.mxu0 0.0
        %5126 = vmatpush1.msra.mxu0 0.0
        %5127 = vmatprep.subr.mxu0 0.0
        %5128 = vmatpush1.msra.mxu0 0.0
        %5129 = vmatprep.subr.mxu0 0.0
        %5130 = vmatpush1.msra.mxu0 0.0
        %5131 = vmatprep.subr.mxu0 0.0
        %5132 = vmatpush1.msra.mxu0 0.0
        %5133 = vmatprep.subr.mxu0 0.0
        %5134 = vmatpush1.msra.mxu0 0.0
        %5135 = vmatprep.subr.mxu0 0.0
        %5136 = vmatpush1.msra.mxu0 0.0
        %5137 = vmatprep.subr.mxu0 0.0
        %5138 = vmatpush1.msra.mxu0 0.0
        %5139 = vmatprep.subr.mxu0 0.0
        %5140 = vmatpush1.msra.mxu0 0.0
        %5141 = vmatprep.subr.mxu0 0.0
        %5142 = vmatpush1.msra.mxu0 0.0
        %5143 = vmatprep.subr.mxu0 0.0
        %5144 = vmatpush1.msra.mxu0 0.0
        %5145 = vmatprep.subr.mxu0 0.0
        %5146 = vmatpush1.msra.mxu0 0.0
        %5147 = vmatprep.mubr.f32.mxu0 0.0
        %5148 = vmatmul.mubr.f32.gmra.mrb[0].mxu0 %v5060
        %v5149 = vpop.f32.mrb[0].mxu0
        %v5150 = vadd.f32 %v5022, %v5149
        %v5151 = vpop.f32.mrb[0].mxu0
        %v5152 = vadd.f32 %v5022, %v5151
        %5153 = vmatprep.mubr.f32.mxu0 0.0
        %5154 = vmatmul.mubr.f32.gmra.mrb[0].mxu0 %v5063
        %v5155 = vpop.f32.mrb[0].mxu0
        %v5156 = vadd.f32 %v5027, %v5155
        %v5157 = vpop.f32.mrb[0].mxu0
        %v5158 = vadd.f32 %v5027, %v5157
        %5159 = vmatprep.mubr.f32.mxu0 0.0
        %5160 = vmatmul.mubr.f32.gmra.mrb[0].mxu0 %v5066
        %v5161 = vpop.f32.mrb[0].mxu0
        %v5162 = vadd.f32 %v5032, %v5161
        %v5163 = vpop.f32.mrb[0].mxu0
        %v5164 = vadd.f32 %v5032, %v5163
        %5165 = vmatprep.mubr.f32.mxu0 0.0
        %5166 = vmatmul.mubr.f32.gmra.mrb[0].mxu0 %v5069
        %v5167 = vpop.f32.mrb[0].mxu0
        %v5168 = vadd.f32 %v5037, %v5167
        %v5169 = vpop.f32.mrb[0].mxu0
        %v5170 = vadd.f32 %v5037, %v5169
        %5171 = vmatprep.mubr.f32.mxu0 0.0
        %5172 = vmatmul.mubr.f32.gmra.mrb[0].mxu0 %v5072
        %v5173 = vpop.f32.mrb[0].mxu0
        %v5174 = vadd.f32 %v5042, %v5173
        %v5175 = vpop.f32.mrb[0].mxu0
        %v5176 = vadd.f32 %v5042, %v5175
        %5177 = vmatprep.mubr.f32.mxu0 0.0
        %5178 = vmatmul.mubr.f32.gmra.mrb[0].mxu0 %v5075
        %v5179 = vpop.f32.mrb[0].mxu0
        %v5180 = vadd.f32 %v5047, %v5179
        %v5181 = vpop.f32.mrb[0].mxu0
        %v5182 = vadd.f32 %v5047, %v5181
        %5183 = vmatprep.mubr.f32.mxu0 0.0
        %5184 = vmatmul.mubr.f32.gmra.mrb[0].mxu0 %v5078
        %v5185 = vpop.f32.mrb[0].mxu0
        %v5186 = vadd.f32 %v5052, %v5185
        %v5187 = vpop.f32.mrb[0].mxu0
        %v5188 = vadd.f32 %v5052, %v5187
        %5189 = vmatprep.mubr.f32.mxu0 0.0
        %5190 = vmatmul.mubr.f32.gmra.mrb[0].mxu0 %v5081
        %v5191 = vpop.f32.mrb[0].mxu0
        %v5192 = vadd.f32 %v5057, %v5191
        %v5193 = vpop.f32.mrb[0].mxu0
        %v5194 = vadd.f32 %v5057, %v5193
        %5195 = vdwg.mxu0
        %v5196 = vmul.f32 %v5150, 0.5
        %v5197 = vmul.f32 %v5152, 0.5
        %v5198 = vmul.f32 %v5156, 0.5
        %v5199 = vmul.f32 %v5158, 0.5
        %v5200 = vmul.f32 %v5162, 0.5
        %v5201 = vmul.f32 %v5164, 0.5
        %v5202 = vmul.f32 %v5168, 0.5
        %v5203 = vmul.f32 %v5170, 0.5
        %v5204 = vmul.f32 %v5174, 0.5
        %v5205 = vmul.f32 %v5176, 0.5
        %v5206 = vmul.f32 %v5180, 0.5
        %v5207 = vmul.f32 %v5182, 0.5
        %v5208 = vmul.f32 %v5186, 0.5
        %v5209 = vmul.f32 %v5188, 0.5
        %v5210 = vmul.f32 %v5192, 0.5
        %v5211 = vmul.f32 %v5194, 0.5
        %v5212 = vmul.f32 %v5150, 0.044715
        %v5213 = vmul.f32 %v5152, 0.044715
        %v5214 = vmul.f32 %v5156, 0.044715
        %v5215 = vmul.f32 %v5158, 0.044715
        %v5216 = vmul.f32 %v5162, 0.044715
        %v5217 = vmul.f32 %v5164, 0.044715
        %v5218 = vmul.f32 %v5168, 0.044715
        %v5219 = vmul.f32 %v5170, 0.044715
        %v5220 = vmul.f32 %v5174, 0.044715
        %v5221 = vmul.f32 %v5176, 0.044715
        %v5222 = vmul.f32 %v5180, 0.044715
        %v5223 = vmul.f32 %v5182, 0.044715
        %v5224 = vmul.f32 %v5186, 0.044715
        %v5225 = vmul.f32 %v5188, 0.044715
        %v5226 = vmul.f32 %v5192, 0.044715
        %v5227 = vmul.f32 %v5194, 0.044715
        %v5228 = vmul.f32 %v5212, %v5150
        %v5229 = vmul.f32 %v5213, %v5152
        %v5230 = vmul.f32 %v5214, %v5156
        %v5231 = vmul.f32 %v5215, %v5158
        %v5232 = vmul.f32 %v5216, %v5162
        %v5233 = vmul.f32 %v5217, %v5164
        %v5234 = vmul.f32 %v5218, %v5168
        %v5235 = vmul.f32 %v5219, %v5170
        %v5236 = vmul.f32 %v5220, %v5174
        %v5237 = vmul.f32 %v5221, %v5176
        %v5238 = vmul.f32 %v5222, %v5180
        %v5239 = vmul.f32 %v5223, %v5182
        %v5240 = vmul.f32 %v5224, %v5186
        %v5241 = vmul.f32 %v5225, %v5188
        %v5242 = vmul.f32 %v5226, %v5192
        %v5243 = vmul.f32 %v5227, %v5194
        %v5244 = vmul.f32 %v5228, %v5150
        %v5245 = vmul.f32 %v5229, %v5152
        %v5246 = vmul.f32 %v5230, %v5156
        %v5247 = vmul.f32 %v5231, %v5158
        %v5248 = vmul.f32 %v5232, %v5162
        %v5249 = vmul.f32 %v5233, %v5164
        %v5250 = vmul.f32 %v5234, %v5168
        %v5251 = vmul.f32 %v5235, %v5170
        %v5252 = vmul.f32 %v5236, %v5174
        %v5253 = vmul.f32 %v5237, %v5176
        %v5254 = vmul.f32 %v5238, %v5180
        %v5255 = vmul.f32 %v5239, %v5182
        %v5256 = vmul.f32 %v5240, %v5186
        %v5257 = vmul.f32 %v5241, %v5188
        %v5258 = vmul.f32 %v5242, %v5192
        %v5259 = vmul.f32 %v5243, %v5194
        %v5260 = vadd.f32 %v5150, %v5244
        %v5261 = vadd.f32 %v5152, %v5245
        %v5262 = vadd.f32 %v5156, %v5246
        %v5263 = vadd.f32 %v5158, %v5247
        %v5264 = vadd.f32 %v5162, %v5248
        %v5265 = vadd.f32 %v5164, %v5249
        %v5266 = vadd.f32 %v5168, %v5250
        %v5267 = vadd.f32 %v5170, %v5251
        %v5268 = vadd.f32 %v5174, %v5252
        %v5269 = vadd.f32 %v5176, %v5253
        %v5270 = vadd.f32 %v5180, %v5254
        %v5271 = vadd.f32 %v5182, %v5255
        %v5272 = vadd.f32 %v5186, %v5256
        %v5273 = vadd.f32 %v5188, %v5257
        %v5274 = vadd.f32 %v5192, %v5258
        %v5275 = vadd.f32 %v5194, %v5259
        %v5276 = vmul.f32 %v5260, 0.7978846
        %v5277 = vmul.f32 %v5261, 0.7978846
        %v5278 = vmul.f32 %v5262, 0.7978846
        %v5279 = vmul.f32 %v5263, 0.7978846
        %v5280 = vmul.f32 %v5264, 0.7978846
        %v5281 = vmul.f32 %v5265, 0.7978846
        %v5282 = vmul.f32 %v5266, 0.7978846
        %v5283 = vmul.f32 %v5267, 0.7978846
        %v5284 = vmul.f32 %v5268, 0.7978846
        %v5285 = vmul.f32 %v5269, 0.7978846
        %v5286 = vmul.f32 %v5270, 0.7978846
        %v5287 = vmul.f32 %v5271, 0.7978846
        %v5288 = vmul.f32 %v5272, 0.7978846
        %v5289 = vmul.f32 %v5273, 0.7978846
        %v5290 = vmul.f32 %v5274, 0.7978846
        %v5291 = vmul.f32 %v5275, 0.7978846
        %v5292 = vtanh.pop %v5276
        %v5293 = vtanh.pop %v5277
        %v5294 = vtanh.pop %v5278
        %v5295 = vtanh.pop %v5279
        %v5296 = vtanh.pop %v5280
        %v5297 = vtanh.pop %v5281
        %v5298 = vtanh.pop %v5282
        %v5299 = vtanh.pop %v5283
        %v5300 = vtanh.pop %v5284
        %v5301 = vtanh.pop %v5285
        %v5302 = vtanh.pop %v5286
        %v5303 = vtanh.pop %v5287
        %v5304 = vtanh.pop %v5288
        %v5305 = vtanh.pop %v5289
        %v5306 = vtanh.pop %v5290
        %v5307 = vtanh.pop %v5291
        %v5308 = vadd.f32 %v5292, 1.0
        %v5309 = vadd.f32 %v5293, 1.0
        %v5310 = vadd.f32 %v5294, 1.0
        %v5311 = vadd.f32 %v5295, 1.0
        %v5312 = vadd.f32 %v5296, 1.0
        %v5313 = vadd.f32 %v5297, 1.0
        %v5314 = vadd.f32 %v5298, 1.0
        %v5315 = vadd.f32 %v5299, 1.0
        %v5316 = vadd.f32 %v5300, 1.0
        %v5317 = vadd.f32 %v5301, 1.0
        %v5318 = vadd.f32 %v5302, 1.0
        %v5319 = vadd.f32 %v5303, 1.0
        %v5320 = vadd.f32 %v5304, 1.0
        %v5321 = vadd.f32 %v5305, 1.0
        %v5322 = vadd.f32 %v5306, 1.0
        %v5323 = vadd.f32 %v5307, 1.0
        %v5324 = vmul.f32 %v5196, %v5308
        %v5325 = vmul.f32 %v5197, %v5309
        %v5326 = vmul.f32 %v5198, %v5310
        %v5327 = vmul.f32 %v5199, %v5311
        %v5328 = vmul.f32 %v5200, %v5312
        %v5329 = vmul.f32 %v5201, %v5313
        %v5330 = vmul.f32 %v5202, %v5314
        %v5331 = vmul.f32 %v5203, %v5315
        %v5332 = vmul.f32 %v5204, %v5316
        %v5333 = vmul.f32 %v5205, %v5317
        %v5334 = vmul.f32 %v5206, %v5318
        %v5335 = vmul.f32 %v5207, %v5319
        %v5336 = vmul.f32 %v5208, %v5320
        %v5337 = vmul.f32 %v5209, %v5321
        %v5338 = vmul.f32 %v5210, %v5322
        %v5339 = vmul.f32 %v5211, %v5323
        %v5340 = vld [vmem:[%s4] sm:$0xff]
        %v5341 = vld [vmem:[%s4 + $0x8] sm:$0xff]
        %5342 = vset.pattern.permute.xlu0 6
        %5343 = vperm.xlu0 %5342, %v1062
        %v5344 = vpop.permute.xlu0 %5343
        %5346 = vset.pattern.permute.xlu0 6
        %5347 = vperm.xlu0 %5346, %v1063
        %v5348 = vpop.permute.xlu0 %5347
        %vm5350 = vcmask 523264
        %v5352 = vsel %vm5350, %v5340, 0
        %v5355 = vsel %vm5350, %v5341, 0
        %5357 = vmatprep.subr.mxu0 %v5325
        %5358 = vmatpush1.msra.mxu0 %v5324
        %5359 = vmatprep.subr.mxu0 %v5327
        %5360 = vmatpush1.msra.mxu0 %v5326
        %5361 = vmatprep.subr.mxu0 %v5329
        %5362 = vmatpush1.msra.mxu0 %v5328
        %5363 = vmatprep.subr.mxu0 %v5331
        %5364 = vmatpush1.msra.mxu0 %v5330
        %5365 = vmatprep.subr.mxu0 %v5333
        %5366 = vmatpush1.msra.mxu0 %v5332
        %5367 = vmatprep.subr.mxu0 %v5335
        %5368 = vmatpush1.msra.mxu0 %v5334
        %5369 = vmatprep.subr.mxu0 %v5337
        %5370 = vmatpush1.msra.mxu0 %v5336
        %5371 = vmatprep.subr.mxu0 %v5339
        %5372 = vmatpush1.msra.mxu0 %v5338
        %5373 = vmatprep.subr.mxu0 0.0
        %5374 = vmatpush1.msra.mxu0 0.0
        %5375 = vmatprep.subr.mxu0 0.0
        %5376 = vmatpush1.msra.mxu0 0.0
        %5377 = vmatprep.subr.mxu0 0.0
        %5378 = vmatpush1.msra.mxu0 0.0
        %5379 = vmatprep.subr.mxu0 0.0
        %5380 = vmatpush1.msra.mxu0 0.0
        %5381 = vmatprep.subr.mxu0 0.0
        %5382 = vmatpush1.msra.mxu0 0.0
        %5383 = vmatprep.subr.mxu0 0.0
        %5384 = vmatpush1.msra.mxu0 0.0
        %5385 = vmatprep.subr.mxu0 0.0
        %5386 = vmatpush1.msra.mxu0 0.0
        %5387 = vmatprep.subr.mxu0 0.0
        %5388 = vmatpush1.msra.mxu0 0.0
        %5389 = vmatprep.subr.mxu0 0.0
        %5390 = vmatpush1.msra.mxu0 0.0
        %5391 = vmatprep.subr.mxu0 0.0
        %5392 = vmatpush1.msra.mxu0 0.0
        %5393 = vmatprep.subr.mxu0 0.0
        %5394 = vmatpush1.msra.mxu0 0.0
        %5395 = vmatprep.subr.mxu0 0.0
        %5396 = vmatpush1.msra.mxu0 0.0
        %5397 = vmatprep.subr.mxu0 0.0
        %5398 = vmatpush1.msra.mxu0 0.0
        %5399 = vmatprep.subr.mxu0 0.0
        %5400 = vmatpush1.msra.mxu0 0.0
        %5401 = vmatprep.subr.mxu0 0.0
        %5402 = vmatpush1.msra.mxu0 0.0
        %5403 = vmatprep.subr.mxu0 0.0
        %5404 = vmatpush1.msra.mxu0 0.0
        %5405 = vmatprep.subr.mxu0 0.0
        %5406 = vmatpush1.msra.mxu0 0.0
        %5407 = vmatprep.subr.mxu0 0.0
        %5408 = vmatpush1.msra.mxu0 0.0
        %5409 = vmatprep.subr.mxu0 0.0
        %5410 = vmatpush1.msra.mxu0 0.0
        %5411 = vmatprep.subr.mxu0 0.0
        %5412 = vmatpush1.msra.mxu0 0.0
        %5413 = vmatprep.subr.mxu0 0.0
        %5414 = vmatpush1.msra.mxu0 0.0
        %5415 = vmatprep.subr.mxu0 0.0
        %5416 = vmatpush1.msra.mxu0 0.0
        %5417 = vmatprep.subr.mxu0 0.0
        %5418 = vmatpush1.msra.mxu0 0.0
        %5419 = vmatprep.subr.mxu0 0.0
        %5420 = vmatpush1.msra.mxu0 0.0
        %5421 = vmatprep.mubr.f32.mxu0 0.0
        %5422 = vmatmul.mubr.f32.gmra.mrb[0].mxu0 %v5352
        %v5423 = vpop.f32.mrb[0].mxu0
        %v5424 = vadd.f32 %v5344, %v5423
        %v5425 = vpop.f32.mrb[0].mxu0
        %v5426 = vadd.f32 %v5344, %v5425
        %5427 = vmatprep.mubr.f32.mxu0 0.0
        %5428 = vmatmul.mubr.f32.gmra.mrb[0].mxu0 %v5355
        %v5429 = vpop.f32.mrb[0].mxu0
        %v5430 = vadd.f32 %v5348, %v5429
        %v5431 = vpop.f32.mrb[0].mxu0
        %v5432 = vadd.f32 %v5348, %v5431
        %5433 = vdwg.mxu0
        %v5434 = vadd.f32 %v4927, %v5424
        %v5435 = vadd.f32 %v4928, %v5426
        %v5436 = vadd.f32 %v4929, %v5430
        %v5437 = vadd.f32 %v4930, %v5432
        %v5438 = vadd.f32 %v5434, %v5436
        %v5439 = vrot.slane %v5438, 4
        %v5440 = vadd.f32 %v5438, %v5439
        %v5441 = vrot.slane %v5440, 2
        %v5442 = vadd.f32 %v5440, %v5441
        %v5443 = vrot.slane %v5442, 1
        %v5444 = vadd.f32 %v5442, %v5443
        %v5445 = vadd.f32 %v5435, %v5437
        %v5446 = vrot.slane %v5445, 4
        %v5447 = vadd.f32 %v5445, %v5446
        %v5448 = vrot.slane %v5447, 2
        %v5449 = vadd.f32 %v5447, %v5448
        %v5450 = vrot.slane %v5449, 1
        %v5451 = vadd.f32 %v5449, %v5450
        %v5452 = vmul.f32 %v5444, %v1078
        %v5453 = vmul.f32 %v5451, %v1078
        %v5454 = vsub.f32 %v5434, %v5452
        %v5455 = vsub.f32 %v5435, %v5453
        %v5456 = vsub.f32 %v5436, %v5452
        %v5457 = vsub.f32 %v5437, %v5453
        %v5458 = vmul.f32 %v5454, %v5454
        %v5459 = vmul.f32 %v5455, %v5455
        %v5460 = vmul.f32 %v5456, %v5456
        %v5461 = vmul.f32 %v5457, %v5457
        %v5462 = vadd.f32 %v5458, %v5460
        %v5463 = vrot.slane %v5462, 4
        %v5464 = vadd.f32 %v5462, %v5463
        %v5465 = vrot.slane %v5464, 2
        %v5466 = vadd.f32 %v5464, %v5465
        %v5467 = vrot.slane %v5466, 1
        %v5468 = vadd.f32 %v5466, %v5467
        %v5469 = vadd.f32 %v5459, %v5461
        %v5470 = vrot.slane %v5469, 4
        %v5471 = vadd.f32 %v5469, %v5470
        %v5472 = vrot.slane %v5471, 2
        %v5473 = vadd.f32 %v5471, %v5472
        %v5474 = vrot.slane %v5473, 1
        %v5475 = vadd.f32 %v5473, %v5474
        %v5476 = vmul.f32 %v5468, %v1078
        %v5477 = vmul.f32 %v5475, %v1078
        %v5478 = vadd.f32 %v5476, 1e-05
        %v5479 = vadd.f32 %v5477, 1e-05
        %v5480 = vrsqrt.pop %v5478
        %v5481 = vrsqrt.pop %v5479
        %v5482 = vmul.f32 %v5454, %v5480
        %v5483 = vmul.f32 %v5455, %v5481
        %v5484 = vmul.f32 %v5456, %v5480
        %v5485 = vmul.f32 %v5457, %v5481
        %5486 = vset.pattern.permute.xlu0 7
        %5487 = vperm.xlu0 %5486, %v1062
        %v5488 = vpop.permute.xlu0 %5487
        %5490 = vset.pattern.permute.xlu0 7
        %5491 = vperm.xlu0 %5490, %v1063
        %v5492 = vpop.permute.xlu0 %5491
        %v5494 = vmul.f32 %v5482, %v5488
        %v5495 = vmul.f32 %v5483, %v5488
        %v5496 = vmul.f32 %v5484, %v5492
        %v5497 = vmul.f32 %v5485, %v5492
        %5498 = vset.pattern.permute.xlu0 8
        %5499 = vperm.xlu0 %5498, %v1062
        %v5500 = vpop.permute.xlu0 %5499
        %5502 = vset.pattern.permute.xlu0 8
        %5503 = vperm.xlu0 %5502, %v1063
        %v5504 = vpop.permute.xlu0 %5503
        %v5506 = vadd.f32 %v5494, %v5500
        %v5507 = vadd.f32 %v5495, %v5500
        %v5508 = vadd.f32 %v5496, %v5504
        %v5509 = vadd.f32 %v5497, %v5504
        %s5510 = scalar_lea.vmem %s3, 128
        %v5511 = vld [vmem:[%s5510] sm:$0xff]
        %v5512 = vld [vmem:[%s5510 + $0x8] sm:$0xff]
        %v5513 = vld [vmem:[%s5510 + $0x10] sm:$0xff]
        %v5514 = vld [vmem:[%s5510 + $0x18] sm:$0xff]
        %v5515 = vld [vmem:[%s5510 + $0x20] sm:$0xff]
        %v5516 = vld [vmem:[%s5510 + $0x28] sm:$0xff]
        %v5518 = vsel %vm1145, %v5511, 0
        %v5521 = vsel %vm1145, %v5512, 0
        %v5524 = vsel %vm1145, %v5513, 0
        %v5527 = vsel %vm1145, %v5514, 0
        %v5530 = vsel %vm1145, %v5515, 0
        %v5533 = vsel %vm1145, %v5516, 0
        %5535 = vmatprep.subr.mxu0 %v5507
        %5536 = vmatpush1.msra.mxu0 %v5506
        %5537 = vmatprep.subr.mxu0 %v5509
        %5538 = vmatpush1.msra.mxu0 %v5508
        %5539 = vmatprep.subr.mxu0 0.0
        %5540 = vmatpush1.msra.mxu0 0.0
        %5541 = vmatprep.subr.mxu0 0.0
        %5542 = vmatpush1.msra.mxu0 0.0
        %5543 = vmatprep.subr.mxu0 0.0
        %5544 = vmatpush1.msra.mxu0 0.0
        %5545 = vmatprep.subr.mxu0 0.0
        %5546 = vmatpush1.msra.mxu0 0.0
        %5547 = vmatprep.subr.mxu0 0.0
        %5548 = vmatpush1.msra.mxu0 0.0
        %5549 = vmatprep.subr.mxu0 0.0
        %5550 = vmatpush1.msra.mxu0 0.0
        %5551 = vmatprep.subr.mxu0 0.0
        %5552 = vmatpush1.msra.mxu0 0.0
        %5553 = vmatprep.subr.mxu0 0.0
        %5554 = vmatpush1.msra.mxu0 0.0
        %5555 = vmatprep.subr.mxu0 0.0
        %5556 = vmatpush1.msra.mxu0 0.0
        %5557 = vmatprep.subr.mxu0 0.0
        %5558 = vmatpush1.msra.mxu0 0.0
        %5559 = vmatprep.subr.mxu0 0.0
        %5560 = vmatpush1.msra.mxu0 0.0
        %5561 = vmatprep.subr.mxu0 0.0
        %5562 = vmatpush1.msra.mxu0 0.0
        %5563 = vmatprep.subr.mxu0 0.0
        %5564 = vmatpush1.msra.mxu0 0.0
        %5565 = vmatprep.subr.mxu0 0.0
        %5566 = vmatpush1.msra.mxu0 0.0
        %5567 = vmatprep.subr.mxu0 0.0
        %5568 = vmatpush1.msra.mxu0 0.0
        %5569 = vmatprep.subr.mxu0 0.0
        %5570 = vmatpush1.msra.mxu0 0.0
        %5571 = vmatprep.subr.mxu0 0.0
        %5572 = vmatpush1.msra.mxu0 0.0
        %5573 = vmatprep.subr.mxu0 0.0
        %5574 = vmatpush1.msra.mxu0 0.0
        %5575 = vmatprep.subr.mxu0 0.0
        %5576 = vmatpush1.msra.mxu0 0.0
        %5577 = vmatprep.subr.mxu0 0.0
        %5578 = vmatpush1.msra.mxu0 0.0
        %5579 = vmatprep.subr.mxu0 0.0
        %5580 = vmatpush1.msra.mxu0 0.0
        %5581 = vmatprep.subr.mxu0 0.0
        %5582 = vmatpush1.msra.mxu0 0.0
        %5583 = vmatprep.subr.mxu0 0.0
        %5584 = vmatpush1.msra.mxu0 0.0
        %5585 = vmatprep.subr.mxu0 0.0
        %5586 = vmatpush1.msra.mxu0 0.0
        %5587 = vmatprep.subr.mxu0 0.0
        %5588 = vmatpush1.msra.mxu0 0.0
        %5589 = vmatprep.subr.mxu0 0.0
        %5590 = vmatpush1.msra.mxu0 0.0
        %5591 = vmatprep.subr.mxu0 0.0
        %5592 = vmatpush1.msra.mxu0 0.0
        %5593 = vmatprep.subr.mxu0 0.0
        %5594 = vmatpush1.msra.mxu0 0.0
        %5595 = vmatprep.subr.mxu0 0.0
        %5596 = vmatpush1.msra.mxu0 0.0
        %5597 = vmatprep.subr.mxu0 0.0
        %5598 = vmatpush1.msra.mxu0 0.0
        %5599 = vmatprep.mubr.f32.mxu0 0.0
        %5600 = vmatmul.mubr.f32.gmra.mrb[0].mxu0 %v5518
        %v5601 = vpop.f32.mrb[0].mxu0
        %v5602 = vadd.f32 0.0, %v5601
        %v5603 = vpop.f32.mrb[0].mxu0
        %v5604 = vadd.f32 0.0, %v5603
        %5605 = vmatprep.mubr.f32.mxu0 0.0
        %5606 = vmatmul.mubr.f32.gmra.mrb[0].mxu0 %v5521
        %v5607 = vpop.f32.mrb[0].mxu0
        %v5608 = vadd.f32 0.0, %v5607
        %v5609 = vpop.f32.mrb[0].mxu0
        %v5610 = vadd.f32 0.0, %v5609
        %5611 = vmatprep.mubr.f32.mxu0 0.0
        %5612 = vmatmul.mubr.f32.gmra.mrb[0].mxu0 %v5524
        %v5613 = vpop.f32.mrb[0].mxu0
        %v5614 = vadd.f32 0.0, %v5613
        %v5615 = vpop.f32.mrb[0].mxu0
        %v5616 = vadd.f32 0.0, %v5615
        %5617 = vmatprep.mubr.f32.mxu0 0.0
        %5618 = vmatmul.mubr.f32.gmra.mrb[0].mxu0 %v5527
        %v5619 = vpop.f32.mrb[0].mxu0
        %v5620 = vadd.f32 0.0, %v5619
        %v5621 = vpop.f32.mrb[0].mxu0
        %v5622 = vadd.f32 0.0, %v5621
        %5623 = vmatprep.mubr.f32.mxu0 0.0
        %5624 = vmatmul.mubr.f32.gmra.mrb[0].mxu0 %v5530
        %v5625 = vpop.f32.mrb[0].mxu0
        %v5626 = vadd.f32 0.0, %v5625
        %v5627 = vpop.f32.mrb[0].mxu0
        %v5628 = vadd.f32 0.0, %v5627
        %5629 = vmatprep.mubr.f32.mxu0 0.0
        %5630 = vmatmul.mubr.f32.gmra.mrb[0].mxu0 %v5533
        %v5631 = vpop.f32.mrb[0].mxu0
        %v5632 = vadd.f32 0.0, %v5631
        %v5633 = vpop.f32.mrb[0].mxu0
        %v5634 = vadd.f32 0.0, %v5633
        %5635 = vdwg.mxu0
        %5636 = vxpose.xlu0.b32.start [1/16] %v5614, 128
        %5637 = vxpose.xlu0.b32.cont [2/16] %v5620, 128
        %5638 = vxpose.xlu0.b32.cont [3/16] 0.0, 128
        %5639 = vxpose.xlu0.b32.cont [4/16] 0.0, 128
        %5640 = vxpose.xlu0.b32.cont [5/16] 0.0, 128
        %5641 = vxpose.xlu0.b32.cont [6/16] 0.0, 128
        %5642 = vxpose.xlu0.b32.cont [7/16] 0.0, 128
        %5643 = vxpose.xlu0.b32.cont [8/16] 0.0, 128
        %5644 = vxpose.xlu0.b32.cont [9/16] 0.0, 128
        %5645 = vxpose.xlu0.b32.cont [10/16] 0.0, 128
        %5646 = vxpose.xlu0.b32.cont [11/16] 0.0, 128
        %5647 = vxpose.xlu0.b32.cont [12/16] 0.0, 128
        %5648 = vxpose.xlu0.b32.cont [13/16] 0.0, 128
        %5649 = vxpose.xlu0.b32.cont [14/16] 0.0, 128
        %5650 = vxpose.xlu0.b32.cont [15/16] 0.0, 128
        %5651 = vxpose.xlu0.b32.end [16/16] 0.0, 128
        %v5652 = vpop.trf.xlu0
        %v5653 = vpop.trf.xlu0
        %v5654 = vpop.trf.xlu0
        %v5655 = vpop.trf.xlu0
        %v5656 = vpop.trf.xlu0
        %v5657 = vpop.trf.xlu0
        %v5658 = vpop.trf.xlu0
        %v5659 = vpop.trf.xlu0
        %v5660 = vpop.trf.xlu0
        %v5661 = vpop.trf.xlu0
        %v5662 = vpop.trf.xlu0
        %v5663 = vpop.trf.xlu0
        %v5664 = vpop.trf.xlu0
        %v5665 = vpop.trf.xlu0
        %v5666 = vpop.trf.xlu0
        %v5667 = vpop.trf.xlu0
        %5668 = vxpose.xlu0.b32.start [1/16] %v5616, 128
        %5669 = vxpose.xlu0.b32.cont [2/16] %v5622, 128
        %5670 = vxpose.xlu0.b32.cont [3/16] 0.0, 128
        %5671 = vxpose.xlu0.b32.cont [4/16] 0.0, 128
        %5672 = vxpose.xlu0.b32.cont [5/16] 0.0, 128
        %5673 = vxpose.xlu0.b32.cont [6/16] 0.0, 128
        %5674 = vxpose.xlu0.b32.cont [7/16] 0.0, 128
        %5675 = vxpose.xlu0.b32.cont [8/16] 0.0, 128
        %5676 = vxpose.xlu0.b32.cont [9/16] 0.0, 128
        %5677 = vxpose.xlu0.b32.cont [10/16] 0.0, 128
        %5678 = vxpose.xlu0.b32.cont [11/16] 0.0, 128
        %5679 = vxpose.xlu0.b32.cont [12/16] 0.0, 128
        %5680 = vxpose.xlu0.b32.cont [13/16] 0.0, 128
        %5681 = vxpose.xlu0.b32.cont [14/16] 0.0, 128
        %5682 = vxpose.xlu0.b32.cont [15/16] 0.0, 128
        %5683 = vxpose.xlu0.b32.end [16/16] 0.0, 128
        %v5684 = vpop.trf.xlu0
        %v5685 = vpop.trf.xlu0
        %v5686 = vpop.trf.xlu0
        %v5687 = vpop.trf.xlu0
        %v5688 = vpop.trf.xlu0
        %v5689 = vpop.trf.xlu0
        %v5690 = vpop.trf.xlu0
        %v5691 = vpop.trf.xlu0
        %v5692 = vpop.trf.xlu0
        %v5693 = vpop.trf.xlu0
        %v5694 = vpop.trf.xlu0
        %v5695 = vpop.trf.xlu0
        %v5696 = vpop.trf.xlu0
        %v5697 = vpop.trf.xlu0
        %v5698 = vpop.trf.xlu0
        %v5699 = vpop.trf.xlu0
        %v5701 = vsel %vm1329, %v5652, 0
        %v5704 = vsel %vm1329, %v5653, 0
        %v5707 = vsel %vm1329, %v5654, 0
        %v5710 = vsel %vm1329, %v5655, 0
        %v5713 = vsel %vm1329, %v5656, 0
        %v5716 = vsel %vm1329, %v5657, 0
        %v5719 = vsel %vm1329, %v5658, 0
        %v5722 = vsel %vm1329, %v5659, 0
        %v5725 = vsel %vm1329, %v5660, 0
        %v5728 = vsel %vm1329, %v5661, 0
        %v5731 = vsel %vm1329, %v5662, 0
        %v5734 = vsel %vm1329, %v5663, 0
        %v5737 = vsel %vm1329, %v5664, 0
        %v5740 = vsel %vm1329, %v5665, 0
        %v5743 = vsel %vm1329, %v5666, 0
        %v5746 = vsel %vm1329, %v5667, 0
        %v5749 = vsel %vm1329, %v5684, 0
        %v5752 = vsel %vm1329, %v5685, 0
        %v5755 = vsel %vm1329, %v5686, 0
        %v5758 = vsel %vm1329, %v5687, 0
        %v5761 = vsel %vm1329, %v5688, 0
        %v5764 = vsel %vm1329, %v5689, 0
        %v5767 = vsel %vm1329, %v5690, 0
        %v5770 = vsel %vm1329, %v5691, 0
        %v5773 = vsel %vm1329, %v5692, 0
        %v5776 = vsel %vm1329, %v5693, 0
        %v5779 = vsel %vm1329, %v5694, 0
        %v5782 = vsel %vm1329, %v5695, 0
        %v5785 = vsel %vm1329, %v5696, 0
        %v5788 = vsel %vm1329, %v5697, 0
        %v5791 = vsel %vm1329, %v5698, 0
        %v5794 = vsel %vm1329, %v5699, 0
        %v5797 = vsel %vm1426, %v5602, 0
        %v5800 = vsel %vm1426, %v5604, 0
        %5802 = vmatprep.subr.mxu0 %v5800
        %5803 = vmatpush1.msra.mxu0 %v5797
        %5804 = vmatprep.subr.mxu0 0.0
        %5805 = vmatpush1.msra.mxu0 0.0
        %5806 = vmatprep.subr.mxu0 0.0
        %5807 = vmatpush1.msra.mxu0 0.0
        %5808 = vmatprep.subr.mxu0 0.0
        %5809 = vmatpush1.msra.mxu0 0.0
        %5810 = vmatprep.subr.mxu0 0.0
        %5811 = vmatpush1.msra.mxu0 0.0
        %5812 = vmatprep.subr.mxu0 0.0
        %5813 = vmatpush1.msra.mxu0 0.0
        %5814 = vmatprep.subr.mxu0 0.0
        %5815 = vmatpush1.msra.mxu0 0.0
        %5816 = vmatprep.subr.mxu0 0.0
        %5817 = vmatpush1.msra.mxu0 0.0
        %5818 = vmatprep.subr.mxu0 0.0
        %5819 = vmatpush1.msra.mxu0 0.0
        %5820 = vmatprep.subr.mxu0 0.0
        %5821 = vmatpush1.msra.mxu0 0.0
        %5822 = vmatprep.subr.mxu0 0.0
        %5823 = vmatpush1.msra.mxu0 0.0
        %5824 = vmatprep.subr.mxu0 0.0
        %5825 = vmatpush1.msra.mxu0 0.0
        %5826 = vmatprep.subr.mxu0 0.0
        %5827 = vmatpush1.msra.mxu0 0.0
        %5828 = vmatprep.subr.mxu0 0.0
        %5829 = vmatpush1.msra.mxu0 0.0
        %5830 = vmatprep.subr.mxu0 0.0
        %5831 = vmatpush1.msra.mxu0 0.0
        %5832 = vmatprep.subr.mxu0 0.0
        %5833 = vmatpush1.msra.mxu0 0.0
        %5834 = vmatprep.subr.mxu0 0.0
        %5835 = vmatpush1.msra.mxu0 0.0
        %5836 = vmatprep.subr.mxu0 0.0
        %5837 = vmatpush1.msra.mxu0 0.0
        %5838 = vmatprep.subr.mxu0 0.0
        %5839 = vmatpush1.msra.mxu0 0.0
        %5840 = vmatprep.subr.mxu0 0.0
        %5841 = vmatpush1.msra.mxu0 0.0
        %5842 = vmatprep.subr.mxu0 0.0
        %5843 = vmatpush1.msra.mxu0 0.0
        %5844 = vmatprep.subr.mxu0 0.0
        %5845 = vmatpush1.msra.mxu0 0.0
        %5846 = vmatprep.subr.mxu0 0.0
        %5847 = vmatpush1.msra.mxu0 0.0
        %5848 = vmatprep.subr.mxu0 0.0
        %5849 = vmatpush1.msra.mxu0 0.0
        %5850 = vmatprep.subr.mxu0 0.0
        %5851 = vmatpush1.msra.mxu0 0.0
        %5852 = vmatprep.subr.mxu0 0.0
        %5853 = vmatpush1.msra.mxu0 0.0
        %5854 = vmatprep.subr.mxu0 0.0
        %5855 = vmatpush1.msra.mxu0 0.0
        %5856 = vmatprep.subr.mxu0 0.0
        %5857 = vmatpush1.msra.mxu0 0.0
        %5858 = vmatprep.subr.mxu0 0.0
        %5859 = vmatpush1.msra.mxu0 0.0
        %5860 = vmatprep.subr.mxu0 0.0
        %5861 = vmatpush1.msra.mxu0 0.0
        %5862 = vmatprep.subr.mxu0 0.0
        %5863 = vmatpush1.msra.mxu0 0.0
        %5864 = vmatprep.subr.mxu0 0.0
        %5865 = vmatpush1.msra.mxu0 0.0
        %5866 = vmatprep.mubr.f32.mxu0 0.0
        %5867 = vmatmul.mubr.f32.gmra.mrb[0].mxu0 %v5701
        %v5868 = vpop.f32.mrb[0].mxu0
        %v5869 = vadd.f32 0.0, %v5868
        %v5870 = vpop.f32.mrb[0].mxu0
        %v5871 = vadd.f32 0.0, %v5870
        %5872 = vmatprep.mubr.f32.mxu0 0.0
        %5873 = vmatmul.mubr.f32.gmra.mrb[0].mxu0 %v5704
        %v5874 = vpop.f32.mrb[0].mxu0
        %v5875 = vadd.f32 0.0, %v5874
        %v5876 = vpop.f32.mrb[0].mxu0
        %v5877 = vadd.f32 0.0, %v5876
        %5878 = vmatprep.mubr.f32.mxu0 0.0
        %5879 = vmatmul.mubr.f32.gmra.mrb[0].mxu0 %v5707
        %v5880 = vpop.f32.mrb[0].mxu0
        %v5881 = vadd.f32 0.0, %v5880
        %v5882 = vpop.f32.mrb[0].mxu0
        %v5883 = vadd.f32 0.0, %v5882
        %5884 = vmatprep.mubr.f32.mxu0 0.0
        %5885 = vmatmul.mubr.f32.gmra.mrb[0].mxu0 %v5710
        %v5886 = vpop.f32.mrb[0].mxu0
        %v5887 = vadd.f32 0.0, %v5886
        %v5888 = vpop.f32.mrb[0].mxu0
        %v5889 = vadd.f32 0.0, %v5888
        %5890 = vmatprep.mubr.f32.mxu0 0.0
        %5891 = vmatmul.mubr.f32.gmra.mrb[0].mxu0 %v5713
        %v5892 = vpop.f32.mrb[0].mxu0
        %v5893 = vadd.f32 0.0, %v5892
        %v5894 = vpop.f32.mrb[0].mxu0
        %v5895 = vadd.f32 0.0, %v5894
        %5896 = vmatprep.mubr.f32.mxu0 0.0
        %5897 = vmatmul.mubr.f32.gmra.mrb[0].mxu0 %v5716
        %v5898 = vpop.f32.mrb[0].mxu0
        %v5899 = vadd.f32 0.0, %v5898
        %v5900 = vpop.f32.mrb[0].mxu0
        %v5901 = vadd.f32 0.0, %v5900
        %5902 = vmatprep.mubr.f32.mxu0 0.0
        %5903 = vmatmul.mubr.f32.gmra.mrb[0].mxu0 %v5719
        %v5904 = vpop.f32.mrb[0].mxu0
        %v5905 = vadd.f32 0.0, %v5904
        %v5906 = vpop.f32.mrb[0].mxu0
        %v5907 = vadd.f32 0.0, %v5906
        %5908 = vmatprep.mubr.f32.mxu0 0.0
        %5909 = vmatmul.mubr.f32.gmra.mrb[0].mxu0 %v5722
        %v5910 = vpop.f32.mrb[0].mxu0
        %v5911 = vadd.f32 0.0, %v5910
        %v5912 = vpop.f32.mrb[0].mxu0
        %v5913 = vadd.f32 0.0, %v5912
        %5914 = vmatprep.mubr.f32.mxu0 0.0
        %5915 = vmatmul.mubr.f32.gmra.mrb[0].mxu0 %v5725
        %v5916 = vpop.f32.mrb[0].mxu0
        %v5917 = vadd.f32 0.0, %v5916
        %v5918 = vpop.f32.mrb[0].mxu0
        %v5919 = vadd.f32 0.0, %v5918
        %5920 = vmatprep.mubr.f32.mxu0 0.0
        %5921 = vmatmul.mubr.f32.gmra.mrb[0].mxu0 %v5728
        %v5922 = vpop.f32.mrb[0].mxu0
        %v5923 = vadd.f32 0.0, %v5922
        %v5924 = vpop.f32.mrb[0].mxu0
        %v5925 = vadd.f32 0.0, %v5924
        %5926 = vmatprep.mubr.f32.mxu0 0.0
        %5927 = vmatmul.mubr.f32.gmra.mrb[0].mxu0 %v5731
        %v5928 = vpop.f32.mrb[0].mxu0
        %v5929 = vadd.f32 0.0, %v5928
        %v5930 = vpop.f32.mrb[0].mxu0
        %v5931 = vadd.f32 0.0, %v5930
        %5932 = vmatprep.mubr.f32.mxu0 0.0
        %5933 = vmatmul.mubr.f32.gmra.mrb[0].mxu0 %v5734
        %v5934 = vpop.f32.mrb[0].mxu0
        %v5935 = vadd.f32 0.0, %v5934
        %v5936 = vpop.f32.mrb[0].mxu0
        %v5937 = vadd.f32 0.0, %v5936
        %5938 = vmatprep.mubr.f32.mxu0 0.0
        %5939 = vmatmul.mubr.f32.gmra.mrb[0].mxu0 %v5737
        %v5940 = vpop.f32.mrb[0].mxu0
        %v5941 = vadd.f32 0.0, %v5940
        %v5942 = vpop.f32.mrb[0].mxu0
        %v5943 = vadd.f32 0.0, %v5942
        %5944 = vmatprep.mubr.f32.mxu0 0.0
        %5945 = vmatmul.mubr.f32.gmra.mrb[0].mxu0 %v5740
        %v5946 = vpop.f32.mrb[0].mxu0
        %v5947 = vadd.f32 0.0, %v5946
        %v5948 = vpop.f32.mrb[0].mxu0
        %v5949 = vadd.f32 0.0, %v5948
        %5950 = vmatprep.mubr.f32.mxu0 0.0
        %5951 = vmatmul.mubr.f32.gmra.mrb[0].mxu0 %v5743
        %v5952 = vpop.f32.mrb[0].mxu0
        %v5953 = vadd.f32 0.0, %v5952
        %v5954 = vpop.f32.mrb[0].mxu0
        %v5955 = vadd.f32 0.0, %v5954
        %5956 = vmatprep.mubr.f32.mxu0 0.0
        %5957 = vmatmul.mubr.f32.gmra.mrb[0].mxu0 %v5746
        %v5958 = vpop.f32.mrb[0].mxu0
        %v5959 = vadd.f32 0.0, %v5958
        %v5960 = vpop.f32.mrb[0].mxu0
        %v5961 = vadd.f32 0.0, %v5960
        %5962 = vmatprep.mubr.f32.mxu0 0.0
        %5963 = vmatmul.mubr.f32.gmra.mrb[0].mxu0 %v5749
        %v5964 = vpop.f32.mrb[0].mxu0
        %v5965 = vadd.f32 0.0, %v5964
        %v5966 = vpop.f32.mrb[0].mxu0
        %v5967 = vadd.f32 0.0, %v5966
        %5968 = vmatprep.mubr.f32.mxu0 0.0
        %5969 = vmatmul.mubr.f32.gmra.mrb[0].mxu0 %v5752
        %v5970 = vpop.f32.mrb[0].mxu0
        %v5971 = vadd.f32 0.0, %v5970
        %v5972 = vpop.f32.mrb[0].mxu0
        %v5973 = vadd.f32 0.0, %v5972
        %5974 = vmatprep.mubr.f32.mxu0 0.0
        %5975 = vmatmul.mubr.f32.gmra.mrb[0].mxu0 %v5755
        %v5976 = vpop.f32.mrb[0].mxu0
        %v5977 = vadd.f32 0.0, %v5976
        %v5978 = vpop.f32.mrb[0].mxu0
        %v5979 = vadd.f32 0.0, %v5978
        %5980 = vmatprep.mubr.f32.mxu0 0.0
        %5981 = vmatmul.mubr.f32.gmra.mrb[0].mxu0 %v5758
        %v5982 = vpop.f32.mrb[0].mxu0
        %v5983 = vadd.f32 0.0, %v5982
        %v5984 = vpop.f32.mrb[0].mxu0
        %v5985 = vadd.f32 0.0, %v5984
        %5986 = vmatprep.mubr.f32.mxu0 0.0
        %5987 = vmatmul.mubr.f32.gmra.mrb[0].mxu0 %v5761
        %v5988 = vpop.f32.mrb[0].mxu0
        %v5989 = vadd.f32 0.0, %v5988
        %v5990 = vpop.f32.mrb[0].mxu0
        %v5991 = vadd.f32 0.0, %v5990
        %5992 = vmatprep.mubr.f32.mxu0 0.0
        %5993 = vmatmul.mubr.f32.gmra.mrb[0].mxu0 %v5764
        %v5994 = vpop.f32.mrb[0].mxu0
        %v5995 = vadd.f32 0.0, %v5994
        %v5996 = vpop.f32.mrb[0].mxu0
        %v5997 = vadd.f32 0.0, %v5996
        %5998 = vmatprep.mubr.f32.mxu0 0.0
        %5999 = vmatmul.mubr.f32.gmra.mrb[0].mxu0 %v5767
        %v6000 = vpop.f32.mrb[0].mxu0
        %v6001 = vadd.f32 0.0, %v6000
        %v6002 = vpop.f32.mrb[0].mxu0
        %v6003 = vadd.f32 0.0, %v6002
        %6004 = vmatprep.mubr.f32.mxu0 0.0
        %6005 = vmatmul.mubr.f32.gmra.mrb[0].mxu0 %v5770
        %v6006 = vpop.f32.mrb[0].mxu0
        %v6007 = vadd.f32 0.0, %v6006
        %v6008 = vpop.f32.mrb[0].mxu0
        %v6009 = vadd.f32 0.0, %v6008
        %6010 = vmatprep.mubr.f32.mxu0 0.0
        %6011 = vmatmul.mubr.f32.gmra.mrb[0].mxu0 %v5773
        %v6012 = vpop.f32.mrb[0].mxu0
        %v6013 = vadd.f32 0.0, %v6012
        %v6014 = vpop.f32.mrb[0].mxu0
        %v6015 = vadd.f32 0.0, %v6014
        %6016 = vmatprep.mubr.f32.mxu0 0.0
        %6017 = vmatmul.mubr.f32.gmra.mrb[0].mxu0 %v5776
        %v6018 = vpop.f32.mrb[0].mxu0
        %v6019 = vadd.f32 0.0, %v6018
        %v6020 = vpop.f32.mrb[0].mxu0
        %v6021 = vadd.f32 0.0, %v6020
        %6022 = vmatprep.mubr.f32.mxu0 0.0
        %6023 = vmatmul.mubr.f32.gmra.mrb[0].mxu0 %v5779
        %v6024 = vpop.f32.mrb[0].mxu0
        %v6025 = vadd.f32 0.0, %v6024
        %v6026 = vpop.f32.mrb[0].mxu0
        %v6027 = vadd.f32 0.0, %v6026
        %6028 = vmatprep.mubr.f32.mxu0 0.0
        %6029 = vmatmul.mubr.f32.gmra.mrb[0].mxu0 %v5782
        %v6030 = vpop.f32.mrb[0].mxu0
        %v6031 = vadd.f32 0.0, %v6030
        %v6032 = vpop.f32.mrb[0].mxu0
        %v6033 = vadd.f32 0.0, %v6032
        %6034 = vmatprep.mubr.f32.mxu0 0.0
        %6035 = vmatmul.mubr.f32.gmra.mrb[0].mxu0 %v5785
        %v6036 = vpop.f32.mrb[0].mxu0
        %v6037 = vadd.f32 0.0, %v6036
        %v6038 = vpop.f32.mrb[0].mxu0
        %v6039 = vadd.f32 0.0, %v6038
        %6040 = vmatprep.mubr.f32.mxu0 0.0
        %6041 = vmatmul.mubr.f32.gmra.mrb[0].mxu0 %v5788
        %v6042 = vpop.f32.mrb[0].mxu0
        %v6043 = vadd.f32 0.0, %v6042
        %v6044 = vpop.f32.mrb[0].mxu0
        %v6045 = vadd.f32 0.0, %v6044
        %6046 = vmatprep.mubr.f32.mxu0 0.0
        %6047 = vmatmul.mubr.f32.gmra.mrb[0].mxu0 %v5791
        %v6048 = vpop.f32.mrb[0].mxu0
        %v6049 = vadd.f32 0.0, %v6048
        %v6050 = vpop.f32.mrb[0].mxu0
        %v6051 = vadd.f32 0.0, %v6050
        %6052 = vmatprep.mubr.f32.mxu0 0.0
        %6053 = vmatmul.mubr.f32.gmra.mrb[0].mxu0 %v5794
        %v6054 = vpop.f32.mrb[0].mxu0
        %v6055 = vadd.f32 0.0, %v6054
        %v6056 = vpop.f32.mrb[0].mxu0
        %v6057 = vadd.f32 0.0, %v6056
        %6058 = vdwg.mxu0
        %v6059 = vmax.f32 %v5869, %v5881
        %v6060 = vmax.f32 %v5875, %v5887
        %v6061 = vmax.f32 %v6059, %v5893
        %v6062 = vmax.f32 %v6060, %v5899
        %v6063 = vmax.f32 %v6061, %v5905
        %v6064 = vmax.f32 %v6062, %v5911
        %v6065 = vmax.f32 %v6063, %v5917
        %v6066 = vmax.f32 %v6064, %v5923
        %v6067 = vmax.f32 %v6065, %v5929
        %v6068 = vmax.f32 %v6066, %v5935
        %v6069 = vmax.f32 %v6067, %v5941
        %v6070 = vmax.f32 %v6068, %v5947
        %v6071 = vmax.f32 %v6069, %v5953
        %v6072 = vmax.f32 %v6070, %v5959
        %v6073 = vmax.f32 %v6071, %v5965
        %v6074 = vmax.f32 %v6072, %v5971
        %v6075 = vmax.f32 %v6073, %v5977
        %v6076 = vmax.f32 %v6074, %v5983
        %v6077 = vmax.f32 %v6075, %v5989
        %v6078 = vmax.f32 %v6076, %v5995
        %v6079 = vmax.f32 %v6077, %v6001
        %v6080 = vmax.f32 %v6078, %v6007
        %v6081 = vmax.f32 %v6079, %v6013
        %v6082 = vmax.f32 %v6080, %v6019
        %v6083 = vmax.f32 %v6081, %v6025
        %v6084 = vmax.f32 %v6082, %v6031
        %v6085 = vmax.f32 %v6083, %v6037
        %v6086 = vmax.f32 %v6084, %v6043
        %v6087 = vmax.f32 %v6085, %v6049
        %v6088 = vmax.f32 %v6086, %v6055
        %v6089 = vmax.f32 %v6087, %v6088
        %v6090 = vrot.slane %v6089, 4
        %v6091 = vmax.f32 %v6089, %v6090
        %v6092 = vrot.slane %v6091, 2
        %v6093 = vmax.f32 %v6091, %v6092
        %v6094 = vrot.slane %v6093, 1
        %v6095 = vmax.f32 %v6093, %v6094
        %v6096 = vmax.f32 %v5871, %v5883
        %v6097 = vmax.f32 %v5877, %v5889
        %v6098 = vmax.f32 %v6096, %v5895
        %v6099 = vmax.f32 %v6097, %v5901
        %v6100 = vmax.f32 %v6098, %v5907
        %v6101 = vmax.f32 %v6099, %v5913
        %v6102 = vmax.f32 %v6100, %v5919
        %v6103 = vmax.f32 %v6101, %v5925
        %v6104 = vmax.f32 %v6102, %v5931
        %v6105 = vmax.f32 %v6103, %v5937
        %v6106 = vmax.f32 %v6104, %v5943
        %v6107 = vmax.f32 %v6105, %v5949
        %v6108 = vmax.f32 %v6106, %v5955
        %v6109 = vmax.f32 %v6107, %v5961
        %v6110 = vmax.f32 %v6108, %v5967
        %v6111 = vmax.f32 %v6109, %v5973
        %v6112 = vmax.f32 %v6110, %v5979
        %v6113 = vmax.f32 %v6111, %v5985
        %v6114 = vmax.f32 %v6112, %v5991
        %v6115 = vmax.f32 %v6113, %v5997
        %v6116 = vmax.f32 %v6114, %v6003
        %v6117 = vmax.f32 %v6115, %v6009
        %v6118 = vmax.f32 %v6116, %v6015
        %v6119 = vmax.f32 %v6117, %v6021
        %v6120 = vmax.f32 %v6118, %v6027
        %v6121 = vmax.f32 %v6119, %v6033
        %v6122 = vmax.f32 %v6120, %v6039
        %v6123 = vmax.f32 %v6121, %v6045
        %v6124 = vmax.f32 %v6122, %v6051
        %v6125 = vmax.f32 %v6123, %v6057
        %v6126 = vmax.f32 %v6124, %v6125
        %v6127 = vrot.slane %v6126, 4
        %v6128 = vmax.f32 %v6126, %v6127
        %v6129 = vrot.slane %v6128, 2
        %v6130 = vmax.f32 %v6128, %v6129
        %v6131 = vrot.slane %v6130, 1
        %v6132 = vmax.f32 %v6130, %v6131
        %v6133 = vsub.f32 %v5869, %v6095
        %v6134 = vsub.f32 %v5871, %v6132
        %v6135 = vsub.f32 %v5875, %v6095
        %v6136 = vsub.f32 %v5877, %v6132
        %v6137 = vsub.f32 %v5881, %v6095
        %v6138 = vsub.f32 %v5883, %v6132
        %v6139 = vsub.f32 %v5887, %v6095
        %v6140 = vsub.f32 %v5889, %v6132
        %v6141 = vsub.f32 %v5893, %v6095
        %v6142 = vsub.f32 %v5895, %v6132
        %v6143 = vsub.f32 %v5899, %v6095
        %v6144 = vsub.f32 %v5901, %v6132
        %v6145 = vsub.f32 %v5905, %v6095
        %v6146 = vsub.f32 %v5907, %v6132
        %v6147 = vsub.f32 %v5911, %v6095
        %v6148 = vsub.f32 %v5913, %v6132
        %v6149 = vsub.f32 %v5917, %v6095
        %v6150 = vsub.f32 %v5919, %v6132
        %v6151 = vsub.f32 %v5923, %v6095
        %v6152 = vsub.f32 %v5925, %v6132
        %v6153 = vsub.f32 %v5929, %v6095
        %v6154 = vsub.f32 %v5931, %v6132
        %v6155 = vsub.f32 %v5935, %v6095
        %v6156 = vsub.f32 %v5937, %v6132
        %v6157 = vsub.f32 %v5941, %v6095
        %v6158 = vsub.f32 %v5943, %v6132
        %v6159 = vsub.f32 %v5947, %v6095
        %v6160 = vsub.f32 %v5949, %v6132
        %v6161 = vsub.f32 %v5953, %v6095
        %v6162 = vsub.f32 %v5955, %v6132
        %v6163 = vsub.f32 %v5959, %v6095
        %v6164 = vsub.f32 %v5961, %v6132
        %v6165 = vsub.f32 %v5965, %v6095
        %v6166 = vsub.f32 %v5967, %v6132
        %v6167 = vsub.f32 %v5971, %v6095
        %v6168 = vsub.f32 %v5973, %v6132
        %v6169 = vsub.f32 %v5977, %v6095
        %v6170 = vsub.f32 %v5979, %v6132
        %v6171 = vsub.f32 %v5983, %v6095
        %v6172 = vsub.f32 %v5985, %v6132
        %v6173 = vsub.f32 %v5989, %v6095
        %v6174 = vsub.f32 %v5991, %v6132
        %v6175 = vsub.f32 %v5995, %v6095
        %v6176 = vsub.f32 %v5997, %v6132
        %v6177 = vsub.f32 %v6001, %v6095
        %v6178 = vsub.f32 %v6003, %v6132
        %v6179 = vsub.f32 %v6007, %v6095
        %v6180 = vsub.f32 %v6009, %v6132
        %v6181 = vsub.f32 %v6013, %v6095
        %v6182 = vsub.f32 %v6015, %v6132
        %v6183 = vsub.f32 %v6019, %v6095
        %v6184 = vsub.f32 %v6021, %v6132
        %v6185 = vsub.f32 %v6025, %v6095
        %v6186 = vsub.f32 %v6027, %v6132
        %v6187 = vsub.f32 %v6031, %v6095
        %v6188 = vsub.f32 %v6033, %v6132
        %v6189 = vsub.f32 %v6037, %v6095
        %v6190 = vsub.f32 %v6039, %v6132
        %v6191 = vsub.f32 %v6043, %v6095
        %v6192 = vsub.f32 %v6045, %v6132
        %v6193 = vsub.f32 %v6049, %v6095
        %v6194 = vsub.f32 %v6051, %v6132
        %v6195 = vsub.f32 %v6055, %v6095
        %v6196 = vsub.f32 %v6057, %v6132
        %v6197 = vmul.f32 %v6133, 1.442695
        %v6198 = vpow.pop %v6197
        %v6199 = vmul.f32 %v6134, 1.442695
        %v6200 = vpow.pop %v6199
        %v6201 = vmul.f32 %v6135, 1.442695
        %v6202 = vpow.pop %v6201
        %v6203 = vmul.f32 %v6136, 1.442695
        %v6204 = vpow.pop %v6203
        %v6205 = vmul.f32 %v6137, 1.442695
        %v6206 = vpow.pop %v6205
        %v6207 = vmul.f32 %v6138, 1.442695
        %v6208 = vpow.pop %v6207
        %v6209 = vmul.f32 %v6139, 1.442695
        %v6210 = vpow.pop %v6209
        %v6211 = vmul.f32 %v6140, 1.442695
        %v6212 = vpow.pop %v6211
        %v6213 = vmul.f32 %v6141, 1.442695
        %v6214 = vpow.pop %v6213
        %v6215 = vmul.f32 %v6142, 1.442695
        %v6216 = vpow.pop %v6215
        %v6217 = vmul.f32 %v6143, 1.442695
        %v6218 = vpow.pop %v6217
        %v6219 = vmul.f32 %v6144, 1.442695
        %v6220 = vpow.pop %v6219
        %v6221 = vmul.f32 %v6145, 1.442695
        %v6222 = vpow.pop %v6221
        %v6223 = vmul.f32 %v6146, 1.442695
        %v6224 = vpow.pop %v6223
        %v6225 = vmul.f32 %v6147, 1.442695
        %v6226 = vpow.pop %v6225
        %v6227 = vmul.f32 %v6148, 1.442695
        %v6228 = vpow.pop %v6227
        %v6229 = vmul.f32 %v6149, 1.442695
        %v6230 = vpow.pop %v6229
        %v6231 = vmul.f32 %v6150, 1.442695
        %v6232 = vpow.pop %v6231
        %v6233 = vmul.f32 %v6151, 1.442695
        %v6234 = vpow.pop %v6233
        %v6235 = vmul.f32 %v6152, 1.442695
        %v6236 = vpow.pop %v6235
        %v6237 = vmul.f32 %v6153, 1.442695
        %v6238 = vpow.pop %v6237
        %v6239 = vmul.f32 %v6154, 1.442695
        %v6240 = vpow.pop %v6239
        %v6241 = vmul.f32 %v6155, 1.442695
        %v6242 = vpow.pop %v6241
        %v6243 = vmul.f32 %v6156, 1.442695
        %v6244 = vpow.pop %v6243
        %v6245 = vmul.f32 %v6157, 1.442695
        %v6246 = vpow.pop %v6245
        %v6247 = vmul.f32 %v6158, 1.442695
        %v6248 = vpow.pop %v6247
        %v6249 = vmul.f32 %v6159, 1.442695
        %v6250 = vpow.pop %v6249
        %v6251 = vmul.f32 %v6160, 1.442695
        %v6252 = vpow.pop %v6251
        %v6253 = vmul.f32 %v6161, 1.442695
        %v6254 = vpow.pop %v6253
        %v6255 = vmul.f32 %v6162, 1.442695
        %v6256 = vpow.pop %v6255
        %v6257 = vmul.f32 %v6163, 1.442695
        %v6258 = vpow.pop %v6257
        %v6259 = vmul.f32 %v6164, 1.442695
        %v6260 = vpow.pop %v6259
        %v6261 = vmul.f32 %v6165, 1.442695
        %v6262 = vpow.pop %v6261
        %v6263 = vmul.f32 %v6166, 1.442695
        %v6264 = vpow.pop %v6263
        %v6265 = vmul.f32 %v6167, 1.442695
        %v6266 = vpow.pop %v6265
        %v6267 = vmul.f32 %v6168, 1.442695
        %v6268 = vpow.pop %v6267
        %v6269 = vmul.f32 %v6169, 1.442695
        %v6270 = vpow.pop %v6269
        %v6271 = vmul.f32 %v6170, 1.442695
        %v6272 = vpow.pop %v6271
        %v6273 = vmul.f32 %v6171, 1.442695
        %v6274 = vpow.pop %v6273
        %v6275 = vmul.f32 %v6172, 1.442695
        %v6276 = vpow.pop %v6275
        %v6277 = vmul.f32 %v6173, 1.442695
        %v6278 = vpow.pop %v6277
        %v6279 = vmul.f32 %v6174, 1.442695
        %v6280 = vpow.pop %v6279
        %v6281 = vmul.f32 %v6175, 1.442695
        %v6282 = vpow.pop %v6281
        %v6283 = vmul.f32 %v6176, 1.442695
        %v6284 = vpow.pop %v6283
        %v6285 = vmul.f32 %v6177, 1.442695
        %v6286 = vpow.pop %v6285
        %v6287 = vmul.f32 %v6178, 1.442695
        %v6288 = vpow.pop %v6287
        %v6289 = vmul.f32 %v6179, 1.442695
        %v6290 = vpow.pop %v6289
        %v6291 = vmul.f32 %v6180, 1.442695
        %v6292 = vpow.pop %v6291
        %v6293 = vmul.f32 %v6181, 1.442695
        %v6294 = vpow.pop %v6293
        %v6295 = vmul.f32 %v6182, 1.442695
        %v6296 = vpow.pop %v6295
        %v6297 = vmul.f32 %v6183, 1.442695
        %v6298 = vpow.pop %v6297
        %v6299 = vmul.f32 %v6184, 1.442695
        %v6300 = vpow.pop %v6299
        %v6301 = vmul.f32 %v6185, 1.442695
        %v6302 = vpow.pop %v6301
        %v6303 = vmul.f32 %v6186, 1.442695
        %v6304 = vpow.pop %v6303
        %v6305 = vmul.f32 %v6187, 1.442695
        %v6306 = vpow.pop %v6305
        %v6307 = vmul.f32 %v6188, 1.442695
        %v6308 = vpow.pop %v6307
        %v6309 = vmul.f32 %v6189, 1.442695
        %v6310 = vpow.pop %v6309
        %v6311 = vmul.f32 %v6190, 1.442695
        %v6312 = vpow.pop %v6311
        %v6313 = vmul.f32 %v6191, 1.442695
        %v6314 = vpow.pop %v6313
        %v6315 = vmul.f32 %v6192, 1.442695
        %v6316 = vpow.pop %v6315
        %v6317 = vmul.f32 %v6193, 1.442695
        %v6318 = vpow.pop %v6317
        %v6319 = vmul.f32 %v6194, 1.442695
        %v6320 = vpow.pop %v6319
        %v6321 = vmul.f32 %v6195, 1.442695
        %v6322 = vpow.pop %v6321
        %v6323 = vmul.f32 %v6196, 1.442695
        %v6324 = vpow.pop %v6323
        %v6325 = vadd.f32 %v6198, %v6202
        %v6326 = vadd.f32 %v6325, %v6206
        %v6327 = vadd.f32 %v6326, %v6210
        %v6328 = vadd.f32 %v6327, %v6214
        %v6329 = vadd.f32 %v6328, %v6218
        %v6330 = vadd.f32 %v6329, %v6222
        %v6331 = vadd.f32 %v6330, %v6226
        %v6332 = vadd.f32 %v6331, %v6230
        %v6333 = vadd.f32 %v6332, %v6234
        %v6334 = vadd.f32 %v6333, %v6238
        %v6335 = vadd.f32 %v6334, %v6242
        %v6336 = vadd.f32 %v6335, %v6246
        %v6337 = vadd.f32 %v6336, %v6250
        %v6338 = vadd.f32 %v6337, %v6254
        %v6339 = vadd.f32 %v6338, %v6258
        %v6340 = vadd.f32 %v6339, %v6262
        %v6341 = vadd.f32 %v6340, %v6266
        %v6342 = vadd.f32 %v6341, %v6270
        %v6343 = vadd.f32 %v6342, %v6274
        %v6344 = vadd.f32 %v6343, %v6278
        %v6345 = vadd.f32 %v6344, %v6282
        %v6346 = vadd.f32 %v6345, %v6286
        %v6347 = vadd.f32 %v6346, %v6290
        %v6348 = vadd.f32 %v6347, %v6294
        %v6349 = vadd.f32 %v6348, %v6298
        %v6350 = vadd.f32 %v6349, %v6302
        %v6351 = vadd.f32 %v6350, %v6306
        %v6352 = vadd.f32 %v6351, %v6310
        %v6353 = vadd.f32 %v6352, %v6314
        %v6354 = vadd.f32 %v6353, %v6318
        %v6355 = vadd.f32 %v6354, %v6322
        %v6356 = vrot.slane %v6355, 4
        %v6357 = vadd.f32 %v6355, %v6356
        %v6358 = vrot.slane %v6357, 2
        %v6359 = vadd.f32 %v6357, %v6358
        %v6360 = vrot.slane %v6359, 1
        %v6361 = vadd.f32 %v6359, %v6360
        %v6362 = vadd.f32 %v6200, %v6204
        %v6363 = vadd.f32 %v6362, %v6208
        %v6364 = vadd.f32 %v6363, %v6212
        %v6365 = vadd.f32 %v6364, %v6216
        %v6366 = vadd.f32 %v6365, %v6220
        %v6367 = vadd.f32 %v6366, %v6224
        %v6368 = vadd.f32 %v6367, %v6228
        %v6369 = vadd.f32 %v6368, %v6232
        %v6370 = vadd.f32 %v6369, %v6236
        %v6371 = vadd.f32 %v6370, %v6240
        %v6372 = vadd.f32 %v6371, %v6244
        %v6373 = vadd.f32 %v6372, %v6248
        %v6374 = vadd.f32 %v6373, %v6252
        %v6375 = vadd.f32 %v6374, %v6256
        %v6376 = vadd.f32 %v6375, %v6260
        %v6377 = vadd.f32 %v6376, %v6264
        %v6378 = vadd.f32 %v6377, %v6268
        %v6379 = vadd.f32 %v6378, %v6272
        %v6380 = vadd.f32 %v6379, %v6276
        %v6381 = vadd.f32 %v6380, %v6280
        %v6382 = vadd.f32 %v6381, %v6284
        %v6383 = vadd.f32 %v6382, %v6288
        %v6384 = vadd.f32 %v6383, %v6292
        %v6385 = vadd.f32 %v6384, %v6296
        %v6386 = vadd.f32 %v6385, %v6300
        %v6387 = vadd.f32 %v6386, %v6304
        %v6388 = vadd.f32 %v6387, %v6308
        %v6389 = vadd.f32 %v6388, %v6312
        %v6390 = vadd.f32 %v6389, %v6316
        %v6391 = vadd.f32 %v6390, %v6320
        %v6392 = vadd.f32 %v6391, %v6324
        %v6393 = vrot.slane %v6392, 4
        %v6394 = vadd.f32 %v6392, %v6393
        %v6395 = vrot.slane %v6394, 2
        %v6396 = vadd.f32 %v6394, %v6395
        %v6397 = vrot.slane %v6396, 1
        %v6398 = vadd.f32 %v6396, %v6397
        %v6399 = vrcp.pop %v6361
        %v6400 = vmul.f32 1.0, %v6399
        %v6401 = vrcp.pop %v6398
        %v6402 = vmul.f32 1.0, %v6401
        %6403 = vmatprep.subr.mxu0 %v6200
        %6404 = vmatpush1.msra.mxu0 %v6198
        %6405 = vmatprep.subr.mxu0 %v6204
        %6406 = vmatpush1.msra.mxu0 %v6202
        %6407 = vmatprep.subr.mxu0 %v6208
        %6408 = vmatpush1.msra.mxu0 %v6206
        %6409 = vmatprep.subr.mxu0 %v6212
        %6410 = vmatpush1.msra.mxu0 %v6210
        %6411 = vmatprep.subr.mxu0 %v6216
        %6412 = vmatpush1.msra.mxu0 %v6214
        %6413 = vmatprep.subr.mxu0 %v6220
        %6414 = vmatpush1.msra.mxu0 %v6218
        %6415 = vmatprep.subr.mxu0 %v6224
        %6416 = vmatpush1.msra.mxu0 %v6222
        %6417 = vmatprep.subr.mxu0 %v6228
        %6418 = vmatpush1.msra.mxu0 %v6226
        %6419 = vmatprep.subr.mxu0 %v6232
        %6420 = vmatpush1.msra.mxu0 %v6230
        %6421 = vmatprep.subr.mxu0 %v6236
        %6422 = vmatpush1.msra.mxu0 %v6234
        %6423 = vmatprep.subr.mxu0 %v6240
        %6424 = vmatpush1.msra.mxu0 %v6238
        %6425 = vmatprep.subr.mxu0 %v6244
        %6426 = vmatpush1.msra.mxu0 %v6242
        %6427 = vmatprep.subr.mxu0 %v6248
        %6428 = vmatpush1.msra.mxu0 %v6246
        %6429 = vmatprep.subr.mxu0 %v6252
        %6430 = vmatpush1.msra.mxu0 %v6250
        %6431 = vmatprep.subr.mxu0 %v6256
        %6432 = vmatpush1.msra.mxu0 %v6254
        %6433 = vmatprep.subr.mxu0 %v6260
        %6434 = vmatpush1.msra.mxu0 %v6258
        %6435 = vmatprep.subr.mxu0 %v6264
        %6436 = vmatpush1.msra.mxu0 %v6262
        %6437 = vmatprep.subr.mxu0 %v6268
        %6438 = vmatpush1.msra.mxu0 %v6266
        %6439 = vmatprep.subr.mxu0 %v6272
        %6440 = vmatpush1.msra.mxu0 %v6270
        %6441 = vmatprep.subr.mxu0 %v6276
        %6442 = vmatpush1.msra.mxu0 %v6274
        %6443 = vmatprep.subr.mxu0 %v6280
        %6444 = vmatpush1.msra.mxu0 %v6278
        %6445 = vmatprep.subr.mxu0 %v6284
        %6446 = vmatpush1.msra.mxu0 %v6282
        %6447 = vmatprep.subr.mxu0 %v6288
        %6448 = vmatpush1.msra.mxu0 %v6286
        %6449 = vmatprep.subr.mxu0 %v6292
        %6450 = vmatpush1.msra.mxu0 %v6290
        %6451 = vmatprep.subr.mxu0 %v6296
        %6452 = vmatpush1.msra.mxu0 %v6294
        %6453 = vmatprep.subr.mxu0 %v6300
        %6454 = vmatpush1.msra.mxu0 %v6298
        %6455 = vmatprep.subr.mxu0 %v6304
        %6456 = vmatpush1.msra.mxu0 %v6302
        %6457 = vmatprep.subr.mxu0 %v6308
        %6458 = vmatpush1.msra.mxu0 %v6306
        %6459 = vmatprep.subr.mxu0 %v6312
        %6460 = vmatpush1.msra.mxu0 %v6310
        %6461 = vmatprep.subr.mxu0 %v6316
        %6462 = vmatpush1.msra.mxu0 %v6314
        %6463 = vmatprep.subr.mxu0 %v6320
        %6464 = vmatpush1.msra.mxu0 %v6318
        %6465 = vmatprep.subr.mxu0 %v6324
        %6466 = vmatpush1.msra.mxu0 %v6322
        %6467 = vmatprep.mubr.f32.mxu0 %v5628
        %6468 = vmatmul.mubr.f32.gmra.mrb[0].mxu0 %v5626
        %v6469 = vpop.f32.mrb[0].mxu0
        %v6470 = vadd.f32 0.0, %v6469
        %v6471 = vpop.f32.mrb[0].mxu0
        %v6472 = vadd.f32 0.0, %v6471
        %6473 = vdwg.mxu0
        %v6474 = vmul.f32 %v6470, %v6400
        %v6475 = vmul.f32 %v6472, %v6402
        %v6476 = vld [vmem:[%s5510 + $0x30] sm:$0xff]
        %v6477 = vld [vmem:[%s5510 + $0x38] sm:$0xff]
        %v6478 = vmul.f32 %v6198, %v6400
        %v6479 = vmul.f32 %v6200, %v6402
        %v6480 = vmul.f32 %v6202, %v6400
        %v6481 = vmul.f32 %v6204, %v6402
        %v6482 = vmul.f32 %v6206, %v6400
        %v6483 = vmul.f32 %v6208, %v6402
        %v6484 = vmul.f32 %v6210, %v6400
        %v6485 = vmul.f32 %v6212, %v6402
        %v6486 = vmul.f32 %v6214, %v6400
        %v6487 = vmul.f32 %v6216, %v6402
        %v6488 = vmul.f32 %v6218, %v6400
        %v6489 = vmul.f32 %v6220, %v6402
        %v6490 = vmul.f32 %v6222, %v6400
        %v6491 = vmul.f32 %v6224, %v6402
        %v6492 = vmul.f32 %v6226, %v6400
        %v6493 = vmul.f32 %v6228, %v6402
        %v6494 = vmul.f32 %v6230, %v6400
        %v6495 = vmul.f32 %v6232, %v6402
        %v6496 = vmul.f32 %v6234, %v6400
        %v6497 = vmul.f32 %v6236, %v6402
        %v6498 = vmul.f32 %v6238, %v6400
        %v6499 = vmul.f32 %v6240, %v6402
        %v6500 = vmul.f32 %v6242, %v6400
        %v6501 = vmul.f32 %v6244, %v6402
        %v6502 = vmul.f32 %v6246, %v6400
        %v6503 = vmul.f32 %v6248, %v6402
        %v6504 = vmul.f32 %v6250, %v6400
        %v6505 = vmul.f32 %v6252, %v6402
        %v6506 = vmul.f32 %v6254, %v6400
        %v6507 = vmul.f32 %v6256, %v6402
        %v6508 = vmul.f32 %v6258, %v6400
        %v6509 = vmul.f32 %v6260, %v6402
        %v6510 = vmul.f32 %v6262, %v6400
        %v6511 = vmul.f32 %v6264, %v6402
        %v6512 = vmul.f32 %v6266, %v6400
        %v6513 = vmul.f32 %v6268, %v6402
        %v6514 = vmul.f32 %v6270, %v6400
        %v6515 = vmul.f32 %v6272, %v6402
        %v6516 = vmul.f32 %v6274, %v6400
        %v6517 = vmul.f32 %v6276, %v6402
        %v6518 = vmul.f32 %v6278, %v6400
        %v6519 = vmul.f32 %v6280, %v6402
        %v6520 = vmul.f32 %v6282, %v6400
        %v6521 = vmul.f32 %v6284, %v6402
        %v6522 = vmul.f32 %v6286, %v6400
        %v6523 = vmul.f32 %v6288, %v6402
        %v6524 = vmul.f32 %v6290, %v6400
        %v6525 = vmul.f32 %v6292, %v6402
        %v6526 = vmul.f32 %v6294, %v6400
        %v6527 = vmul.f32 %v6296, %v6402
        %v6528 = vmul.f32 %v6298, %v6400
        %v6529 = vmul.f32 %v6300, %v6402
        %v6530 = vmul.f32 %v6302, %v6400
        %v6531 = vmul.f32 %v6304, %v6402
        %v6532 = vmul.f32 %v6306, %v6400
        %v6533 = vmul.f32 %v6308, %v6402
        %v6534 = vmul.f32 %v6310, %v6400
        %v6535 = vmul.f32 %v6312, %v6402
        %v6536 = vmul.f32 %v6314, %v6400
        %v6537 = vmul.f32 %v6316, %v6402
        %v6538 = vmul.f32 %v6318, %v6400
        %v6539 = vmul.f32 %v6320, %v6402
        %v6540 = vmul.f32 %v6322, %v6400
        %v6541 = vmul.f32 %v6324, %v6402
        %v6542 = vadd.f32 %v6478, %v6479
        %6543 = vadd.xlane.f32.xlu0 %v6542
        %v6544 = vpop.xlane.xlu0 %6543
        %v6545 = vadd.f32 %v6480, %v6481
        %6546 = vadd.xlane.f32.xlu0 %v6545
        %v6547 = vpop.xlane.xlu0 %6546
        %v6548 = vadd.f32 %v6482, %v6483
        %6549 = vadd.xlane.f32.xlu0 %v6548
        %v6550 = vpop.xlane.xlu0 %6549
        %v6551 = vadd.f32 %v6484, %v6485
        %6552 = vadd.xlane.f32.xlu0 %v6551
        %v6553 = vpop.xlane.xlu0 %6552
        %v6554 = vadd.f32 %v6486, %v6487
        %6555 = vadd.xlane.f32.xlu0 %v6554
        %v6556 = vpop.xlane.xlu0 %6555
        %v6557 = vadd.f32 %v6488, %v6489
        %6558 = vadd.xlane.f32.xlu0 %v6557
        %v6559 = vpop.xlane.xlu0 %6558
        %v6560 = vadd.f32 %v6490, %v6491
        %6561 = vadd.xlane.f32.xlu0 %v6560
        %v6562 = vpop.xlane.xlu0 %6561
        %v6563 = vadd.f32 %v6492, %v6493
        %6564 = vadd.xlane.f32.xlu0 %v6563
        %v6565 = vpop.xlane.xlu0 %6564
        %v6566 = vadd.f32 %v6494, %v6495
        %6567 = vadd.xlane.f32.xlu0 %v6566
        %v6568 = vpop.xlane.xlu0 %6567
        %v6569 = vadd.f32 %v6496, %v6497
        %6570 = vadd.xlane.f32.xlu0 %v6569
        %v6571 = vpop.xlane.xlu0 %6570
        %v6572 = vadd.f32 %v6498, %v6499
        %6573 = vadd.xlane.f32.xlu0 %v6572
        %v6574 = vpop.xlane.xlu0 %6573
        %v6575 = vadd.f32 %v6500, %v6501
        %6576 = vadd.xlane.f32.xlu0 %v6575
        %v6577 = vpop.xlane.xlu0 %6576
        %v6578 = vadd.f32 %v6502, %v6503
        %6579 = vadd.xlane.f32.xlu0 %v6578
        %v6580 = vpop.xlane.xlu0 %6579
        %v6581 = vadd.f32 %v6504, %v6505
        %6582 = vadd.xlane.f32.xlu0 %v6581
        %v6583 = vpop.xlane.xlu0 %6582
        %v6584 = vadd.f32 %v6506, %v6507
        %6585 = vadd.xlane.f32.xlu0 %v6584
        %v6586 = vpop.xlane.xlu0 %6585
        %v6587 = vadd.f32 %v6508, %v6509
        %6588 = vadd.xlane.f32.xlu0 %v6587
        %v6589 = vpop.xlane.xlu0 %6588
        %v6590 = vadd.f32 %v6510, %v6511
        %6591 = vadd.xlane.f32.xlu0 %v6590
        %v6592 = vpop.xlane.xlu0 %6591
        %v6593 = vadd.f32 %v6512, %v6513
        %6594 = vadd.xlane.f32.xlu0 %v6593
        %v6595 = vpop.xlane.xlu0 %6594
        %v6596 = vadd.f32 %v6514, %v6515
        %6597 = vadd.xlane.f32.xlu0 %v6596
        %v6598 = vpop.xlane.xlu0 %6597
        %v6599 = vadd.f32 %v6516, %v6517
        %6600 = vadd.xlane.f32.xlu0 %v6599
        %v6601 = vpop.xlane.xlu0 %6600
        %v6602 = vadd.f32 %v6518, %v6519
        %6603 = vadd.xlane.f32.xlu0 %v6602
        %v6604 = vpop.xlane.xlu0 %6603
        %v6605 = vadd.f32 %v6520, %v6521
        %6606 = vadd.xlane.f32.xlu0 %v6605
        %v6607 = vpop.xlane.xlu0 %6606
        %v6608 = vadd.f32 %v6522, %v6523
        %6609 = vadd.xlane.f32.xlu0 %v6608
        %v6610 = vpop.xlane.xlu0 %6609
        %v6611 = vadd.f32 %v6524, %v6525
        %6612 = vadd.xlane.f32.xlu0 %v6611
        %v6613 = vpop.xlane.xlu0 %6612
        %v6614 = vadd.f32 %v6526, %v6527
        %6615 = vadd.xlane.f32.xlu0 %v6614
        %v6616 = vpop.xlane.xlu0 %6615
        %v6617 = vadd.f32 %v6528, %v6529
        %6618 = vadd.xlane.f32.xlu0 %v6617
        %v6619 = vpop.xlane.xlu0 %6618
        %v6620 = vadd.f32 %v6530, %v6531
        %6621 = vadd.xlane.f32.xlu0 %v6620
        %v6622 = vpop.xlane.xlu0 %6621
        %v6623 = vadd.f32 %v6532, %v6533
        %6624 = vadd.xlane.f32.xlu0 %v6623
        %v6625 = vpop.xlane.xlu0 %6624
        %v6626 = vadd.f32 %v6534, %v6535
        %6627 = vadd.xlane.f32.xlu0 %v6626
        %v6628 = vpop.xlane.xlu0 %6627
        %v6629 = vadd.f32 %v6536, %v6537
        %6630 = vadd.xlane.f32.xlu0 %v6629
        %v6631 = vpop.xlane.xlu0 %6630
        %v6632 = vadd.f32 %v6538, %v6539
        %6633 = vadd.xlane.f32.xlu0 %v6632
        %v6634 = vpop.xlane.xlu0 %6633
        %v6635 = vadd.f32 %v6540, %v6541
        %6636 = vadd.xlane.f32.xlu0 %v6635
        %v6637 = vpop.xlane.xlu0 %6636
        %v6638 = vadd.f32 %v6544, 0.0
        %v6639 = vadd.f32 %v6547, 0.0
        %v6640 = vadd.f32 %v6550, 0.0
        %v6641 = vadd.f32 %v6553, 0.0
        %v6642 = vadd.f32 %v6556, 0.0
        %v6643 = vadd.f32 %v6559, 0.0
        %v6644 = vadd.f32 %v6562, 0.0
        %v6645 = vadd.f32 %v6565, 0.0
        %v6646 = vadd.f32 %v6568, 0.0
        %v6647 = vadd.f32 %v6571, 0.0
        %v6648 = vadd.f32 %v6574, 0.0
        %v6649 = vadd.f32 %v6577, 0.0
        %v6650 = vadd.f32 %v6580, 0.0
        %v6651 = vadd.f32 %v6583, 0.0
        %v6652 = vadd.f32 %v6586, 0.0
        %v6653 = vadd.f32 %v6589, 0.0
        %v6654 = vadd.f32 %v6592, 0.0
        %v6655 = vadd.f32 %v6595, 0.0
        %v6656 = vadd.f32 %v6598, 0.0
        %v6657 = vadd.f32 %v6601, 0.0
        %v6658 = vadd.f32 %v6604, 0.0
        %v6659 = vadd.f32 %v6607, 0.0
        %v6660 = vadd.f32 %v6610, 0.0
        %v6661 = vadd.f32 %v6613, 0.0
        %v6662 = vadd.f32 %v6616, 0.0
        %v6663 = vadd.f32 %v6619, 0.0
        %v6664 = vadd.f32 %v6622, 0.0
        %v6665 = vadd.f32 %v6625, 0.0
        %v6666 = vadd.f32 %v6628, 0.0
        %v6667 = vadd.f32 %v6631, 0.0
        %v6668 = vadd.f32 %v6634, 0.0
        %v6669 = vadd.f32 %v6637, 0.0
        %6670 = vrot.lane.b32.xlu0 %v5652, 124
        %v6671 = vpop.permute.xlu0 %6670
        %6672 = vrot.lane.b32.xlu0 %v5653, 124
        %v6673 = vpop.permute.xlu0 %6672
        %6674 = vrot.lane.b32.xlu0 %v5654, 124
        %v6675 = vpop.permute.xlu0 %6674
        %6676 = vrot.lane.b32.xlu0 %v5655, 124
        %v6677 = vpop.permute.xlu0 %6676
        %6678 = vrot.lane.b32.xlu0 %v5656, 124
        %v6679 = vpop.permute.xlu0 %6678
        %6680 = vrot.lane.b32.xlu0 %v5657, 124
        %v6681 = vpop.permute.xlu0 %6680
        %6682 = vrot.lane.b32.xlu0 %v5658, 124
        %v6683 = vpop.permute.xlu0 %6682
        %6684 = vrot.lane.b32.xlu0 %v5659, 124
        %v6685 = vpop.permute.xlu0 %6684
        %6686 = vrot.lane.b32.xlu0 %v5660, 124
        %v6687 = vpop.permute.xlu0 %6686
        %6688 = vrot.lane.b32.xlu0 %v5661, 124
        %v6689 = vpop.permute.xlu0 %6688
        %6690 = vrot.lane.b32.xlu0 %v5662, 124
        %v6691 = vpop.permute.xlu0 %6690
        %6692 = vrot.lane.b32.xlu0 %v5663, 124
        %v6693 = vpop.permute.xlu0 %6692
        %6694 = vrot.lane.b32.xlu0 %v5664, 124
        %v6695 = vpop.permute.xlu0 %6694
        %6696 = vrot.lane.b32.xlu0 %v5665, 124
        %v6697 = vpop.permute.xlu0 %6696
        %6698 = vrot.lane.b32.xlu0 %v5666, 124
        %v6699 = vpop.permute.xlu0 %6698
        %6700 = vrot.lane.b32.xlu0 %v5667, 124
        %v6701 = vpop.permute.xlu0 %6700
        %6702 = vrot.lane.b32.xlu0 %v5684, 124
        %v6703 = vpop.permute.xlu0 %6702
        %6704 = vrot.lane.b32.xlu0 %v5685, 124
        %v6705 = vpop.permute.xlu0 %6704
        %6706 = vrot.lane.b32.xlu0 %v5686, 124
        %v6707 = vpop.permute.xlu0 %6706
        %6708 = vrot.lane.b32.xlu0 %v5687, 124
        %v6709 = vpop.permute.xlu0 %6708
        %6710 = vrot.lane.b32.xlu0 %v5688, 124
        %v6711 = vpop.permute.xlu0 %6710
        %6712 = vrot.lane.b32.xlu0 %v5689, 124
        %v6713 = vpop.permute.xlu0 %6712
        %6714 = vrot.lane.b32.xlu0 %v5690, 124
        %v6715 = vpop.permute.xlu0 %6714
        %6716 = vrot.lane.b32.xlu0 %v5691, 124
        %v6717 = vpop.permute.xlu0 %6716
        %6718 = vrot.lane.b32.xlu0 %v5692, 124
        %v6719 = vpop.permute.xlu0 %6718
        %6720 = vrot.lane.b32.xlu0 %v5693, 124
        %v6721 = vpop.permute.xlu0 %6720
        %6722 = vrot.lane.b32.xlu0 %v5694, 124
        %v6723 = vpop.permute.xlu0 %6722
        %6724 = vrot.lane.b32.xlu0 %v5695, 124
        %v6725 = vpop.permute.xlu0 %6724
        %6726 = vrot.lane.b32.xlu0 %v5696, 124
        %v6727 = vpop.permute.xlu0 %6726
        %6728 = vrot.lane.b32.xlu0 %v5697, 124
        %v6729 = vpop.permute.xlu0 %6728
        %6730 = vrot.lane.b32.xlu0 %v5698, 124
        %v6731 = vpop.permute.xlu0 %6730
        %6732 = vrot.lane.b32.xlu0 %v5699, 124
        %v6733 = vpop.permute.xlu0 %6732
        %v6734 = vrot.slane %v5602, 4
        %v6735 = vrot.slane %v5604, 4
        %v6736 = vsel %vm1329, %v6671, 0
        %v6738 = vsel %vm1329, %v6673, 0
        %v6740 = vsel %vm1329, %v6675, 0
        %v6742 = vsel %vm1329, %v6677, 0
        %v6744 = vsel %vm1329, %v6679, 0
        %v6746 = vsel %vm1329, %v6681, 0
        %v6748 = vsel %vm1329, %v6683, 0
        %v6750 = vsel %vm1329, %v6685, 0
        %v6752 = vsel %vm1329, %v6687, 0
        %v6754 = vsel %vm1329, %v6689, 0
        %v6756 = vsel %vm1329, %v6691, 0
        %v6758 = vsel %vm1329, %v6693, 0
        %v6760 = vsel %vm1329, %v6695, 0
        %v6762 = vsel %vm1329, %v6697, 0
        %v6764 = vsel %vm1329, %v6699, 0
        %v6766 = vsel %vm1329, %v6701, 0
        %v6768 = vsel %vm1329, %v6703, 0
        %v6770 = vsel %vm1329, %v6705, 0
        %v6772 = vsel %vm1329, %v6707, 0
        %v6774 = vsel %vm1329, %v6709, 0
        %v6776 = vsel %vm1329, %v6711, 0
        %v6778 = vsel %vm1329, %v6713, 0
        %v6780 = vsel %vm1329, %v6715, 0
        %v6782 = vsel %vm1329, %v6717, 0
        %v6784 = vsel %vm1329, %v6719, 0
        %v6786 = vsel %vm1329, %v6721, 0
        %v6788 = vsel %vm1329, %v6723, 0
        %v6790 = vsel %vm1329, %v6725, 0
        %v6792 = vsel %vm1329, %v6727, 0
        %v6794 = vsel %vm1329, %v6729, 0
        %v6796 = vsel %vm1329, %v6731, 0
        %v6798 = vsel %vm1329, %v6733, 0
        %v6800 = vsel %vm1426, %v6734, 0
        %v6802 = vsel %vm1426, %v6735, 0
        %6804 = vmatprep.subr.mxu0 %v6802
        %6805 = vmatpush1.msra.mxu0 %v6800
        %6806 = vmatprep.subr.mxu0 0.0
        %6807 = vmatpush1.msra.mxu0 0.0
        %6808 = vmatprep.subr.mxu0 0.0
        %6809 = vmatpush1.msra.mxu0 0.0
        %6810 = vmatprep.subr.mxu0 0.0
        %6811 = vmatpush1.msra.mxu0 0.0
        %6812 = vmatprep.subr.mxu0 0.0
        %6813 = vmatpush1.msra.mxu0 0.0
        %6814 = vmatprep.subr.mxu0 0.0
        %6815 = vmatpush1.msra.mxu0 0.0
        %6816 = vmatprep.subr.mxu0 0.0
        %6817 = vmatpush1.msra.mxu0 0.0
        %6818 = vmatprep.subr.mxu0 0.0
        %6819 = vmatpush1.msra.mxu0 0.0
        %6820 = vmatprep.subr.mxu0 0.0
        %6821 = vmatpush1.msra.mxu0 0.0
        %6822 = vmatprep.subr.mxu0 0.0
        %6823 = vmatpush1.msra.mxu0 0.0
        %6824 = vmatprep.subr.mxu0 0.0
        %6825 = vmatpush1.msra.mxu0 0.0
        %6826 = vmatprep.subr.mxu0 0.0
        %6827 = vmatpush1.msra.mxu0 0.0
        %6828 = vmatprep.subr.mxu0 0.0
        %6829 = vmatpush1.msra.mxu0 0.0
        %6830 = vmatprep.subr.mxu0 0.0
        %6831 = vmatpush1.msra.mxu0 0.0
        %6832 = vmatprep.subr.mxu0 0.0
        %6833 = vmatpush1.msra.mxu0 0.0
        %6834 = vmatprep.subr.mxu0 0.0
        %6835 = vmatpush1.msra.mxu0 0.0
        %6836 = vmatprep.subr.mxu0 0.0
        %6837 = vmatpush1.msra.mxu0 0.0
        %6838 = vmatprep.subr.mxu0 0.0
        %6839 = vmatpush1.msra.mxu0 0.0
        %6840 = vmatprep.subr.mxu0 0.0
        %6841 = vmatpush1.msra.mxu0 0.0
        %6842 = vmatprep.subr.mxu0 0.0
        %6843 = vmatpush1.msra.mxu0 0.0
        %6844 = vmatprep.subr.mxu0 0.0
        %6845 = vmatpush1.msra.mxu0 0.0
        %6846 = vmatprep.subr.mxu0 0.0
        %6847 = vmatpush1.msra.mxu0 0.0
        %6848 = vmatprep.subr.mxu0 0.0
        %6849 = vmatpush1.msra.mxu0 0.0
        %6850 = vmatprep.subr.mxu0 0.0
        %6851 = vmatpush1.msra.mxu0 0.0
        %6852 = vmatprep.subr.mxu0 0.0
        %6853 = vmatpush1.msra.mxu0 0.0
        %6854 = vmatprep.subr.mxu0 0.0
        %6855 = vmatpush1.msra.mxu0 0.0
        %6856 = vmatprep.subr.mxu0 0.0
        %6857 = vmatpush1.msra.mxu0 0.0
        %6858 = vmatprep.subr.mxu0 0.0
        %6859 = vmatpush1.msra.mxu0 0.0
        %6860 = vmatprep.subr.mxu0 0.0
        %6861 = vmatpush1.msra.mxu0 0.0
        %6862 = vmatprep.subr.mxu0 0.0
        %6863 = vmatpush1.msra.mxu0 0.0
        %6864 = vmatprep.subr.mxu0 0.0
        %6865 = vmatpush1.msra.mxu0 0.0
        %6866 = vmatprep.subr.mxu0 0.0
        %6867 = vmatpush1.msra.mxu0 0.0
        %6868 = vmatprep.mubr.f32.mxu0 0.0
        %6869 = vmatmul.mubr.f32.gmra.mrb[0].mxu0 %v6736
        %v6870 = vpop.f32.mrb[0].mxu0
        %v6871 = vadd.f32 0.0, %v6870
        %v6872 = vpop.f32.mrb[0].mxu0
        %v6873 = vadd.f32 0.0, %v6872
        %6874 = vmatprep.mubr.f32.mxu0 0.0
        %6875 = vmatmul.mubr.f32.gmra.mrb[0].mxu0 %v6738
        %v6876 = vpop.f32.mrb[0].mxu0
        %v6877 = vadd.f32 0.0, %v6876
        %v6878 = vpop.f32.mrb[0].mxu0
        %v6879 = vadd.f32 0.0, %v6878
        %6880 = vmatprep.mubr.f32.mxu0 0.0
        %6881 = vmatmul.mubr.f32.gmra.mrb[0].mxu0 %v6740
        %v6882 = vpop.f32.mrb[0].mxu0
        %v6883 = vadd.f32 0.0, %v6882
        %v6884 = vpop.f32.mrb[0].mxu0
        %v6885 = vadd.f32 0.0, %v6884
        %6886 = vmatprep.mubr.f32.mxu0 0.0
        %6887 = vmatmul.mubr.f32.gmra.mrb[0].mxu0 %v6742
        %v6888 = vpop.f32.mrb[0].mxu0
        %v6889 = vadd.f32 0.0, %v6888
        %v6890 = vpop.f32.mrb[0].mxu0
        %v6891 = vadd.f32 0.0, %v6890
        %6892 = vmatprep.mubr.f32.mxu0 0.0
        %6893 = vmatmul.mubr.f32.gmra.mrb[0].mxu0 %v6744
        %v6894 = vpop.f32.mrb[0].mxu0
        %v6895 = vadd.f32 0.0, %v6894
        %v6896 = vpop.f32.mrb[0].mxu0
        %v6897 = vadd.f32 0.0, %v6896
        %6898 = vmatprep.mubr.f32.mxu0 0.0
        %6899 = vmatmul.mubr.f32.gmra.mrb[0].mxu0 %v6746
        %v6900 = vpop.f32.mrb[0].mxu0
        %v6901 = vadd.f32 0.0, %v6900
        %v6902 = vpop.f32.mrb[0].mxu0
        %v6903 = vadd.f32 0.0, %v6902
        %6904 = vmatprep.mubr.f32.mxu0 0.0
        %6905 = vmatmul.mubr.f32.gmra.mrb[0].mxu0 %v6748
        %v6906 = vpop.f32.mrb[0].mxu0
        %v6907 = vadd.f32 0.0, %v6906
        %v6908 = vpop.f32.mrb[0].mxu0
        %v6909 = vadd.f32 0.0, %v6908
        %6910 = vmatprep.mubr.f32.mxu0 0.0
        %6911 = vmatmul.mubr.f32.gmra.mrb[0].mxu0 %v6750
        %v6912 = vpop.f32.mrb[0].mxu0
        %v6913 = vadd.f32 0.0, %v6912
        %v6914 = vpop.f32.mrb[0].mxu0
        %v6915 = vadd.f32 0.0, %v6914
        %6916 = vmatprep.mubr.f32.mxu0 0.0
        %6917 = vmatmul.mubr.f32.gmra.mrb[0].mxu0 %v6752
        %v6918 = vpop.f32.mrb[0].mxu0
        %v6919 = vadd.f32 0.0, %v6918
        %v6920 = vpop.f32.mrb[0].mxu0
        %v6921 = vadd.f32 0.0, %v6920
        %6922 = vmatprep.mubr.f32.mxu0 0.0
        %6923 = vmatmul.mubr.f32.gmra.mrb[0].mxu0 %v6754
        %v6924 = vpop.f32.mrb[0].mxu0
        %v6925 = vadd.f32 0.0, %v6924
        %v6926 = vpop.f32.mrb[0].mxu0
        %v6927 = vadd.f32 0.0, %v6926
        %6928 = vmatprep.mubr.f32.mxu0 0.0
        %6929 = vmatmul.mubr.f32.gmra.mrb[0].mxu0 %v6756
        %v6930 = vpop.f32.mrb[0].mxu0
        %v6931 = vadd.f32 0.0, %v6930
        %v6932 = vpop.f32.mrb[0].mxu0
        %v6933 = vadd.f32 0.0, %v6932
        %6934 = vmatprep.mubr.f32.mxu0 0.0
        %6935 = vmatmul.mubr.f32.gmra.mrb[0].mxu0 %v6758
        %v6936 = vpop.f32.mrb[0].mxu0
        %v6937 = vadd.f32 0.0, %v6936
        %v6938 = vpop.f32.mrb[0].mxu0
        %v6939 = vadd.f32 0.0, %v6938
        %6940 = vmatprep.mubr.f32.mxu0 0.0
        %6941 = vmatmul.mubr.f32.gmra.mrb[0].mxu0 %v6760
        %v6942 = vpop.f32.mrb[0].mxu0
        %v6943 = vadd.f32 0.0, %v6942
        %v6944 = vpop.f32.mrb[0].mxu0
        %v6945 = vadd.f32 0.0, %v6944
        %6946 = vmatprep.mubr.f32.mxu0 0.0
        %6947 = vmatmul.mubr.f32.gmra.mrb[0].mxu0 %v6762
        %v6948 = vpop.f32.mrb[0].mxu0
        %v6949 = vadd.f32 0.0, %v6948
        %v6950 = vpop.f32.mrb[0].mxu0
        %v6951 = vadd.f32 0.0, %v6950
        %6952 = vmatprep.mubr.f32.mxu0 0.0
        %6953 = vmatmul.mubr.f32.gmra.mrb[0].mxu0 %v6764
        %v6954 = vpop.f32.mrb[0].mxu0
        %v6955 = vadd.f32 0.0, %v6954
        %v6956 = vpop.f32.mrb[0].mxu0
        %v6957 = vadd.f32 0.0, %v6956
        %6958 = vmatprep.mubr.f32.mxu0 0.0
        %6959 = vmatmul.mubr.f32.gmra.mrb[0].mxu0 %v6766
        %v6960 = vpop.f32.mrb[0].mxu0
        %v6961 = vadd.f32 0.0, %v6960
        %v6962 = vpop.f32.mrb[0].mxu0
        %v6963 = vadd.f32 0.0, %v6962
        %6964 = vmatprep.mubr.f32.mxu0 0.0
        %6965 = vmatmul.mubr.f32.gmra.mrb[0].mxu0 %v6768
        %v6966 = vpop.f32.mrb[0].mxu0
        %v6967 = vadd.f32 0.0, %v6966
        %v6968 = vpop.f32.mrb[0].mxu0
        %v6969 = vadd.f32 0.0, %v6968
        %6970 = vmatprep.mubr.f32.mxu0 0.0
        %6971 = vmatmul.mubr.f32.gmra.mrb[0].mxu0 %v6770
        %v6972 = vpop.f32.mrb[0].mxu0
        %v6973 = vadd.f32 0.0, %v6972
        %v6974 = vpop.f32.mrb[0].mxu0
        %v6975 = vadd.f32 0.0, %v6974
        %6976 = vmatprep.mubr.f32.mxu0 0.0
        %6977 = vmatmul.mubr.f32.gmra.mrb[0].mxu0 %v6772
        %v6978 = vpop.f32.mrb[0].mxu0
        %v6979 = vadd.f32 0.0, %v6978
        %v6980 = vpop.f32.mrb[0].mxu0
        %v6981 = vadd.f32 0.0, %v6980
        %6982 = vmatprep.mubr.f32.mxu0 0.0
        %6983 = vmatmul.mubr.f32.gmra.mrb[0].mxu0 %v6774
        %v6984 = vpop.f32.mrb[0].mxu0
        %v6985 = vadd.f32 0.0, %v6984
        %v6986 = vpop.f32.mrb[0].mxu0
        %v6987 = vadd.f32 0.0, %v6986
        %6988 = vmatprep.mubr.f32.mxu0 0.0
        %6989 = vmatmul.mubr.f32.gmra.mrb[0].mxu0 %v6776
        %v6990 = vpop.f32.mrb[0].mxu0
        %v6991 = vadd.f32 0.0, %v6990
        %v6992 = vpop.f32.mrb[0].mxu0
        %v6993 = vadd.f32 0.0, %v6992
        %6994 = vmatprep.mubr.f32.mxu0 0.0
        %6995 = vmatmul.mubr.f32.gmra.mrb[0].mxu0 %v6778
        %v6996 = vpop.f32.mrb[0].mxu0
        %v6997 = vadd.f32 0.0, %v6996
        %v6998 = vpop.f32.mrb[0].mxu0
        %v6999 = vadd.f32 0.0, %v6998
        %7000 = vmatprep.mubr.f32.mxu0 0.0
        %7001 = vmatmul.mubr.f32.gmra.mrb[0].mxu0 %v6780
        %v7002 = vpop.f32.mrb[0].mxu0
        %v7003 = vadd.f32 0.0, %v7002
        %v7004 = vpop.f32.mrb[0].mxu0
        %v7005 = vadd.f32 0.0, %v7004
        %7006 = vmatprep.mubr.f32.mxu0 0.0
        %7007 = vmatmul.mubr.f32.gmra.mrb[0].mxu0 %v6782
        %v7008 = vpop.f32.mrb[0].mxu0
        %v7009 = vadd.f32 0.0, %v7008
        %v7010 = vpop.f32.mrb[0].mxu0
        %v7011 = vadd.f32 0.0, %v7010
        %7012 = vmatprep.mubr.f32.mxu0 0.0
        %7013 = vmatmul.mubr.f32.gmra.mrb[0].mxu0 %v6784
        %v7014 = vpop.f32.mrb[0].mxu0
        %v7015 = vadd.f32 0.0, %v7014
        %v7016 = vpop.f32.mrb[0].mxu0
        %v7017 = vadd.f32 0.0, %v7016
        %7018 = vmatprep.mubr.f32.mxu0 0.0
        %7019 = vmatmul.mubr.f32.gmra.mrb[0].mxu0 %v6786
        %v7020 = vpop.f32.mrb[0].mxu0
        %v7021 = vadd.f32 0.0, %v7020
        %v7022 = vpop.f32.mrb[0].mxu0
        %v7023 = vadd.f32 0.0, %v7022
        %7024 = vmatprep.mubr.f32.mxu0 0.0
        %7025 = vmatmul.mubr.f32.gmra.mrb[0].mxu0 %v6788
        %v7026 = vpop.f32.mrb[0].mxu0
        %v7027 = vadd.f32 0.0, %v7026
        %v7028 = vpop.f32.mrb[0].mxu0
        %v7029 = vadd.f32 0.0, %v7028
        %7030 = vmatprep.mubr.f32.mxu0 0.0
        %7031 = vmatmul.mubr.f32.gmra.mrb[0].mxu0 %v6790
        %v7032 = vpop.f32.mrb[0].mxu0
        %v7033 = vadd.f32 0.0, %v7032
        %v7034 = vpop.f32.mrb[0].mxu0
        %v7035 = vadd.f32 0.0, %v7034
        %7036 = vmatprep.mubr.f32.mxu0 0.0
        %7037 = vmatmul.mubr.f32.gmra.mrb[0].mxu0 %v6792
        %v7038 = vpop.f32.mrb[0].mxu0
        %v7039 = vadd.f32 0.0, %v7038
        %v7040 = vpop.f32.mrb[0].mxu0
        %v7041 = vadd.f32 0.0, %v7040
        %7042 = vmatprep.mubr.f32.mxu0 0.0
        %7043 = vmatmul.mubr.f32.gmra.mrb[0].mxu0 %v6794
        %v7044 = vpop.f32.mrb[0].mxu0
        %v7045 = vadd.f32 0.0, %v7044
        %v7046 = vpop.f32.mrb[0].mxu0
        %v7047 = vadd.f32 0.0, %v7046
        %7048 = vmatprep.mubr.f32.mxu0 0.0
        %7049 = vmatmul.mubr.f32.gmra.mrb[0].mxu0 %v6796
        %v7050 = vpop.f32.mrb[0].mxu0
        %v7051 = vadd.f32 0.0, %v7050
        %v7052 = vpop.f32.mrb[0].mxu0
        %v7053 = vadd.f32 0.0, %v7052
        %7054 = vmatprep.mubr.f32.mxu0 0.0
        %7055 = vmatmul.mubr.f32.gmra.mrb[0].mxu0 %v6798
        %v7056 = vpop.f32.mrb[0].mxu0
        %v7057 = vadd.f32 0.0, %v7056
        %v7058 = vpop.f32.mrb[0].mxu0
        %v7059 = vadd.f32 0.0, %v7058
        %7060 = vdwg.mxu0
        %v7061 = vmax.f32 %v6871, %v6883
        %v7062 = vmax.f32 %v6877, %v6889
        %v7063 = vmax.f32 %v7061, %v6895
        %v7064 = vmax.f32 %v7062, %v6901
        %v7065 = vmax.f32 %v7063, %v6907
        %v7066 = vmax.f32 %v7064, %v6913
        %v7067 = vmax.f32 %v7065, %v6919
        %v7068 = vmax.f32 %v7066, %v6925
        %v7069 = vmax.f32 %v7067, %v6931
        %v7070 = vmax.f32 %v7068, %v6937
        %v7071 = vmax.f32 %v7069, %v6943
        %v7072 = vmax.f32 %v7070, %v6949
        %v7073 = vmax.f32 %v7071, %v6955
        %v7074 = vmax.f32 %v7072, %v6961
        %v7075 = vmax.f32 %v7073, %v6967
        %v7076 = vmax.f32 %v7074, %v6973
        %v7077 = vmax.f32 %v7075, %v6979
        %v7078 = vmax.f32 %v7076, %v6985
        %v7079 = vmax.f32 %v7077, %v6991
        %v7080 = vmax.f32 %v7078, %v6997
        %v7081 = vmax.f32 %v7079, %v7003
        %v7082 = vmax.f32 %v7080, %v7009
        %v7083 = vmax.f32 %v7081, %v7015
        %v7084 = vmax.f32 %v7082, %v7021
        %v7085 = vmax.f32 %v7083, %v7027
        %v7086 = vmax.f32 %v7084, %v7033
        %v7087 = vmax.f32 %v7085, %v7039
        %v7088 = vmax.f32 %v7086, %v7045
        %v7089 = vmax.f32 %v7087, %v7051
        %v7090 = vmax.f32 %v7088, %v7057
        %v7091 = vmax.f32 %v7089, %v7090
        %v7092 = vrot.slane %v7091, 4
        %v7093 = vmax.f32 %v7091, %v7092
        %v7094 = vrot.slane %v7093, 2
        %v7095 = vmax.f32 %v7093, %v7094
        %v7096 = vrot.slane %v7095, 1
        %v7097 = vmax.f32 %v7095, %v7096
        %v7098 = vmax.f32 %v6873, %v6885
        %v7099 = vmax.f32 %v6879, %v6891
        %v7100 = vmax.f32 %v7098, %v6897
        %v7101 = vmax.f32 %v7099, %v6903
        %v7102 = vmax.f32 %v7100, %v6909
        %v7103 = vmax.f32 %v7101, %v6915
        %v7104 = vmax.f32 %v7102, %v6921
        %v7105 = vmax.f32 %v7103, %v6927
        %v7106 = vmax.f32 %v7104, %v6933
        %v7107 = vmax.f32 %v7105, %v6939
        %v7108 = vmax.f32 %v7106, %v6945
        %v7109 = vmax.f32 %v7107, %v6951
        %v7110 = vmax.f32 %v7108, %v6957
        %v7111 = vmax.f32 %v7109, %v6963
        %v7112 = vmax.f32 %v7110, %v6969
        %v7113 = vmax.f32 %v7111, %v6975
        %v7114 = vmax.f32 %v7112, %v6981
        %v7115 = vmax.f32 %v7113, %v6987
        %v7116 = vmax.f32 %v7114, %v6993
        %v7117 = vmax.f32 %v7115, %v6999
        %v7118 = vmax.f32 %v7116, %v7005
        %v7119 = vmax.f32 %v7117, %v7011
        %v7120 = vmax.f32 %v7118, %v7017
        %v7121 = vmax.f32 %v7119, %v7023
        %v7122 = vmax.f32 %v7120, %v7029
        %v7123 = vmax.f32 %v7121, %v7035
        %v7124 = vmax.f32 %v7122, %v7041
        %v7125 = vmax.f32 %v7123, %v7047
        %v7126 = vmax.f32 %v7124, %v7053
        %v7127 = vmax.f32 %v7125, %v7059
        %v7128 = vmax.f32 %v7126, %v7127
        %v7129 = vrot.slane %v7128, 4
        %v7130 = vmax.f32 %v7128, %v7129
        %v7131 = vrot.slane %v7130, 2
        %v7132 = vmax.f32 %v7130, %v7131
        %v7133 = vrot.slane %v7132, 1
        %v7134 = vmax.f32 %v7132, %v7133
        %v7135 = vsub.f32 %v6871, %v7097
        %v7136 = vsub.f32 %v6873, %v7134
        %v7137 = vsub.f32 %v6877, %v7097
        %v7138 = vsub.f32 %v6879, %v7134
        %v7139 = vsub.f32 %v6883, %v7097
        %v7140 = vsub.f32 %v6885, %v7134
        %v7141 = vsub.f32 %v6889, %v7097
        %v7142 = vsub.f32 %v6891, %v7134
        %v7143 = vsub.f32 %v6895, %v7097
        %v7144 = vsub.f32 %v6897, %v7134
        %v7145 = vsub.f32 %v6901, %v7097
        %v7146 = vsub.f32 %v6903, %v7134
        %v7147 = vsub.f32 %v6907, %v7097
        %v7148 = vsub.f32 %v6909, %v7134
        %v7149 = vsub.f32 %v6913, %v7097
        %v7150 = vsub.f32 %v6915, %v7134
        %v7151 = vsub.f32 %v6919, %v7097
        %v7152 = vsub.f32 %v6921, %v7134
        %v7153 = vsub.f32 %v6925, %v7097
        %v7154 = vsub.f32 %v6927, %v7134
        %v7155 = vsub.f32 %v6931, %v7097
        %v7156 = vsub.f32 %v6933, %v7134
        %v7157 = vsub.f32 %v6937, %v7097
        %v7158 = vsub.f32 %v6939, %v7134
        %v7159 = vsub.f32 %v6943, %v7097
        %v7160 = vsub.f32 %v6945, %v7134
        %v7161 = vsub.f32 %v6949, %v7097
        %v7162 = vsub.f32 %v6951, %v7134
        %v7163 = vsub.f32 %v6955, %v7097
        %v7164 = vsub.f32 %v6957, %v7134
        %v7165 = vsub.f32 %v6961, %v7097
        %v7166 = vsub.f32 %v6963, %v7134
        %v7167 = vsub.f32 %v6967, %v7097
        %v7168 = vsub.f32 %v6969, %v7134
        %v7169 = vsub.f32 %v6973, %v7097
        %v7170 = vsub.f32 %v6975, %v7134
        %v7171 = vsub.f32 %v6979, %v7097
        %v7172 = vsub.f32 %v6981, %v7134
        %v7173 = vsub.f32 %v6985, %v7097
        %v7174 = vsub.f32 %v6987, %v7134
        %v7175 = vsub.f32 %v6991, %v7097
        %v7176 = vsub.f32 %v6993, %v7134
        %v7177 = vsub.f32 %v6997, %v7097
        %v7178 = vsub.f32 %v6999, %v7134
        %v7179 = vsub.f32 %v7003, %v7097
        %v7180 = vsub.f32 %v7005, %v7134
        %v7181 = vsub.f32 %v7009, %v7097
        %v7182 = vsub.f32 %v7011, %v7134
        %v7183 = vsub.f32 %v7015, %v7097
        %v7184 = vsub.f32 %v7017, %v7134
        %v7185 = vsub.f32 %v7021, %v7097
        %v7186 = vsub.f32 %v7023, %v7134
        %v7187 = vsub.f32 %v7027, %v7097
        %v7188 = vsub.f32 %v7029, %v7134
        %v7189 = vsub.f32 %v7033, %v7097
        %v7190 = vsub.f32 %v7035, %v7134
        %v7191 = vsub.f32 %v7039, %v7097
        %v7192 = vsub.f32 %v7041, %v7134
        %v7193 = vsub.f32 %v7045, %v7097
        %v7194 = vsub.f32 %v7047, %v7134
        %v7195 = vsub.f32 %v7051, %v7097
        %v7196 = vsub.f32 %v7053, %v7134
        %v7197 = vsub.f32 %v7057, %v7097
        %v7198 = vsub.f32 %v7059, %v7134
        %v7199 = vmul.f32 %v7135, 1.442695
        %v7200 = vpow.pop %v7199
        %v7201 = vmul.f32 %v7136, 1.442695
        %v7202 = vpow.pop %v7201
        %v7203 = vmul.f32 %v7137, 1.442695
        %v7204 = vpow.pop %v7203
        %v7205 = vmul.f32 %v7138, 1.442695
        %v7206 = vpow.pop %v7205
        %v7207 = vmul.f32 %v7139, 1.442695
        %v7208 = vpow.pop %v7207
        %v7209 = vmul.f32 %v7140, 1.442695
        %v7210 = vpow.pop %v7209
        %v7211 = vmul.f32 %v7141, 1.442695
        %v7212 = vpow.pop %v7211
        %v7213 = vmul.f32 %v7142, 1.442695
        %v7214 = vpow.pop %v7213
        %v7215 = vmul.f32 %v7143, 1.442695
        %v7216 = vpow.pop %v7215
        %v7217 = vmul.f32 %v7144, 1.442695
        %v7218 = vpow.pop %v7217
        %v7219 = vmul.f32 %v7145, 1.442695
        %v7220 = vpow.pop %v7219
        %v7221 = vmul.f32 %v7146, 1.442695
        %v7222 = vpow.pop %v7221
        %v7223 = vmul.f32 %v7147, 1.442695
        %v7224 = vpow.pop %v7223
        %v7225 = vmul.f32 %v7148, 1.442695
        %v7226 = vpow.pop %v7225
        %v7227 = vmul.f32 %v7149, 1.442695
        %v7228 = vpow.pop %v7227
        %v7229 = vmul.f32 %v7150, 1.442695
        %v7230 = vpow.pop %v7229
        %v7231 = vmul.f32 %v7151, 1.442695
        %v7232 = vpow.pop %v7231
        %v7233 = vmul.f32 %v7152, 1.442695
        %v7234 = vpow.pop %v7233
        %v7235 = vmul.f32 %v7153, 1.442695
        %v7236 = vpow.pop %v7235
        %v7237 = vmul.f32 %v7154, 1.442695
        %v7238 = vpow.pop %v7237
        %v7239 = vmul.f32 %v7155, 1.442695
        %v7240 = vpow.pop %v7239
        %v7241 = vmul.f32 %v7156, 1.442695
        %v7242 = vpow.pop %v7241
        %v7243 = vmul.f32 %v7157, 1.442695
        %v7244 = vpow.pop %v7243
        %v7245 = vmul.f32 %v7158, 1.442695
        %v7246 = vpow.pop %v7245
        %v7247 = vmul.f32 %v7159, 1.442695
        %v7248 = vpow.pop %v7247
        %v7249 = vmul.f32 %v7160, 1.442695
        %v7250 = vpow.pop %v7249
        %v7251 = vmul.f32 %v7161, 1.442695
        %v7252 = vpow.pop %v7251
        %v7253 = vmul.f32 %v7162, 1.442695
        %v7254 = vpow.pop %v7253
        %v7255 = vmul.f32 %v7163, 1.442695
        %v7256 = vpow.pop %v7255
        %v7257 = vmul.f32 %v7164, 1.442695
        %v7258 = vpow.pop %v7257
        %v7259 = vmul.f32 %v7165, 1.442695
        %v7260 = vpow.pop %v7259
        %v7261 = vmul.f32 %v7166, 1.442695
        %v7262 = vpow.pop %v7261
        %v7263 = vmul.f32 %v7167, 1.442695
        %v7264 = vpow.pop %v7263
        %v7265 = vmul.f32 %v7168, 1.442695
        %v7266 = vpow.pop %v7265
        %v7267 = vmul.f32 %v7169, 1.442695
        %v7268 = vpow.pop %v7267
        %v7269 = vmul.f32 %v7170, 1.442695
        %v7270 = vpow.pop %v7269
        %v7271 = vmul.f32 %v7171, 1.442695
        %v7272 = vpow.pop %v7271
        %v7273 = vmul.f32 %v7172, 1.442695
        %v7274 = vpow.pop %v7273
        %v7275 = vmul.f32 %v7173, 1.442695
        %v7276 = vpow.pop %v7275
        %v7277 = vmul.f32 %v7174, 1.442695
        %v7278 = vpow.pop %v7277
        %v7279 = vmul.f32 %v7175, 1.442695
        %v7280 = vpow.pop %v7279
        %v7281 = vmul.f32 %v7176, 1.442695
        %v7282 = vpow.pop %v7281
        %v7283 = vmul.f32 %v7177, 1.442695
        %v7284 = vpow.pop %v7283
        %v7285 = vmul.f32 %v7178, 1.442695
        %v7286 = vpow.pop %v7285
        %v7287 = vmul.f32 %v7179, 1.442695
        %v7288 = vpow.pop %v7287
        %v7289 = vmul.f32 %v7180, 1.442695
        %v7290 = vpow.pop %v7289
        %v7291 = vmul.f32 %v7181, 1.442695
        %v7292 = vpow.pop %v7291
        %v7293 = vmul.f32 %v7182, 1.442695
        %v7294 = vpow.pop %v7293
        %v7295 = vmul.f32 %v7183, 1.442695
        %v7296 = vpow.pop %v7295
        %v7297 = vmul.f32 %v7184, 1.442695
        %v7298 = vpow.pop %v7297
        %v7299 = vmul.f32 %v7185, 1.442695
        %v7300 = vpow.pop %v7299
        %v7301 = vmul.f32 %v7186, 1.442695
        %v7302 = vpow.pop %v7301
        %v7303 = vmul.f32 %v7187, 1.442695
        %v7304 = vpow.pop %v7303
        %v7305 = vmul.f32 %v7188, 1.442695
        %v7306 = vpow.pop %v7305
        %v7307 = vmul.f32 %v7189, 1.442695
        %v7308 = vpow.pop %v7307
        %v7309 = vmul.f32 %v7190, 1.442695
        %v7310 = vpow.pop %v7309
        %v7311 = vmul.f32 %v7191, 1.442695
        %v7312 = vpow.pop %v7311
        %v7313 = vmul.f32 %v7192, 1.442695
        %v7314 = vpow.pop %v7313
        %v7315 = vmul.f32 %v7193, 1.442695
        %v7316 = vpow.pop %v7315
        %v7317 = vmul.f32 %v7194, 1.442695
        %v7318 = vpow.pop %v7317
        %v7319 = vmul.f32 %v7195, 1.442695
        %v7320 = vpow.pop %v7319
        %v7321 = vmul.f32 %v7196, 1.442695
        %v7322 = vpow.pop %v7321
        %v7323 = vmul.f32 %v7197, 1.442695
        %v7324 = vpow.pop %v7323
        %v7325 = vmul.f32 %v7198, 1.442695
        %v7326 = vpow.pop %v7325
        %v7327 = vadd.f32 %v7200, %v7204
        %v7328 = vadd.f32 %v7327, %v7208
        %v7329 = vadd.f32 %v7328, %v7212
        %v7330 = vadd.f32 %v7329, %v7216
        %v7331 = vadd.f32 %v7330, %v7220
        %v7332 = vadd.f32 %v7331, %v7224
        %v7333 = vadd.f32 %v7332, %v7228
        %v7334 = vadd.f32 %v7333, %v7232
        %v7335 = vadd.f32 %v7334, %v7236
        %v7336 = vadd.f32 %v7335, %v7240
        %v7337 = vadd.f32 %v7336, %v7244
        %v7338 = vadd.f32 %v7337, %v7248
        %v7339 = vadd.f32 %v7338, %v7252
        %v7340 = vadd.f32 %v7339, %v7256
        %v7341 = vadd.f32 %v7340, %v7260
        %v7342 = vadd.f32 %v7341, %v7264
        %v7343 = vadd.f32 %v7342, %v7268
        %v7344 = vadd.f32 %v7343, %v7272
        %v7345 = vadd.f32 %v7344, %v7276
        %v7346 = vadd.f32 %v7345, %v7280
        %v7347 = vadd.f32 %v7346, %v7284
        %v7348 = vadd.f32 %v7347, %v7288
        %v7349 = vadd.f32 %v7348, %v7292
        %v7350 = vadd.f32 %v7349, %v7296
        %v7351 = vadd.f32 %v7350, %v7300
        %v7352 = vadd.f32 %v7351, %v7304
        %v7353 = vadd.f32 %v7352, %v7308
        %v7354 = vadd.f32 %v7353, %v7312
        %v7355 = vadd.f32 %v7354, %v7316
        %v7356 = vadd.f32 %v7355, %v7320
        %v7357 = vadd.f32 %v7356, %v7324
        %v7358 = vrot.slane %v7357, 4
        %v7359 = vadd.f32 %v7357, %v7358
        %v7360 = vrot.slane %v7359, 2
        %v7361 = vadd.f32 %v7359, %v7360
        %v7362 = vrot.slane %v7361, 1
        %v7363 = vadd.f32 %v7361, %v7362
        %v7364 = vadd.f32 %v7202, %v7206
        %v7365 = vadd.f32 %v7364, %v7210
        %v7366 = vadd.f32 %v7365, %v7214
        %v7367 = vadd.f32 %v7366, %v7218
        %v7368 = vadd.f32 %v7367, %v7222
        %v7369 = vadd.f32 %v7368, %v7226
        %v7370 = vadd.f32 %v7369, %v7230
        %v7371 = vadd.f32 %v7370, %v7234
        %v7372 = vadd.f32 %v7371, %v7238
        %v7373 = vadd.f32 %v7372, %v7242
        %v7374 = vadd.f32 %v7373, %v7246
        %v7375 = vadd.f32 %v7374, %v7250
        %v7376 = vadd.f32 %v7375, %v7254
        %v7377 = vadd.f32 %v7376, %v7258
        %v7378 = vadd.f32 %v7377, %v7262
        %v7379 = vadd.f32 %v7378, %v7266
        %v7380 = vadd.f32 %v7379, %v7270
        %v7381 = vadd.f32 %v7380, %v7274
        %v7382 = vadd.f32 %v7381, %v7278
        %v7383 = vadd.f32 %v7382, %v7282
        %v7384 = vadd.f32 %v7383, %v7286
        %v7385 = vadd.f32 %v7384, %v7290
        %v7386 = vadd.f32 %v7385, %v7294
        %v7387 = vadd.f32 %v7386, %v7298
        %v7388 = vadd.f32 %v7387, %v7302
        %v7389 = vadd.f32 %v7388, %v7306
        %v7390 = vadd.f32 %v7389, %v7310
        %v7391 = vadd.f32 %v7390, %v7314
        %v7392 = vadd.f32 %v7391, %v7318
        %v7393 = vadd.f32 %v7392, %v7322
        %v7394 = vadd.f32 %v7393, %v7326
        %v7395 = vrot.slane %v7394, 4
        %v7396 = vadd.f32 %v7394, %v7395
        %v7397 = vrot.slane %v7396, 2
        %v7398 = vadd.f32 %v7396, %v7397
        %v7399 = vrot.slane %v7398, 1
        %v7400 = vadd.f32 %v7398, %v7399
        %v7401 = vrcp.pop %v7363
        %v7402 = vmul.f32 1.0, %v7401
        %v7403 = vrcp.pop %v7400
        %v7404 = vmul.f32 1.0, %v7403
        %v7407 = vrot.slane %v5626, 4
        %v7408 = vrot.slane %v5628, 4
        %7411 = vmatprep.subr.mxu0 %v7202
        %7412 = vmatpush1.msra.mxu0 %v7200
        %7413 = vmatprep.subr.mxu0 %v7206
        %7414 = vmatpush1.msra.mxu0 %v7204
        %7415 = vmatprep.subr.mxu0 %v7210
        %7416 = vmatpush1.msra.mxu0 %v7208
        %7417 = vmatprep.subr.mxu0 %v7214
        %7418 = vmatpush1.msra.mxu0 %v7212
        %7419 = vmatprep.subr.mxu0 %v7218
        %7420 = vmatpush1.msra.mxu0 %v7216
        %7421 = vmatprep.subr.mxu0 %v7222
        %7422 = vmatpush1.msra.mxu0 %v7220
        %7423 = vmatprep.subr.mxu0 %v7226
        %7424 = vmatpush1.msra.mxu0 %v7224
        %7425 = vmatprep.subr.mxu0 %v7230
        %7426 = vmatpush1.msra.mxu0 %v7228
        %7427 = vmatprep.subr.mxu0 %v7234
        %7428 = vmatpush1.msra.mxu0 %v7232
        %7429 = vmatprep.subr.mxu0 %v7238
        %7430 = vmatpush1.msra.mxu0 %v7236
        %7431 = vmatprep.subr.mxu0 %v7242
        %7432 = vmatpush1.msra.mxu0 %v7240
        %7433 = vmatprep.subr.mxu0 %v7246
        %7434 = vmatpush1.msra.mxu0 %v7244
        %7435 = vmatprep.subr.mxu0 %v7250
        %7436 = vmatpush1.msra.mxu0 %v7248
        %7437 = vmatprep.subr.mxu0 %v7254
        %7438 = vmatpush1.msra.mxu0 %v7252
        %7439 = vmatprep.subr.mxu0 %v7258
        %7440 = vmatpush1.msra.mxu0 %v7256
        %7441 = vmatprep.subr.mxu0 %v7262
        %7442 = vmatpush1.msra.mxu0 %v7260
        %7443 = vmatprep.subr.mxu0 %v7266
        %7444 = vmatpush1.msra.mxu0 %v7264
        %7445 = vmatprep.subr.mxu0 %v7270
        %7446 = vmatpush1.msra.mxu0 %v7268
        %7447 = vmatprep.subr.mxu0 %v7274
        %7448 = vmatpush1.msra.mxu0 %v7272
        %7449 = vmatprep.subr.mxu0 %v7278
        %7450 = vmatpush1.msra.mxu0 %v7276
        %7451 = vmatprep.subr.mxu0 %v7282
        %7452 = vmatpush1.msra.mxu0 %v7280
        %7453 = vmatprep.subr.mxu0 %v7286
        %7454 = vmatpush1.msra.mxu0 %v7284
        %7455 = vmatprep.subr.mxu0 %v7290
        %7456 = vmatpush1.msra.mxu0 %v7288
        %7457 = vmatprep.subr.mxu0 %v7294
        %7458 = vmatpush1.msra.mxu0 %v7292
        %7459 = vmatprep.subr.mxu0 %v7298
        %7460 = vmatpush1.msra.mxu0 %v7296
        %7461 = vmatprep.subr.mxu0 %v7302
        %7462 = vmatpush1.msra.mxu0 %v7300
        %7463 = vmatprep.subr.mxu0 %v7306
        %7464 = vmatpush1.msra.mxu0 %v7304
        %7465 = vmatprep.subr.mxu0 %v7310
        %7466 = vmatpush1.msra.mxu0 %v7308
        %7467 = vmatprep.subr.mxu0 %v7314
        %7468 = vmatpush1.msra.mxu0 %v7312
        %7469 = vmatprep.subr.mxu0 %v7318
        %7470 = vmatpush1.msra.mxu0 %v7316
        %7471 = vmatprep.subr.mxu0 %v7322
        %7472 = vmatpush1.msra.mxu0 %v7320
        %7473 = vmatprep.subr.mxu0 %v7326
        %7474 = vmatpush1.msra.mxu0 %v7324
        %7475 = vmatprep.mubr.f32.mxu0 %v7408
        %7476 = vmatmul.mubr.f32.gmra.mrb[0].mxu0 %v7407
        %v7477 = vpop.f32.mrb[0].mxu0
        %v7478 = vadd.f32 0.0, %v7477
        %v7479 = vpop.f32.mrb[0].mxu0
        %v7480 = vadd.f32 0.0, %v7479
        %7481 = vdwg.mxu0
        %v7482 = vmul.f32 %v7478, %v7402
        %v7483 = vmul.f32 %v7480, %v7404
        %7486 = vrot.lane.b32.xlu0 %v6476, 124
        %v7487 = vpop.permute.xlu0 %7486
        %7488 = vrot.lane.b32.xlu0 %v6477, 124
        %v7489 = vpop.permute.xlu0 %7488
        %v7490 = vsel %vm1329, %v7487, 0
        %v7492 = vsel %vm1329, %v7489, 0
        %v7495 = vsel %vm1426, %v7482, 0
        %v7498 = vsel %vm1426, %v7483, 0
        %7500 = vmatprep.subr.mxu0 %v7498
        %7501 = vmatpush1.msra.mxu0 %v7495
        %7502 = vmatprep.subr.mxu0 0.0
        %7503 = vmatpush1.msra.mxu0 0.0
        %7504 = vmatprep.subr.mxu0 0.0
        %7505 = vmatpush1.msra.mxu0 0.0
        %7506 = vmatprep.subr.mxu0 0.0
        %7507 = vmatpush1.msra.mxu0 0.0
        %7508 = vmatprep.subr.mxu0 0.0
        %7509 = vmatpush1.msra.mxu0 0.0
        %7510 = vmatprep.subr.mxu0 0.0
        %7511 = vmatpush1.msra.mxu0 0.0
        %7512 = vmatprep.subr.mxu0 0.0
        %7513 = vmatpush1.msra.mxu0 0.0
        %7514 = vmatprep.subr.mxu0 0.0
        %7515 = vmatpush1.msra.mxu0 0.0
        %7516 = vmatprep.subr.mxu0 0.0
        %7517 = vmatpush1.msra.mxu0 0.0
        %7518 = vmatprep.subr.mxu0 0.0
        %7519 = vmatpush1.msra.mxu0 0.0
        %7520 = vmatprep.subr.mxu0 0.0
        %7521 = vmatpush1.msra.mxu0 0.0
        %7522 = vmatprep.subr.mxu0 0.0
        %7523 = vmatpush1.msra.mxu0 0.0
        %7524 = vmatprep.subr.mxu0 0.0
        %7525 = vmatpush1.msra.mxu0 0.0
        %7526 = vmatprep.subr.mxu0 0.0
        %7527 = vmatpush1.msra.mxu0 0.0
        %7528 = vmatprep.subr.mxu0 0.0
        %7529 = vmatpush1.msra.mxu0 0.0
        %7530 = vmatprep.subr.mxu0 0.0
        %7531 = vmatpush1.msra.mxu0 0.0
        %7532 = vmatprep.subr.mxu0 0.0
        %7533 = vmatpush1.msra.mxu0 0.0
        %7534 = vmatprep.subr.mxu0 0.0
        %7535 = vmatpush1.msra.mxu0 0.0
        %7536 = vmatprep.subr.mxu0 0.0
        %7537 = vmatpush1.msra.mxu0 0.0
        %7538 = vmatprep.subr.mxu0 0.0
        %7539 = vmatpush1.msra.mxu0 0.0
        %7540 = vmatprep.subr.mxu0 0.0
        %7541 = vmatpush1.msra.mxu0 0.0
        %7542 = vmatprep.subr.mxu0 0.0
        %7543 = vmatpush1.msra.mxu0 0.0
        %7544 = vmatprep.subr.mxu0 0.0
        %7545 = vmatpush1.msra.mxu0 0.0
        %7546 = vmatprep.subr.mxu0 0.0
        %7547 = vmatpush1.msra.mxu0 0.0
        %7548 = vmatprep.subr.mxu0 0.0
        %7549 = vmatpush1.msra.mxu0 0.0
        %7550 = vmatprep.subr.mxu0 0.0
        %7551 = vmatpush1.msra.mxu0 0.0
        %7552 = vmatprep.subr.mxu0 0.0
        %7553 = vmatpush1.msra.mxu0 0.0
        %7554 = vmatprep.subr.mxu0 0.0
        %7555 = vmatpush1.msra.mxu0 0.0
        %7556 = vmatprep.subr.mxu0 0.0
        %7557 = vmatpush1.msra.mxu0 0.0
        %7558 = vmatprep.subr.mxu0 0.0
        %7559 = vmatpush1.msra.mxu0 0.0
        %7560 = vmatprep.subr.mxu0 0.0
        %7561 = vmatpush1.msra.mxu0 0.0
        %7562 = vmatprep.subr.mxu0 0.0
        %7563 = vmatpush1.msra.mxu0 0.0
        %7564 = vmatprep.mubr.f32.mxu0 0.0
        %7565 = vmatmul.mubr.f32.gmra.mrb[0].mxu0 %v7490
        %v7566 = vpop.f32.mrb[0].mxu0
        %v7567 = vadd.f32 0.0, %v7566
        %v7568 = vpop.f32.mrb[0].mxu0
        %v7569 = vadd.f32 0.0, %v7568
        %7570 = vmatprep.mubr.f32.mxu0 0.0
        %7571 = vmatmul.mubr.f32.gmra.mrb[0].mxu0 %v7492
        %v7572 = vpop.f32.mrb[0].mxu0
        %v7573 = vadd.f32 0.0, %v7572
        %v7574 = vpop.f32.mrb[0].mxu0
        %v7575 = vadd.f32 0.0, %v7574
        %7576 = vdwg.mxu0
        %v7577 = vsel %vm1329, %v6476, 0
        %v7579 = vsel %vm1329, %v6477, 0
        %v7582 = vsel %vm1426, %v6474, 0
        %v7585 = vsel %vm1426, %v6475, 0
        %7587 = vmatprep.subr.mxu0 %v7585
        %7588 = vmatpush1.msra.mxu0 %v7582
        %7589 = vmatprep.subr.mxu0 0.0
        %7590 = vmatpush1.msra.mxu0 0.0
        %7591 = vmatprep.subr.mxu0 0.0
        %7592 = vmatpush1.msra.mxu0 0.0
        %7593 = vmatprep.subr.mxu0 0.0
        %7594 = vmatpush1.msra.mxu0 0.0
        %7595 = vmatprep.subr.mxu0 0.0
        %7596 = vmatpush1.msra.mxu0 0.0
        %7597 = vmatprep.subr.mxu0 0.0
        %7598 = vmatpush1.msra.mxu0 0.0
        %7599 = vmatprep.subr.mxu0 0.0
        %7600 = vmatpush1.msra.mxu0 0.0
        %7601 = vmatprep.subr.mxu0 0.0
        %7602 = vmatpush1.msra.mxu0 0.0
        %7603 = vmatprep.subr.mxu0 0.0
        %7604 = vmatpush1.msra.mxu0 0.0
        %7605 = vmatprep.subr.mxu0 0.0
        %7606 = vmatpush1.msra.mxu0 0.0
        %7607 = vmatprep.subr.mxu0 0.0
        %7608 = vmatpush1.msra.mxu0 0.0
        %7609 = vmatprep.subr.mxu0 0.0
        %7610 = vmatpush1.msra.mxu0 0.0
        %7611 = vmatprep.subr.mxu0 0.0
        %7612 = vmatpush1.msra.mxu0 0.0
        %7613 = vmatprep.subr.mxu0 0.0
        %7614 = vmatpush1.msra.mxu0 0.0
        %7615 = vmatprep.subr.mxu0 0.0
        %7616 = vmatpush1.msra.mxu0 0.0
        %7617 = vmatprep.subr.mxu0 0.0
        %7618 = vmatpush1.msra.mxu0 0.0
        %7619 = vmatprep.subr.mxu0 0.0
        %7620 = vmatpush1.msra.mxu0 0.0
        %7621 = vmatprep.subr.mxu0 0.0
        %7622 = vmatpush1.msra.mxu0 0.0
        %7623 = vmatprep.subr.mxu0 0.0
        %7624 = vmatpush1.msra.mxu0 0.0
        %7625 = vmatprep.subr.mxu0 0.0
        %7626 = vmatpush1.msra.mxu0 0.0
        %7627 = vmatprep.subr.mxu0 0.0
        %7628 = vmatpush1.msra.mxu0 0.0
        %7629 = vmatprep.subr.mxu0 0.0
        %7630 = vmatpush1.msra.mxu0 0.0
        %7631 = vmatprep.subr.mxu0 0.0
        %7632 = vmatpush1.msra.mxu0 0.0
        %7633 = vmatprep.subr.mxu0 0.0
        %7634 = vmatpush1.msra.mxu0 0.0
        %7635 = vmatprep.subr.mxu0 0.0
        %7636 = vmatpush1.msra.mxu0 0.0
        %7637 = vmatprep.subr.mxu0 0.0
        %7638 = vmatpush1.msra.mxu0 0.0
        %7639 = vmatprep.subr.mxu0 0.0
        %7640 = vmatpush1.msra.mxu0 0.0
        %7641 = vmatprep.subr.mxu0 0.0
        %7642 = vmatpush1.msra.mxu0 0.0
        %7643 = vmatprep.subr.mxu0 0.0
        %7644 = vmatpush1.msra.mxu0 0.0
        %7645 = vmatprep.subr.mxu0 0.0
        %7646 = vmatpush1.msra.mxu0 0.0
        %7647 = vmatprep.subr.mxu0 0.0
        %7648 = vmatpush1.msra.mxu0 0.0
        %7649 = vmatprep.subr.mxu0 0.0
        %7650 = vmatpush1.msra.mxu0 0.0
        %7651 = vmatprep.mubr.f32.mxu0 0.0
        %7652 = vmatmul.mubr.f32.gmra.mrb[0].mxu0 %v7577
        %v7653 = vpop.f32.mrb[0].mxu0
        %v7654 = vadd.f32 %v7567, %v7653
        %v7655 = vpop.f32.mrb[0].mxu0
        %v7656 = vadd.f32 %v7569, %v7655
        %7657 = vmatprep.mubr.f32.mxu0 0.0
        %7658 = vmatmul.mubr.f32.gmra.mrb[0].mxu0 %v7579
        %v7659 = vpop.f32.mrb[0].mxu0
        %v7660 = vadd.f32 %v7573, %v7659
        %v7661 = vpop.f32.mrb[0].mxu0
        %v7662 = vadd.f32 %v7575, %v7661
        %7663 = vdwg.mxu0
        %v7664 = vmul.f32 %v7200, %v7402
        %v7665 = vmul.f32 %v7202, %v7404
        %v7666 = vmul.f32 %v7204, %v7402
        %v7667 = vmul.f32 %v7206, %v7404
        %v7668 = vmul.f32 %v7208, %v7402
        %v7669 = vmul.f32 %v7210, %v7404
        %v7670 = vmul.f32 %v7212, %v7402
        %v7671 = vmul.f32 %v7214, %v7404
        %v7672 = vmul.f32 %v7216, %v7402
        %v7673 = vmul.f32 %v7218, %v7404
        %v7674 = vmul.f32 %v7220, %v7402
        %v7675 = vmul.f32 %v7222, %v7404
        %v7676 = vmul.f32 %v7224, %v7402
        %v7677 = vmul.f32 %v7226, %v7404
        %v7678 = vmul.f32 %v7228, %v7402
        %v7679 = vmul.f32 %v7230, %v7404
        %v7680 = vmul.f32 %v7232, %v7402
        %v7681 = vmul.f32 %v7234, %v7404
        %v7682 = vmul.f32 %v7236, %v7402
        %v7683 = vmul.f32 %v7238, %v7404
        %v7684 = vmul.f32 %v7240, %v7402
        %v7685 = vmul.f32 %v7242, %v7404
        %v7686 = vmul.f32 %v7244, %v7402
        %v7687 = vmul.f32 %v7246, %v7404
        %v7688 = vmul.f32 %v7248, %v7402
        %v7689 = vmul.f32 %v7250, %v7404
        %v7690 = vmul.f32 %v7252, %v7402
        %v7691 = vmul.f32 %v7254, %v7404
        %v7692 = vmul.f32 %v7256, %v7402
        %v7693 = vmul.f32 %v7258, %v7404
        %v7694 = vmul.f32 %v7260, %v7402
        %v7695 = vmul.f32 %v7262, %v7404
        %v7696 = vmul.f32 %v7264, %v7402
        %v7697 = vmul.f32 %v7266, %v7404
        %v7698 = vmul.f32 %v7268, %v7402
        %v7699 = vmul.f32 %v7270, %v7404
        %v7700 = vmul.f32 %v7272, %v7402
        %v7701 = vmul.f32 %v7274, %v7404
        %v7702 = vmul.f32 %v7276, %v7402
        %v7703 = vmul.f32 %v7278, %v7404
        %v7704 = vmul.f32 %v7280, %v7402
        %v7705 = vmul.f32 %v7282, %v7404
        %v7706 = vmul.f32 %v7284, %v7402
        %v7707 = vmul.f32 %v7286, %v7404
        %v7708 = vmul.f32 %v7288, %v7402
        %v7709 = vmul.f32 %v7290, %v7404
        %v7710 = vmul.f32 %v7292, %v7402
        %v7711 = vmul.f32 %v7294, %v7404
        %v7712 = vmul.f32 %v7296, %v7402
        %v7713 = vmul.f32 %v7298, %v7404
        %v7714 = vmul.f32 %v7300, %v7402
        %v7715 = vmul.f32 %v7302, %v7404
        %v7716 = vmul.f32 %v7304, %v7402
        %v7717 = vmul.f32 %v7306, %v7404
        %v7718 = vmul.f32 %v7308, %v7402
        %v7719 = vmul.f32 %v7310, %v7404
        %v7720 = vmul.f32 %v7312, %v7402
        %v7721 = vmul.f32 %v7314, %v7404
        %v7722 = vmul.f32 %v7316, %v7402
        %v7723 = vmul.f32 %v7318, %v7404
        %v7724 = vmul.f32 %v7320, %v7402
        %v7725 = vmul.f32 %v7322, %v7404
        %v7726 = vmul.f32 %v7324, %v7402
        %v7727 = vmul.f32 %v7326, %v7404
        %v7728 = vadd.f32 %v7664, %v7665
        %7729 = vadd.xlane.f32.xlu0 %v7728
        %v7730 = vpop.xlane.xlu0 %7729
        %v7731 = vadd.f32 %v7666, %v7667
        %7732 = vadd.xlane.f32.xlu0 %v7731
        %v7733 = vpop.xlane.xlu0 %7732
        %v7734 = vadd.f32 %v7668, %v7669
        %7735 = vadd.xlane.f32.xlu0 %v7734
        %v7736 = vpop.xlane.xlu0 %7735
        %v7737 = vadd.f32 %v7670, %v7671
        %7738 = vadd.xlane.f32.xlu0 %v7737
        %v7739 = vpop.xlane.xlu0 %7738
        %v7740 = vadd.f32 %v7672, %v7673
        %7741 = vadd.xlane.f32.xlu0 %v7740
        %v7742 = vpop.xlane.xlu0 %7741
        %v7743 = vadd.f32 %v7674, %v7675
        %7744 = vadd.xlane.f32.xlu0 %v7743
        %v7745 = vpop.xlane.xlu0 %7744
        %v7746 = vadd.f32 %v7676, %v7677
        %7747 = vadd.xlane.f32.xlu0 %v7746
        %v7748 = vpop.xlane.xlu0 %7747
        %v7749 = vadd.f32 %v7678, %v7679
        %7750 = vadd.xlane.f32.xlu0 %v7749
        %v7751 = vpop.xlane.xlu0 %7750
        %v7752 = vadd.f32 %v7680, %v7681
        %7753 = vadd.xlane.f32.xlu0 %v7752
        %v7754 = vpop.xlane.xlu0 %7753
        %v7755 = vadd.f32 %v7682, %v7683
        %7756 = vadd.xlane.f32.xlu0 %v7755
        %v7757 = vpop.xlane.xlu0 %7756
        %v7758 = vadd.f32 %v7684, %v7685
        %7759 = vadd.xlane.f32.xlu0 %v7758
        %v7760 = vpop.xlane.xlu0 %7759
        %v7761 = vadd.f32 %v7686, %v7687
        %7762 = vadd.xlane.f32.xlu0 %v7761
        %v7763 = vpop.xlane.xlu0 %7762
        %v7764 = vadd.f32 %v7688, %v7689
        %7765 = vadd.xlane.f32.xlu0 %v7764
        %v7766 = vpop.xlane.xlu0 %7765
        %v7767 = vadd.f32 %v7690, %v7691
        %7768 = vadd.xlane.f32.xlu0 %v7767
        %v7769 = vpop.xlane.xlu0 %7768
        %v7770 = vadd.f32 %v7692, %v7693
        %7771 = vadd.xlane.f32.xlu0 %v7770
        %v7772 = vpop.xlane.xlu0 %7771
        %v7773 = vadd.f32 %v7694, %v7695
        %7774 = vadd.xlane.f32.xlu0 %v7773
        %v7775 = vpop.xlane.xlu0 %7774
        %v7776 = vadd.f32 %v7696, %v7697
        %7777 = vadd.xlane.f32.xlu0 %v7776
        %v7778 = vpop.xlane.xlu0 %7777
        %v7779 = vadd.f32 %v7698, %v7699
        %7780 = vadd.xlane.f32.xlu0 %v7779
        %v7781 = vpop.xlane.xlu0 %7780
        %v7782 = vadd.f32 %v7700, %v7701
        %7783 = vadd.xlane.f32.xlu0 %v7782
        %v7784 = vpop.xlane.xlu0 %7783
        %v7785 = vadd.f32 %v7702, %v7703
        %7786 = vadd.xlane.f32.xlu0 %v7785
        %v7787 = vpop.xlane.xlu0 %7786
        %v7788 = vadd.f32 %v7704, %v7705
        %7789 = vadd.xlane.f32.xlu0 %v7788
        %v7790 = vpop.xlane.xlu0 %7789
        %v7791 = vadd.f32 %v7706, %v7707
        %7792 = vadd.xlane.f32.xlu0 %v7791
        %v7793 = vpop.xlane.xlu0 %7792
        %v7794 = vadd.f32 %v7708, %v7709
        %7795 = vadd.xlane.f32.xlu0 %v7794
        %v7796 = vpop.xlane.xlu0 %7795
        %v7797 = vadd.f32 %v7710, %v7711
        %7798 = vadd.xlane.f32.xlu0 %v7797
        %v7799 = vpop.xlane.xlu0 %7798
        %v7800 = vadd.f32 %v7712, %v7713
        %7801 = vadd.xlane.f32.xlu0 %v7800
        %v7802 = vpop.xlane.xlu0 %7801
        %v7803 = vadd.f32 %v7714, %v7715
        %7804 = vadd.xlane.f32.xlu0 %v7803
        %v7805 = vpop.xlane.xlu0 %7804
        %v7806 = vadd.f32 %v7716, %v7717
        %7807 = vadd.xlane.f32.xlu0 %v7806
        %v7808 = vpop.xlane.xlu0 %7807
        %v7809 = vadd.f32 %v7718, %v7719
        %7810 = vadd.xlane.f32.xlu0 %v7809
        %v7811 = vpop.xlane.xlu0 %7810
        %v7812 = vadd.f32 %v7720, %v7721
        %7813 = vadd.xlane.f32.xlu0 %v7812
        %v7814 = vpop.xlane.xlu0 %7813
        %v7815 = vadd.f32 %v7722, %v7723
        %7816 = vadd.xlane.f32.xlu0 %v7815
        %v7817 = vpop.xlane.xlu0 %7816
        %v7818 = vadd.f32 %v7724, %v7725
        %7819 = vadd.xlane.f32.xlu0 %v7818
        %v7820 = vpop.xlane.xlu0 %7819
        %v7821 = vadd.f32 %v7726, %v7727
        %7822 = vadd.xlane.f32.xlu0 %v7821
        %v7823 = vpop.xlane.xlu0 %7822
        %v7824 = vadd.f32 %v6638, %v7730
        %v7825 = vadd.f32 %v6639, %v7733
        %v7826 = vadd.f32 %v6640, %v7736
        %v7827 = vadd.f32 %v6641, %v7739
        %v7828 = vadd.f32 %v6642, %v7742
        %v7829 = vadd.f32 %v6643, %v7745
        %v7830 = vadd.f32 %v6644, %v7748
        %v7831 = vadd.f32 %v6645, %v7751
        %v7832 = vadd.f32 %v6646, %v7754
        %v7833 = vadd.f32 %v6647, %v7757
        %v7834 = vadd.f32 %v6648, %v7760
        %v7835 = vadd.f32 %v6649, %v7763
        %v7836 = vadd.f32 %v6650, %v7766
        %v7837 = vadd.f32 %v6651, %v7769
        %v7838 = vadd.f32 %v6652, %v7772
        %v7839 = vadd.f32 %v6653, %v7775
        %v7840 = vadd.f32 %v6654, %v7778
        %v7841 = vadd.f32 %v6655, %v7781
        %v7842 = vadd.f32 %v6656, %v7784
        %v7843 = vadd.f32 %v6657, %v7787
        %v7844 = vadd.f32 %v6658, %v7790
        %v7845 = vadd.f32 %v6659, %v7793
        %v7846 = vadd.f32 %v6660, %v7796
        %v7847 = vadd.f32 %v6661, %v7799
        %v7848 = vadd.f32 %v6662, %v7802
        %v7849 = vadd.f32 %v6663, %v7805
        %v7850 = vadd.f32 %v6664, %v7808
        %v7851 = vadd.f32 %v6665, %v7811
        %v7852 = vadd.f32 %v6666, %v7814
        %v7853 = vadd.f32 %v6667, %v7817
        %v7854 = vadd.f32 %v6668, %v7820
        %v7855 = vadd.f32 %v6669, %v7823
        %7856 = vrot.lane.b32.xlu0 %v5652, 120
        %v7857 = vpop.permute.xlu0 %7856
        %7858 = vrot.lane.b32.xlu0 %v5653, 120
        %v7859 = vpop.permute.xlu0 %7858
        %7860 = vrot.lane.b32.xlu0 %v5654, 120
        %v7861 = vpop.permute.xlu0 %7860
        %7862 = vrot.lane.b32.xlu0 %v5655, 120
        %v7863 = vpop.permute.xlu0 %7862
        %7864 = vrot.lane.b32.xlu0 %v5656, 120
        %v7865 = vpop.permute.xlu0 %7864
        %7866 = vrot.lane.b32.xlu0 %v5657, 120
        %v7867 = vpop.permute.xlu0 %7866
        %7868 = vrot.lane.b32.xlu0 %v5658, 120
        %v7869 = vpop.permute.xlu0 %7868
        %7870 = vrot.lane.b32.xlu0 %v5659, 120
        %v7871 = vpop.permute.xlu0 %7870
        %7872 = vrot.lane.b32.xlu0 %v5660, 120
        %v7873 = vpop.permute.xlu0 %7872
        %7874 = vrot.lane.b32.xlu0 %v5661, 120
        %v7875 = vpop.permute.xlu0 %7874
        %7876 = vrot.lane.b32.xlu0 %v5662, 120
        %v7877 = vpop.permute.xlu0 %7876
        %7878 = vrot.lane.b32.xlu0 %v5663, 120
        %v7879 = vpop.permute.xlu0 %7878
        %7880 = vrot.lane.b32.xlu0 %v5664, 120
        %v7881 = vpop.permute.xlu0 %7880
        %7882 = vrot.lane.b32.xlu0 %v5665, 120
        %v7883 = vpop.permute.xlu0 %7882
        %7884 = vrot.lane.b32.xlu0 %v5666, 120
        %v7885 = vpop.permute.xlu0 %7884
        %7886 = vrot.lane.b32.xlu0 %v5667, 120
        %v7887 = vpop.permute.xlu0 %7886
        %7888 = vrot.lane.b32.xlu0 %v5684, 120
        %v7889 = vpop.permute.xlu0 %7888
        %7890 = vrot.lane.b32.xlu0 %v5685, 120
        %v7891 = vpop.permute.xlu0 %7890
        %7892 = vrot.lane.b32.xlu0 %v5686, 120
        %v7893 = vpop.permute.xlu0 %7892
        %7894 = vrot.lane.b32.xlu0 %v5687, 120
        %v7895 = vpop.permute.xlu0 %7894
        %7896 = vrot.lane.b32.xlu0 %v5688, 120
        %v7897 = vpop.permute.xlu0 %7896
        %7898 = vrot.lane.b32.xlu0 %v5689, 120
        %v7899 = vpop.permute.xlu0 %7898
        %7900 = vrot.lane.b32.xlu0 %v5690, 120
        %v7901 = vpop.permute.xlu0 %7900
        %7902 = vrot.lane.b32.xlu0 %v5691, 120
        %v7903 = vpop.permute.xlu0 %7902
        %7904 = vrot.lane.b32.xlu0 %v5692, 120
        %v7905 = vpop.permute.xlu0 %7904
        %7906 = vrot.lane.b32.xlu0 %v5693, 120
        %v7907 = vpop.permute.xlu0 %7906
        %7908 = vrot.lane.b32.xlu0 %v5694, 120
        %v7909 = vpop.permute.xlu0 %7908
        %7910 = vrot.lane.b32.xlu0 %v5695, 120
        %v7911 = vpop.permute.xlu0 %7910
        %7912 = vrot.lane.b32.xlu0 %v5696, 120
        %v7913 = vpop.permute.xlu0 %7912
        %7914 = vrot.lane.b32.xlu0 %v5697, 120
        %v7915 = vpop.permute.xlu0 %7914
        %7916 = vrot.lane.b32.xlu0 %v5698, 120
        %v7917 = vpop.permute.xlu0 %7916
        %7918 = vrot.lane.b32.xlu0 %v5699, 120
        %v7919 = vpop.permute.xlu0 %7918
        %v7920 = vsel %vm1329, %v7857, 0
        %v7922 = vsel %vm1329, %v7859, 0
        %v7924 = vsel %vm1329, %v7861, 0
        %v7926 = vsel %vm1329, %v7863, 0
        %v7928 = vsel %vm1329, %v7865, 0
        %v7930 = vsel %vm1329, %v7867, 0
        %v7932 = vsel %vm1329, %v7869, 0
        %v7934 = vsel %vm1329, %v7871, 0
        %v7936 = vsel %vm1329, %v7873, 0
        %v7938 = vsel %vm1329, %v7875, 0
        %v7940 = vsel %vm1329, %v7877, 0
        %v7942 = vsel %vm1329, %v7879, 0
        %v7944 = vsel %vm1329, %v7881, 0
        %v7946 = vsel %vm1329, %v7883, 0
        %v7948 = vsel %vm1329, %v7885, 0
        %v7950 = vsel %vm1329, %v7887, 0
        %v7952 = vsel %vm1329, %v7889, 0
        %v7954 = vsel %vm1329, %v7891, 0
        %v7956 = vsel %vm1329, %v7893, 0
        %v7958 = vsel %vm1329, %v7895, 0
        %v7960 = vsel %vm1329, %v7897, 0
        %v7962 = vsel %vm1329, %v7899, 0
        %v7964 = vsel %vm1329, %v7901, 0
        %v7966 = vsel %vm1329, %v7903, 0
        %v7968 = vsel %vm1329, %v7905, 0
        %v7970 = vsel %vm1329, %v7907, 0
        %v7972 = vsel %vm1329, %v7909, 0
        %v7974 = vsel %vm1329, %v7911, 0
        %v7976 = vsel %vm1329, %v7913, 0
        %v7978 = vsel %vm1329, %v7915, 0
        %v7980 = vsel %vm1329, %v7917, 0
        %v7982 = vsel %vm1329, %v7919, 0
        %v7985 = vsel %vm1426, %v5608, 0
        %v7988 = vsel %vm1426, %v5610, 0
        %7990 = vmatprep.subr.mxu0 %v7988
        %7991 = vmatpush1.msra.mxu0 %v7985
        %7992 = vmatprep.subr.mxu0 0.0
        %7993 = vmatpush1.msra.mxu0 0.0
        %7994 = vmatprep.subr.mxu0 0.0
        %7995 = vmatpush1.msra.mxu0 0.0
        %7996 = vmatprep.subr.mxu0 0.0
        %7997 = vmatpush1.msra.mxu0 0.0
        %7998 = vmatprep.subr.mxu0 0.0
        %7999 = vmatpush1.msra.mxu0 0.0
        %8000 = vmatprep.subr.mxu0 0.0
        %8001 = vmatpush1.msra.mxu0 0.0
        %8002 = vmatprep.subr.mxu0 0.0
        %8003 = vmatpush1.msra.mxu0 0.0
        %8004 = vmatprep.subr.mxu0 0.0
        %8005 = vmatpush1.msra.mxu0 0.0
        %8006 = vmatprep.subr.mxu0 0.0
        %8007 = vmatpush1.msra.mxu0 0.0
        %8008 = vmatprep.subr.mxu0 0.0
        %8009 = vmatpush1.msra.mxu0 0.0
        %8010 = vmatprep.subr.mxu0 0.0
        %8011 = vmatpush1.msra.mxu0 0.0
        %8012 = vmatprep.subr.mxu0 0.0
        %8013 = vmatpush1.msra.mxu0 0.0
        %8014 = vmatprep.subr.mxu0 0.0
        %8015 = vmatpush1.msra.mxu0 0.0
        %8016 = vmatprep.subr.mxu0 0.0
        %8017 = vmatpush1.msra.mxu0 0.0
        %8018 = vmatprep.subr.mxu0 0.0
        %8019 = vmatpush1.msra.mxu0 0.0
        %8020 = vmatprep.subr.mxu0 0.0
        %8021 = vmatpush1.msra.mxu0 0.0
        %8022 = vmatprep.subr.mxu0 0.0
        %8023 = vmatpush1.msra.mxu0 0.0
        %8024 = vmatprep.subr.mxu0 0.0
        %8025 = vmatpush1.msra.mxu0 0.0
        %8026 = vmatprep.subr.mxu0 0.0
        %8027 = vmatpush1.msra.mxu0 0.0
        %8028 = vmatprep.subr.mxu0 0.0
        %8029 = vmatpush1.msra.mxu0 0.0
        %8030 = vmatprep.subr.mxu0 0.0
        %8031 = vmatpush1.msra.mxu0 0.0
        %8032 = vmatprep.subr.mxu0 0.0
        %8033 = vmatpush1.msra.mxu0 0.0
        %8034 = vmatprep.subr.mxu0 0.0
        %8035 = vmatpush1.msra.mxu0 0.0
        %8036 = vmatprep.subr.mxu0 0.0
        %8037 = vmatpush1.msra.mxu0 0.0
        %8038 = vmatprep.subr.mxu0 0.0
        %8039 = vmatpush1.msra.mxu0 0.0
        %8040 = vmatprep.subr.mxu0 0.0
        %8041 = vmatpush1.msra.mxu0 0.0
        %8042 = vmatprep.subr.mxu0 0.0
        %8043 = vmatpush1.msra.mxu0 0.0
        %8044 = vmatprep.subr.mxu0 0.0
        %8045 = vmatpush1.msra.mxu0 0.0
        %8046 = vmatprep.subr.mxu0 0.0
        %8047 = vmatpush1.msra.mxu0 0.0
        %8048 = vmatprep.subr.mxu0 0.0
        %8049 = vmatpush1.msra.mxu0 0.0
        %8050 = vmatprep.subr.mxu0 0.0
        %8051 = vmatpush1.msra.mxu0 0.0
        %8052 = vmatprep.subr.mxu0 0.0
        %8053 = vmatpush1.msra.mxu0 0.0
        %8054 = vmatprep.mubr.f32.mxu0 0.0
        %8055 = vmatmul.mubr.f32.gmra.mrb[0].mxu0 %v7920
        %v8056 = vpop.f32.mrb[0].mxu0
        %v8057 = vadd.f32 0.0, %v8056
        %v8058 = vpop.f32.mrb[0].mxu0
        %v8059 = vadd.f32 0.0, %v8058
        %8060 = vmatprep.mubr.f32.mxu0 0.0
        %8061 = vmatmul.mubr.f32.gmra.mrb[0].mxu0 %v7922
        %v8062 = vpop.f32.mrb[0].mxu0
        %v8063 = vadd.f32 0.0, %v8062
        %v8064 = vpop.f32.mrb[0].mxu0
        %v8065 = vadd.f32 0.0, %v8064
        %8066 = vmatprep.mubr.f32.mxu0 0.0
        %8067 = vmatmul.mubr.f32.gmra.mrb[0].mxu0 %v7924
        %v8068 = vpop.f32.mrb[0].mxu0
        %v8069 = vadd.f32 0.0, %v8068
        %v8070 = vpop.f32.mrb[0].mxu0
        %v8071 = vadd.f32 0.0, %v8070
        %8072 = vmatprep.mubr.f32.mxu0 0.0
        %8073 = vmatmul.mubr.f32.gmra.mrb[0].mxu0 %v7926
        %v8074 = vpop.f32.mrb[0].mxu0
        %v8075 = vadd.f32 0.0, %v8074
        %v8076 = vpop.f32.mrb[0].mxu0
        %v8077 = vadd.f32 0.0, %v8076
        %8078 = vmatprep.mubr.f32.mxu0 0.0
        %8079 = vmatmul.mubr.f32.gmra.mrb[0].mxu0 %v7928
        %v8080 = vpop.f32.mrb[0].mxu0
        %v8081 = vadd.f32 0.0, %v8080
        %v8082 = vpop.f32.mrb[0].mxu0
        %v8083 = vadd.f32 0.0, %v8082
        %8084 = vmatprep.mubr.f32.mxu0 0.0
        %8085 = vmatmul.mubr.f32.gmra.mrb[0].mxu0 %v7930
        %v8086 = vpop.f32.mrb[0].mxu0
        %v8087 = vadd.f32 0.0, %v8086
        %v8088 = vpop.f32.mrb[0].mxu0
        %v8089 = vadd.f32 0.0, %v8088
        %8090 = vmatprep.mubr.f32.mxu0 0.0
        %8091 = vmatmul.mubr.f32.gmra.mrb[0].mxu0 %v7932
        %v8092 = vpop.f32.mrb[0].mxu0
        %v8093 = vadd.f32 0.0, %v8092
        %v8094 = vpop.f32.mrb[0].mxu0
        %v8095 = vadd.f32 0.0, %v8094
        %8096 = vmatprep.mubr.f32.mxu0 0.0
        %8097 = vmatmul.mubr.f32.gmra.mrb[0].mxu0 %v7934
        %v8098 = vpop.f32.mrb[0].mxu0
        %v8099 = vadd.f32 0.0, %v8098
        %v8100 = vpop.f32.mrb[0].mxu0
        %v8101 = vadd.f32 0.0, %v8100
        %8102 = vmatprep.mubr.f32.mxu0 0.0
        %8103 = vmatmul.mubr.f32.gmra.mrb[0].mxu0 %v7936
        %v8104 = vpop.f32.mrb[0].mxu0
        %v8105 = vadd.f32 0.0, %v8104
        %v8106 = vpop.f32.mrb[0].mxu0
        %v8107 = vadd.f32 0.0, %v8106
        %8108 = vmatprep.mubr.f32.mxu0 0.0
        %8109 = vmatmul.mubr.f32.gmra.mrb[0].mxu0 %v7938
        %v8110 = vpop.f32.mrb[0].mxu0
        %v8111 = vadd.f32 0.0, %v8110
        %v8112 = vpop.f32.mrb[0].mxu0
        %v8113 = vadd.f32 0.0, %v8112
        %8114 = vmatprep.mubr.f32.mxu0 0.0
        %8115 = vmatmul.mubr.f32.gmra.mrb[0].mxu0 %v7940
        %v8116 = vpop.f32.mrb[0].mxu0
        %v8117 = vadd.f32 0.0, %v8116
        %v8118 = vpop.f32.mrb[0].mxu0
        %v8119 = vadd.f32 0.0, %v8118
        %8120 = vmatprep.mubr.f32.mxu0 0.0
        %8121 = vmatmul.mubr.f32.gmra.mrb[0].mxu0 %v7942
        %v8122 = vpop.f32.mrb[0].mxu0
        %v8123 = vadd.f32 0.0, %v8122
        %v8124 = vpop.f32.mrb[0].mxu0
        %v8125 = vadd.f32 0.0, %v8124
        %8126 = vmatprep.mubr.f32.mxu0 0.0
        %8127 = vmatmul.mubr.f32.gmra.mrb[0].mxu0 %v7944
        %v8128 = vpop.f32.mrb[0].mxu0
        %v8129 = vadd.f32 0.0, %v8128
        %v8130 = vpop.f32.mrb[0].mxu0
        %v8131 = vadd.f32 0.0, %v8130
        %8132 = vmatprep.mubr.f32.mxu0 0.0
        %8133 = vmatmul.mubr.f32.gmra.mrb[0].mxu0 %v7946
        %v8134 = vpop.f32.mrb[0].mxu0
        %v8135 = vadd.f32 0.0, %v8134
        %v8136 = vpop.f32.mrb[0].mxu0
        %v8137 = vadd.f32 0.0, %v8136
        %8138 = vmatprep.mubr.f32.mxu0 0.0
        %8139 = vmatmul.mubr.f32.gmra.mrb[0].mxu0 %v7948
        %v8140 = vpop.f32.mrb[0].mxu0
        %v8141 = vadd.f32 0.0, %v8140
        %v8142 = vpop.f32.mrb[0].mxu0
        %v8143 = vadd.f32 0.0, %v8142
        %8144 = vmatprep.mubr.f32.mxu0 0.0
        %8145 = vmatmul.mubr.f32.gmra.mrb[0].mxu0 %v7950
        %v8146 = vpop.f32.mrb[0].mxu0
        %v8147 = vadd.f32 0.0, %v8146
        %v8148 = vpop.f32.mrb[0].mxu0
        %v8149 = vadd.f32 0.0, %v8148
        %8150 = vmatprep.mubr.f32.mxu0 0.0
        %8151 = vmatmul.mubr.f32.gmra.mrb[0].mxu0 %v7952
        %v8152 = vpop.f32.mrb[0].mxu0
        %v8153 = vadd.f32 0.0, %v8152
        %v8154 = vpop.f32.mrb[0].mxu0
        %v8155 = vadd.f32 0.0, %v8154
        %8156 = vmatprep.mubr.f32.mxu0 0.0
        %8157 = vmatmul.mubr.f32.gmra.mrb[0].mxu0 %v7954
        %v8158 = vpop.f32.mrb[0].mxu0
        %v8159 = vadd.f32 0.0, %v8158
        %v8160 = vpop.f32.mrb[0].mxu0
        %v8161 = vadd.f32 0.0, %v8160
        %8162 = vmatprep.mubr.f32.mxu0 0.0
        %8163 = vmatmul.mubr.f32.gmra.mrb[0].mxu0 %v7956
        %v8164 = vpop.f32.mrb[0].mxu0
        %v8165 = vadd.f32 0.0, %v8164
        %v8166 = vpop.f32.mrb[0].mxu0
        %v8167 = vadd.f32 0.0, %v8166
        %8168 = vmatprep.mubr.f32.mxu0 0.0
        %8169 = vmatmul.mubr.f32.gmra.mrb[0].mxu0 %v7958
        %v8170 = vpop.f32.mrb[0].mxu0
        %v8171 = vadd.f32 0.0, %v8170
        %v8172 = vpop.f32.mrb[0].mxu0
        %v8173 = vadd.f32 0.0, %v8172
        %8174 = vmatprep.mubr.f32.mxu0 0.0
        %8175 = vmatmul.mubr.f32.gmra.mrb[0].mxu0 %v7960
        %v8176 = vpop.f32.mrb[0].mxu0
        %v8177 = vadd.f32 0.0, %v8176
        %v8178 = vpop.f32.mrb[0].mxu0
        %v8179 = vadd.f32 0.0, %v8178
        %8180 = vmatprep.mubr.f32.mxu0 0.0
        %8181 = vmatmul.mubr.f32.gmra.mrb[0].mxu0 %v7962
        %v8182 = vpop.f32.mrb[0].mxu0
        %v8183 = vadd.f32 0.0, %v8182
        %v8184 = vpop.f32.mrb[0].mxu0
        %v8185 = vadd.f32 0.0, %v8184
        %8186 = vmatprep.mubr.f32.mxu0 0.0
        %8187 = vmatmul.mubr.f32.gmra.mrb[0].mxu0 %v7964
        %v8188 = vpop.f32.mrb[0].mxu0
        %v8189 = vadd.f32 0.0, %v8188
        %v8190 = vpop.f32.mrb[0].mxu0
        %v8191 = vadd.f32 0.0, %v8190
        %8192 = vmatprep.mubr.f32.mxu0 0.0
        %8193 = vmatmul.mubr.f32.gmra.mrb[0].mxu0 %v7966
        %v8194 = vpop.f32.mrb[0].mxu0
        %v8195 = vadd.f32 0.0, %v8194
        %v8196 = vpop.f32.mrb[0].mxu0
        %v8197 = vadd.f32 0.0, %v8196
        %8198 = vmatprep.mubr.f32.mxu0 0.0
        %8199 = vmatmul.mubr.f32.gmra.mrb[0].mxu0 %v7968
        %v8200 = vpop.f32.mrb[0].mxu0
        %v8201 = vadd.f32 0.0, %v8200
        %v8202 = vpop.f32.mrb[0].mxu0
        %v8203 = vadd.f32 0.0, %v8202
        %8204 = vmatprep.mubr.f32.mxu0 0.0
        %8205 = vmatmul.mubr.f32.gmra.mrb[0].mxu0 %v7970
        %v8206 = vpop.f32.mrb[0].mxu0
        %v8207 = vadd.f32 0.0, %v8206
        %v8208 = vpop.f32.mrb[0].mxu0
        %v8209 = vadd.f32 0.0, %v8208
        %8210 = vmatprep.mubr.f32.mxu0 0.0
        %8211 = vmatmul.mubr.f32.gmra.mrb[0].mxu0 %v7972
        %v8212 = vpop.f32.mrb[0].mxu0
        %v8213 = vadd.f32 0.0, %v8212
        %v8214 = vpop.f32.mrb[0].mxu0
        %v8215 = vadd.f32 0.0, %v8214
        %8216 = vmatprep.mubr.f32.mxu0 0.0
        %8217 = vmatmul.mubr.f32.gmra.mrb[0].mxu0 %v7974
        %v8218 = vpop.f32.mrb[0].mxu0
        %v8219 = vadd.f32 0.0, %v8218
        %v8220 = vpop.f32.mrb[0].mxu0
        %v8221 = vadd.f32 0.0, %v8220
        %8222 = vmatprep.mubr.f32.mxu0 0.0
        %8223 = vmatmul.mubr.f32.gmra.mrb[0].mxu0 %v7976
        %v8224 = vpop.f32.mrb[0].mxu0
        %v8225 = vadd.f32 0.0, %v8224
        %v8226 = vpop.f32.mrb[0].mxu0
        %v8227 = vadd.f32 0.0, %v8226
        %8228 = vmatprep.mubr.f32.mxu0 0.0
        %8229 = vmatmul.mubr.f32.gmra.mrb[0].mxu0 %v7978
        %v8230 = vpop.f32.mrb[0].mxu0
        %v8231 = vadd.f32 0.0, %v8230
        %v8232 = vpop.f32.mrb[0].mxu0
        %v8233 = vadd.f32 0.0, %v8232
        %8234 = vmatprep.mubr.f32.mxu0 0.0
        %8235 = vmatmul.mubr.f32.gmra.mrb[0].mxu0 %v7980
        %v8236 = vpop.f32.mrb[0].mxu0
        %v8237 = vadd.f32 0.0, %v8236
        %v8238 = vpop.f32.mrb[0].mxu0
        %v8239 = vadd.f32 0.0, %v8238
        %8240 = vmatprep.mubr.f32.mxu0 0.0
        %8241 = vmatmul.mubr.f32.gmra.mrb[0].mxu0 %v7982
        %v8242 = vpop.f32.mrb[0].mxu0
        %v8243 = vadd.f32 0.0, %v8242
        %v8244 = vpop.f32.mrb[0].mxu0
        %v8245 = vadd.f32 0.0, %v8244
        %8246 = vdwg.mxu0
        %v8247 = vmax.f32 %v8057, %v8069
        %v8248 = vmax.f32 %v8063, %v8075
        %v8249 = vmax.f32 %v8247, %v8081
        %v8250 = vmax.f32 %v8248, %v8087
        %v8251 = vmax.f32 %v8249, %v8093
        %v8252 = vmax.f32 %v8250, %v8099
        %v8253 = vmax.f32 %v8251, %v8105
        %v8254 = vmax.f32 %v8252, %v8111
        %v8255 = vmax.f32 %v8253, %v8117
        %v8256 = vmax.f32 %v8254, %v8123
        %v8257 = vmax.f32 %v8255, %v8129
        %v8258 = vmax.f32 %v8256, %v8135
        %v8259 = vmax.f32 %v8257, %v8141
        %v8260 = vmax.f32 %v8258, %v8147
        %v8261 = vmax.f32 %v8259, %v8153
        %v8262 = vmax.f32 %v8260, %v8159
        %v8263 = vmax.f32 %v8261, %v8165
        %v8264 = vmax.f32 %v8262, %v8171
        %v8265 = vmax.f32 %v8263, %v8177
        %v8266 = vmax.f32 %v8264, %v8183
        %v8267 = vmax.f32 %v8265, %v8189
        %v8268 = vmax.f32 %v8266, %v8195
        %v8269 = vmax.f32 %v8267, %v8201
        %v8270 = vmax.f32 %v8268, %v8207
        %v8271 = vmax.f32 %v8269, %v8213
        %v8272 = vmax.f32 %v8270, %v8219
        %v8273 = vmax.f32 %v8271, %v8225
        %v8274 = vmax.f32 %v8272, %v8231
        %v8275 = vmax.f32 %v8273, %v8237
        %v8276 = vmax.f32 %v8274, %v8243
        %v8277 = vmax.f32 %v8275, %v8276
        %v8278 = vrot.slane %v8277, 4
        %v8279 = vmax.f32 %v8277, %v8278
        %v8280 = vrot.slane %v8279, 2
        %v8281 = vmax.f32 %v8279, %v8280
        %v8282 = vrot.slane %v8281, 1
        %v8283 = vmax.f32 %v8281, %v8282
        %v8284 = vmax.f32 %v8059, %v8071
        %v8285 = vmax.f32 %v8065, %v8077
        %v8286 = vmax.f32 %v8284, %v8083
        %v8287 = vmax.f32 %v8285, %v8089
        %v8288 = vmax.f32 %v8286, %v8095
        %v8289 = vmax.f32 %v8287, %v8101
        %v8290 = vmax.f32 %v8288, %v8107
        %v8291 = vmax.f32 %v8289, %v8113
        %v8292 = vmax.f32 %v8290, %v8119
        %v8293 = vmax.f32 %v8291, %v8125
        %v8294 = vmax.f32 %v8292, %v8131
        %v8295 = vmax.f32 %v8293, %v8137
        %v8296 = vmax.f32 %v8294, %v8143
        %v8297 = vmax.f32 %v8295, %v8149
        %v8298 = vmax.f32 %v8296, %v8155
        %v8299 = vmax.f32 %v8297, %v8161
        %v8300 = vmax.f32 %v8298, %v8167
        %v8301 = vmax.f32 %v8299, %v8173
        %v8302 = vmax.f32 %v8300, %v8179
        %v8303 = vmax.f32 %v8301, %v8185
        %v8304 = vmax.f32 %v8302, %v8191
        %v8305 = vmax.f32 %v8303, %v8197
        %v8306 = vmax.f32 %v8304, %v8203
        %v8307 = vmax.f32 %v8305, %v8209
        %v8308 = vmax.f32 %v8306, %v8215
        %v8309 = vmax.f32 %v8307, %v8221
        %v8310 = vmax.f32 %v8308, %v8227
        %v8311 = vmax.f32 %v8309, %v8233
        %v8312 = vmax.f32 %v8310, %v8239
        %v8313 = vmax.f32 %v8311, %v8245
        %v8314 = vmax.f32 %v8312, %v8313
        %v8315 = vrot.slane %v8314, 4
        %v8316 = vmax.f32 %v8314, %v8315
        %v8317 = vrot.slane %v8316, 2
        %v8318 = vmax.f32 %v8316, %v8317
        %v8319 = vrot.slane %v8318, 1
        %v8320 = vmax.f32 %v8318, %v8319
        %v8321 = vsub.f32 %v8057, %v8283
        %v8322 = vsub.f32 %v8059, %v8320
        %v8323 = vsub.f32 %v8063, %v8283
        %v8324 = vsub.f32 %v8065, %v8320
        %v8325 = vsub.f32 %v8069, %v8283
        %v8326 = vsub.f32 %v8071, %v8320
        %v8327 = vsub.f32 %v8075, %v8283
        %v8328 = vsub.f32 %v8077, %v8320
        %v8329 = vsub.f32 %v8081, %v8283
        %v8330 = vsub.f32 %v8083, %v8320
        %v8331 = vsub.f32 %v8087, %v8283
        %v8332 = vsub.f32 %v8089, %v8320
        %v8333 = vsub.f32 %v8093, %v8283
        %v8334 = vsub.f32 %v8095, %v8320
        %v8335 = vsub.f32 %v8099, %v8283
        %v8336 = vsub.f32 %v8101, %v8320
        %v8337 = vsub.f32 %v8105, %v8283
        %v8338 = vsub.f32 %v8107, %v8320
        %v8339 = vsub.f32 %v8111, %v8283
        %v8340 = vsub.f32 %v8113, %v8320
        %v8341 = vsub.f32 %v8117, %v8283
        %v8342 = vsub.f32 %v8119, %v8320
        %v8343 = vsub.f32 %v8123, %v8283
        %v8344 = vsub.f32 %v8125, %v8320
        %v8345 = vsub.f32 %v8129, %v8283
        %v8346 = vsub.f32 %v8131, %v8320
        %v8347 = vsub.f32 %v8135, %v8283
        %v8348 = vsub.f32 %v8137, %v8320
        %v8349 = vsub.f32 %v8141, %v8283
        %v8350 = vsub.f32 %v8143, %v8320
        %v8351 = vsub.f32 %v8147, %v8283
        %v8352 = vsub.f32 %v8149, %v8320
        %v8353 = vsub.f32 %v8153, %v8283
        %v8354 = vsub.f32 %v8155, %v8320
        %v8355 = vsub.f32 %v8159, %v8283
        %v8356 = vsub.f32 %v8161, %v8320
        %v8357 = vsub.f32 %v8165, %v8283
        %v8358 = vsub.f32 %v8167, %v8320
        %v8359 = vsub.f32 %v8171, %v8283
        %v8360 = vsub.f32 %v8173, %v8320
        %v8361 = vsub.f32 %v8177, %v8283
        %v8362 = vsub.f32 %v8179, %v8320
        %v8363 = vsub.f32 %v8183, %v8283
        %v8364 = vsub.f32 %v8185, %v8320
        %v8365 = vsub.f32 %v8189, %v8283
        %v8366 = vsub.f32 %v8191, %v8320
        %v8367 = vsub.f32 %v8195, %v8283
        %v8368 = vsub.f32 %v8197, %v8320
        %v8369 = vsub.f32 %v8201, %v8283
        %v8370 = vsub.f32 %v8203, %v8320
        %v8371 = vsub.f32 %v8207, %v8283
        %v8372 = vsub.f32 %v8209, %v8320
        %v8373 = vsub.f32 %v8213, %v8283
        %v8374 = vsub.f32 %v8215, %v8320
        %v8375 = vsub.f32 %v8219, %v8283
        %v8376 = vsub.f32 %v8221, %v8320
        %v8377 = vsub.f32 %v8225, %v8283
        %v8378 = vsub.f32 %v8227, %v8320
        %v8379 = vsub.f32 %v8231, %v8283
        %v8380 = vsub.f32 %v8233, %v8320
        %v8381 = vsub.f32 %v8237, %v8283
        %v8382 = vsub.f32 %v8239, %v8320
        %v8383 = vsub.f32 %v8243, %v8283
        %v8384 = vsub.f32 %v8245, %v8320
        %v8385 = vmul.f32 %v8321, 1.442695
        %v8386 = vpow.pop %v8385
        %v8387 = vmul.f32 %v8322, 1.442695
        %v8388 = vpow.pop %v8387
        %v8389 = vmul.f32 %v8323, 1.442695
        %v8390 = vpow.pop %v8389
        %v8391 = vmul.f32 %v8324, 1.442695
        %v8392 = vpow.pop %v8391
        %v8393 = vmul.f32 %v8325, 1.442695
        %v8394 = vpow.pop %v8393
        %v8395 = vmul.f32 %v8326, 1.442695
        %v8396 = vpow.pop %v8395
        %v8397 = vmul.f32 %v8327, 1.442695
        %v8398 = vpow.pop %v8397
        %v8399 = vmul.f32 %v8328, 1.442695
        %v8400 = vpow.pop %v8399
        %v8401 = vmul.f32 %v8329, 1.442695
        %v8402 = vpow.pop %v8401
        %v8403 = vmul.f32 %v8330, 1.442695
        %v8404 = vpow.pop %v8403
        %v8405 = vmul.f32 %v8331, 1.442695
        %v8406 = vpow.pop %v8405
        %v8407 = vmul.f32 %v8332, 1.442695
        %v8408 = vpow.pop %v8407
        %v8409 = vmul.f32 %v8333, 1.442695
        %v8410 = vpow.pop %v8409
        %v8411 = vmul.f32 %v8334, 1.442695
        %v8412 = vpow.pop %v8411
        %v8413 = vmul.f32 %v8335, 1.442695
        %v8414 = vpow.pop %v8413
        %v8415 = vmul.f32 %v8336, 1.442695
        %v8416 = vpow.pop %v8415
        %v8417 = vmul.f32 %v8337, 1.442695
        %v8418 = vpow.pop %v8417
        %v8419 = vmul.f32 %v8338, 1.442695
        %v8420 = vpow.pop %v8419
        %v8421 = vmul.f32 %v8339, 1.442695
        %v8422 = vpow.pop %v8421
        %v8423 = vmul.f32 %v8340, 1.442695
        %v8424 = vpow.pop %v8423
        %v8425 = vmul.f32 %v8341, 1.442695
        %v8426 = vpow.pop %v8425
        %v8427 = vmul.f32 %v8342, 1.442695
        %v8428 = vpow.pop %v8427
        %v8429 = vmul.f32 %v8343, 1.442695
        %v8430 = vpow.pop %v8429
        %v8431 = vmul.f32 %v8344, 1.442695
        %v8432 = vpow.pop %v8431
        %v8433 = vmul.f32 %v8345, 1.442695
        %v8434 = vpow.pop %v8433
        %v8435 = vmul.f32 %v8346, 1.442695
        %v8436 = vpow.pop %v8435
        %v8437 = vmul.f32 %v8347, 1.442695
        %v8438 = vpow.pop %v8437
        %v8439 = vmul.f32 %v8348, 1.442695
        %v8440 = vpow.pop %v8439
        %v8441 = vmul.f32 %v8349, 1.442695
        %v8442 = vpow.pop %v8441
        %v8443 = vmul.f32 %v8350, 1.442695
        %v8444 = vpow.pop %v8443
        %v8445 = vmul.f32 %v8351, 1.442695
        %v8446 = vpow.pop %v8445
        %v8447 = vmul.f32 %v8352, 1.442695
        %v8448 = vpow.pop %v8447
        %v8449 = vmul.f32 %v8353, 1.442695
        %v8450 = vpow.pop %v8449
        %v8451 = vmul.f32 %v8354, 1.442695
        %v8452 = vpow.pop %v8451
        %v8453 = vmul.f32 %v8355, 1.442695
        %v8454 = vpow.pop %v8453
        %v8455 = vmul.f32 %v8356, 1.442695
        %v8456 = vpow.pop %v8455
        %v8457 = vmul.f32 %v8357, 1.442695
        %v8458 = vpow.pop %v8457
        %v8459 = vmul.f32 %v8358, 1.442695
        %v8460 = vpow.pop %v8459
        %v8461 = vmul.f32 %v8359, 1.442695
        %v8462 = vpow.pop %v8461
        %v8463 = vmul.f32 %v8360, 1.442695
        %v8464 = vpow.pop %v8463
        %v8465 = vmul.f32 %v8361, 1.442695
        %v8466 = vpow.pop %v8465
        %v8467 = vmul.f32 %v8362, 1.442695
        %v8468 = vpow.pop %v8467
        %v8469 = vmul.f32 %v8363, 1.442695
        %v8470 = vpow.pop %v8469
        %v8471 = vmul.f32 %v8364, 1.442695
        %v8472 = vpow.pop %v8471
        %v8473 = vmul.f32 %v8365, 1.442695
        %v8474 = vpow.pop %v8473
        %v8475 = vmul.f32 %v8366, 1.442695
        %v8476 = vpow.pop %v8475
        %v8477 = vmul.f32 %v8367, 1.442695
        %v8478 = vpow.pop %v8477
        %v8479 = vmul.f32 %v8368, 1.442695
        %v8480 = vpow.pop %v8479
        %v8481 = vmul.f32 %v8369, 1.442695
        %v8482 = vpow.pop %v8481
        %v8483 = vmul.f32 %v8370, 1.442695
        %v8484 = vpow.pop %v8483
        %v8485 = vmul.f32 %v8371, 1.442695
        %v8486 = vpow.pop %v8485
        %v8487 = vmul.f32 %v8372, 1.442695
        %v8488 = vpow.pop %v8487
        %v8489 = vmul.f32 %v8373, 1.442695
        %v8490 = vpow.pop %v8489
        %v8491 = vmul.f32 %v8374, 1.442695
        %v8492 = vpow.pop %v8491
        %v8493 = vmul.f32 %v8375, 1.442695
        %v8494 = vpow.pop %v8493
        %v8495 = vmul.f32 %v8376, 1.442695
        %v8496 = vpow.pop %v8495
        %v8497 = vmul.f32 %v8377, 1.442695
        %v8498 = vpow.pop %v8497
        %v8499 = vmul.f32 %v8378, 1.442695
        %v8500 = vpow.pop %v8499
        %v8501 = vmul.f32 %v8379, 1.442695
        %v8502 = vpow.pop %v8501
        %v8503 = vmul.f32 %v8380, 1.442695
        %v8504 = vpow.pop %v8503
        %v8505 = vmul.f32 %v8381, 1.442695
        %v8506 = vpow.pop %v8505
        %v8507 = vmul.f32 %v8382, 1.442695
        %v8508 = vpow.pop %v8507
        %v8509 = vmul.f32 %v8383, 1.442695
        %v8510 = vpow.pop %v8509
        %v8511 = vmul.f32 %v8384, 1.442695
        %v8512 = vpow.pop %v8511
        %v8513 = vadd.f32 %v8386, %v8390
        %v8514 = vadd.f32 %v8513, %v8394
        %v8515 = vadd.f32 %v8514, %v8398
        %v8516 = vadd.f32 %v8515, %v8402
        %v8517 = vadd.f32 %v8516, %v8406
        %v8518 = vadd.f32 %v8517, %v8410
        %v8519 = vadd.f32 %v8518, %v8414
        %v8520 = vadd.f32 %v8519, %v8418
        %v8521 = vadd.f32 %v8520, %v8422
        %v8522 = vadd.f32 %v8521, %v8426
        %v8523 = vadd.f32 %v8522, %v8430
        %v8524 = vadd.f32 %v8523, %v8434
        %v8525 = vadd.f32 %v8524, %v8438
        %v8526 = vadd.f32 %v8525, %v8442
        %v8527 = vadd.f32 %v8526, %v8446
        %v8528 = vadd.f32 %v8527, %v8450
        %v8529 = vadd.f32 %v8528, %v8454
        %v8530 = vadd.f32 %v8529, %v8458
        %v8531 = vadd.f32 %v8530, %v8462
        %v8532 = vadd.f32 %v8531, %v8466
        %v8533 = vadd.f32 %v8532, %v8470
        %v8534 = vadd.f32 %v8533, %v8474
        %v8535 = vadd.f32 %v8534, %v8478
        %v8536 = vadd.f32 %v8535, %v8482
        %v8537 = vadd.f32 %v8536, %v8486
        %v8538 = vadd.f32 %v8537, %v8490
        %v8539 = vadd.f32 %v8538, %v8494
        %v8540 = vadd.f32 %v8539, %v8498
        %v8541 = vadd.f32 %v8540, %v8502
        %v8542 = vadd.f32 %v8541, %v8506
        %v8543 = vadd.f32 %v8542, %v8510
        %v8544 = vrot.slane %v8543, 4
        %v8545 = vadd.f32 %v8543, %v8544
        %v8546 = vrot.slane %v8545, 2
        %v8547 = vadd.f32 %v8545, %v8546
        %v8548 = vrot.slane %v8547, 1
        %v8549 = vadd.f32 %v8547, %v8548
        %v8550 = vadd.f32 %v8388, %v8392
        %v8551 = vadd.f32 %v8550, %v8396
        %v8552 = vadd.f32 %v8551, %v8400
        %v8553 = vadd.f32 %v8552, %v8404
        %v8554 = vadd.f32 %v8553, %v8408
        %v8555 = vadd.f32 %v8554, %v8412
        %v8556 = vadd.f32 %v8555, %v8416
        %v8557 = vadd.f32 %v8556, %v8420
        %v8558 = vadd.f32 %v8557, %v8424
        %v8559 = vadd.f32 %v8558, %v8428
        %v8560 = vadd.f32 %v8559, %v8432
        %v8561 = vadd.f32 %v8560, %v8436
        %v8562 = vadd.f32 %v8561, %v8440
        %v8563 = vadd.f32 %v8562, %v8444
        %v8564 = vadd.f32 %v8563, %v8448
        %v8565 = vadd.f32 %v8564, %v8452
        %v8566 = vadd.f32 %v8565, %v8456
        %v8567 = vadd.f32 %v8566, %v8460
        %v8568 = vadd.f32 %v8567, %v8464
        %v8569 = vadd.f32 %v8568, %v8468
        %v8570 = vadd.f32 %v8569, %v8472
        %v8571 = vadd.f32 %v8570, %v8476
        %v8572 = vadd.f32 %v8571, %v8480
        %v8573 = vadd.f32 %v8572, %v8484
        %v8574 = vadd.f32 %v8573, %v8488
        %v8575 = vadd.f32 %v8574, %v8492
        %v8576 = vadd.f32 %v8575, %v8496
        %v8577 = vadd.f32 %v8576, %v8500
        %v8578 = vadd.f32 %v8577, %v8504
        %v8579 = vadd.f32 %v8578, %v8508
        %v8580 = vadd.f32 %v8579, %v8512
        %v8581 = vrot.slane %v8580, 4
        %v8582 = vadd.f32 %v8580, %v8581
        %v8583 = vrot.slane %v8582, 2
        %v8584 = vadd.f32 %v8582, %v8583
        %v8585 = vrot.slane %v8584, 1
        %v8586 = vadd.f32 %v8584, %v8585
        %v8587 = vrcp.pop %v8549
        %v8588 = vmul.f32 1.0, %v8587
        %v8589 = vrcp.pop %v8586
        %v8590 = vmul.f32 1.0, %v8589
        %8591 = vmatprep.subr.mxu0 %v8388
        %8592 = vmatpush1.msra.mxu0 %v8386
        %8593 = vmatprep.subr.mxu0 %v8392
        %8594 = vmatpush1.msra.mxu0 %v8390
        %8595 = vmatprep.subr.mxu0 %v8396
        %8596 = vmatpush1.msra.mxu0 %v8394
        %8597 = vmatprep.subr.mxu0 %v8400
        %8598 = vmatpush1.msra.mxu0 %v8398
        %8599 = vmatprep.subr.mxu0 %v8404
        %8600 = vmatpush1.msra.mxu0 %v8402
        %8601 = vmatprep.subr.mxu0 %v8408
        %8602 = vmatpush1.msra.mxu0 %v8406
        %8603 = vmatprep.subr.mxu0 %v8412
        %8604 = vmatpush1.msra.mxu0 %v8410
        %8605 = vmatprep.subr.mxu0 %v8416
        %8606 = vmatpush1.msra.mxu0 %v8414
        %8607 = vmatprep.subr.mxu0 %v8420
        %8608 = vmatpush1.msra.mxu0 %v8418
        %8609 = vmatprep.subr.mxu0 %v8424
        %8610 = vmatpush1.msra.mxu0 %v8422
        %8611 = vmatprep.subr.mxu0 %v8428
        %8612 = vmatpush1.msra.mxu0 %v8426
        %8613 = vmatprep.subr.mxu0 %v8432
        %8614 = vmatpush1.msra.mxu0 %v8430
        %8615 = vmatprep.subr.mxu0 %v8436
        %8616 = vmatpush1.msra.mxu0 %v8434
        %8617 = vmatprep.subr.mxu0 %v8440
        %8618 = vmatpush1.msra.mxu0 %v8438
        %8619 = vmatprep.subr.mxu0 %v8444
        %8620 = vmatpush1.msra.mxu0 %v8442
        %8621 = vmatprep.subr.mxu0 %v8448
        %8622 = vmatpush1.msra.mxu0 %v8446
        %8623 = vmatprep.subr.mxu0 %v8452
        %8624 = vmatpush1.msra.mxu0 %v8450
        %8625 = vmatprep.subr.mxu0 %v8456
        %8626 = vmatpush1.msra.mxu0 %v8454
        %8627 = vmatprep.subr.mxu0 %v8460
        %8628 = vmatpush1.msra.mxu0 %v8458
        %8629 = vmatprep.subr.mxu0 %v8464
        %8630 = vmatpush1.msra.mxu0 %v8462
        %8631 = vmatprep.subr.mxu0 %v8468
        %8632 = vmatpush1.msra.mxu0 %v8466
        %8633 = vmatprep.subr.mxu0 %v8472
        %8634 = vmatpush1.msra.mxu0 %v8470
        %8635 = vmatprep.subr.mxu0 %v8476
        %8636 = vmatpush1.msra.mxu0 %v8474
        %8637 = vmatprep.subr.mxu0 %v8480
        %8638 = vmatpush1.msra.mxu0 %v8478
        %8639 = vmatprep.subr.mxu0 %v8484
        %8640 = vmatpush1.msra.mxu0 %v8482
        %8641 = vmatprep.subr.mxu0 %v8488
        %8642 = vmatpush1.msra.mxu0 %v8486
        %8643 = vmatprep.subr.mxu0 %v8492
        %8644 = vmatpush1.msra.mxu0 %v8490
        %8645 = vmatprep.subr.mxu0 %v8496
        %8646 = vmatpush1.msra.mxu0 %v8494
        %8647 = vmatprep.subr.mxu0 %v8500
        %8648 = vmatpush1.msra.mxu0 %v8498
        %8649 = vmatprep.subr.mxu0 %v8504
        %8650 = vmatpush1.msra.mxu0 %v8502
        %8651 = vmatprep.subr.mxu0 %v8508
        %8652 = vmatpush1.msra.mxu0 %v8506
        %8653 = vmatprep.subr.mxu0 %v8512
        %8654 = vmatpush1.msra.mxu0 %v8510
        %8655 = vmatprep.mubr.f32.mxu0 %v5634
        %8656 = vmatmul.mubr.f32.gmra.mrb[0].mxu0 %v5632
        %v8657 = vpop.f32.mrb[0].mxu0
        %v8658 = vadd.f32 0.0, %v8657
        %v8659 = vpop.f32.mrb[0].mxu0
        %v8660 = vadd.f32 0.0, %v8659
        %8661 = vdwg.mxu0
        %v8662 = vmul.f32 %v8658, %v8588
        %v8663 = vmul.f32 %v8660, %v8590
        %8664 = vrot.lane.b32.xlu0 %v6476, 120
        %v8665 = vpop.permute.xlu0 %8664
        %8666 = vrot.lane.b32.xlu0 %v6477, 120
        %v8667 = vpop.permute.xlu0 %8666
        %v8668 = vsel %vm1329, %v8665, 0
        %v8670 = vsel %vm1329, %v8667, 0
        %v8673 = vsel %vm1426, %v8662, 0
        %v8676 = vsel %vm1426, %v8663, 0
        %8678 = vmatprep.subr.mxu0 %v8676
        %8679 = vmatpush1.msra.mxu0 %v8673
        %8680 = vmatprep.subr.mxu0 0.0
        %8681 = vmatpush1.msra.mxu0 0.0
        %8682 = vmatprep.subr.mxu0 0.0
        %8683 = vmatpush1.msra.mxu0 0.0
        %8684 = vmatprep.subr.mxu0 0.0
        %8685 = vmatpush1.msra.mxu0 0.0
        %8686 = vmatprep.subr.mxu0 0.0
        %8687 = vmatpush1.msra.mxu0 0.0
        %8688 = vmatprep.subr.mxu0 0.0
        %8689 = vmatpush1.msra.mxu0 0.0
        %8690 = vmatprep.subr.mxu0 0.0
        %8691 = vmatpush1.msra.mxu0 0.0
        %8692 = vmatprep.subr.mxu0 0.0
        %8693 = vmatpush1.msra.mxu0 0.0
        %8694 = vmatprep.subr.mxu0 0.0
        %8695 = vmatpush1.msra.mxu0 0.0
        %8696 = vmatprep.subr.mxu0 0.0
        %8697 = vmatpush1.msra.mxu0 0.0
        %8698 = vmatprep.subr.mxu0 0.0
        %8699 = vmatpush1.msra.mxu0 0.0
        %8700 = vmatprep.subr.mxu0 0.0
        %8701 = vmatpush1.msra.mxu0 0.0
        %8702 = vmatprep.subr.mxu0 0.0
        %8703 = vmatpush1.msra.mxu0 0.0
        %8704 = vmatprep.subr.mxu0 0.0
        %8705 = vmatpush1.msra.mxu0 0.0
        %8706 = vmatprep.subr.mxu0 0.0
        %8707 = vmatpush1.msra.mxu0 0.0
        %8708 = vmatprep.subr.mxu0 0.0
        %8709 = vmatpush1.msra.mxu0 0.0
        %8710 = vmatprep.subr.mxu0 0.0
        %8711 = vmatpush1.msra.mxu0 0.0
        %8712 = vmatprep.subr.mxu0 0.0
        %8713 = vmatpush1.msra.mxu0 0.0
        %8714 = vmatprep.subr.mxu0 0.0
        %8715 = vmatpush1.msra.mxu0 0.0
        %8716 = vmatprep.subr.mxu0 0.0
        %8717 = vmatpush1.msra.mxu0 0.0
        %8718 = vmatprep.subr.mxu0 0.0
        %8719 = vmatpush1.msra.mxu0 0.0
        %8720 = vmatprep.subr.mxu0 0.0
        %8721 = vmatpush1.msra.mxu0 0.0
        %8722 = vmatprep.subr.mxu0 0.0
        %8723 = vmatpush1.msra.mxu0 0.0
        %8724 = vmatprep.subr.mxu0 0.0
        %8725 = vmatpush1.msra.mxu0 0.0
        %8726 = vmatprep.subr.mxu0 0.0
        %8727 = vmatpush1.msra.mxu0 0.0
        %8728 = vmatprep.subr.mxu0 0.0
        %8729 = vmatpush1.msra.mxu0 0.0
        %8730 = vmatprep.subr.mxu0 0.0
        %8731 = vmatpush1.msra.mxu0 0.0
        %8732 = vmatprep.subr.mxu0 0.0
        %8733 = vmatpush1.msra.mxu0 0.0
        %8734 = vmatprep.subr.mxu0 0.0
        %8735 = vmatpush1.msra.mxu0 0.0
        %8736 = vmatprep.subr.mxu0 0.0
        %8737 = vmatpush1.msra.mxu0 0.0
        %8738 = vmatprep.subr.mxu0 0.0
        %8739 = vmatpush1.msra.mxu0 0.0
        %8740 = vmatprep.subr.mxu0 0.0
        %8741 = vmatpush1.msra.mxu0 0.0
        %8742 = vmatprep.mubr.f32.mxu0 0.0
        %8743 = vmatmul.mubr.f32.gmra.mrb[0].mxu0 %v8668
        %v8744 = vpop.f32.mrb[0].mxu0
        %v8745 = vadd.f32 0.0, %v8744
        %v8746 = vpop.f32.mrb[0].mxu0
        %v8747 = vadd.f32 0.0, %v8746
        %8748 = vmatprep.mubr.f32.mxu0 0.0
        %8749 = vmatmul.mubr.f32.gmra.mrb[0].mxu0 %v8670
        %v8750 = vpop.f32.mrb[0].mxu0
        %v8751 = vadd.f32 0.0, %v8750
        %v8752 = vpop.f32.mrb[0].mxu0
        %v8753 = vadd.f32 0.0, %v8752
        %8754 = vdwg.mxu0
        %v8755 = vadd.f32 %v7654, %v8745
        %v8756 = vadd.f32 %v7656, %v8747
        %v8757 = vadd.f32 %v7660, %v8751
        %v8758 = vadd.f32 %v7662, %v8753
        %8759 = vrot.lane.b32.xlu0 %v5652, 116
        %v8760 = vpop.permute.xlu0 %8759
        %8761 = vrot.lane.b32.xlu0 %v5653, 116
        %v8762 = vpop.permute.xlu0 %8761
        %8763 = vrot.lane.b32.xlu0 %v5654, 116
        %v8764 = vpop.permute.xlu0 %8763
        %8765 = vrot.lane.b32.xlu0 %v5655, 116
        %v8766 = vpop.permute.xlu0 %8765
        %8767 = vrot.lane.b32.xlu0 %v5656, 116
        %v8768 = vpop.permute.xlu0 %8767
        %8769 = vrot.lane.b32.xlu0 %v5657, 116
        %v8770 = vpop.permute.xlu0 %8769
        %8771 = vrot.lane.b32.xlu0 %v5658, 116
        %v8772 = vpop.permute.xlu0 %8771
        %8773 = vrot.lane.b32.xlu0 %v5659, 116
        %v8774 = vpop.permute.xlu0 %8773
        %8775 = vrot.lane.b32.xlu0 %v5660, 116
        %v8776 = vpop.permute.xlu0 %8775
        %8777 = vrot.lane.b32.xlu0 %v5661, 116
        %v8778 = vpop.permute.xlu0 %8777
        %8779 = vrot.lane.b32.xlu0 %v5662, 116
        %v8780 = vpop.permute.xlu0 %8779
        %8781 = vrot.lane.b32.xlu0 %v5663, 116
        %v8782 = vpop.permute.xlu0 %8781
        %8783 = vrot.lane.b32.xlu0 %v5664, 116
        %v8784 = vpop.permute.xlu0 %8783
        %8785 = vrot.lane.b32.xlu0 %v5665, 116
        %v8786 = vpop.permute.xlu0 %8785
        %8787 = vrot.lane.b32.xlu0 %v5666, 116
        %v8788 = vpop.permute.xlu0 %8787
        %8789 = vrot.lane.b32.xlu0 %v5667, 116
        %v8790 = vpop.permute.xlu0 %8789
        %8791 = vrot.lane.b32.xlu0 %v5684, 116
        %v8792 = vpop.permute.xlu0 %8791
        %8793 = vrot.lane.b32.xlu0 %v5685, 116
        %v8794 = vpop.permute.xlu0 %8793
        %8795 = vrot.lane.b32.xlu0 %v5686, 116
        %v8796 = vpop.permute.xlu0 %8795
        %8797 = vrot.lane.b32.xlu0 %v5687, 116
        %v8798 = vpop.permute.xlu0 %8797
        %8799 = vrot.lane.b32.xlu0 %v5688, 116
        %v8800 = vpop.permute.xlu0 %8799
        %8801 = vrot.lane.b32.xlu0 %v5689, 116
        %v8802 = vpop.permute.xlu0 %8801
        %8803 = vrot.lane.b32.xlu0 %v5690, 116
        %v8804 = vpop.permute.xlu0 %8803
        %8805 = vrot.lane.b32.xlu0 %v5691, 116
        %v8806 = vpop.permute.xlu0 %8805
        %8807 = vrot.lane.b32.xlu0 %v5692, 116
        %v8808 = vpop.permute.xlu0 %8807
        %8809 = vrot.lane.b32.xlu0 %v5693, 116
        %v8810 = vpop.permute.xlu0 %8809
        %8811 = vrot.lane.b32.xlu0 %v5694, 116
        %v8812 = vpop.permute.xlu0 %8811
        %8813 = vrot.lane.b32.xlu0 %v5695, 116
        %v8814 = vpop.permute.xlu0 %8813
        %8815 = vrot.lane.b32.xlu0 %v5696, 116
        %v8816 = vpop.permute.xlu0 %8815
        %8817 = vrot.lane.b32.xlu0 %v5697, 116
        %v8818 = vpop.permute.xlu0 %8817
        %8819 = vrot.lane.b32.xlu0 %v5698, 116
        %v8820 = vpop.permute.xlu0 %8819
        %8821 = vrot.lane.b32.xlu0 %v5699, 116
        %v8822 = vpop.permute.xlu0 %8821
        %v8823 = vrot.slane %v5608, 4
        %v8824 = vrot.slane %v5610, 4
        %v8825 = vsel %vm1329, %v8760, 0
        %v8827 = vsel %vm1329, %v8762, 0
        %v8829 = vsel %vm1329, %v8764, 0
        %v8831 = vsel %vm1329, %v8766, 0
        %v8833 = vsel %vm1329, %v8768, 0
        %v8835 = vsel %vm1329, %v8770, 0
        %v8837 = vsel %vm1329, %v8772, 0
        %v8839 = vsel %vm1329, %v8774, 0
        %v8841 = vsel %vm1329, %v8776, 0
        %v8843 = vsel %vm1329, %v8778, 0
        %v8845 = vsel %vm1329, %v8780, 0
        %v8847 = vsel %vm1329, %v8782, 0
        %v8849 = vsel %vm1329, %v8784, 0
        %v8851 = vsel %vm1329, %v8786, 0
        %v8853 = vsel %vm1329, %v8788, 0
        %v8855 = vsel %vm1329, %v8790, 0
        %v8857 = vsel %vm1329, %v8792, 0
        %v8859 = vsel %vm1329, %v8794, 0
        %v8861 = vsel %vm1329, %v8796, 0
        %v8863 = vsel %vm1329, %v8798, 0
        %v8865 = vsel %vm1329, %v8800, 0
        %v8867 = vsel %vm1329, %v8802, 0
        %v8869 = vsel %vm1329, %v8804, 0
        %v8871 = vsel %vm1329, %v8806, 0
        %v8873 = vsel %vm1329, %v8808, 0
        %v8875 = vsel %vm1329, %v8810, 0
        %v8877 = vsel %vm1329, %v8812, 0
        %v8879 = vsel %vm1329, %v8814, 0
        %v8881 = vsel %vm1329, %v8816, 0
        %v8883 = vsel %vm1329, %v8818, 0
        %v8885 = vsel %vm1329, %v8820, 0
        %v8887 = vsel %vm1329, %v8822, 0
        %v8889 = vsel %vm1426, %v8823, 0
        %v8891 = vsel %vm1426, %v8824, 0
        %8893 = vmatprep.subr.mxu0 %v8891
        %8894 = vmatpush1.msra.mxu0 %v8889
        %8895 = vmatprep.subr.mxu0 0.0
        %8896 = vmatpush1.msra.mxu0 0.0
        %8897 = vmatprep.subr.mxu0 0.0
        %8898 = vmatpush1.msra.mxu0 0.0
        %8899 = vmatprep.subr.mxu0 0.0
        %8900 = vmatpush1.msra.mxu0 0.0
        %8901 = vmatprep.subr.mxu0 0.0
        %8902 = vmatpush1.msra.mxu0 0.0
        %8903 = vmatprep.subr.mxu0 0.0
        %8904 = vmatpush1.msra.mxu0 0.0
        %8905 = vmatprep.subr.mxu0 0.0
        %8906 = vmatpush1.msra.mxu0 0.0
        %8907 = vmatprep.subr.mxu0 0.0
        %8908 = vmatpush1.msra.mxu0 0.0
        %8909 = vmatprep.subr.mxu0 0.0
        %8910 = vmatpush1.msra.mxu0 0.0
        %8911 = vmatprep.subr.mxu0 0.0
        %8912 = vmatpush1.msra.mxu0 0.0
        %8913 = vmatprep.subr.mxu0 0.0
        %8914 = vmatpush1.msra.mxu0 0.0
        %8915 = vmatprep.subr.mxu0 0.0
        %8916 = vmatpush1.msra.mxu0 0.0
        %8917 = vmatprep.subr.mxu0 0.0
        %8918 = vmatpush1.msra.mxu0 0.0
        %8919 = vmatprep.subr.mxu0 0.0
        %8920 = vmatpush1.msra.mxu0 0.0
        %8921 = vmatprep.subr.mxu0 0.0
        %8922 = vmatpush1.msra.mxu0 0.0
        %8923 = vmatprep.subr.mxu0 0.0
        %8924 = vmatpush1.msra.mxu0 0.0
        %8925 = vmatprep.subr.mxu0 0.0
        %8926 = vmatpush1.msra.mxu0 0.0
        %8927 = vmatprep.subr.mxu0 0.0
        %8928 = vmatpush1.msra.mxu0 0.0
        %8929 = vmatprep.subr.mxu0 0.0
        %8930 = vmatpush1.msra.mxu0 0.0
        %8931 = vmatprep.subr.mxu0 0.0
        %8932 = vmatpush1.msra.mxu0 0.0
        %8933 = vmatprep.subr.mxu0 0.0
        %8934 = vmatpush1.msra.mxu0 0.0
        %8935 = vmatprep.subr.mxu0 0.0
        %8936 = vmatpush1.msra.mxu0 0.0
        %8937 = vmatprep.subr.mxu0 0.0
        %8938 = vmatpush1.msra.mxu0 0.0
        %8939 = vmatprep.subr.mxu0 0.0
        %8940 = vmatpush1.msra.mxu0 0.0
        %8941 = vmatprep.subr.mxu0 0.0
        %8942 = vmatpush1.msra.mxu0 0.0
        %8943 = vmatprep.subr.mxu0 0.0
        %8944 = vmatpush1.msra.mxu0 0.0
        %8945 = vmatprep.subr.mxu0 0.0
        %8946 = vmatpush1.msra.mxu0 0.0
        %8947 = vmatprep.subr.mxu0 0.0
        %8948 = vmatpush1.msra.mxu0 0.0
        %8949 = vmatprep.subr.mxu0 0.0
        %8950 = vmatpush1.msra.mxu0 0.0
        %8951 = vmatprep.subr.mxu0 0.0
        %8952 = vmatpush1.msra.mxu0 0.0
        %8953 = vmatprep.subr.mxu0 0.0
        %8954 = vmatpush1.msra.mxu0 0.0
        %8955 = vmatprep.subr.mxu0 0.0
        %8956 = vmatpush1.msra.mxu0 0.0
        %8957 = vmatprep.mubr.f32.mxu0 0.0
        %8958 = vmatmul.mubr.f32.gmra.mrb[0].mxu0 %v8825
        %v8959 = vpop.f32.mrb[0].mxu0
        %v8960 = vadd.f32 0.0, %v8959
        %v8961 = vpop.f32.mrb[0].mxu0
        %v8962 = vadd.f32 0.0, %v8961
        %8963 = vmatprep.mubr.f32.mxu0 0.0
        %8964 = vmatmul.mubr.f32.gmra.mrb[0].mxu0 %v8827
        %v8965 = vpop.f32.mrb[0].mxu0
        %v8966 = vadd.f32 0.0, %v8965
        %v8967 = vpop.f32.mrb[0].mxu0
        %v8968 = vadd.f32 0.0, %v8967
        %8969 = vmatprep.mubr.f32.mxu0 0.0
        %8970 = vmatmul.mubr.f32.gmra.mrb[0].mxu0 %v8829
        %v8971 = vpop.f32.mrb[0].mxu0
        %v8972 = vadd.f32 0.0, %v8971
        %v8973 = vpop.f32.mrb[0].mxu0
        %v8974 = vadd.f32 0.0, %v8973
        %8975 = vmatprep.mubr.f32.mxu0 0.0
        %8976 = vmatmul.mubr.f32.gmra.mrb[0].mxu0 %v8831
        %v8977 = vpop.f32.mrb[0].mxu0
        %v8978 = vadd.f32 0.0, %v8977
        %v8979 = vpop.f32.mrb[0].mxu0
        %v8980 = vadd.f32 0.0, %v8979
        %8981 = vmatprep.mubr.f32.mxu0 0.0
        %8982 = vmatmul.mubr.f32.gmra.mrb[0].mxu0 %v8833
        %v8983 = vpop.f32.mrb[0].mxu0
        %v8984 = vadd.f32 0.0, %v8983
        %v8985 = vpop.f32.mrb[0].mxu0
        %v8986 = vadd.f32 0.0, %v8985
        %8987 = vmatprep.mubr.f32.mxu0 0.0
        %8988 = vmatmul.mubr.f32.gmra.mrb[0].mxu0 %v8835
        %v8989 = vpop.f32.mrb[0].mxu0
        %v8990 = vadd.f32 0.0, %v8989
        %v8991 = vpop.f32.mrb[0].mxu0
        %v8992 = vadd.f32 0.0, %v8991
        %8993 = vmatprep.mubr.f32.mxu0 0.0
        %8994 = vmatmul.mubr.f32.gmra.mrb[0].mxu0 %v8837
        %v8995 = vpop.f32.mrb[0].mxu0
        %v8996 = vadd.f32 0.0, %v8995
        %v8997 = vpop.f32.mrb[0].mxu0
        %v8998 = vadd.f32 0.0, %v8997
        %8999 = vmatprep.mubr.f32.mxu0 0.0
        %9000 = vmatmul.mubr.f32.gmra.mrb[0].mxu0 %v8839
        %v9001 = vpop.f32.mrb[0].mxu0
        %v9002 = vadd.f32 0.0, %v9001
        %v9003 = vpop.f32.mrb[0].mxu0
        %v9004 = vadd.f32 0.0, %v9003
        %9005 = vmatprep.mubr.f32.mxu0 0.0
        %9006 = vmatmul.mubr.f32.gmra.mrb[0].mxu0 %v8841
        %v9007 = vpop.f32.mrb[0].mxu0
        %v9008 = vadd.f32 0.0, %v9007
        %v9009 = vpop.f32.mrb[0].mxu0
        %v9010 = vadd.f32 0.0, %v9009
        %9011 = vmatprep.mubr.f32.mxu0 0.0
        %9012 = vmatmul.mubr.f32.gmra.mrb[0].mxu0 %v8843
        %v9013 = vpop.f32.mrb[0].mxu0
        %v9014 = vadd.f32 0.0, %v9013
        %v9015 = vpop.f32.mrb[0].mxu0
        %v9016 = vadd.f32 0.0, %v9015
        %9017 = vmatprep.mubr.f32.mxu0 0.0
        %9018 = vmatmul.mubr.f32.gmra.mrb[0].mxu0 %v8845
        %v9019 = vpop.f32.mrb[0].mxu0
        %v9020 = vadd.f32 0.0, %v9019
        %v9021 = vpop.f32.mrb[0].mxu0
        %v9022 = vadd.f32 0.0, %v9021
        %9023 = vmatprep.mubr.f32.mxu0 0.0
        %9024 = vmatmul.mubr.f32.gmra.mrb[0].mxu0 %v8847
        %v9025 = vpop.f32.mrb[0].mxu0
        %v9026 = vadd.f32 0.0, %v9025
        %v9027 = vpop.f32.mrb[0].mxu0
        %v9028 = vadd.f32 0.0, %v9027
        %9029 = vmatprep.mubr.f32.mxu0 0.0
        %9030 = vmatmul.mubr.f32.gmra.mrb[0].mxu0 %v8849
        %v9031 = vpop.f32.mrb[0].mxu0
        %v9032 = vadd.f32 0.0, %v9031
        %v9033 = vpop.f32.mrb[0].mxu0
        %v9034 = vadd.f32 0.0, %v9033
        %9035 = vmatprep.mubr.f32.mxu0 0.0
        %9036 = vmatmul.mubr.f32.gmra.mrb[0].mxu0 %v8851
        %v9037 = vpop.f32.mrb[0].mxu0
        %v9038 = vadd.f32 0.0, %v9037
        %v9039 = vpop.f32.mrb[0].mxu0
        %v9040 = vadd.f32 0.0, %v9039
        %9041 = vmatprep.mubr.f32.mxu0 0.0
        %9042 = vmatmul.mubr.f32.gmra.mrb[0].mxu0 %v8853
        %v9043 = vpop.f32.mrb[0].mxu0
        %v9044 = vadd.f32 0.0, %v9043
        %v9045 = vpop.f32.mrb[0].mxu0
        %v9046 = vadd.f32 0.0, %v9045
        %9047 = vmatprep.mubr.f32.mxu0 0.0
        %9048 = vmatmul.mubr.f32.gmra.mrb[0].mxu0 %v8855
        %v9049 = vpop.f32.mrb[0].mxu0
        %v9050 = vadd.f32 0.0, %v9049
        %v9051 = vpop.f32.mrb[0].mxu0
        %v9052 = vadd.f32 0.0, %v9051
        %9053 = vmatprep.mubr.f32.mxu0 0.0
        %9054 = vmatmul.mubr.f32.gmra.mrb[0].mxu0 %v8857
        %v9055 = vpop.f32.mrb[0].mxu0
        %v9056 = vadd.f32 0.0, %v9055
        %v9057 = vpop.f32.mrb[0].mxu0
        %v9058 = vadd.f32 0.0, %v9057
        %9059 = vmatprep.mubr.f32.mxu0 0.0
        %9060 = vmatmul.mubr.f32.gmra.mrb[0].mxu0 %v8859
        %v9061 = vpop.f32.mrb[0].mxu0
        %v9062 = vadd.f32 0.0, %v9061
        %v9063 = vpop.f32.mrb[0].mxu0
        %v9064 = vadd.f32 0.0, %v9063
        %9065 = vmatprep.mubr.f32.mxu0 0.0
        %9066 = vmatmul.mubr.f32.gmra.mrb[0].mxu0 %v8861
        %v9067 = vpop.f32.mrb[0].mxu0
        %v9068 = vadd.f32 0.0, %v9067
        %v9069 = vpop.f32.mrb[0].mxu0
        %v9070 = vadd.f32 0.0, %v9069
        %9071 = vmatprep.mubr.f32.mxu0 0.0
        %9072 = vmatmul.mubr.f32.gmra.mrb[0].mxu0 %v8863
        %v9073 = vpop.f32.mrb[0].mxu0
        %v9074 = vadd.f32 0.0, %v9073
        %v9075 = vpop.f32.mrb[0].mxu0
        %v9076 = vadd.f32 0.0, %v9075
        %9077 = vmatprep.mubr.f32.mxu0 0.0
        %9078 = vmatmul.mubr.f32.gmra.mrb[0].mxu0 %v8865
        %v9079 = vpop.f32.mrb[0].mxu0
        %v9080 = vadd.f32 0.0, %v9079
        %v9081 = vpop.f32.mrb[0].mxu0
        %v9082 = vadd.f32 0.0, %v9081
        %9083 = vmatprep.mubr.f32.mxu0 0.0
        %9084 = vmatmul.mubr.f32.gmra.mrb[0].mxu0 %v8867
        %v9085 = vpop.f32.mrb[0].mxu0
        %v9086 = vadd.f32 0.0, %v9085
        %v9087 = vpop.f32.mrb[0].mxu0
        %v9088 = vadd.f32 0.0, %v9087
        %9089 = vmatprep.mubr.f32.mxu0 0.0
        %9090 = vmatmul.mubr.f32.gmra.mrb[0].mxu0 %v8869
        %v9091 = vpop.f32.mrb[0].mxu0
        %v9092 = vadd.f32 0.0, %v9091
        %v9093 = vpop.f32.mrb[0].mxu0
        %v9094 = vadd.f32 0.0, %v9093
        %9095 = vmatprep.mubr.f32.mxu0 0.0
        %9096 = vmatmul.mubr.f32.gmra.mrb[0].mxu0 %v8871
        %v9097 = vpop.f32.mrb[0].mxu0
        %v9098 = vadd.f32 0.0, %v9097
        %v9099 = vpop.f32.mrb[0].mxu0
        %v9100 = vadd.f32 0.0, %v9099
        %9101 = vmatprep.mubr.f32.mxu0 0.0
        %9102 = vmatmul.mubr.f32.gmra.mrb[0].mxu0 %v8873
        %v9103 = vpop.f32.mrb[0].mxu0
        %v9104 = vadd.f32 0.0, %v9103
        %v9105 = vpop.f32.mrb[0].mxu0
        %v9106 = vadd.f32 0.0, %v9105
        %9107 = vmatprep.mubr.f32.mxu0 0.0
        %9108 = vmatmul.mubr.f32.gmra.mrb[0].mxu0 %v8875
        %v9109 = vpop.f32.mrb[0].mxu0
        %v9110 = vadd.f32 0.0, %v9109
        %v9111 = vpop.f32.mrb[0].mxu0
        %v9112 = vadd.f32 0.0, %v9111
        %9113 = vmatprep.mubr.f32.mxu0 0.0
        %9114 = vmatmul.mubr.f32.gmra.mrb[0].mxu0 %v8877
        %v9115 = vpop.f32.mrb[0].mxu0
        %v9116 = vadd.f32 0.0, %v9115
        %v9117 = vpop.f32.mrb[0].mxu0
        %v9118 = vadd.f32 0.0, %v9117
        %9119 = vmatprep.mubr.f32.mxu0 0.0
        %9120 = vmatmul.mubr.f32.gmra.mrb[0].mxu0 %v8879
        %v9121 = vpop.f32.mrb[0].mxu0
        %v9122 = vadd.f32 0.0, %v9121
        %v9123 = vpop.f32.mrb[0].mxu0
        %v9124 = vadd.f32 0.0, %v9123
        %9125 = vmatprep.mubr.f32.mxu0 0.0
        %9126 = vmatmul.mubr.f32.gmra.mrb[0].mxu0 %v8881
        %v9127 = vpop.f32.mrb[0].mxu0
        %v9128 = vadd.f32 0.0, %v9127
        %v9129 = vpop.f32.mrb[0].mxu0
        %v9130 = vadd.f32 0.0, %v9129
        %9131 = vmatprep.mubr.f32.mxu0 0.0
        %9132 = vmatmul.mubr.f32.gmra.mrb[0].mxu0 %v8883
        %v9133 = vpop.f32.mrb[0].mxu0
        %v9134 = vadd.f32 0.0, %v9133
        %v9135 = vpop.f32.mrb[0].mxu0
        %v9136 = vadd.f32 0.0, %v9135
        %9137 = vmatprep.mubr.f32.mxu0 0.0
        %9138 = vmatmul.mubr.f32.gmra.mrb[0].mxu0 %v8885
        %v9139 = vpop.f32.mrb[0].mxu0
        %v9140 = vadd.f32 0.0, %v9139
        %v9141 = vpop.f32.mrb[0].mxu0
        %v9142 = vadd.f32 0.0, %v9141
        %9143 = vmatprep.mubr.f32.mxu0 0.0
        %9144 = vmatmul.mubr.f32.gmra.mrb[0].mxu0 %v8887
        %v9145 = vpop.f32.mrb[0].mxu0
        %v9146 = vadd.f32 0.0, %v9145
        %v9147 = vpop.f32.mrb[0].mxu0
        %v9148 = vadd.f32 0.0, %v9147
        %9149 = vdwg.mxu0
        %v9150 = vmax.f32 %v8960, %v8972
        %v9151 = vmax.f32 %v8966, %v8978
        %v9152 = vmax.f32 %v9150, %v8984
        %v9153 = vmax.f32 %v9151, %v8990
        %v9154 = vmax.f32 %v9152, %v8996
        %v9155 = vmax.f32 %v9153, %v9002
        %v9156 = vmax.f32 %v9154, %v9008
        %v9157 = vmax.f32 %v9155, %v9014
        %v9158 = vmax.f32 %v9156, %v9020
        %v9159 = vmax.f32 %v9157, %v9026
        %v9160 = vmax.f32 %v9158, %v9032
        %v9161 = vmax.f32 %v9159, %v9038
        %v9162 = vmax.f32 %v9160, %v9044
        %v9163 = vmax.f32 %v9161, %v9050
        %v9164 = vmax.f32 %v9162, %v9056
        %v9165 = vmax.f32 %v9163, %v9062
        %v9166 = vmax.f32 %v9164, %v9068
        %v9167 = vmax.f32 %v9165, %v9074
        %v9168 = vmax.f32 %v9166, %v9080
        %v9169 = vmax.f32 %v9167, %v9086
        %v9170 = vmax.f32 %v9168, %v9092
        %v9171 = vmax.f32 %v9169, %v9098
        %v9172 = vmax.f32 %v9170, %v9104
        %v9173 = vmax.f32 %v9171, %v9110
        %v9174 = vmax.f32 %v9172, %v9116
        %v9175 = vmax.f32 %v9173, %v9122
        %v9176 = vmax.f32 %v9174, %v9128
        %v9177 = vmax.f32 %v9175, %v9134
        %v9178 = vmax.f32 %v9176, %v9140
        %v9179 = vmax.f32 %v9177, %v9146
        %v9180 = vmax.f32 %v9178, %v9179
        %v9181 = vrot.slane %v9180, 4
        %v9182 = vmax.f32 %v9180, %v9181
        %v9183 = vrot.slane %v9182, 2
        %v9184 = vmax.f32 %v9182, %v9183
        %v9185 = vrot.slane %v9184, 1
        %v9186 = vmax.f32 %v9184, %v9185
        %v9187 = vmax.f32 %v8962, %v8974
        %v9188 = vmax.f32 %v8968, %v8980
        %v9189 = vmax.f32 %v9187, %v8986
        %v9190 = vmax.f32 %v9188, %v8992
        %v9191 = vmax.f32 %v9189, %v8998
        %v9192 = vmax.f32 %v9190, %v9004
        %v9193 = vmax.f32 %v9191, %v9010
        %v9194 = vmax.f32 %v9192, %v9016
        %v9195 = vmax.f32 %v9193, %v9022
        %v9196 = vmax.f32 %v9194, %v9028
        %v9197 = vmax.f32 %v9195, %v9034
        %v9198 = vmax.f32 %v9196, %v9040
        %v9199 = vmax.f32 %v9197, %v9046
        %v9200 = vmax.f32 %v9198, %v9052
        %v9201 = vmax.f32 %v9199, %v9058
        %v9202 = vmax.f32 %v9200, %v9064
        %v9203 = vmax.f32 %v9201, %v9070
        %v9204 = vmax.f32 %v9202, %v9076
        %v9205 = vmax.f32 %v9203, %v9082
        %v9206 = vmax.f32 %v9204, %v9088
        %v9207 = vmax.f32 %v9205, %v9094
        %v9208 = vmax.f32 %v9206, %v9100
        %v9209 = vmax.f32 %v9207, %v9106
        %v9210 = vmax.f32 %v9208, %v9112
        %v9211 = vmax.f32 %v9209, %v9118
        %v9212 = vmax.f32 %v9210, %v9124
        %v9213 = vmax.f32 %v9211, %v9130
        %v9214 = vmax.f32 %v9212, %v9136
        %v9215 = vmax.f32 %v9213, %v9142
        %v9216 = vmax.f32 %v9214, %v9148
        %v9217 = vmax.f32 %v9215, %v9216
        %v9218 = vrot.slane %v9217, 4
        %v9219 = vmax.f32 %v9217, %v9218
        %v9220 = vrot.slane %v9219, 2
        %v9221 = vmax.f32 %v9219, %v9220
        %v9222 = vrot.slane %v9221, 1
        %v9223 = vmax.f32 %v9221, %v9222
        %v9224 = vsub.f32 %v8960, %v9186
        %v9225 = vsub.f32 %v8962, %v9223
        %v9226 = vsub.f32 %v8966, %v9186
        %v9227 = vsub.f32 %v8968, %v9223
        %v9228 = vsub.f32 %v8972, %v9186
        %v9229 = vsub.f32 %v8974, %v9223
        %v9230 = vsub.f32 %v8978, %v9186
        %v9231 = vsub.f32 %v8980, %v9223
        %v9232 = vsub.f32 %v8984, %v9186
        %v9233 = vsub.f32 %v8986, %v9223
        %v9234 = vsub.f32 %v8990, %v9186
        %v9235 = vsub.f32 %v8992, %v9223
        %v9236 = vsub.f32 %v8996, %v9186
        %v9237 = vsub.f32 %v8998, %v9223
        %v9238 = vsub.f32 %v9002, %v9186
        %v9239 = vsub.f32 %v9004, %v9223
        %v9240 = vsub.f32 %v9008, %v9186
        %v9241 = vsub.f32 %v9010, %v9223
        %v9242 = vsub.f32 %v9014, %v9186
        %v9243 = vsub.f32 %v9016, %v9223
        %v9244 = vsub.f32 %v9020, %v9186
        %v9245 = vsub.f32 %v9022, %v9223
        %v9246 = vsub.f32 %v9026, %v9186
        %v9247 = vsub.f32 %v9028, %v9223
        %v9248 = vsub.f32 %v9032, %v9186
        %v9249 = vsub.f32 %v9034, %v9223
        %v9250 = vsub.f32 %v9038, %v9186
        %v9251 = vsub.f32 %v9040, %v9223
        %v9252 = vsub.f32 %v9044, %v9186
        %v9253 = vsub.f32 %v9046, %v9223
        %v9254 = vsub.f32 %v9050, %v9186
        %v9255 = vsub.f32 %v9052, %v9223
        %v9256 = vsub.f32 %v9056, %v9186
        %v9257 = vsub.f32 %v9058, %v9223
        %v9258 = vsub.f32 %v9062, %v9186
        %v9259 = vsub.f32 %v9064, %v9223
        %v9260 = vsub.f32 %v9068, %v9186
        %v9261 = vsub.f32 %v9070, %v9223
        %v9262 = vsub.f32 %v9074, %v9186
        %v9263 = vsub.f32 %v9076, %v9223
        %v9264 = vsub.f32 %v9080, %v9186
        %v9265 = vsub.f32 %v9082, %v9223
        %v9266 = vsub.f32 %v9086, %v9186
        %v9267 = vsub.f32 %v9088, %v9223
        %v9268 = vsub.f32 %v9092, %v9186
        %v9269 = vsub.f32 %v9094, %v9223
        %v9270 = vsub.f32 %v9098, %v9186
        %v9271 = vsub.f32 %v9100, %v9223
        %v9272 = vsub.f32 %v9104, %v9186
        %v9273 = vsub.f32 %v9106, %v9223
        %v9274 = vsub.f32 %v9110, %v9186
        %v9275 = vsub.f32 %v9112, %v9223
        %v9276 = vsub.f32 %v9116, %v9186
        %v9277 = vsub.f32 %v9118, %v9223
        %v9278 = vsub.f32 %v9122, %v9186
        %v9279 = vsub.f32 %v9124, %v9223
        %v9280 = vsub.f32 %v9128, %v9186
        %v9281 = vsub.f32 %v9130, %v9223
        %v9282 = vsub.f32 %v9134, %v9186
        %v9283 = vsub.f32 %v9136, %v9223
        %v9284 = vsub.f32 %v9140, %v9186
        %v9285 = vsub.f32 %v9142, %v9223
        %v9286 = vsub.f32 %v9146, %v9186
        %v9287 = vsub.f32 %v9148, %v9223
        %v9288 = vmul.f32 %v9224, 1.442695
        %v9289 = vpow.pop %v9288
        %v9290 = vmul.f32 %v9225, 1.442695
        %v9291 = vpow.pop %v9290
        %v9292 = vmul.f32 %v9226, 1.442695
        %v9293 = vpow.pop %v9292
        %v9294 = vmul.f32 %v9227, 1.442695
        %v9295 = vpow.pop %v9294
        %v9296 = vmul.f32 %v9228, 1.442695
        %v9297 = vpow.pop %v9296
        %v9298 = vmul.f32 %v9229, 1.442695
        %v9299 = vpow.pop %v9298
        %v9300 = vmul.f32 %v9230, 1.442695
        %v9301 = vpow.pop %v9300
        %v9302 = vmul.f32 %v9231, 1.442695
        %v9303 = vpow.pop %v9302
        %v9304 = vmul.f32 %v9232, 1.442695
        %v9305 = vpow.pop %v9304
        %v9306 = vmul.f32 %v9233, 1.442695
        %v9307 = vpow.pop %v9306
        %v9308 = vmul.f32 %v9234, 1.442695
        %v9309 = vpow.pop %v9308
        %v9310 = vmul.f32 %v9235, 1.442695
        %v9311 = vpow.pop %v9310
        %v9312 = vmul.f32 %v9236, 1.442695
        %v9313 = vpow.pop %v9312
        %v9314 = vmul.f32 %v9237, 1.442695
        %v9315 = vpow.pop %v9314
        %v9316 = vmul.f32 %v9238, 1.442695
        %v9317 = vpow.pop %v9316
        %v9318 = vmul.f32 %v9239, 1.442695
        %v9319 = vpow.pop %v9318
        %v9320 = vmul.f32 %v9240, 1.442695
        %v9321 = vpow.pop %v9320
        %v9322 = vmul.f32 %v9241, 1.442695
        %v9323 = vpow.pop %v9322
        %v9324 = vmul.f32 %v9242, 1.442695
        %v9325 = vpow.pop %v9324
        %v9326 = vmul.f32 %v9243, 1.442695
        %v9327 = vpow.pop %v9326
        %v9328 = vmul.f32 %v9244, 1.442695
        %v9329 = vpow.pop %v9328
        %v9330 = vmul.f32 %v9245, 1.442695
        %v9331 = vpow.pop %v9330
        %v9332 = vmul.f32 %v9246, 1.442695
        %v9333 = vpow.pop %v9332
        %v9334 = vmul.f32 %v9247, 1.442695
        %v9335 = vpow.pop %v9334
        %v9336 = vmul.f32 %v9248, 1.442695
        %v9337 = vpow.pop %v9336
        %v9338 = vmul.f32 %v9249, 1.442695
        %v9339 = vpow.pop %v9338
        %v9340 = vmul.f32 %v9250, 1.442695
        %v9341 = vpow.pop %v9340
        %v9342 = vmul.f32 %v9251, 1.442695
        %v9343 = vpow.pop %v9342
        %v9344 = vmul.f32 %v9252, 1.442695
        %v9345 = vpow.pop %v9344
        %v9346 = vmul.f32 %v9253, 1.442695
        %v9347 = vpow.pop %v9346
        %v9348 = vmul.f32 %v9254, 1.442695
        %v9349 = vpow.pop %v9348
        %v9350 = vmul.f32 %v9255, 1.442695
        %v9351 = vpow.pop %v9350
        %v9352 = vmul.f32 %v9256, 1.442695
        %v9353 = vpow.pop %v9352
        %v9354 = vmul.f32 %v9257, 1.442695
        %v9355 = vpow.pop %v9354
        %v9356 = vmul.f32 %v9258, 1.442695
        %v9357 = vpow.pop %v9356
        %v9358 = vmul.f32 %v9259, 1.442695
        %v9359 = vpow.pop %v9358
        %v9360 = vmul.f32 %v9260, 1.442695
        %v9361 = vpow.pop %v9360
        %v9362 = vmul.f32 %v9261, 1.442695
        %v9363 = vpow.pop %v9362
        %v9364 = vmul.f32 %v9262, 1.442695
        %v9365 = vpow.pop %v9364
        %v9366 = vmul.f32 %v9263, 1.442695
        %v9367 = vpow.pop %v9366
        %v9368 = vmul.f32 %v9264, 1.442695
        %v9369 = vpow.pop %v9368
        %v9370 = vmul.f32 %v9265, 1.442695
        %v9371 = vpow.pop %v9370
        %v9372 = vmul.f32 %v9266, 1.442695
        %v9373 = vpow.pop %v9372
        %v9374 = vmul.f32 %v9267, 1.442695
        %v9375 = vpow.pop %v9374
        %v9376 = vmul.f32 %v9268, 1.442695
        %v9377 = vpow.pop %v9376
        %v9378 = vmul.f32 %v9269, 1.442695
        %v9379 = vpow.pop %v9378
        %v9380 = vmul.f32 %v9270, 1.442695
        %v9381 = vpow.pop %v9380
        %v9382 = vmul.f32 %v9271, 1.442695
        %v9383 = vpow.pop %v9382
        %v9384 = vmul.f32 %v9272, 1.442695
        %v9385 = vpow.pop %v9384
        %v9386 = vmul.f32 %v9273, 1.442695
        %v9387 = vpow.pop %v9386
        %v9388 = vmul.f32 %v9274, 1.442695
        %v9389 = vpow.pop %v9388
        %v9390 = vmul.f32 %v9275, 1.442695
        %v9391 = vpow.pop %v9390
        %v9392 = vmul.f32 %v9276, 1.442695
        %v9393 = vpow.pop %v9392
        %v9394 = vmul.f32 %v9277, 1.442695
        %v9395 = vpow.pop %v9394
        %v9396 = vmul.f32 %v9278, 1.442695
        %v9397 = vpow.pop %v9396
        %v9398 = vmul.f32 %v9279, 1.442695
        %v9399 = vpow.pop %v9398
        %v9400 = vmul.f32 %v9280, 1.442695
        %v9401 = vpow.pop %v9400
        %v9402 = vmul.f32 %v9281, 1.442695
        %v9403 = vpow.pop %v9402
        %v9404 = vmul.f32 %v9282, 1.442695
        %v9405 = vpow.pop %v9404
        %v9406 = vmul.f32 %v9283, 1.442695
        %v9407 = vpow.pop %v9406
        %v9408 = vmul.f32 %v9284, 1.442695
        %v9409 = vpow.pop %v9408
        %v9410 = vmul.f32 %v9285, 1.442695
        %v9411 = vpow.pop %v9410
        %v9412 = vmul.f32 %v9286, 1.442695
        %v9413 = vpow.pop %v9412
        %v9414 = vmul.f32 %v9287, 1.442695
        %v9415 = vpow.pop %v9414
        %v9416 = vadd.f32 %v9289, %v9293
        %v9417 = vadd.f32 %v9416, %v9297
        %v9418 = vadd.f32 %v9417, %v9301
        %v9419 = vadd.f32 %v9418, %v9305
        %v9420 = vadd.f32 %v9419, %v9309
        %v9421 = vadd.f32 %v9420, %v9313
        %v9422 = vadd.f32 %v9421, %v9317
        %v9423 = vadd.f32 %v9422, %v9321
        %v9424 = vadd.f32 %v9423, %v9325
        %v9425 = vadd.f32 %v9424, %v9329
        %v9426 = vadd.f32 %v9425, %v9333
        %v9427 = vadd.f32 %v9426, %v9337
        %v9428 = vadd.f32 %v9427, %v9341
        %v9429 = vadd.f32 %v9428, %v9345
        %v9430 = vadd.f32 %v9429, %v9349
        %v9431 = vadd.f32 %v9430, %v9353
        %v9432 = vadd.f32 %v9431, %v9357
        %v9433 = vadd.f32 %v9432, %v9361
        %v9434 = vadd.f32 %v9433, %v9365
        %v9435 = vadd.f32 %v9434, %v9369
        %v9436 = vadd.f32 %v9435, %v9373
        %v9437 = vadd.f32 %v9436, %v9377
        %v9438 = vadd.f32 %v9437, %v9381
        %v9439 = vadd.f32 %v9438, %v9385
        %v9440 = vadd.f32 %v9439, %v9389
        %v9441 = vadd.f32 %v9440, %v9393
        %v9442 = vadd.f32 %v9441, %v9397
        %v9443 = vadd.f32 %v9442, %v9401
        %v9444 = vadd.f32 %v9443, %v9405
        %v9445 = vadd.f32 %v9444, %v9409
        %v9446 = vadd.f32 %v9445, %v9413
        %v9447 = vrot.slane %v9446, 4
        %v9448 = vadd.f32 %v9446, %v9447
        %v9449 = vrot.slane %v9448, 2
        %v9450 = vadd.f32 %v9448, %v9449
        %v9451 = vrot.slane %v9450, 1
        %v9452 = vadd.f32 %v9450, %v9451
        %v9453 = vadd.f32 %v9291, %v9295
        %v9454 = vadd.f32 %v9453, %v9299
        %v9455 = vadd.f32 %v9454, %v9303
        %v9456 = vadd.f32 %v9455, %v9307
        %v9457 = vadd.f32 %v9456, %v9311
        %v9458 = vadd.f32 %v9457, %v9315
        %v9459 = vadd.f32 %v9458, %v9319
        %v9460 = vadd.f32 %v9459, %v9323
        %v9461 = vadd.f32 %v9460, %v9327
        %v9462 = vadd.f32 %v9461, %v9331
        %v9463 = vadd.f32 %v9462, %v9335
        %v9464 = vadd.f32 %v9463, %v9339
        %v9465 = vadd.f32 %v9464, %v9343
        %v9466 = vadd.f32 %v9465, %v9347
        %v9467 = vadd.f32 %v9466, %v9351
        %v9468 = vadd.f32 %v9467, %v9355
        %v9469 = vadd.f32 %v9468, %v9359
        %v9470 = vadd.f32 %v9469, %v9363
        %v9471 = vadd.f32 %v9470, %v9367
        %v9472 = vadd.f32 %v9471, %v9371
        %v9473 = vadd.f32 %v9472, %v9375
        %v9474 = vadd.f32 %v9473, %v9379
        %v9475 = vadd.f32 %v9474, %v9383
        %v9476 = vadd.f32 %v9475, %v9387
        %v9477 = vadd.f32 %v9476, %v9391
        %v9478 = vadd.f32 %v9477, %v9395
        %v9479 = vadd.f32 %v9478, %v9399
        %v9480 = vadd.f32 %v9479, %v9403
        %v9481 = vadd.f32 %v9480, %v9407
        %v9482 = vadd.f32 %v9481, %v9411
        %v9483 = vadd.f32 %v9482, %v9415
        %v9484 = vrot.slane %v9483, 4
        %v9485 = vadd.f32 %v9483, %v9484
        %v9486 = vrot.slane %v9485, 2
        %v9487 = vadd.f32 %v9485, %v9486
        %v9488 = vrot.slane %v9487, 1
        %v9489 = vadd.f32 %v9487, %v9488
        %v9490 = vrcp.pop %v9452
        %v9491 = vmul.f32 1.0, %v9490
        %v9492 = vrcp.pop %v9489
        %v9493 = vmul.f32 1.0, %v9492
        %v9496 = vrot.slane %v5632, 4
        %v9497 = vrot.slane %v5634, 4
        %9500 = vmatprep.subr.mxu0 %v9291
        %9501 = vmatpush1.msra.mxu0 %v9289
        %9502 = vmatprep.subr.mxu0 %v9295
        %9503 = vmatpush1.msra.mxu0 %v9293
        %9504 = vmatprep.subr.mxu0 %v9299
        %9505 = vmatpush1.msra.mxu0 %v9297
        %9506 = vmatprep.subr.mxu0 %v9303
        %9507 = vmatpush1.msra.mxu0 %v9301
        %9508 = vmatprep.subr.mxu0 %v9307
        %9509 = vmatpush1.msra.mxu0 %v9305
        %9510 = vmatprep.subr.mxu0 %v9311
        %9511 = vmatpush1.msra.mxu0 %v9309
        %9512 = vmatprep.subr.mxu0 %v9315
        %9513 = vmatpush1.msra.mxu0 %v9313
        %9514 = vmatprep.subr.mxu0 %v9319
        %9515 = vmatpush1.msra.mxu0 %v9317
        %9516 = vmatprep.subr.mxu0 %v9323
        %9517 = vmatpush1.msra.mxu0 %v9321
        %9518 = vmatprep.subr.mxu0 %v9327
        %9519 = vmatpush1.msra.mxu0 %v9325
        %9520 = vmatprep.subr.mxu0 %v9331
        %9521 = vmatpush1.msra.mxu0 %v9329
        %9522 = vmatprep.subr.mxu0 %v9335
        %9523 = vmatpush1.msra.mxu0 %v9333
        %9524 = vmatprep.subr.mxu0 %v9339
        %9525 = vmatpush1.msra.mxu0 %v9337
        %9526 = vmatprep.subr.mxu0 %v9343
        %9527 = vmatpush1.msra.mxu0 %v9341
        %9528 = vmatprep.subr.mxu0 %v9347
        %9529 = vmatpush1.msra.mxu0 %v9345
        %9530 = vmatprep.subr.mxu0 %v9351
        %9531 = vmatpush1.msra.mxu0 %v9349
        %9532 = vmatprep.subr.mxu0 %v9355
        %9533 = vmatpush1.msra.mxu0 %v9353
        %9534 = vmatprep.subr.mxu0 %v9359
        %9535 = vmatpush1.msra.mxu0 %v9357
        %9536 = vmatprep.subr.mxu0 %v9363
        %9537 = vmatpush1.msra.mxu0 %v9361
        %9538 = vmatprep.subr.mxu0 %v9367
        %9539 = vmatpush1.msra.mxu0 %v9365
        %9540 = vmatprep.subr.mxu0 %v9371
        %9541 = vmatpush1.msra.mxu0 %v9369
        %9542 = vmatprep.subr.mxu0 %v9375
        %9543 = vmatpush1.msra.mxu0 %v9373
        %9544 = vmatprep.subr.mxu0 %v9379
        %9545 = vmatpush1.msra.mxu0 %v9377
        %9546 = vmatprep.subr.mxu0 %v9383
        %9547 = vmatpush1.msra.mxu0 %v9381
        %9548 = vmatprep.subr.mxu0 %v9387
        %9549 = vmatpush1.msra.mxu0 %v9385
        %9550 = vmatprep.subr.mxu0 %v9391
        %9551 = vmatpush1.msra.mxu0 %v9389
        %9552 = vmatprep.subr.mxu0 %v9395
        %9553 = vmatpush1.msra.mxu0 %v9393
        %9554 = vmatprep.subr.mxu0 %v9399
        %9555 = vmatpush1.msra.mxu0 %v9397
        %9556 = vmatprep.subr.mxu0 %v9403
        %9557 = vmatpush1.msra.mxu0 %v9401
        %9558 = vmatprep.subr.mxu0 %v9407
        %9559 = vmatpush1.msra.mxu0 %v9405
        %9560 = vmatprep.subr.mxu0 %v9411
        %9561 = vmatpush1.msra.mxu0 %v9409
        %9562 = vmatprep.subr.mxu0 %v9415
        %9563 = vmatpush1.msra.mxu0 %v9413
        %9564 = vmatprep.mubr.f32.mxu0 %v9497
        %9565 = vmatmul.mubr.f32.gmra.mrb[0].mxu0 %v9496
        %v9566 = vpop.f32.mrb[0].mxu0
        %v9567 = vadd.f32 0.0, %v9566
        %v9568 = vpop.f32.mrb[0].mxu0
        %v9569 = vadd.f32 0.0, %v9568
        %9570 = vdwg.mxu0
        %v9571 = vmul.f32 %v9567, %v9491
        %v9572 = vmul.f32 %v9569, %v9493
        %9573 = vrot.lane.b32.xlu0 %v6476, 116
        %v9574 = vpop.permute.xlu0 %9573
        %9575 = vrot.lane.b32.xlu0 %v6477, 116
        %v9576 = vpop.permute.xlu0 %9575
        %v9577 = vsel %vm1329, %v9574, 0
        %v9579 = vsel %vm1329, %v9576, 0
        %v9582 = vsel %vm1426, %v9571, 0
        %v9585 = vsel %vm1426, %v9572, 0
        %9587 = vmatprep.subr.mxu0 %v9585
        %9588 = vmatpush1.msra.mxu0 %v9582
        %9589 = vmatprep.subr.mxu0 0.0
        %9590 = vmatpush1.msra.mxu0 0.0
        %9591 = vmatprep.subr.mxu0 0.0
        %9592 = vmatpush1.msra.mxu0 0.0
        %9593 = vmatprep.subr.mxu0 0.0
        %9594 = vmatpush1.msra.mxu0 0.0
        %9595 = vmatprep.subr.mxu0 0.0
        %9596 = vmatpush1.msra.mxu0 0.0
        %9597 = vmatprep.subr.mxu0 0.0
        %9598 = vmatpush1.msra.mxu0 0.0
        %9599 = vmatprep.subr.mxu0 0.0
        %9600 = vmatpush1.msra.mxu0 0.0
        %9601 = vmatprep.subr.mxu0 0.0
        %9602 = vmatpush1.msra.mxu0 0.0
        %9603 = vmatprep.subr.mxu0 0.0
        %9604 = vmatpush1.msra.mxu0 0.0
        %9605 = vmatprep.subr.mxu0 0.0
        %9606 = vmatpush1.msra.mxu0 0.0
        %9607 = vmatprep.subr.mxu0 0.0
        %9608 = vmatpush1.msra.mxu0 0.0
        %9609 = vmatprep.subr.mxu0 0.0
        %9610 = vmatpush1.msra.mxu0 0.0
        %9611 = vmatprep.subr.mxu0 0.0
        %9612 = vmatpush1.msra.mxu0 0.0
        %9613 = vmatprep.subr.mxu0 0.0
        %9614 = vmatpush1.msra.mxu0 0.0
        %9615 = vmatprep.subr.mxu0 0.0
        %9616 = vmatpush1.msra.mxu0 0.0
        %9617 = vmatprep.subr.mxu0 0.0
        %9618 = vmatpush1.msra.mxu0 0.0
        %9619 = vmatprep.subr.mxu0 0.0
        %9620 = vmatpush1.msra.mxu0 0.0
        %9621 = vmatprep.subr.mxu0 0.0
        %9622 = vmatpush1.msra.mxu0 0.0
        %9623 = vmatprep.subr.mxu0 0.0
        %9624 = vmatpush1.msra.mxu0 0.0
        %9625 = vmatprep.subr.mxu0 0.0
        %9626 = vmatpush1.msra.mxu0 0.0
        %9627 = vmatprep.subr.mxu0 0.0
        %9628 = vmatpush1.msra.mxu0 0.0
        %9629 = vmatprep.subr.mxu0 0.0
        %9630 = vmatpush1.msra.mxu0 0.0
        %9631 = vmatprep.subr.mxu0 0.0
        %9632 = vmatpush1.msra.mxu0 0.0
        %9633 = vmatprep.subr.mxu0 0.0
        %9634 = vmatpush1.msra.mxu0 0.0
        %9635 = vmatprep.subr.mxu0 0.0
        %9636 = vmatpush1.msra.mxu0 0.0
        %9637 = vmatprep.subr.mxu0 0.0
        %9638 = vmatpush1.msra.mxu0 0.0
        %9639 = vmatprep.subr.mxu0 0.0
        %9640 = vmatpush1.msra.mxu0 0.0
        %9641 = vmatprep.subr.mxu0 0.0
        %9642 = vmatpush1.msra.mxu0 0.0
        %9643 = vmatprep.subr.mxu0 0.0
        %9644 = vmatpush1.msra.mxu0 0.0
        %9645 = vmatprep.subr.mxu0 0.0
        %9646 = vmatpush1.msra.mxu0 0.0
        %9647 = vmatprep.subr.mxu0 0.0
        %9648 = vmatpush1.msra.mxu0 0.0
        %9649 = vmatprep.subr.mxu0 0.0
        %9650 = vmatpush1.msra.mxu0 0.0
        %9651 = vmatprep.mubr.f32.mxu0 0.0
        %9652 = vmatmul.mubr.f32.gmra.mrb[0].mxu0 %v9577
        %v9653 = vpop.f32.mrb[0].mxu0
        %v9654 = vadd.f32 0.0, %v9653
        %v9655 = vpop.f32.mrb[0].mxu0
        %v9656 = vadd.f32 0.0, %v9655
        %9657 = vmatprep.mubr.f32.mxu0 0.0
        %9658 = vmatmul.mubr.f32.gmra.mrb[0].mxu0 %v9579
        %v9659 = vpop.f32.mrb[0].mxu0
        %v9660 = vadd.f32 0.0, %v9659
        %v9661 = vpop.f32.mrb[0].mxu0
        %v9662 = vadd.f32 0.0, %v9661
        %9663 = vdwg.mxu0
        %v9664 = vadd.f32 %v8755, %v9654
        %v9665 = vadd.f32 %v8756, %v9656
        %v9666 = vadd.f32 %v8757, %v9660
        %v9667 = vadd.f32 %v8758, %v9662
        %v9668 = vadd.f32 %v5434, %v9664
        %v9669 = vadd.f32 %v5435, %v9665
        %v9670 = vadd.f32 %v5436, %v9666
        %v9671 = vadd.f32 %v5437, %v9667
        %9672 = vset.pattern.permute.xlu0 11
        %9673 = vperm.xlu0 %9672, %v1062
        %v9674 = vpop.permute.xlu0 %9673
        %9676 = vset.pattern.permute.xlu0 11
        %9677 = vperm.xlu0 %9676, %v1063
        %v9678 = vpop.permute.xlu0 %9677
        %v9680 = vadd.f32 %v9668, %v9674
        %v9681 = vadd.f32 %v9669, %v9674
        %v9682 = vadd.f32 %v9670, %v9678
        %v9683 = vadd.f32 %v9671, %v9678
        %v9684 = vadd.f32 %v9680, %v9682
        %v9685 = vrot.slane %v9684, 4
        %v9686 = vadd.f32 %v9684, %v9685
        %v9687 = vrot.slane %v9686, 2
        %v9688 = vadd.f32 %v9686, %v9687
        %v9689 = vrot.slane %v9688, 1
        %v9690 = vadd.f32 %v9688, %v9689
        %v9691 = vadd.f32 %v9681, %v9683
        %v9692 = vrot.slane %v9691, 4
        %v9693 = vadd.f32 %v9691, %v9692
        %v9694 = vrot.slane %v9693, 2
        %v9695 = vadd.f32 %v9693, %v9694
        %v9696 = vrot.slane %v9695, 1
        %v9697 = vadd.f32 %v9695, %v9696
        %v9698 = vmul.f32 %v9690, %v1078
        %v9699 = vmul.f32 %v9697, %v1078
        %v9700 = vsub.f32 %v9680, %v9698
        %v9701 = vsub.f32 %v9681, %v9699
        %v9702 = vsub.f32 %v9682, %v9698
        %v9703 = vsub.f32 %v9683, %v9699
        %v9704 = vmul.f32 %v9700, %v9700
        %v9705 = vmul.f32 %v9701, %v9701
        %v9706 = vmul.f32 %v9702, %v9702
        %v9707 = vmul.f32 %v9703, %v9703
        %v9708 = vadd.f32 %v9704, %v9706
        %v9709 = vrot.slane %v9708, 4
        %v9710 = vadd.f32 %v9708, %v9709
        %v9711 = vrot.slane %v9710, 2
        %v9712 = vadd.f32 %v9710, %v9711
        %v9713 = vrot.slane %v9712, 1
        %v9714 = vadd.f32 %v9712, %v9713
        %v9715 = vadd.f32 %v9705, %v9707
        %v9716 = vrot.slane %v9715, 4
        %v9717 = vadd.f32 %v9715, %v9716
        %v9718 = vrot.slane %v9717, 2
        %v9719 = vadd.f32 %v9717, %v9718
        %v9720 = vrot.slane %v9719, 1
        %v9721 = vadd.f32 %v9719, %v9720
        %v9722 = vmul.f32 %v9714, %v1078
        %v9723 = vmul.f32 %v9721, %v1078
        %v9724 = vadd.f32 %v9722, 1e-05
        %v9725 = vadd.f32 %v9723, 1e-05
        %v9726 = vrsqrt.pop %v9724
        %v9727 = vrsqrt.pop %v9725
        %v9728 = vmul.f32 %v9700, %v9726
        %v9729 = vmul.f32 %v9701, %v9727
        %v9730 = vmul.f32 %v9702, %v9726
        %v9731 = vmul.f32 %v9703, %v9727
        %9732 = vset.pattern.permute.xlu0 9
        %9733 = vperm.xlu0 %9732, %v1062
        %v9734 = vpop.permute.xlu0 %9733
        %9736 = vset.pattern.permute.xlu0 9
        %9737 = vperm.xlu0 %9736, %v1063
        %v9738 = vpop.permute.xlu0 %9737
        %v9740 = vmul.f32 %v9728, %v9734
        %v9741 = vmul.f32 %v9729, %v9734
        %v9742 = vmul.f32 %v9730, %v9738
        %v9743 = vmul.f32 %v9731, %v9738
        %9744 = vset.pattern.permute.xlu0 10
        %9745 = vperm.xlu0 %9744, %v1062
        %v9746 = vpop.permute.xlu0 %9745
        %9748 = vset.pattern.permute.xlu0 10
        %9749 = vperm.xlu0 %9748, %v1063
        %v9750 = vpop.permute.xlu0 %9749
        %v9752 = vadd.f32 %v9740, %v9746
        %v9753 = vadd.f32 %v9741, %v9746
        %v9754 = vadd.f32 %v9742, %v9750
        %v9755 = vadd.f32 %v9743, %v9750
        %v9756 = vld [vmem:[%s5510 + $0x40] sm:$0xff]
        %v9757 = vld [vmem:[%s5510 + $0x48] sm:$0xff]
        %v9758 = vld [vmem:[%s5510 + $0x50] sm:$0xff]
        %v9759 = vld [vmem:[%s5510 + $0x58] sm:$0xff]
        %v9760 = vld [vmem:[%s5510 + $0x60] sm:$0xff]
        %v9761 = vld [vmem:[%s5510 + $0x68] sm:$0xff]
        %v9762 = vld [vmem:[%s5510 + $0x70] sm:$0xff]
        %v9763 = vld [vmem:[%s5510 + $0x78] sm:$0xff]
        %9764 = vset.pattern.permute.xlu0 12
        %9765 = vperm.xlu0 %9764, %v5011
        %v9766 = vpop.permute.xlu0 %9765
        %9768 = vset.pattern.permute.xlu0 12
        %9769 = vperm.xlu0 %9768, %v5012
        %v9770 = vpop.permute.xlu0 %9769
        %9772 = vset.pattern.permute.xlu0 12
        %9773 = vperm.xlu0 %9772, %v5013
        %v9774 = vpop.permute.xlu0 %9773
        %9776 = vset.pattern.permute.xlu0 12
        %9777 = vperm.xlu0 %9776, %v5014
        %v9778 = vpop.permute.xlu0 %9777
        %9780 = vset.pattern.permute.xlu0 12
        %9781 = vperm.xlu0 %9780, %v5015
        %v9782 = vpop.permute.xlu0 %9781
        %9784 = vset.pattern.permute.xlu0 12
        %9785 = vperm.xlu0 %9784, %v5016
        %v9786 = vpop.permute.xlu0 %9785
        %9788 = vset.pattern.permute.xlu0 12
        %9789 = vperm.xlu0 %9788, %v5017
        %v9790 = vpop.permute.xlu0 %9789
        %9792 = vset.pattern.permute.xlu0 12
        %9793 = vperm.xlu0 %9792, %v5018
        %v9794 = vpop.permute.xlu0 %9793
        %v9797 = vsel %vm1145, %v9756, 0
        %v9800 = vsel %vm1145, %v9757, 0
        %v9803 = vsel %vm1145, %v9758, 0
        %v9806 = vsel %vm1145, %v9759, 0
        %v9809 = vsel %vm1145, %v9760, 0
        %v9812 = vsel %vm1145, %v9761, 0
        %v9815 = vsel %vm1145, %v9762, 0
        %v9818 = vsel %vm1145, %v9763, 0
        %9820 = vmatprep.subr.mxu0 %v9753
        %9821 = vmatpush1.msra.mxu0 %v9752
        %9822 = vmatprep.subr.mxu0 %v9755
        %9823 = vmatpush1.msra.mxu0 %v9754
        %9824 = vmatprep.subr.mxu0 0.0
        %9825 = vmatpush1.msra.mxu0 0.0
        %9826 = vmatprep.subr.mxu0 0.0
        %9827 = vmatpush1.msra.mxu0 0.0
        %9828 = vmatprep.subr.mxu0 0.0
        %9829 = vmatpush1.msra.mxu0 0.0
        %9830 = vmatprep.subr.mxu0 0.0
        %9831 = vmatpush1.msra.mxu0 0.0
        %9832 = vmatprep.subr.mxu0 0.0
        %9833 = vmatpush1.msra.mxu0 0.0
        %9834 = vmatprep.subr.mxu0 0.0
        %9835 = vmatpush1.msra.mxu0 0.0
        %9836 = vmatprep.subr.mxu0 0.0
        %9837 = vmatpush1.msra.mxu0 0.0
        %9838 = vmatprep.subr.mxu0 0.0
        %9839 = vmatpush1.msra.mxu0 0.0
        %9840 = vmatprep.subr.mxu0 0.0
        %9841 = vmatpush1.msra.mxu0 0.0
        %9842 = vmatprep.subr.mxu0 0.0
        %9843 = vmatpush1.msra.mxu0 0.0
        %9844 = vmatprep.subr.mxu0 0.0
        %9845 = vmatpush1.msra.mxu0 0.0
        %9846 = vmatprep.subr.mxu0 0.0
        %9847 = vmatpush1.msra.mxu0 0.0
        %9848 = vmatprep.subr.mxu0 0.0
        %9849 = vmatpush1.msra.mxu0 0.0
        %9850 = vmatprep.subr.mxu0 0.0
        %9851 = vmatpush1.msra.mxu0 0.0
        %9852 = vmatprep.subr.mxu0 0.0
        %9853 = vmatpush1.msra.mxu0 0.0
        %9854 = vmatprep.subr.mxu0 0.0
        %9855 = vmatpush1.msra.mxu0 0.0
        %9856 = vmatprep.subr.mxu0 0.0
        %9857 = vmatpush1.msra.mxu0 0.0
        %9858 = vmatprep.subr.mxu0 0.0
        %9859 = vmatpush1.msra.mxu0 0.0
        %9860 = vmatprep.subr.mxu0 0.0
        %9861 = vmatpush1.msra.mxu0 0.0
        %9862 = vmatprep.subr.mxu0 0.0
        %9863 = vmatpush1.msra.mxu0 0.0
        %9864 = vmatprep.subr.mxu0 0.0
        %9865 = vmatpush1.msra.mxu0 0.0
        %9866 = vmatprep.subr.mxu0 0.0
        %9867 = vmatpush1.msra.mxu0 0.0
        %9868 = vmatprep.subr.mxu0 0.0
        %9869 = vmatpush1.msra.mxu0 0.0
        %9870 = vmatprep.subr.mxu0 0.0
        %9871 = vmatpush1.msra.mxu0 0.0
        %9872 = vmatprep.subr.mxu0 0.0
        %9873 = vmatpush1.msra.mxu0 0.0
        %9874 = vmatprep.subr.mxu0 0.0
        %9875 = vmatpush1.msra.mxu0 0.0
        %9876 = vmatprep.subr.mxu0 0.0
        %9877 = vmatpush1.msra.mxu0 0.0
        %9878 = vmatprep.subr.mxu0 0.0
        %9879 = vmatpush1.msra.mxu0 0.0
        %9880 = vmatprep.subr.mxu0 0.0
        %9881 = vmatpush1.msra.mxu0 0.0
        %9882 = vmatprep.subr.mxu0 0.0
        %9883 = vmatpush1.msra.mxu0 0.0
        %9884 = vmatprep.mubr.f32.mxu0 0.0
        %9885 = vmatmul.mubr.f32.gmra.mrb[0].mxu0 %v9797
        %v9886 = vpop.f32.mrb[0].mxu0
        %v9887 = vadd.f32 %v9766, %v9886
        %v9888 = vpop.f32.mrb[0].mxu0
        %v9889 = vadd.f32 %v9766, %v9888
        %9890 = vmatprep.mubr.f32.mxu0 0.0
        %9891 = vmatmul.mubr.f32.gmra.mrb[0].mxu0 %v9800
        %v9892 = vpop.f32.mrb[0].mxu0
        %v9893 = vadd.f32 %v9770, %v9892
        %v9894 = vpop.f32.mrb[0].mxu0
        %v9895 = vadd.f32 %v9770, %v9894
        %9896 = vmatprep.mubr.f32.mxu0 0.0
        %9897 = vmatmul.mubr.f32.gmra.mrb[0].mxu0 %v9803
        %v9898 = vpop.f32.mrb[0].mxu0
        %v9899 = vadd.f32 %v9774, %v9898
        %v9900 = vpop.f32.mrb[0].mxu0
        %v9901 = vadd.f32 %v9774, %v9900
        %9902 = vmatprep.mubr.f32.mxu0 0.0
        %9903 = vmatmul.mubr.f32.gmra.mrb[0].mxu0 %v9806
        %v9904 = vpop.f32.mrb[0].mxu0
        %v9905 = vadd.f32 %v9778, %v9904
        %v9906 = vpop.f32.mrb[0].mxu0
        %v9907 = vadd.f32 %v9778, %v9906
        %9908 = vmatprep.mubr.f32.mxu0 0.0
        %9909 = vmatmul.mubr.f32.gmra.mrb[0].mxu0 %v9809
        %v9910 = vpop.f32.mrb[0].mxu0
        %v9911 = vadd.f32 %v9782, %v9910
        %v9912 = vpop.f32.mrb[0].mxu0
        %v9913 = vadd.f32 %v9782, %v9912
        %9914 = vmatprep.mubr.f32.mxu0 0.0
        %9915 = vmatmul.mubr.f32.gmra.mrb[0].mxu0 %v9812
        %v9916 = vpop.f32.mrb[0].mxu0
        %v9917 = vadd.f32 %v9786, %v9916
        %v9918 = vpop.f32.mrb[0].mxu0
        %v9919 = vadd.f32 %v9786, %v9918
        %9920 = vmatprep.mubr.f32.mxu0 0.0
        %9921 = vmatmul.mubr.f32.gmra.mrb[0].mxu0 %v9815
        %v9922 = vpop.f32.mrb[0].mxu0
        %v9923 = vadd.f32 %v9790, %v9922
        %v9924 = vpop.f32.mrb[0].mxu0
        %v9925 = vadd.f32 %v9790, %v9924
        %9926 = vmatprep.mubr.f32.mxu0 0.0
        %9927 = vmatmul.mubr.f32.gmra.mrb[0].mxu0 %v9818
        %v9928 = vpop.f32.mrb[0].mxu0
        %v9929 = vadd.f32 %v9794, %v9928
        %v9930 = vpop.f32.mrb[0].mxu0
        %v9931 = vadd.f32 %v9794, %v9930
        %9932 = vdwg.mxu0
        %v9933 = vmul.f32 %v9887, 0.5
        %v9934 = vmul.f32 %v9889, 0.5
        %v9935 = vmul.f32 %v9893, 0.5
        %v9936 = vmul.f32 %v9895, 0.5
        %v9937 = vmul.f32 %v9899, 0.5
        %v9938 = vmul.f32 %v9901, 0.5
        %v9939 = vmul.f32 %v9905, 0.5
        %v9940 = vmul.f32 %v9907, 0.5
        %v9941 = vmul.f32 %v9911, 0.5
        %v9942 = vmul.f32 %v9913, 0.5
        %v9943 = vmul.f32 %v9917, 0.5
        %v9944 = vmul.f32 %v9919, 0.5
        %v9945 = vmul.f32 %v9923, 0.5
        %v9946 = vmul.f32 %v9925, 0.5
        %v9947 = vmul.f32 %v9929, 0.5
        %v9948 = vmul.f32 %v9931, 0.5
        %v9949 = vmul.f32 %v9887, 0.044715
        %v9950 = vmul.f32 %v9889, 0.044715
        %v9951 = vmul.f32 %v9893, 0.044715
        %v9952 = vmul.f32 %v9895, 0.044715
        %v9953 = vmul.f32 %v9899, 0.044715
        %v9954 = vmul.f32 %v9901, 0.044715
        %v9955 = vmul.f32 %v9905, 0.044715
        %v9956 = vmul.f32 %v9907, 0.044715
        %v9957 = vmul.f32 %v9911, 0.044715
        %v9958 = vmul.f32 %v9913, 0.044715
        %v9959 = vmul.f32 %v9917, 0.044715
        %v9960 = vmul.f32 %v9919, 0.044715
        %v9961 = vmul.f32 %v9923, 0.044715
        %v9962 = vmul.f32 %v9925, 0.044715
        %v9963 = vmul.f32 %v9929, 0.044715
        %v9964 = vmul.f32 %v9931, 0.044715
        %v9965 = vmul.f32 %v9949, %v9887
        %v9966 = vmul.f32 %v9950, %v9889
        %v9967 = vmul.f32 %v9951, %v9893
        %v9968 = vmul.f32 %v9952, %v9895
        %v9969 = vmul.f32 %v9953, %v9899
        %v9970 = vmul.f32 %v9954, %v9901
        %v9971 = vmul.f32 %v9955, %v9905
        %v9972 = vmul.f32 %v9956, %v9907
        %v9973 = vmul.f32 %v9957, %v9911
        %v9974 = vmul.f32 %v9958, %v9913
        %v9975 = vmul.f32 %v9959, %v9917
        %v9976 = vmul.f32 %v9960, %v9919
        %v9977 = vmul.f32 %v9961, %v9923
        %v9978 = vmul.f32 %v9962, %v9925
        %v9979 = vmul.f32 %v9963, %v9929
        %v9980 = vmul.f32 %v9964, %v9931
        %v9981 = vmul.f32 %v9965, %v9887
        %v9982 = vmul.f32 %v9966, %v9889
        %v9983 = vmul.f32 %v9967, %v9893
        %v9984 = vmul.f32 %v9968, %v9895
        %v9985 = vmul.f32 %v9969, %v9899
        %v9986 = vmul.f32 %v9970, %v9901
        %v9987 = vmul.f32 %v9971, %v9905
        %v9988 = vmul.f32 %v9972, %v9907
        %v9989 = vmul.f32 %v9973, %v9911
        %v9990 = vmul.f32 %v9974, %v9913
        %v9991 = vmul.f32 %v9975, %v9917
        %v9992 = vmul.f32 %v9976, %v9919
        %v9993 = vmul.f32 %v9977, %v9923
        %v9994 = vmul.f32 %v9978, %v9925
        %v9995 = vmul.f32 %v9979, %v9929
        %v9996 = vmul.f32 %v9980, %v9931
        %v9997 = vadd.f32 %v9887, %v9981
        %v9998 = vadd.f32 %v9889, %v9982
        %v9999 = vadd.f32 %v9893, %v9983
        %v10000 = vadd.f32 %v9895, %v9984
        %v10001 = vadd.f32 %v9899, %v9985
        %v10002 = vadd.f32 %v9901, %v9986
        %v10003 = vadd.f32 %v9905, %v9987
        %v10004 = vadd.f32 %v9907, %v9988
        %v10005 = vadd.f32 %v9911, %v9989
        %v10006 = vadd.f32 %v9913, %v9990
        %v10007 = vadd.f32 %v9917, %v9991
        %v10008 = vadd.f32 %v9919, %v9992
        %v10009 = vadd.f32 %v9923, %v9993
        %v10010 = vadd.f32 %v9925, %v9994
        %v10011 = vadd.f32 %v9929, %v9995
        %v10012 = vadd.f32 %v9931, %v9996
        %v10013 = vmul.f32 %v9997, 0.7978846
        %v10014 = vmul.f32 %v9998, 0.7978846
        %v10015 = vmul.f32 %v9999, 0.7978846
        %v10016 = vmul.f32 %v10000, 0.7978846
        %v10017 = vmul.f32 %v10001, 0.7978846
        %v10018 = vmul.f32 %v10002, 0.7978846
        %v10019 = vmul.f32 %v10003, 0.7978846
        %v10020 = vmul.f32 %v10004, 0.7978846
        %v10021 = vmul.f32 %v10005, 0.7978846
        %v10022 = vmul.f32 %v10006, 0.7978846
        %v10023 = vmul.f32 %v10007, 0.7978846
        %v10024 = vmul.f32 %v10008, 0.7978846
        %v10025 = vmul.f32 %v10009, 0.7978846
        %v10026 = vmul.f32 %v10010, 0.7978846
        %v10027 = vmul.f32 %v10011, 0.7978846
        %v10028 = vmul.f32 %v10012, 0.7978846
        %v10029 = vtanh.pop %v10013
        %v10030 = vtanh.pop %v10014
        %v10031 = vtanh.pop %v10015
        %v10032 = vtanh.pop %v10016
        %v10033 = vtanh.pop %v10017
        %v10034 = vtanh.pop %v10018
        %v10035 = vtanh.pop %v10019
        %v10036 = vtanh.pop %v10020
        %v10037 = vtanh.pop %v10021
        %v10038 = vtanh.pop %v10022
        %v10039 = vtanh.pop %v10023
        %v10040 = vtanh.pop %v10024
        %v10041 = vtanh.pop %v10025
        %v10042 = vtanh.pop %v10026
        %v10043 = vtanh.pop %v10027
        %v10044 = vtanh.pop %v10028
        %v10045 = vadd.f32 %v10029, 1.0
        %v10046 = vadd.f32 %v10030, 1.0
        %v10047 = vadd.f32 %v10031, 1.0
        %v10048 = vadd.f32 %v10032, 1.0
        %v10049 = vadd.f32 %v10033, 1.0
        %v10050 = vadd.f32 %v10034, 1.0
        %v10051 = vadd.f32 %v10035, 1.0
        %v10052 = vadd.f32 %v10036, 1.0
        %v10053 = vadd.f32 %v10037, 1.0
        %v10054 = vadd.f32 %v10038, 1.0
        %v10055 = vadd.f32 %v10039, 1.0
        %v10056 = vadd.f32 %v10040, 1.0
        %v10057 = vadd.f32 %v10041, 1.0
        %v10058 = vadd.f32 %v10042, 1.0
        %v10059 = vadd.f32 %v10043, 1.0
        %v10060 = vadd.f32 %v10044, 1.0
        %v10061 = vmul.f32 %v9933, %v10045
        %v10062 = vmul.f32 %v9934, %v10046
        %v10063 = vmul.f32 %v9935, %v10047
        %v10064 = vmul.f32 %v9936, %v10048
        %v10065 = vmul.f32 %v9937, %v10049
        %v10066 = vmul.f32 %v9938, %v10050
        %v10067 = vmul.f32 %v9939, %v10051
        %v10068 = vmul.f32 %v9940, %v10052
        %v10069 = vmul.f32 %v9941, %v10053
        %v10070 = vmul.f32 %v9942, %v10054
        %v10071 = vmul.f32 %v9943, %v10055
        %v10072 = vmul.f32 %v9944, %v10056
        %v10073 = vmul.f32 %v9945, %v10057
        %v10074 = vmul.f32 %v9946, %v10058
        %v10075 = vmul.f32 %v9947, %v10059
        %v10076 = vmul.f32 %v9948, %v10060
        %s10077 = scalar_lea.vmem %s4, 16
        %v10078 = vld [vmem:[%s10077] sm:$0xff]
        %v10079 = vld [vmem:[%s10077 + $0x8] sm:$0xff]
        %10080 = vset.pattern.permute.xlu0 13
        %10081 = vperm.xlu0 %10080, %v1062
        %v10082 = vpop.permute.xlu0 %10081
        %10084 = vset.pattern.permute.xlu0 13
        %10085 = vperm.xlu0 %10084, %v1063
        %v10086 = vpop.permute.xlu0 %10085
        %v10089 = vsel %vm5350, %v10078, 0
        %v10092 = vsel %vm5350, %v10079, 0
        %10094 = vmatprep.subr.mxu0 %v10062
        %10095 = vmatpush1.msra.mxu0 %v10061
        %10096 = vmatprep.subr.mxu0 %v10064
        %10097 = vmatpush1.msra.mxu0 %v10063
        %10098 = vmatprep.subr.mxu0 %v10066
        %10099 = vmatpush1.msra.mxu0 %v10065
        %10100 = vmatprep.subr.mxu0 %v10068
        %10101 = vmatpush1.msra.mxu0 %v10067
        %10102 = vmatprep.subr.mxu0 %v10070
        %10103 = vmatpush1.msra.mxu0 %v10069
        %10104 = vmatprep.subr.mxu0 %v10072
        %10105 = vmatpush1.msra.mxu0 %v10071
        %10106 = vmatprep.subr.mxu0 %v10074
        %10107 = vmatpush1.msra.mxu0 %v10073
        %10108 = vmatprep.subr.mxu0 %v10076
        %10109 = vmatpush1.msra.mxu0 %v10075
        %10110 = vmatprep.subr.mxu0 0.0
        %10111 = vmatpush1.msra.mxu0 0.0
        %10112 = vmatprep.subr.mxu0 0.0
        %10113 = vmatpush1.msra.mxu0 0.0
        %10114 = vmatprep.subr.mxu0 0.0
        %10115 = vmatpush1.msra.mxu0 0.0
        %10116 = vmatprep.subr.mxu0 0.0
        %10117 = vmatpush1.msra.mxu0 0.0
        %10118 = vmatprep.subr.mxu0 0.0
        %10119 = vmatpush1.msra.mxu0 0.0
        %10120 = vmatprep.subr.mxu0 0.0
        %10121 = vmatpush1.msra.mxu0 0.0
        %10122 = vmatprep.subr.mxu0 0.0
        %10123 = vmatpush1.msra.mxu0 0.0
        %10124 = vmatprep.subr.mxu0 0.0
        %10125 = vmatpush1.msra.mxu0 0.0
        %10126 = vmatprep.subr.mxu0 0.0
        %10127 = vmatpush1.msra.mxu0 0.0
        %10128 = vmatprep.subr.mxu0 0.0
        %10129 = vmatpush1.msra.mxu0 0.0
        %10130 = vmatprep.subr.mxu0 0.0
        %10131 = vmatpush1.msra.mxu0 0.0
        %10132 = vmatprep.subr.mxu0 0.0
        %10133 = vmatpush1.msra.mxu0 0.0
        %10134 = vmatprep.subr.mxu0 0.0
        %10135 = vmatpush1.msra.mxu0 0.0
        %10136 = vmatprep.subr.mxu0 0.0
        %10137 = vmatpush1.msra.mxu0 0.0
        %10138 = vmatprep.subr.mxu0 0.0
        %10139 = vmatpush1.msra.mxu0 0.0
        %10140 = vmatprep.subr.mxu0 0.0
        %10141 = vmatpush1.msra.mxu0 0.0
        %10142 = vmatprep.subr.mxu0 0.0
        %10143 = vmatpush1.msra.mxu0 0.0
        %10144 = vmatprep.subr.mxu0 0.0
        %10145 = vmatpush1.msra.mxu0 0.0
        %10146 = vmatprep.subr.mxu0 0.0
        %10147 = vmatpush1.msra.mxu0 0.0
        %10148 = vmatprep.subr.mxu0 0.0
        %10149 = vmatpush1.msra.mxu0 0.0
        %10150 = vmatprep.subr.mxu0 0.0
        %10151 = vmatpush1.msra.mxu0 0.0
        %10152 = vmatprep.subr.mxu0 0.0
        %10153 = vmatpush1.msra.mxu0 0.0
        %10154 = vmatprep.subr.mxu0 0.0
        %10155 = vmatpush1.msra.mxu0 0.0
        %10156 = vmatprep.subr.mxu0 0.0
        %10157 = vmatpush1.msra.mxu0 0.0
        %10158 = vmatprep.mubr.f32.mxu0 0.0
        %10159 = vmatmul.mubr.f32.gmra.mrb[0].mxu0 %v10089
        %v10160 = vpop.f32.mrb[0].mxu0
        %v10161 = vadd.f32 %v10082, %v10160
        %v10162 = vpop.f32.mrb[0].mxu0
        %v10163 = vadd.f32 %v10082, %v10162
        %10164 = vmatprep.mubr.f32.mxu0 0.0
        %10165 = vmatmul.mubr.f32.gmra.mrb[0].mxu0 %v10092
        %v10166 = vpop.f32.mrb[0].mxu0
        %v10167 = vadd.f32 %v10086, %v10166
        %v10168 = vpop.f32.mrb[0].mxu0
        %v10169 = vadd.f32 %v10086, %v10168
        %10170 = vdwg.mxu0
        %v10171 = vadd.f32 %v9680, %v10161
        %v10172 = vadd.f32 %v9681, %v10163
        %v10173 = vadd.f32 %v9682, %v10167
        %v10174 = vadd.f32 %v9683, %v10169
        %v10175 = vmin.f32 %v7824, %v7828
        %v10176 = vmin.f32 %v7825, %v7829
        %v10177 = vmin.f32 %v7826, %v7830
        %v10178 = vmin.f32 %v7827, %v7831
        %v10179 = vmin.f32 %v10175, %v7832
        %v10180 = vmin.f32 %v10176, %v7833
        %v10181 = vmin.f32 %v10177, %v7834
        %v10182 = vmin.f32 %v10178, %v7835
        %v10183 = vmin.f32 %v10179, %v7836
        %v10184 = vmin.f32 %v10180, %v7837
        %v10185 = vmin.f32 %v10181, %v7838
        %v10186 = vmin.f32 %v10182, %v7839
        %v10187 = vmin.f32 %v10183, %v7840
        %v10188 = vmin.f32 %v10184, %v7841
        %v10189 = vmin.f32 %v10185, %v7842
        %v10190 = vmin.f32 %v10186, %v7843
        %v10191 = vmin.f32 %v10187, %v7844
        %v10192 = vmin.f32 %v10188, %v7845
        %v10193 = vmin.f32 %v10189, %v7846
        %v10194 = vmin.f32 %v10190, %v7847
        %v10195 = vmin.f32 %v10191, %v7848
        %v10196 = vmin.f32 %v10192, %v7849
        %v10197 = vmin.f32 %v10193, %v7850
        %v10198 = vmin.f32 %v10194, %v7851
        %v10199 = vmin.f32 %v10195, %v7852
        %v10200 = vmin.f32 %v10196, %v7853
        %v10201 = vmin.f32 %v10197, %v7854
        %v10202 = vmin.f32 %v10198, %v7855
        %v10203 = vmin.f32 %v10199, %v10200
        %v10204 = vmin.f32 %v10201, %v10202
        %v10205 = vmin.f32 %v10203, %v10204
        %v10206 = vrot.slane %v10205, 4
        %v10207 = vmin.f32 %v10205, %v10206
        %v10208 = vrot.slane %v10207, 2
        %v10209 = vmin.f32 %v10207, %v10208
        %v10210 = vrot.slane %v10209, 1
        %v10211 = vmin.f32 %v10209, %v10210
        %v10212 = vmax.f32 %v7824, %v7828
        %v10213 = vmax.f32 %v7825, %v7829
        %v10214 = vmax.f32 %v7826, %v7830
        %v10215 = vmax.f32 %v7827, %v7831
        %v10216 = vmax.f32 %v10212, %v7832
        %v10217 = vmax.f32 %v10213, %v7833
        %v10218 = vmax.f32 %v10214, %v7834
        %v10219 = vmax.f32 %v10215, %v7835
        %v10220 = vmax.f32 %v10216, %v7836
        %v10221 = vmax.f32 %v10217, %v7837
        %v10222 = vmax.f32 %v10218, %v7838
        %v10223 = vmax.f32 %v10219, %v7839
        %v10224 = vmax.f32 %v10220, %v7840
        %v10225 = vmax.f32 %v10221, %v7841
        %v10226 = vmax.f32 %v10222, %v7842
        %v10227 = vmax.f32 %v10223, %v7843
        %v10228 = vmax.f32 %v10224, %v7844
        %v10229 = vmax.f32 %v10225, %v7845
        %v10230 = vmax.f32 %v10226, %v7846
        %v10231 = vmax.f32 %v10227, %v7847
        %v10232 = vmax.f32 %v10228, %v7848
        %v10233 = vmax.f32 %v10229, %v7849
        %v10234 = vmax.f32 %v10230, %v7850
        %v10235 = vmax.f32 %v10231, %v7851
        %v10236 = vmax.f32 %v10232, %v7852
        %v10237 = vmax.f32 %v10233, %v7853
        %v10238 = vmax.f32 %v10234, %v7854
        %v10239 = vmax.f32 %v10235, %v7855
        %v10240 = vmax.f32 %v10236, %v10237
        %v10241 = vmax.f32 %v10238, %v10239
        %v10242 = vmax.f32 %v10240, %v10241
        %v10243 = vrot.slane %v10242, 4
        %v10244 = vmax.f32 %v10242, %v10243
        %v10245 = vrot.slane %v10244, 2
        %v10246 = vmax.f32 %v10244, %v10245
        %v10247 = vrot.slane %v10246, 1
        %v10248 = vmax.f32 %v10246, %v10247
        %v10249 = vsub.f32 %v7824, %v10211
        %v10250 = vsub.f32 %v7825, %v10211
        %v10251 = vsub.f32 %v7826, %v10211
        %v10252 = vsub.f32 %v7827, %v10211
        %v10253 = vsub.f32 %v7828, %v10211
        %v10254 = vsub.f32 %v7829, %v10211
        %v10255 = vsub.f32 %v7830, %v10211
        %v10256 = vsub.f32 %v7831, %v10211
        %v10257 = vsub.f32 %v7832, %v10211
        %v10258 = vsub.f32 %v7833, %v10211
        %v10259 = vsub.f32 %v7834, %v10211
        %v10260 = vsub.f32 %v7835, %v10211
        %v10261 = vsub.f32 %v7836, %v10211
        %v10262 = vsub.f32 %v7837, %v10211
        %v10263 = vsub.f32 %v7838, %v10211
        %v10264 = vsub.f32 %v7839, %v10211
        %v10265 = vsub.f32 %v7840, %v10211
        %v10266 = vsub.f32 %v7841, %v10211
        %v10267 = vsub.f32 %v7842, %v10211
        %v10268 = vsub.f32 %v7843, %v10211
        %v10269 = vsub.f32 %v7844, %v10211
        %v10270 = vsub.f32 %v7845, %v10211
        %v10271 = vsub.f32 %v7846, %v10211
        %v10272 = vsub.f32 %v7847, %v10211
        %v10273 = vsub.f32 %v7848, %v10211
        %v10274 = vsub.f32 %v7849, %v10211
        %v10275 = vsub.f32 %v7850, %v10211
        %v10276 = vsub.f32 %v7851, %v10211
        %v10277 = vsub.f32 %v7852, %v10211
        %v10278 = vsub.f32 %v7853, %v10211
        %v10279 = vsub.f32 %v7854, %v10211
        %v10280 = vsub.f32 %v7855, %v10211
        %v10281 = vsub.f32 %v10248, %v10211
        %v10282 = vadd.f32 %v10281, 1e-08
        %v10283 = vrcp.pop %v10282
        %v10284 = vmul.f32 %v10249, %v10283
        %v10285 = vmul.f32 %v10250, %v10283
        %v10286 = vmul.f32 %v10251, %v10283
        %v10287 = vmul.f32 %v10252, %v10283
        %v10288 = vmul.f32 %v10253, %v10283
        %v10289 = vmul.f32 %v10254, %v10283
        %v10290 = vmul.f32 %v10255, %v10283
        %v10291 = vmul.f32 %v10256, %v10283
        %v10292 = vmul.f32 %v10257, %v10283
        %v10293 = vmul.f32 %v10258, %v10283
        %v10294 = vmul.f32 %v10259, %v10283
        %v10295 = vmul.f32 %v10260, %v10283
        %v10296 = vmul.f32 %v10261, %v10283
        %v10297 = vmul.f32 %v10262, %v10283
        %v10298 = vmul.f32 %v10263, %v10283
        %v10299 = vmul.f32 %v10264, %v10283
        %v10300 = vmul.f32 %v10265, %v10283
        %v10301 = vmul.f32 %v10266, %v10283
        %v10302 = vmul.f32 %v10267, %v10283
        %v10303 = vmul.f32 %v10268, %v10283
        %v10304 = vmul.f32 %v10269, %v10283
        %v10305 = vmul.f32 %v10270, %v10283
        %v10306 = vmul.f32 %v10271, %v10283
        %v10307 = vmul.f32 %v10272, %v10283
        %v10308 = vmul.f32 %v10273, %v10283
        %v10309 = vmul.f32 %v10274, %v10283
        %v10310 = vmul.f32 %v10275, %v10283
        %v10311 = vmul.f32 %v10276, %v10283
        %v10312 = vmul.f32 %v10277, %v10283
        %v10313 = vmul.f32 %v10278, %v10283
        %v10314 = vmul.f32 %v10279, %v10283
        %v10315 = vmul.f32 %v10280, %v10283
        %vm10316 = vcmask 7168
        %10317 = vst.msk [vmem:[%s316] sm:$0xff] %vm10316, %v10284
        %10318 = vst.msk [vmem:[%s316 + $0x8] sm:$0xff] %vm10316, %v10285
        %10319 = vst.msk [vmem:[%s316 + $0x10] sm:$0xff] %vm10316, %v10286
        %10320 = vst.msk [vmem:[%s316 + $0x18] sm:$0xff] %vm10316, %v10287
        %10321 = vst.msk [vmem:[%s316 + $0x20] sm:$0xff] %vm10316, %v10288
        %10322 = vst.msk [vmem:[%s316 + $0x28] sm:$0xff] %vm10316, %v10289
        %10323 = vst.msk [vmem:[%s316 + $0x30] sm:$0xff] %vm10316, %v10290
        %10324 = vst.msk [vmem:[%s316 + $0x38] sm:$0xff] %vm10316, %v10291
        %10325 = vst.msk [vmem:[%s316 + $0x40] sm:$0xff] %vm10316, %v10292
        %10326 = vst.msk [vmem:[%s316 + $0x48] sm:$0xff] %vm10316, %v10293
        %10327 = vst.msk [vmem:[%s316 + $0x50] sm:$0xff] %vm10316, %v10294
        %10328 = vst.msk [vmem:[%s316 + $0x58] sm:$0xff] %vm10316, %v10295
        %10329 = vst.msk [vmem:[%s316 + $0x60] sm:$0xff] %vm10316, %v10296
        %10330 = vst.msk [vmem:[%s316 + $0x68] sm:$0xff] %vm10316, %v10297
        %10331 = vst.msk [vmem:[%s316 + $0x70] sm:$0xff] %vm10316, %v10298
        %10332 = vst.msk [vmem:[%s316 + $0x78] sm:$0xff] %vm10316, %v10299
        %10333 = vst.msk [vmem:[%s316 + $0x80] sm:$0xff] %vm10316, %v10300
        %10334 = vst.msk [vmem:[%s316 + $0x88] sm:$0xff] %vm10316, %v10301
        %10335 = vst.msk [vmem:[%s316 + $0x90] sm:$0xff] %vm10316, %v10302
        %10336 = vst.msk [vmem:[%s316 + $0x98] sm:$0xff] %vm10316, %v10303
        %10337 = vst.msk [vmem:[%s316 + $0xa0] sm:$0xff] %vm10316, %v10304
        %10338 = vst.msk [vmem:[%s316 + $0xa8] sm:$0xff] %vm10316, %v10305
        %10339 = vst.msk [vmem:[%s316 + $0xb0] sm:$0xff] %vm10316, %v10306
        %10340 = vst.msk [vmem:[%s316 + $0xb8] sm:$0xff] %vm10316, %v10307
        %10341 = vst.msk [vmem:[%s316 + $0xc0] sm:$0xff] %vm10316, %v10308
        %10342 = vst.msk [vmem:[%s316 + $0xc8] sm:$0xff] %vm10316, %v10309
        %10343 = vst.msk [vmem:[%s316 + $0xd0] sm:$0xff] %vm10316, %v10310
        %10344 = vst.msk [vmem:[%s316 + $0xd8] sm:$0xff] %vm10316, %v10311
        %10345 = vst.msk [vmem:[%s316 + $0xe0] sm:$0xff] %vm10316, %v10312
        %10346 = vst.msk [vmem:[%s316 + $0xe8] sm:$0xff] %vm10316, %v10313
        %10347 = vst.msk [vmem:[%s316 + $0xf0] sm:$0xff] %vm10316, %v10314
        %10348 = vst.msk [vmem:[%s316 + $0xf8] sm:$0xff] %vm10316, %v10315
        %v10349 = vld [vmem:[%s6] sm:$0xff]
        %v10350 = vld [vmem:[%s6 + $0x8] sm:$0xff]
        %v10351 = vadd.f32 %v10171, %v10173
        %v10352 = vrot.slane %v10351, 4
        %v10353 = vadd.f32 %v10351, %v10352
        %v10354 = vrot.slane %v10353, 2
        %v10355 = vadd.f32 %v10353, %v10354
        %v10356 = vrot.slane %v10355, 1
        %v10357 = vadd.f32 %v10355, %v10356
        %v10358 = vadd.f32 %v10172, %v10174
        %v10359 = vrot.slane %v10358, 4
        %v10360 = vadd.f32 %v10358, %v10359
        %v10361 = vrot.slane %v10360, 2
        %v10362 = vadd.f32 %v10360, %v10361
        %v10363 = vrot.slane %v10362, 1
        %v10364 = vadd.f32 %v10362, %v10363
        %v10365 = vmul.f32 %v10357, %v1078
        %v10366 = vmul.f32 %v10364, %v1078
        %v10367 = vsub.f32 %v10171, %v10365
        %v10368 = vsub.f32 %v10172, %v10366
        %v10369 = vsub.f32 %v10173, %v10365
        %v10370 = vsub.f32 %v10174, %v10366
        %v10371 = vmul.f32 %v10367, %v10367
        %v10372 = vmul.f32 %v10368, %v10368
        %v10373 = vmul.f32 %v10369, %v10369
        %v10374 = vmul.f32 %v10370, %v10370
        %v10375 = vadd.f32 %v10371, %v10373
        %v10376 = vrot.slane %v10375, 4
        %v10377 = vadd.f32 %v10375, %v10376
        %v10378 = vrot.slane %v10377, 2
        %v10379 = vadd.f32 %v10377, %v10378
        %v10380 = vrot.slane %v10379, 1
        %v10381 = vadd.f32 %v10379, %v10380
        %v10382 = vadd.f32 %v10372, %v10374
        %v10383 = vrot.slane %v10382, 4
        %v10384 = vadd.f32 %v10382, %v10383
        %v10385 = vrot.slane %v10384, 2
        %v10386 = vadd.f32 %v10384, %v10385
        %v10387 = vrot.slane %v10386, 1
        %v10388 = vadd.f32 %v10386, %v10387
        %v10389 = vmul.f32 %v10381, %v1078
        %v10390 = vmul.f32 %v10388, %v1078
        %v10391 = vadd.f32 %v10389, 1e-05
        %v10392 = vadd.f32 %v10390, 1e-05
        %v10393 = vrsqrt.pop %v10391
        %v10394 = vrsqrt.pop %v10392
        %v10395 = vmul.f32 %v10367, %v10393
        %v10396 = vmul.f32 %v10368, %v10394
        %v10397 = vmul.f32 %v10369, %v10393
        %v10398 = vmul.f32 %v10370, %v10394
        %10400 = vset.pattern.permute.xlu0 14
        %10401 = vperm.xlu0 %10400, %v10349
        %v10402 = vpop.permute.xlu0 %10401
        %10405 = vset.pattern.permute.xlu0 14
        %10406 = vperm.xlu0 %10405, %v10350
        %v10407 = vpop.permute.xlu0 %10406
        %v10409 = vmul.f32 %v10395, %v10402
        %v10410 = vmul.f32 %v10396, %v10402
        %v10411 = vmul.f32 %v10397, %v10407
        %v10412 = vmul.f32 %v10398, %v10407
        %10413 = vset.pattern.permute.xlu0 15
        %10414 = vperm.xlu0 %10413, %v10349
        %v10415 = vpop.permute.xlu0 %10414
        %10417 = vset.pattern.permute.xlu0 15
        %10418 = vperm.xlu0 %10417, %v10350
        %v10419 = vpop.permute.xlu0 %10418
        %v10421 = vadd.f32 %v10409, %v10415
        %v10422 = vadd.f32 %v10410, %v10415
        %v10423 = vadd.f32 %v10411, %v10419
        %v10424 = vadd.f32 %v10412, %v10419
        %v10425 = vld [vmem:[%s5] sm:$0xff]
        %v10426 = vld [vmem:[%s5 + $0x8] sm:$0xff]
        %v10427 = vld [vmem:[%s5 + $0x10] sm:$0xff]
        %v10428 = vld [vmem:[%s5 + $0x18] sm:$0xff]
        %v10429 = vld [vmem:[%s6] sm:$0xff]
        %v10430 = vld [vmem:[%s6 + $0x8] sm:$0xff]
        %v10431 = vld [vmem:[%s6 + $0x10] sm:$0xff]
        %v10432 = vld [vmem:[%s6 + $0x18] sm:$0xff]
        %10434 = vset.pattern.permute.xlu0 16
        %10435 = vperm.xlu0 %10434, %v10429
        %v10436 = vpop.permute.xlu0 %10435
        %10439 = vset.pattern.permute.xlu0 16
        %10440 = vperm.xlu0 %10439, %v10430
        %v10441 = vpop.permute.xlu0 %10440
        %10444 = vset.pattern.permute.xlu0 16
        %10445 = vperm.xlu0 %10444, %v10431
        %v10446 = vpop.permute.xlu0 %10445
        %10449 = vset.pattern.permute.xlu0 16
        %10450 = vperm.xlu0 %10449, %v10432
        %v10451 = vpop.permute.xlu0 %10450
        %v10454 = vsel %vm1145, %v10425, 0
        %v10457 = vsel %vm1145, %v10426, 0
        %v10460 = vsel %vm1145, %v10427, 0
        %v10463 = vsel %vm1145, %v10428, 0
        %10465 = vmatprep.subr.mxu0 %v10422
        %10466 = vmatpush1.msra.mxu0 %v10421
        %10467 = vmatprep.subr.mxu0 %v10424
        %10468 = vmatpush1.msra.mxu0 %v10423
        %10469 = vmatprep.subr.mxu0 0.0
        %10470 = vmatpush1.msra.mxu0 0.0
        %10471 = vmatprep.subr.mxu0 0.0
        %10472 = vmatpush1.msra.mxu0 0.0
        %10473 = vmatprep.subr.mxu0 0.0
        %10474 = vmatpush1.msra.mxu0 0.0
        %10475 = vmatprep.subr.mxu0 0.0
        %10476 = vmatpush1.msra.mxu0 0.0
        %10477 = vmatprep.subr.mxu0 0.0
        %10478 = vmatpush1.msra.mxu0 0.0
        %10479 = vmatprep.subr.mxu0 0.0
        %10480 = vmatpush1.msra.mxu0 0.0
        %10481 = vmatprep.subr.mxu0 0.0
        %10482 = vmatpush1.msra.mxu0 0.0
        %10483 = vmatprep.subr.mxu0 0.0
        %10484 = vmatpush1.msra.mxu0 0.0
        %10485 = vmatprep.subr.mxu0 0.0
        %10486 = vmatpush1.msra.mxu0 0.0
        %10487 = vmatprep.subr.mxu0 0.0
        %10488 = vmatpush1.msra.mxu0 0.0
        %10489 = vmatprep.subr.mxu0 0.0
        %10490 = vmatpush1.msra.mxu0 0.0
        %10491 = vmatprep.subr.mxu0 0.0
        %10492 = vmatpush1.msra.mxu0 0.0
        %10493 = vmatprep.subr.mxu0 0.0
        %10494 = vmatpush1.msra.mxu0 0.0
        %10495 = vmatprep.subr.mxu0 0.0
        %10496 = vmatpush1.msra.mxu0 0.0
        %10497 = vmatprep.subr.mxu0 0.0
        %10498 = vmatpush1.msra.mxu0 0.0
        %10499 = vmatprep.subr.mxu0 0.0
        %10500 = vmatpush1.msra.mxu0 0.0
        %10501 = vmatprep.subr.mxu0 0.0
        %10502 = vmatpush1.msra.mxu0 0.0
        %10503 = vmatprep.subr.mxu0 0.0
        %10504 = vmatpush1.msra.mxu0 0.0
        %10505 = vmatprep.subr.mxu0 0.0
        %10506 = vmatpush1.msra.mxu0 0.0
        %10507 = vmatprep.subr.mxu0 0.0
        %10508 = vmatpush1.msra.mxu0 0.0
        %10509 = vmatprep.subr.mxu0 0.0
        %10510 = vmatpush1.msra.mxu0 0.0
        %10511 = vmatprep.subr.mxu0 0.0
        %10512 = vmatpush1.msra.mxu0 0.0
        %10513 = vmatprep.subr.mxu0 0.0
        %10514 = vmatpush1.msra.mxu0 0.0
        %10515 = vmatprep.subr.mxu0 0.0
        %10516 = vmatpush1.msra.mxu0 0.0
        %10517 = vmatprep.subr.mxu0 0.0
        %10518 = vmatpush1.msra.mxu0 0.0
        %10519 = vmatprep.subr.mxu0 0.0
        %10520 = vmatpush1.msra.mxu0 0.0
        %10521 = vmatprep.subr.mxu0 0.0
        %10522 = vmatpush1.msra.mxu0 0.0
        %10523 = vmatprep.subr.mxu0 0.0
        %10524 = vmatpush1.msra.mxu0 0.0
        %10525 = vmatprep.subr.mxu0 0.0
        %10526 = vmatpush1.msra.mxu0 0.0
        %10527 = vmatprep.subr.mxu0 0.0
        %10528 = vmatpush1.msra.mxu0 0.0
        %10529 = vmatprep.mubr.f32.mxu0 0.0
        %10530 = vmatmul.mubr.f32.gmra.mrb[0].mxu0 %v10454
        %v10531 = vpop.f32.mrb[0].mxu0
        %v10532 = vadd.f32 %v10436, %v10531
        %v10533 = vpop.f32.mrb[0].mxu0
        %v10534 = vadd.f32 %v10436, %v10533
        %10535 = vmatprep.mubr.f32.mxu0 0.0
        %10536 = vmatmul.mubr.f32.gmra.mrb[0].mxu0 %v10457
        %v10537 = vpop.f32.mrb[0].mxu0
        %v10538 = vadd.f32 %v10441, %v10537
        %v10539 = vpop.f32.mrb[0].mxu0
        %v10540 = vadd.f32 %v10441, %v10539
        %10541 = vmatprep.mubr.f32.mxu0 0.0
        %10542 = vmatmul.mubr.f32.gmra.mrb[0].mxu0 %v10460
        %v10543 = vpop.f32.mrb[0].mxu0
        %v10544 = vadd.f32 %v10446, %v10543
        %v10545 = vpop.f32.mrb[0].mxu0
        %v10546 = vadd.f32 %v10446, %v10545
        %10547 = vmatprep.mubr.f32.mxu0 0.0
        %10548 = vmatmul.mubr.f32.gmra.mrb[0].mxu0 %v10463
        %v10549 = vpop.f32.mrb[0].mxu0
        %v10550 = vadd.f32 %v10451, %v10549
        %v10551 = vpop.f32.mrb[0].mxu0
        %v10552 = vadd.f32 %v10451, %v10551
        %10553 = vdwg.mxu0
        %10554 = vst [vmem:[%s299] sm:$0xff] %v10532
        %10555 = vst [vmem:[%s299 + $0x8] sm:$0xff] %v10534
        %10556 = vst [vmem:[%s299 + $0x10] sm:$0xff] %v10538
        %10557 = vst [vmem:[%s299 + $0x18] sm:$0xff] %v10540
        %10558 = vst [vmem:[%s299 + $0x20] sm:$0xff] %v10544
        %10559 = vst [vmem:[%s299 + $0x28] sm:$0xff] %v10546
        %10560 = vst [vmem:[%s299 + $0x30] sm:$0xff] %v10550
        %10561 = vst [vmem:[%s299 + $0x38] sm:$0xff] %v10552
        %s10562 = sand.u32 %s183, 1
        %s10563 = scalar_lea.sflag [#allocation3], %s10562
        %s10564 = sand.u32 %s183, 1
        %s10565 = smul.addr %s10564, 64
        %s10566 = scalar_lea.vmem [#allocation2], %s10565
        %p10567 = scmp.lt.s32.totalorder %s23, 1
        %s10568 = scalar_select %p10567, %s23, 1
        %s10569 = smul.addr %s10568, 32
        %s10570 = smul.addr %s10569, 8
        %s10571 = scalar_lea.vmem %s8, %s10570
        // Predicated region
        $region49: #{vit_forward.1} parent=47 // pred_check
          %p10572 = pneg %p193
        $region50: #{vit_forward.1} parent=47 // pred_check_branch
          %10574 = sbr.rel (%p10572) target = $region52
        $region51: #{vit_forward.1} parent=47 // pred_region
          %s10576 = ssub.s32 1024, 1024
          %10577 = vsyncadd %s10563, %s10576
          %s10578 = smul.addr %s23, 8
          %s10579 = smul.addr %s10578, 128
          %s10580 = scalar_lea.hbm %s7, %s10579
          %s10581 = sshll.u32 %s10566, 4
          %s10582 = int_to_ptr.vmem [resolvable:$true] %s10581
          %10587 = dma.vmem_to_hbm [thread:$0]  %s10582, 1024, %s10580, %s10563, 256, 256, 16
        $region52: #{vit_forward.1} parent=47 // pred_fallthru
          _
        // Predicated region
        $region53: #{vit_forward.1} parent=47 // pred_check
          %p10588 = pneg %p219
        $region54: #{vit_forward.1} parent=47 // pred_check_branch
          %10590 = sbr.rel (%p10588) target = $region56
        $region55: #{vit_forward.1} parent=47 // pred_region
          _
        $region56: #{vit_forward.1} parent=47 // pred_fallthru
          _
      $region48: #{vit_forward.1} parent=5 // pred_fallthru
        _
      %p10591 = scmp.le.s32.totalorder 2, %s18
      // Predicated region
      $region57: #{vit_forward.1} parent=5 // pred_check
        %p10592 = pneg %p10591
      $region58: #{vit_forward.1} parent=5 // pred_check_branch
        %10594 = sbr.rel (%p10592) target = $region60
      $region59: #{vit_forward.1} parent=5 // pred_region
        %s10595 = ssub.s32 %s18, 2
        // Predicated region
        $region61: #{vit_forward.1} parent=59 // pred_check
          %p10596 = pneg %p199
        $region62: #{vit_forward.1} parent=59 // pred_check_branch
          %10598 = sbr.rel (%p10596) target = $region64
        $region63: #{vit_forward.1} parent=59 // pred_region
          %s10599 = sand.u32 %s184, 1
          %s10600 = scalar_lea.sflag [#allocation3], %s10599
          %s10601 = sand.u32 %s184, 1
          %s10602 = smul.addr %s10601, 64
          %s10603 = scalar_lea.vmem [#allocation2], %s10602
          %10604 = dma.done %s10600, 1024
        $region64: #{vit_forward.1} parent=59 // pred_fallthru
          _
        // Predicated region
        $region65: #{vit_forward.1} parent=59 // pred_check
          %p10605 = pneg %p225
        $region66: #{vit_forward.1} parent=59 // pred_check_branch
          %10607 = sbr.rel (%p10605) target = $region68
        $region67: #{vit_forward.1} parent=59 // pred_region
          %p10608 = scmp.lt.s32.totalorder %s24, 1
          %s10609 = scalar_select %p10608, %s24, 1
          %s10610 = smul.addr %s10609, 32
          %s10611 = smul.addr %s10610, 8
          %s10612 = scalar_lea.vmem %s8, %s10611
        $region68: #{vit_forward.1} parent=59 // pred_fallthru
          _
      $region60: #{vit_forward.1} parent=5 // pred_fallthru
        _
    $region6: #{vit_forward.1} parent=1 // loop_footer
      %s22 = sadd.s32 1, %s18
    $region7: #{vit_forward.1} parent=1 // loop_footer_branch
      %17 = sbr.rel target = $region3
    $region8: #{vit_forward.1} parent=1 // loop_exit
      _
    %10613 = vsyncpa [#allocation3], 1
    %s10614 = scalar_lea.sflag [#allocation3], 1
    %10615 = vsyncpa %s10614, 1

</llo_original>
